<compile_context>
chip_gen: v7x
topology: tpu7x:2x2x1
jax: 0.10.0
libtpu: 0.0.40
codegen_flags: <defaults>
</compile_context>

<pallas_src>
import functools

import jax
import jax.numpy as jnp
import numpy as np
from jax import lax
from jax.experimental import pallas as pl
from jax.experimental.pallas import tpu as pltpu

# ---------------- model hyper-parameters (small analog of the reference) ----------
N_VOCAB = 64
HIDDEN = 100                      # hidden_size; Linear(hidden*10 -> n_cat) == Linear(1000, 4)
MAX_LEN = 16                      # sequence length == Conv1d in-channels
KSIZE = 3
POOL_OUT = 10
N_CAT = 4
L_OUT = HIDDEN - KSIZE + 1        # Conv1d output length
K_FOLD = MAX_LEN * N_VOCAB        # contraction length of the fully folded matmul (1024)
C_PAD = 128                       # lane-padded logits width (N_CAT -> 128)
BS = 256                          # demo batch
TILE_B = 128                      # batch rows per grid step


def _adaptive_pool_matrix(length, out_size):
    """Pt[i, l] = 1/count_i if l is inside PyTorch AdaptiveAvgPool1d bin i."""
    pt = np.zeros((out_size, length), dtype=np.float32)
    for i in range(out_size):
        start = (i * length) // out_size
        end = -(-((i + 1) * length) // out_size)   # ceil
        pt[i, start:end] = 1.0 / (end - start)
    return jnp.asarray(pt)


# ---------------- one-time parameter folding (exact affine fold) ------------------
def fold_params(emb, conv_w, conv_b, fc_w, fc_b):
    """Fold Embedding + Conv1d + AdaptiveAvgPool1d(10) + flatten + Linear into a
    single lane-padded lookup weight G_pad[(p*N_VOCAB + v), c_pad] (bf16) and a
    padded bias b_pad (f32).  Parameter-only; re-run once per weight update.

      M[l, o, c]    = sum_i Pt[i, l] * fc_w[c, o*10 + i]
      W_eff[p,m,c]  = sum_{k: 0<=m-k<L_OUT} sum_o conv_w[o, p, k] * M[m-k, o, c]
      G[p, v, c]    = sum_m emb[v, m] * W_eff[p, m, c]
      fcb_eff[c]    = fc_b[c] + sum_{o,l} conv_b[o] * M[l, o, c]
    """
    hi = jax.lax.Precision.HIGHEST
    pt = _adaptive_pool_matrix(L_OUT, POOL_OUT)                               # (10, L_OUT)
    fc_w3 = fc_w.reshape(N_CAT, HIDDEN, POOL_OUT).astype(jnp.float32)         # [c, o, i]
    m = jnp.einsum('il,coi->loc', pt, fc_w3, precision=hi)                    # (L_OUT, H, C)

    w_eff = jnp.zeros((MAX_LEN, HIDDEN, N_CAT), jnp.float32)
    for k in range(KSIZE):
        a_k = jnp.einsum('op,loc->plc', conv_w[:, :, k].astype(jnp.float32),
                         m, precision=hi)                                     # (MAX_LEN, L_OUT, C)
        w_eff = w_eff.at[:, k:k + L_OUT, :].add(a_k)

    # Fold the embedding table itself (this removes the in-kernel gather entirely).
    g = jnp.einsum('vm,pmc->pvc', emb.astype(jnp.float32), w_eff, precision=hi)  # (P, V, C)
    g_flat = g.reshape(K_FOLD, N_CAT)                                         # row = p*N_VOCAB + v

    fcb = fc_b.astype(jnp.float32) + jnp.einsum(
        'o,loc->c', conv_b.astype(jnp.float32), m, precision=hi)

    # Lane-pad the category axis to 128: zero weight columns + -1e30 bias lanes so a
    # log_softmax over the full 128-lane block ignores the padding (exp -> 0).
    g_pad = jnp.zeros((K_FOLD, C_PAD), jnp.float32).at[:, :N_CAT].set(g_flat)
    b_pad = jnp.full((1, C_PAD), -1e30, jnp.float32).at[0, :N_CAT].set(fcb)
    # bf16 weight halves resident-VMEM/DMA bytes; MXU accumulates in f32.
    return g_pad.astype(jnp.bfloat16), b_pad


# ------------------------------- Pallas kernel -----------------------------------
def imdb_cnn_kernel(ids_ref, g_ref, b_ref, o_ref, *, tile_b, max_len, n_vocab):
    # ids_ref : VMEM (tile_b, max_len) int32       token ids (streamed per grid step)
    # g_ref   : VMEM (max_len*n_vocab, C_PAD) bf16 fully folded emb+conv+pool+fc weight
    # b_ref   : VMEM (1, C_PAD) f32                folded bias; padded lanes = -1e30
    # o_ref   : VMEM (tile_b, C_PAD) f32           lane-dense log-softmax output
    k_fold = max_len * n_vocab
    ids = ids_ref[...]

    # Multi-hot token encoding over the flat (position, vocab) axis, built directly
    # in its native (tile_b, k_fold) lane layout (no gather, no relayout). The iota
    # is hoisted out of the loop; each iteration is full-lane VPU compare + add.
    k_iota = lax.broadcasted_iota(jnp.int32, (tile_b, k_fold), 1)
    mh = jnp.zeros((tile_b, k_fold), jnp.float32)
    for p in range(max_len):                         # static unroll (16 iterations)
        tgt = ids[:, p:p + 1] + p * n_vocab          # (tile_b, 1), broadcast over lanes
        mh = mh + (k_iota == tgt).astype(jnp.float32)

    # Embedding + Conv1d + AdaptiveAvgPool1d + flatten + Linear collapsed into one
    # lane-aligned MXU matmul: (tile_b, 1024) bf16 x (1024, 128) bf16 -> f32.
    logits = jnp.dot(mh.astype(jnp.bfloat16), g_ref[...],
                     preferred_element_type=jnp.float32) + b_ref[...]

    # TODO(synk): F.dropout(p=0.5) (training=True in the reference) is stochastic;
    # applied as identity (eval semantics) here.

    # LogSoftmax over the padded 128-lane block; padded lanes carry ~-1e30 so they
    # contribute exp(.) == 0. One full lane-dense (tile_b, 128) store.
    mx = jnp.max(logits, axis=-1, keepdims=True)
    shifted = logits - mx
    lse = jnp.log(jnp.sum(jnp.exp(shifted), axis=-1, keepdims=True))
    o_ref[...] = shifted - lse


# ------------------------------- wrapper ------------------------------------------
def imdb_cnn_forward(inp, g_pad, b_pad):
    """inp: (bs, max_len) int32 token ids; g_pad/b_pad from fold_params()."""
    bs = inp.shape[0]
    n_tiles = pl.cdiv(bs, TILE_B)
    bs_pad = n_tiles * TILE_B
    ids = inp.astype(jnp.int32)
    if bs_pad != bs:
        ids = jnp.pad(ids, ((0, bs_pad - bs), (0, 0)))   # padded rows sliced off below

    kernel = functools.partial(imdb_cnn_kernel, tile_b=TILE_B,
                               max_len=MAX_LEN, n_vocab=N_VOCAB)

    cost = pl.CostEstimate(
        flops=2 * bs_pad * K_FOLD * C_PAD + 2 * bs_pad * K_FOLD * MAX_LEN,
        transcendentals=bs_pad * C_PAD + bs_pad,
        bytes_accessed=(ids.size * 4 + g_pad.size * 2 + b_pad.size * 4
                        + bs_pad * C_PAD * 4),
    )

    grid_spec = pltpu.PrefetchScalarGridSpec(
        num_scalar_prefetch=0,
        grid=(n_tiles,),                                    # batch tiles
        in_specs=[
            pl.BlockSpec((TILE_B, MAX_LEN), lambda i: (i, 0)),   # ids: streamed
            pl.BlockSpec((K_FOLD, C_PAD), lambda i: (0, 0)),     # folded weight: resident
            pl.BlockSpec((1, C_PAD), lambda i: (0, 0)),          # folded bias: resident
        ],
        out_specs=pl.BlockSpec((TILE_B, C_PAD), lambda i: (i, 0)),  # lane-dense output
    )

    out_pad = pl.pallas_call(
        kernel,
        out_shape=jax.ShapeDtypeStruct((bs_pad, C_PAD), jnp.float32),
        grid_spec=grid_spec,
        compiler_params=pltpu.CompilerParams(
            # batch axis is independent -> v7x's 2 TensorCores can split it.
            dimension_semantics=("parallel",),
            # Explicit limit sized with v7x's 64 MiB physical VMEM in mind; actual
            # footprint here is ~1.5 MiB (weight 256 KiB bf16 + tiles + multihot).
            vmem_limit_bytes=32 * 1024 * 1024,
        ),
        cost_estimate=cost,
    )(ids, g_pad, b_pad)

    return out_pad[:bs, :N_CAT]


# ------------------------------- pure-JAX reference --------------------------------
def reference_forward(inp, emb, conv_w, conv_b, fc_w, fc_b):
    hi = jax.lax.Precision.HIGHEST
    e_out = jnp.take(emb, inp, axis=0)                                  # (bs, max_len, hidden)
    conv = conv_b[None, :, None]
    for k in range(KSIZE):
        conv = conv + jnp.einsum('bpl,op->bol', e_out[:, :, k:k + L_OUT],
                                 conv_w[:, :, k], precision=hi)
    pt = _adaptive_pool_matrix(L_OUT, POOL_OUT)
    pooled = jnp.einsum('bol,il->boi', conv, pt, precision=hi)          # (bs, hidden, 10)
    flat = pooled.reshape(inp.shape[0], -1)
    logits = jnp.dot(flat, fc_w.T, precision=hi) + fc_b
    return jax.nn.log_softmax(logits, axis=-1)


if __name__ == "__main__":
    key = jax.random.PRNGKey(0)
    k_inp, k_e, k_w, k_b, k_fw, k_fb = jax.random.split(key, 6)

    inp = jax.random.randint(k_inp, (BS, MAX_LEN), 0, N_VOCAB, dtype=jnp.int32)
    emb = jax.random.normal(k_e, (N_VOCAB, HIDDEN), jnp.float32)
    conv_w = 0.1 * jax.random.normal(k_w, (HIDDEN, MAX_LEN, KSIZE), jnp.float32)
    conv_b = 0.1 * jax.random.normal(k_b, (HIDDEN,), jnp.float32)
    fc_w = 0.1 * jax.random.normal(k_fw, (N_CAT, HIDDEN * POOL_OUT), jnp.float32)
    fc_b = 0.1 * jax.random.normal(k_fb, (N_CAT,), jnp.float32)

    # One-time, parameter-only folding (embedding table included) at f32 HIGHEST.
    g_pad, b_pad = fold_params(emb, conv_w, conv_b, fc_w, fc_b)

    out = imdb_cnn_forward(inp, g_pad, b_pad)
    out = jax.block_until_ready(out)

    ref = reference_forward(inp, emb, conv_w, conv_b, fc_w, fc_b)
    # Tolerance sized for the bf16 quantization of the folded lookup weight (only 16
    # quantized terms enter each logit; f32 accumulation and f32 softmax).  Any real
    # formula/layout bug shows up as O(0.1-1) discrepancies.
    np.testing.assert_allclose(np.asarray(out), np.asarray(ref), rtol=2e-2, atol=2e-2)

    print("KERNEL_OK")
</pallas_src>

<mosaic_0001>
module attributes {stable_mosaic.version = 11 : i64} {
  func.func @imdb_cnn_kernel(%arg0: i32, %arg1: memref<128x16xi32, #tpu.memory_space<vmem>>, %arg2: memref<1024x128xbf16, #tpu.memory_space<vmem>>, %arg3: memref<1x128xf32, #tpu.memory_space<vmem>>, %arg4: memref<128x128xf32, #tpu.memory_space<vmem>>) attributes {dimension_semantics = [#tpu.dimension_semantics<parallel>], iteration_bounds = array<i64: 2>, scalar_prefetch = 0 : i64, scratch_operands = 0 : i64, tpu.core_type = #tpu.core_type<tc>, window_params = [{transform_indices = @transform_0, window_bounds = array<i64: 128, 16>}, {pipeline_mode = #tpu.pipeline_mode<synchronous>, transform_indices = @transform_1, window_bounds = array<i64: 1024, 128>}, {pipeline_mode = #tpu.pipeline_mode<synchronous>, transform_indices = @transform_2, window_bounds = array<i64: 1, 128>}, {transform_indices = @transform_3, window_bounds = array<i64: 128, 128>}]} {
    %c0 = arith.constant 0 : index
    %c0_0 = arith.constant 0 : index
    %0 = vector.load %arg1[%c0, %c0_0] : memref<128x16xi32, #tpu.memory_space<vmem>>, vector<128x16xi32>
    %1 = tpu.iota {dimensions = array<i32: 1>} : vector<128x1024xi32>
    %cst = arith.constant 0.000000e+00 : f32
    %2 = vector.broadcast %cst : f32 to vector<128x1024xf32>
    %3 = vector.extract_strided_slice %0 {offsets = [0, 0], sizes = [128, 1], strides = [1, 1]} : vector<128x16xi32> to vector<128x1xi32>
    %c0_i32 = arith.constant 0 : i32
    %4 = vector.broadcast %c0_i32 : i32 to vector<128x1xi32>
    %5 = arith.addi %3, %4 : vector<128x1xi32>
    %6 = vector.broadcast %5 : vector<128x1xi32> to vector<128x1024xi32>
    %7 = arith.cmpi eq, %1, %6 : vector<128x1024xi32>
    %8 = arith.extui %7 : vector<128x1024xi1> to vector<128x1024xi32>
    %9 = arith.sitofp %8 : vector<128x1024xi32> to vector<128x1024xf32>
    %10 = arith.addf %2, %9 : vector<128x1024xf32>
    %11 = vector.extract_strided_slice %0 {offsets = [0, 1], sizes = [128, 1], strides = [1, 1]} : vector<128x16xi32> to vector<128x1xi32>
    %c64_i32 = arith.constant 64 : i32
    %12 = vector.broadcast %c64_i32 : i32 to vector<128x1xi32>
    %13 = arith.addi %11, %12 : vector<128x1xi32>
    %14 = vector.broadcast %13 : vector<128x1xi32> to vector<128x1024xi32>
    %15 = arith.cmpi eq, %1, %14 : vector<128x1024xi32>
    %16 = arith.extui %15 : vector<128x1024xi1> to vector<128x1024xi32>
    %17 = arith.sitofp %16 : vector<128x1024xi32> to vector<128x1024xf32>
    %18 = arith.addf %10, %17 : vector<128x1024xf32>
    %19 = vector.extract_strided_slice %0 {offsets = [0, 2], sizes = [128, 1], strides = [1, 1]} : vector<128x16xi32> to vector<128x1xi32>
    %c128_i32 = arith.constant 128 : i32
    %20 = vector.broadcast %c128_i32 : i32 to vector<128x1xi32>
    %21 = arith.addi %19, %20 : vector<128x1xi32>
    %22 = vector.broadcast %21 : vector<128x1xi32> to vector<128x1024xi32>
    %23 = arith.cmpi eq, %1, %22 : vector<128x1024xi32>
    %24 = arith.extui %23 : vector<128x1024xi1> to vector<128x1024xi32>
    %25 = arith.sitofp %24 : vector<128x1024xi32> to vector<128x1024xf32>
    %26 = arith.addf %18, %25 : vector<128x1024xf32>
    %27 = vector.extract_strided_slice %0 {offsets = [0, 3], sizes = [128, 1], strides = [1, 1]} : vector<128x16xi32> to vector<128x1xi32>
    %c192_i32 = arith.constant 192 : i32
    %28 = vector.broadcast %c192_i32 : i32 to vector<128x1xi32>
    %29 = arith.addi %27, %28 : vector<128x1xi32>
    %30 = vector.broadcast %29 : vector<128x1xi32> to vector<128x1024xi32>
    %31 = arith.cmpi eq, %1, %30 : vector<128x1024xi32>
    %32 = arith.extui %31 : vector<128x1024xi1> to vector<128x1024xi32>
    %33 = arith.sitofp %32 : vector<128x1024xi32> to vector<128x1024xf32>
    %34 = arith.addf %26, %33 : vector<128x1024xf32>
    %35 = vector.extract_strided_slice %0 {offsets = [0, 4], sizes = [128, 1], strides = [1, 1]} : vector<128x16xi32> to vector<128x1xi32>
    %c256_i32 = arith.constant 256 : i32
    %36 = vector.broadcast %c256_i32 : i32 to vector<128x1xi32>
    %37 = arith.addi %35, %36 : vector<128x1xi32>
    %38 = vector.broadcast %37 : vector<128x1xi32> to vector<128x1024xi32>
    %39 = arith.cmpi eq, %1, %38 : vector<128x1024xi32>
    %40 = arith.extui %39 : vector<128x1024xi1> to vector<128x1024xi32>
    %41 = arith.sitofp %40 : vector<128x1024xi32> to vector<128x1024xf32>
    %42 = arith.addf %34, %41 : vector<128x1024xf32>
    %43 = vector.extract_strided_slice %0 {offsets = [0, 5], sizes = [128, 1], strides = [1, 1]} : vector<128x16xi32> to vector<128x1xi32>
    %c320_i32 = arith.constant 320 : i32
    %44 = vector.broadcast %c320_i32 : i32 to vector<128x1xi32>
    %45 = arith.addi %43, %44 : vector<128x1xi32>
    %46 = vector.broadcast %45 : vector<128x1xi32> to vector<128x1024xi32>
    %47 = arith.cmpi eq, %1, %46 : vector<128x1024xi32>
    %48 = arith.extui %47 : vector<128x1024xi1> to vector<128x1024xi32>
    %49 = arith.sitofp %48 : vector<128x1024xi32> to vector<128x1024xf32>
    %50 = arith.addf %42, %49 : vector<128x1024xf32>
    %51 = vector.extract_strided_slice %0 {offsets = [0, 6], sizes = [128, 1], strides = [1, 1]} : vector<128x16xi32> to vector<128x1xi32>
    %c384_i32 = arith.constant 384 : i32
    %52 = vector.broadcast %c384_i32 : i32 to vector<128x1xi32>
    %53 = arith.addi %51, %52 : vector<128x1xi32>
    %54 = vector.broadcast %53 : vector<128x1xi32> to vector<128x1024xi32>
    %55 = arith.cmpi eq, %1, %54 : vector<128x1024xi32>
    %56 = arith.extui %55 : vector<128x1024xi1> to vector<128x1024xi32>
    %57 = arith.sitofp %56 : vector<128x1024xi32> to vector<128x1024xf32>
    %58 = arith.addf %50, %57 : vector<128x1024xf32>
    %59 = vector.extract_strided_slice %0 {offsets = [0, 7], sizes = [128, 1], strides = [1, 1]} : vector<128x16xi32> to vector<128x1xi32>
    %c448_i32 = arith.constant 448 : i32
    %60 = vector.broadcast %c448_i32 : i32 to vector<128x1xi32>
    %61 = arith.addi %59, %60 : vector<128x1xi32>
    %62 = vector.broadcast %61 : vector<128x1xi32> to vector<128x1024xi32>
    %63 = arith.cmpi eq, %1, %62 : vector<128x1024xi32>
    %64 = arith.extui %63 : vector<128x1024xi1> to vector<128x1024xi32>
    %65 = arith.sitofp %64 : vector<128x1024xi32> to vector<128x1024xf32>
    %66 = arith.addf %58, %65 : vector<128x1024xf32>
    %67 = vector.extract_strided_slice %0 {offsets = [0, 8], sizes = [128, 1], strides = [1, 1]} : vector<128x16xi32> to vector<128x1xi32>
    %c512_i32 = arith.constant 512 : i32
    %68 = vector.broadcast %c512_i32 : i32 to vector<128x1xi32>
    %69 = arith.addi %67, %68 : vector<128x1xi32>
    %70 = vector.broadcast %69 : vector<128x1xi32> to vector<128x1024xi32>
    %71 = arith.cmpi eq, %1, %70 : vector<128x1024xi32>
    %72 = arith.extui %71 : vector<128x1024xi1> to vector<128x1024xi32>
    %73 = arith.sitofp %72 : vector<128x1024xi32> to vector<128x1024xf32>
    %74 = arith.addf %66, %73 : vector<128x1024xf32>
    %75 = vector.extract_strided_slice %0 {offsets = [0, 9], sizes = [128, 1], strides = [1, 1]} : vector<128x16xi32> to vector<128x1xi32>
    %c576_i32 = arith.constant 576 : i32
    %76 = vector.broadcast %c576_i32 : i32 to vector<128x1xi32>
    %77 = arith.addi %75, %76 : vector<128x1xi32>
    %78 = vector.broadcast %77 : vector<128x1xi32> to vector<128x1024xi32>
    %79 = arith.cmpi eq, %1, %78 : vector<128x1024xi32>
    %80 = arith.extui %79 : vector<128x1024xi1> to vector<128x1024xi32>
    %81 = arith.sitofp %80 : vector<128x1024xi32> to vector<128x1024xf32>
    %82 = arith.addf %74, %81 : vector<128x1024xf32>
    %83 = vector.extract_strided_slice %0 {offsets = [0, 10], sizes = [128, 1], strides = [1, 1]} : vector<128x16xi32> to vector<128x1xi32>
    %c640_i32 = arith.constant 640 : i32
    %84 = vector.broadcast %c640_i32 : i32 to vector<128x1xi32>
    %85 = arith.addi %83, %84 : vector<128x1xi32>
    %86 = vector.broadcast %85 : vector<128x1xi32> to vector<128x1024xi32>
    %87 = arith.cmpi eq, %1, %86 : vector<128x1024xi32>
    %88 = arith.extui %87 : vector<128x1024xi1> to vector<128x1024xi32>
    %89 = arith.sitofp %88 : vector<128x1024xi32> to vector<128x1024xf32>
    %90 = arith.addf %82, %89 : vector<128x1024xf32>
    %91 = vector.extract_strided_slice %0 {offsets = [0, 11], sizes = [128, 1], strides = [1, 1]} : vector<128x16xi32> to vector<128x1xi32>
    %c704_i32 = arith.constant 704 : i32
    %92 = vector.broadcast %c704_i32 : i32 to vector<128x1xi32>
    %93 = arith.addi %91, %92 : vector<128x1xi32>
    %94 = vector.broadcast %93 : vector<128x1xi32> to vector<128x1024xi32>
    %95 = arith.cmpi eq, %1, %94 : vector<128x1024xi32>
    %96 = arith.extui %95 : vector<128x1024xi1> to vector<128x1024xi32>
    %97 = arith.sitofp %96 : vector<128x1024xi32> to vector<128x1024xf32>
    %98 = arith.addf %90, %97 : vector<128x1024xf32>
    %99 = vector.extract_strided_slice %0 {offsets = [0, 12], sizes = [128, 1], strides = [1, 1]} : vector<128x16xi32> to vector<128x1xi32>
    %c768_i32 = arith.constant 768 : i32
    %100 = vector.broadcast %c768_i32 : i32 to vector<128x1xi32>
    %101 = arith.addi %99, %100 : vector<128x1xi32>
    %102 = vector.broadcast %101 : vector<128x1xi32> to vector<128x1024xi32>
    %103 = arith.cmpi eq, %1, %102 : vector<128x1024xi32>
    %104 = arith.extui %103 : vector<128x1024xi1> to vector<128x1024xi32>
    %105 = arith.sitofp %104 : vector<128x1024xi32> to vector<128x1024xf32>
    %106 = arith.addf %98, %105 : vector<128x1024xf32>
    %107 = vector.extract_strided_slice %0 {offsets = [0, 13], sizes = [128, 1], strides = [1, 1]} : vector<128x16xi32> to vector<128x1xi32>
    %c832_i32 = arith.constant 832 : i32
    %108 = vector.broadcast %c832_i32 : i32 to vector<128x1xi32>
    %109 = arith.addi %107, %108 : vector<128x1xi32>
    %110 = vector.broadcast %109 : vector<128x1xi32> to vector<128x1024xi32>
    %111 = arith.cmpi eq, %1, %110 : vector<128x1024xi32>
    %112 = arith.extui %111 : vector<128x1024xi1> to vector<128x1024xi32>
    %113 = arith.sitofp %112 : vector<128x1024xi32> to vector<128x1024xf32>
    %114 = arith.addf %106, %113 : vector<128x1024xf32>
    %115 = vector.extract_strided_slice %0 {offsets = [0, 14], sizes = [128, 1], strides = [1, 1]} : vector<128x16xi32> to vector<128x1xi32>
    %c896_i32 = arith.constant 896 : i32
    %116 = vector.broadcast %c896_i32 : i32 to vector<128x1xi32>
    %117 = arith.addi %115, %116 : vector<128x1xi32>
    %118 = vector.broadcast %117 : vector<128x1xi32> to vector<128x1024xi32>
    %119 = arith.cmpi eq, %1, %118 : vector<128x1024xi32>
    %120 = arith.extui %119 : vector<128x1024xi1> to vector<128x1024xi32>
    %121 = arith.sitofp %120 : vector<128x1024xi32> to vector<128x1024xf32>
    %122 = arith.addf %114, %121 : vector<128x1024xf32>
    %123 = vector.extract_strided_slice %0 {offsets = [0, 15], sizes = [128, 1], strides = [1, 1]} : vector<128x16xi32> to vector<128x1xi32>
    %c960_i32 = arith.constant 960 : i32
    %124 = vector.broadcast %c960_i32 : i32 to vector<128x1xi32>
    %125 = arith.addi %123, %124 : vector<128x1xi32>
    %126 = vector.broadcast %125 : vector<128x1xi32> to vector<128x1024xi32>
    %127 = arith.cmpi eq, %1, %126 : vector<128x1024xi32>
    %128 = arith.extui %127 : vector<128x1024xi1> to vector<128x1024xi32>
    %129 = arith.sitofp %128 : vector<128x1024xi32> to vector<128x1024xf32>
    %130 = arith.addf %122, %129 : vector<128x1024xf32>
    %131 = arith.truncf %130 : vector<128x1024xf32> to vector<128x1024xbf16>
    %c0_1 = arith.constant 0 : index
    %c0_2 = arith.constant 0 : index
    %132 = vector.load %arg2[%c0_1, %c0_2] : memref<1024x128xbf16, #tpu.memory_space<vmem>>, vector<1024x128xbf16>
    %cst_3 = arith.constant dense<0.000000e+00> : vector<128x128xf32>
    %133 = tpu.matmul %131, %132, %cst_3 {dimension_numbers = #tpu.dot_dimension_numbers<[1], [0], [0], [1], [0, 0, 1, 1], [], []>} : vector<128x1024xbf16>, vector<1024x128xbf16>, vector<128x128xf32> -> vector<128x128xf32>
    %c0_4 = arith.constant 0 : index
    %c0_5 = arith.constant 0 : index
    %134 = vector.load %arg3[%c0_4, %c0_5] : memref<1x128xf32, #tpu.memory_space<vmem>>, vector<1x128xf32>
    %135 = vector.broadcast %134 : vector<1x128xf32> to vector<128x128xf32>
    %136 = arith.addf %133, %135 : vector<128x128xf32>
    %cst_6 = arith.constant dense<0xFF800000> : vector<128xf32>
    %137 = vector.multi_reduction <maximumf>, %136, %cst_6 [1] : vector<128x128xf32> to vector<128xf32>
    %138 = vector.shape_cast %137 : vector<128xf32> to vector<128x1xf32>
    %139 = vector.broadcast %138 : vector<128x1xf32> to vector<128x128xf32>
    %140 = arith.subf %136, %139 : vector<128x128xf32>
    %141 = math.exp %140 : vector<128x128xf32>
    %cst_7 = arith.constant dense<0.000000e+00> : vector<128xf32>
    %142 = vector.multi_reduction <add>, %141, %cst_7 [1] : vector<128x128xf32> to vector<128xf32>
    %143 = vector.shape_cast %142 : vector<128xf32> to vector<128x1xf32>
    %144 = math.log %143 : vector<128x1xf32>
    %145 = vector.broadcast %144 : vector<128x1xf32> to vector<128x128xf32>
    %146 = arith.subf %140, %145 : vector<128x128xf32>
    %c0_8 = arith.constant 0 : index
    %c0_9 = arith.constant 0 : index
    %147 = vector.load %arg4[%c0_8, %c0_9] : memref<128x128xf32, #tpu.memory_space<vmem>>, vector<128x128xf32>
    tpu.vector_store %arg4[%c0_8, %c0_9], %146 {strides = array<i32>} : memref<128x128xf32, #tpu.memory_space<vmem>>, vector<128x128xf32>,
    return
  }
  func.func @transform_0(%arg0: i32) -> (i32, i32) {
    %c0_i32 = arith.constant 0 : i32
    %c0_i32_0 = arith.constant 0 : i32
    return %arg0, %c0_i32 : i32, i32
  }
  func.func @transform_1(%arg0: i32) -> (i32, i32) {
    %c0_i32 = arith.constant 0 : i32
    %c0_i32_0 = arith.constant 0 : i32
    %c0_i32_1 = arith.constant 0 : i32
    return %c0_i32, %c0_i32_0 : i32, i32
  }
  func.func @transform_2(%arg0: i32) -> (i32, i32) {
    %c0_i32 = arith.constant 0 : i32
    %c0_i32_0 = arith.constant 0 : i32
    %c0_i32_1 = arith.constant 0 : i32
    return %c0_i32, %c0_i32_0 : i32, i32
  }
  func.func @transform_3(%arg0: i32) -> (i32, i32) {
    %c0_i32 = arith.constant 0 : i32
    %c0_i32_0 = arith.constant 0 : i32
    return %arg0, %c0_i32 : i32, i32
  }
}

</mosaic_0001>

<llo_original>
// kernel: tpu_custom_call.1
$region0: #{tpu_custom_call.1}
  #allocation0 [shape = 'u32[]', space=smem, size = 0x4, offset = 0x4, fixed_abs, tag = 'smem constant byte address 0x4 - core index']
  #allocation1 [shape = 'u32[144,128]{1,0:T(1,128)}', space=vmem, size = 0x12000, scoped, tag = 'internal scratch']
  %s0 = inlined_call_operand.vmem [shape: s32[256,16], index: 0, kind: input, shape index: {}]
  %s1 = inlined_call_operand.hbm [shape: bf16[1024,128], index: 1, kind: input, shape index: {}]
  %s2 = inlined_call_operand.vmem [shape: f32[1,128], index: 2, kind: input, shape index: {}]
  %s3 = inlined_call_operand.hbm [shape: f32[256,128], index: 3, kind: output, shape index: {}]
  %s4 = sld [smem:[#allocation0]]
  $region49: #{tpu_custom_call.1} parent=0
    _
  %s6 = ssub.s32 1, %s4
  %s7 = scalar_select 0, %s6, %s4
  $region1: #{tpu_custom_call.1} parent=0
    #allocation2 [shape = 'u8[262144]{0}', space=vmem, size = 0x40000, scoped, tag = 'input window, operand 1, single buffered']
    #allocation3 [shape = 's32[2]{0}', space=sflag, size = 0x8, scoped, tag = 'scoped memory for tpu_custom_call.1']
    #allocation4 [shape = 's32[2]{0}', space=sflag, size = 0x8, scoped, tag = 'scoped memory for tpu_custom_call.1']
    #allocation5 [shape = 'u8[131072]{0}', space=vmem, size = 0x20000, scoped, tag = 'output window, operand 0']
    %8 = vsyncpa [#allocation3], 0
    %9 = vsyncpa [#allocation4], 0
    %s10 = scalar_lea.sflag [#allocation4], 1
    %11 = vsyncpa %s10, 0
    loop: start=0, step=1, limit=4
    $region2: #{tpu_custom_call.1} parent=1 // loop_pre_header
      _
    $region3: #{tpu_custom_call.1} parent=1 // loop_header
      %s13 = sphi 0, %s17
      %p14 = scmp.ge.s32.totalorder %s13, 4
      %s23 = sphi 0, %s25
      %s26 = sphi 0, %s23
      %s27 = sphi 0, %s26
      %s43 = sphi 0, %s27
      %s47 = sphi 0, %s47
      %s49 = sphi 0, %s47
      %s50 = sphi 0, %s49
      %s64 = sphi 0, %s50
      %s68 = sphi 0, %s68
      %s70 = sphi 0, %s68
      %s71 = sphi 0, %s70
      %s85 = sphi 0, %s71
      %s91 = sphi 0, %s93
      %s94 = sphi 0, %s91
      %s95 = sphi 0, %s94
      %s111 = sphi 0, %s95
    $region4: #{tpu_custom_call.1} parent=1 // loop_header_branch
      %16 = sbr.rel (%p14) target = $region8
    $region5: #{tpu_custom_call.1} parent=1 // loop_body
      %s18 = ssub.s32 %s13, 1
      %s19 = ssub.s32 %s13, 2
      %s20 = sadd.s32 %s13, 1
      %s21 = ssub.s32 %s13, %s20
      %p22 = scmp.eq.s32.totalorder %s21, 0
      %s24 = sadd.s32 %s23, 1
      %s25 = scalar_select %p22, %s23, %s24
      %p28 = pneg %p22
      %p29 = scmp.eq.s32.totalorder %s13, 1
      %p30 = por %p28, %p29
      %p31 = scmp.ne.s32.totalorder %s23, %s26
      %p32 = scmp.eq.s32.totalorder %s13, 0
      %p33 = por %p31, %p32
      %p34 = scmp.ne.s32.totalorder %s23, %s26
      %p35 = scmp.eq.s32.totalorder %s18, 1
      %p36 = por %p34, %p35
      %p37 = scmp.ne.s32.totalorder %s26, %s27
      %p38 = scmp.eq.s32.totalorder %s18, 0
      %p39 = por %p37, %p38
      %p40 = scmp.ne.s32.totalorder %s26, %s27
      %p41 = scmp.eq.s32.totalorder %s19, 1
      %p42 = por %p40, %p41
      %p44 = scmp.ne.s32.totalorder %s27, %s43
      %p45 = scmp.eq.s32.totalorder %s19, 0
      %p46 = por %p44, %p45
      %s48 = sadd.s32 %s47, 1
      %p51 = scmp.eq.s32.totalorder %s13, 1
      %p52 = scmp.ne.s32.totalorder %s47, %s49
      %p53 = scmp.eq.s32.totalorder %s13, 0
      %p54 = por %p52, %p53
      %p55 = scmp.ne.s32.totalorder %s47, %s49
      %p56 = scmp.eq.s32.totalorder %s18, 1
      %p57 = por %p55, %p56
      %p58 = scmp.ne.s32.totalorder %s49, %s50
      %p59 = scmp.eq.s32.totalorder %s18, 0
      %p60 = por %p58, %p59
      %p61 = scmp.ne.s32.totalorder %s49, %s50
      %p62 = scmp.eq.s32.totalorder %s19, 1
      %p63 = por %p61, %p62
      %p65 = scmp.ne.s32.totalorder %s50, %s64
      %p66 = scmp.eq.s32.totalorder %s19, 0
      %p67 = por %p65, %p66
      %s69 = sadd.s32 %s68, 1
      %p72 = scmp.eq.s32.totalorder %s13, 1
      %p73 = scmp.ne.s32.totalorder %s68, %s70
      %p74 = scmp.eq.s32.totalorder %s13, 0
      %p75 = por %p73, %p74
      %p76 = scmp.ne.s32.totalorder %s68, %s70
      %p77 = scmp.eq.s32.totalorder %s18, 1
      %p78 = por %p76, %p77
      %p79 = scmp.ne.s32.totalorder %s70, %s71
      %p80 = scmp.eq.s32.totalorder %s18, 0
      %p81 = por %p79, %p80
      %p82 = scmp.ne.s32.totalorder %s70, %s71
      %p83 = scmp.eq.s32.totalorder %s19, 1
      %p84 = por %p82, %p83
      %p86 = scmp.ne.s32.totalorder %s71, %s85
      %p87 = scmp.eq.s32.totalorder %s19, 0
      %p88 = por %p86, %p87
      %s89 = ssub.s32 %s13, %s20
      %p90 = scmp.eq.s32.totalorder %s89, 0
      %s92 = sadd.s32 %s91, 1
      %s93 = scalar_select %p90, %s91, %s92
      %p96 = pneg %p90
      %p97 = scmp.eq.s32.totalorder %s13, 1
      %p98 = por %p96, %p97
      %p99 = scmp.ne.s32.totalorder %s91, %s94
      %p100 = scmp.eq.s32.totalorder %s13, 0
      %p101 = por %p99, %p100
      %p102 = scmp.ne.s32.totalorder %s91, %s94
      %p103 = scmp.eq.s32.totalorder %s18, 1
      %p104 = por %p102, %p103
      %p105 = scmp.ne.s32.totalorder %s94, %s95
      %p106 = scmp.eq.s32.totalorder %s18, 0
      %p107 = por %p105, %p106
      %p108 = scmp.ne.s32.totalorder %s94, %s95
      %p109 = scmp.eq.s32.totalorder %s19, 1
      %p110 = por %p108, %p109
      %p112 = scmp.ne.s32.totalorder %s95, %s111
      %p113 = scmp.eq.s32.totalorder %s19, 0
      %p114 = por %p112, %p113
      %p115 = scmp.le.s32.totalorder 1, %s13
      %p116 = scmp.lt.s32.totalorder %s13, 3
      %p117 = pnand %p115, %p116
      %p118 = pneg %p117
      // Predicated region
      $region9: #{tpu_custom_call.1} parent=5 // pred_check
        _
      $region10: #{tpu_custom_call.1} parent=5 // pred_check_branch
        %120 = sbr.rel (%p117) target = $region12
      $region11: #{tpu_custom_call.1} parent=5 // pred_region
        %s121 = ssub.s32 %s13, 1
        // Predicated region
        $region13: #{tpu_custom_call.1} parent=11 // pred_check
          %p122 = pneg %p60
        $region14: #{tpu_custom_call.1} parent=11 // pred_check_branch
          %124 = sbr.rel (%p122) target = $region16
        $region15: #{tpu_custom_call.1} parent=11 // pred_region
          %s126 = ssub.s32 8192, 8192
          %127 = vsyncadd [#allocation3], %s126
          %s128 = sshll.u32 [#allocation2], 4
          %s129 = int_to_ptr.vmem [resolvable:$true] %s128
          %134 = dma.hbm_to_vmem [thread:$0]  %s1, 8192, %s129, [#allocation3], 64, 64, 4
        $region16: #{tpu_custom_call.1} parent=11 // pred_fallthru
          _
        // Predicated region
        $region17: #{tpu_custom_call.1} parent=11 // pred_check
          %p135 = pneg %p81
        $region18: #{tpu_custom_call.1} parent=11 // pred_check_branch
          %137 = sbr.rel (%p135) target = $region20
        $region19: #{tpu_custom_call.1} parent=11 // pred_region
          _
        $region20: #{tpu_custom_call.1} parent=11 // pred_fallthru
          _
      $region12: #{tpu_custom_call.1} parent=5 // pred_fallthru
        _
      %p138 = scmp.lt.s32.totalorder %s13, 2
      // Predicated region
      $region21: #{tpu_custom_call.1} parent=5 // pred_check
        %p139 = pneg %p138
      $region22: #{tpu_custom_call.1} parent=5 // pred_check_branch
        %141 = sbr.rel (%p139) target = $region24
      $region23: #{tpu_custom_call.1} parent=5 // pred_region
        // Predicated region
        $region25: #{tpu_custom_call.1} parent=23 // pred_check
          %p142 = pneg %p33
        $region26: #{tpu_custom_call.1} parent=23 // pred_check_branch
          %144 = sbr.rel (%p142) target = $region28
        $region27: #{tpu_custom_call.1} parent=23 // pred_region
          %s145 = smul.u32 16, %s13
          %p146 = scmp.lt.s32.totalorder %s145, 31
          %s147 = scalar_select %p146, %s145, 31
          %s148 = smul.addr %s147, 8
          %s149 = scalar_lea.vmem %s0, %s148
          %s150 = smul.u32 16, %s13
        $region28: #{tpu_custom_call.1} parent=23 // pred_fallthru
          _
      $region24: #{tpu_custom_call.1} parent=5 // pred_fallthru
        _
      %p151 = scmp.le.s32.totalorder 1, %s13
      %p152 = scmp.lt.s32.totalorder %s13, 3
      %p153 = pnand %p151, %p152
      %p154 = pneg %p153
      // Predicated region
      $region29: #{tpu_custom_call.1} parent=5 // pred_check
        _
      $region30: #{tpu_custom_call.1} parent=5 // pred_check_branch
        %156 = sbr.rel (%p153) target = $region32
      $region31: #{tpu_custom_call.1} parent=5 // pred_region
        %s157 = ssub.s32 %s13, 1
        // Predicated region
        $region33: #{tpu_custom_call.1} parent=31 // pred_check
          %p158 = pneg %p60
        $region34: #{tpu_custom_call.1} parent=31 // pred_check_branch
          %160 = sbr.rel (%p158) target = $region36
        $region35: #{tpu_custom_call.1} parent=31 // pred_region
          %161 = dma.done [#allocation3], 8192
        $region36: #{tpu_custom_call.1} parent=31 // pred_fallthru
          _
        %s162 = smul.u32 16, %s18
        %p163 = scmp.lt.s32.totalorder %s162, 31
        %s164 = scalar_select %p163, %s162, 31
        %s165 = smul.addr %s164, 8
        %s166 = scalar_lea.vmem %s0, %s165
        %p167 = pneg %p39
        %p168 = pneg %p36
        %p169 = pneg %p60
        %p170 = pneg %p57
        %p171 = pneg %p81
        %p172 = pneg %p78
        %p173 = pneg %p107
        %p174 = pneg %p104
        %s175 = sand.u32 %s94, 1
        %s176 = scalar_lea.sflag [#allocation4], %s175
        %s177 = sand.u32 %s94, 1
        %s178 = smul.addr %s177, 128
        %s179 = scalar_lea.vmem [#allocation5], %s178
        %s180 = smul.u32 16, %s18
        %p181 = scmp.lt.s32.totalorder %s180, 31
        %s182 = scalar_select %p181, %s180, 31
        %s183 = smul.addr %s182, 8
        %s184 = scalar_lea.vmem %s0, %s183
        %s185 = smul.u32 16, %s18
        %s186 = smul.u32 16, %s18
        %v188 = vld [vmem:[%s184] sm:$0xff]
        %v189 = vld [vmem:[%s184 + $0x8] sm:$0xff]
        %v190 = vld [vmem:[%s184 + $0x10] sm:$0xff]
        %v191 = vld [vmem:[%s184 + $0x18] sm:$0xff]
        %v192 = vld [vmem:[%s184 + $0x20] sm:$0xff]
        %v193 = vld [vmem:[%s184 + $0x28] sm:$0xff]
        %v194 = vld [vmem:[%s184 + $0x30] sm:$0xff]
        %v195 = vld [vmem:[%s184 + $0x38] sm:$0xff]
        %v196 = vld [vmem:[%s184 + $0x40] sm:$0xff]
        %v197 = vld [vmem:[%s184 + $0x48] sm:$0xff]
        %v198 = vld [vmem:[%s184 + $0x50] sm:$0xff]
        %v199 = vld [vmem:[%s184 + $0x58] sm:$0xff]
        %v200 = vld [vmem:[%s184 + $0x60] sm:$0xff]
        %v201 = vld [vmem:[%s184 + $0x68] sm:$0xff]
        %v202 = vld [vmem:[%s184 + $0x70] sm:$0xff]
        %v203 = vld [vmem:[%s184 + $0x78] sm:$0xff]
        %v204 = vlaneseq
        %v205 = vand.u32 %v204, 127
        %v206 = vadd.s32 %v205, 128
        %v207 = vadd.s32 %v205, 256
        %v208 = vadd.s32 %v205, 384
        %v209 = vadd.s32 %v205, 512
        %v210 = vadd.s32 %v205, 640
        %v211 = vadd.s32 %v205, 768
        %v212 = vadd.s32 %v205, 896
        %213 = vset.pattern.permute.xlu0 0
        %214 = vperm.xlu0 %213, %v188
        %v215 = vpop.permute.xlu0 %214
        %216 = vset.pattern.permute.xlu0 0
        %217 = vperm.xlu0 %216, %v189
        %v218 = vpop.permute.xlu0 %217
        %219 = vset.pattern.permute.xlu0 0
        %220 = vperm.xlu0 %219, %v190
        %v221 = vpop.permute.xlu0 %220
        %222 = vset.pattern.permute.xlu0 0
        %223 = vperm.xlu0 %222, %v191
        %v224 = vpop.permute.xlu0 %223
        %225 = vset.pattern.permute.xlu0 0
        %226 = vperm.xlu0 %225, %v192
        %v227 = vpop.permute.xlu0 %226
        %228 = vset.pattern.permute.xlu0 0
        %229 = vperm.xlu0 %228, %v193
        %v230 = vpop.permute.xlu0 %229
        %231 = vset.pattern.permute.xlu0 0
        %232 = vperm.xlu0 %231, %v194
        %v233 = vpop.permute.xlu0 %232
        %234 = vset.pattern.permute.xlu0 0
        %235 = vperm.xlu0 %234, %v195
        %v236 = vpop.permute.xlu0 %235
        %237 = vset.pattern.permute.xlu0 0
        %238 = vperm.xlu0 %237, %v196
        %v239 = vpop.permute.xlu0 %238
        %240 = vset.pattern.permute.xlu0 0
        %241 = vperm.xlu0 %240, %v197
        %v242 = vpop.permute.xlu0 %241
        %243 = vset.pattern.permute.xlu0 0
        %244 = vperm.xlu0 %243, %v198
        %v245 = vpop.permute.xlu0 %244
        %246 = vset.pattern.permute.xlu0 0
        %247 = vperm.xlu0 %246, %v199
        %v248 = vpop.permute.xlu0 %247
        %249 = vset.pattern.permute.xlu0 0
        %250 = vperm.xlu0 %249, %v200
        %v251 = vpop.permute.xlu0 %250
        %252 = vset.pattern.permute.xlu0 0
        %253 = vperm.xlu0 %252, %v201
        %v254 = vpop.permute.xlu0 %253
        %255 = vset.pattern.permute.xlu0 0
        %256 = vperm.xlu0 %255, %v202
        %v257 = vpop.permute.xlu0 %256
        %258 = vset.pattern.permute.xlu0 0
        %259 = vperm.xlu0 %258, %v203
        %v260 = vpop.permute.xlu0 %259
        %vm261 = vcmp.eq.s32.totalorder %v205, %v215
        %vm262 = vcmp.eq.s32.totalorder %v206, %v215
        %vm263 = vcmp.eq.s32.totalorder %v207, %v215
        %vm264 = vcmp.eq.s32.totalorder %v208, %v215
        %vm265 = vcmp.eq.s32.totalorder %v209, %v215
        %vm266 = vcmp.eq.s32.totalorder %v210, %v215
        %vm267 = vcmp.eq.s32.totalorder %v211, %v215
        %vm268 = vcmp.eq.s32.totalorder %v212, %v215
        %vm269 = vcmp.eq.s32.totalorder %v205, %v218
        %vm270 = vcmp.eq.s32.totalorder %v206, %v218
        %vm271 = vcmp.eq.s32.totalorder %v207, %v218
        %vm272 = vcmp.eq.s32.totalorder %v208, %v218
        %vm273 = vcmp.eq.s32.totalorder %v209, %v218
        %vm274 = vcmp.eq.s32.totalorder %v210, %v218
        %vm275 = vcmp.eq.s32.totalorder %v211, %v218
        %vm276 = vcmp.eq.s32.totalorder %v212, %v218
        %vm277 = vcmp.eq.s32.totalorder %v205, %v221
        %vm278 = vcmp.eq.s32.totalorder %v206, %v221
        %vm279 = vcmp.eq.s32.totalorder %v207, %v221
        %vm280 = vcmp.eq.s32.totalorder %v208, %v221
        %vm281 = vcmp.eq.s32.totalorder %v209, %v221
        %vm282 = vcmp.eq.s32.totalorder %v210, %v221
        %vm283 = vcmp.eq.s32.totalorder %v211, %v221
        %vm284 = vcmp.eq.s32.totalorder %v212, %v221
        %vm285 = vcmp.eq.s32.totalorder %v205, %v224
        %vm286 = vcmp.eq.s32.totalorder %v206, %v224
        %vm287 = vcmp.eq.s32.totalorder %v207, %v224
        %vm288 = vcmp.eq.s32.totalorder %v208, %v224
        %vm289 = vcmp.eq.s32.totalorder %v209, %v224
        %vm290 = vcmp.eq.s32.totalorder %v210, %v224
        %vm291 = vcmp.eq.s32.totalorder %v211, %v224
        %vm292 = vcmp.eq.s32.totalorder %v212, %v224
        %vm293 = vcmp.eq.s32.totalorder %v205, %v227
        %vm294 = vcmp.eq.s32.totalorder %v206, %v227
        %vm295 = vcmp.eq.s32.totalorder %v207, %v227
        %vm296 = vcmp.eq.s32.totalorder %v208, %v227
        %vm297 = vcmp.eq.s32.totalorder %v209, %v227
        %vm298 = vcmp.eq.s32.totalorder %v210, %v227
        %vm299 = vcmp.eq.s32.totalorder %v211, %v227
        %vm300 = vcmp.eq.s32.totalorder %v212, %v227
        %vm301 = vcmp.eq.s32.totalorder %v205, %v230
        %vm302 = vcmp.eq.s32.totalorder %v206, %v230
        %vm303 = vcmp.eq.s32.totalorder %v207, %v230
        %vm304 = vcmp.eq.s32.totalorder %v208, %v230
        %vm305 = vcmp.eq.s32.totalorder %v209, %v230
        %vm306 = vcmp.eq.s32.totalorder %v210, %v230
        %vm307 = vcmp.eq.s32.totalorder %v211, %v230
        %vm308 = vcmp.eq.s32.totalorder %v212, %v230
        %vm309 = vcmp.eq.s32.totalorder %v205, %v233
        %vm310 = vcmp.eq.s32.totalorder %v206, %v233
        %vm311 = vcmp.eq.s32.totalorder %v207, %v233
        %vm312 = vcmp.eq.s32.totalorder %v208, %v233
        %vm313 = vcmp.eq.s32.totalorder %v209, %v233
        %vm314 = vcmp.eq.s32.totalorder %v210, %v233
        %vm315 = vcmp.eq.s32.totalorder %v211, %v233
        %vm316 = vcmp.eq.s32.totalorder %v212, %v233
        %vm317 = vcmp.eq.s32.totalorder %v205, %v236
        %vm318 = vcmp.eq.s32.totalorder %v206, %v236
        %vm319 = vcmp.eq.s32.totalorder %v207, %v236
        %vm320 = vcmp.eq.s32.totalorder %v208, %v236
        %vm321 = vcmp.eq.s32.totalorder %v209, %v236
        %vm322 = vcmp.eq.s32.totalorder %v210, %v236
        %vm323 = vcmp.eq.s32.totalorder %v211, %v236
        %vm324 = vcmp.eq.s32.totalorder %v212, %v236
        %vm325 = vcmp.eq.s32.totalorder %v205, %v239
        %vm326 = vcmp.eq.s32.totalorder %v206, %v239
        %vm327 = vcmp.eq.s32.totalorder %v207, %v239
        %vm328 = vcmp.eq.s32.totalorder %v208, %v239
        %vm329 = vcmp.eq.s32.totalorder %v209, %v239
        %vm330 = vcmp.eq.s32.totalorder %v210, %v239
        %vm331 = vcmp.eq.s32.totalorder %v211, %v239
        %vm332 = vcmp.eq.s32.totalorder %v212, %v239
        %vm333 = vcmp.eq.s32.totalorder %v205, %v242
        %vm334 = vcmp.eq.s32.totalorder %v206, %v242
        %vm335 = vcmp.eq.s32.totalorder %v207, %v242
        %vm336 = vcmp.eq.s32.totalorder %v208, %v242
        %vm337 = vcmp.eq.s32.totalorder %v209, %v242
        %vm338 = vcmp.eq.s32.totalorder %v210, %v242
        %vm339 = vcmp.eq.s32.totalorder %v211, %v242
        %vm340 = vcmp.eq.s32.totalorder %v212, %v242
        %vm341 = vcmp.eq.s32.totalorder %v205, %v245
        %vm342 = vcmp.eq.s32.totalorder %v206, %v245
        %vm343 = vcmp.eq.s32.totalorder %v207, %v245
        %vm344 = vcmp.eq.s32.totalorder %v208, %v245
        %vm345 = vcmp.eq.s32.totalorder %v209, %v245
        %vm346 = vcmp.eq.s32.totalorder %v210, %v245
        %vm347 = vcmp.eq.s32.totalorder %v211, %v245
        %vm348 = vcmp.eq.s32.totalorder %v212, %v245
        %vm349 = vcmp.eq.s32.totalorder %v205, %v248
        %vm350 = vcmp.eq.s32.totalorder %v206, %v248
        %vm351 = vcmp.eq.s32.totalorder %v207, %v248
        %vm352 = vcmp.eq.s32.totalorder %v208, %v248
        %vm353 = vcmp.eq.s32.totalorder %v209, %v248
        %vm354 = vcmp.eq.s32.totalorder %v210, %v248
        %vm355 = vcmp.eq.s32.totalorder %v211, %v248
        %vm356 = vcmp.eq.s32.totalorder %v212, %v248
        %vm357 = vcmp.eq.s32.totalorder %v205, %v251
        %vm358 = vcmp.eq.s32.totalorder %v206, %v251
        %vm359 = vcmp.eq.s32.totalorder %v207, %v251
        %vm360 = vcmp.eq.s32.totalorder %v208, %v251
        %vm361 = vcmp.eq.s32.totalorder %v209, %v251
        %vm362 = vcmp.eq.s32.totalorder %v210, %v251
        %vm363 = vcmp.eq.s32.totalorder %v211, %v251
        %vm364 = vcmp.eq.s32.totalorder %v212, %v251
        %vm365 = vcmp.eq.s32.totalorder %v205, %v254
        %vm366 = vcmp.eq.s32.totalorder %v206, %v254
        %vm367 = vcmp.eq.s32.totalorder %v207, %v254
        %vm368 = vcmp.eq.s32.totalorder %v208, %v254
        %vm369 = vcmp.eq.s32.totalorder %v209, %v254
        %vm370 = vcmp.eq.s32.totalorder %v210, %v254
        %vm371 = vcmp.eq.s32.totalorder %v211, %v254
        %vm372 = vcmp.eq.s32.totalorder %v212, %v254
        %vm373 = vcmp.eq.s32.totalorder %v205, %v257
        %vm374 = vcmp.eq.s32.totalorder %v206, %v257
        %vm375 = vcmp.eq.s32.totalorder %v207, %v257
        %vm376 = vcmp.eq.s32.totalorder %v208, %v257
        %vm377 = vcmp.eq.s32.totalorder %v209, %v257
        %vm378 = vcmp.eq.s32.totalorder %v210, %v257
        %vm379 = vcmp.eq.s32.totalorder %v211, %v257
        %vm380 = vcmp.eq.s32.totalorder %v212, %v257
        %vm381 = vcmp.eq.s32.totalorder %v205, %v260
        %vm382 = vcmp.eq.s32.totalorder %v206, %v260
        %vm383 = vcmp.eq.s32.totalorder %v207, %v260
        %vm384 = vcmp.eq.s32.totalorder %v208, %v260
        %vm385 = vcmp.eq.s32.totalorder %v209, %v260
        %vm386 = vcmp.eq.s32.totalorder %v210, %v260
        %vm387 = vcmp.eq.s32.totalorder %v211, %v260
        %vm388 = vcmp.eq.s32.totalorder %v212, %v260
        %v389 = vsel %vm261, 1, 0
        %v390 = vsel %vm262, 1, 0
        %v391 = vsel %vm263, 1, 0
        %v392 = vsel %vm264, 1, 0
        %v393 = vsel %vm265, 1, 0
        %v394 = vsel %vm266, 1, 0
        %v395 = vsel %vm267, 1, 0
        %v396 = vsel %vm268, 1, 0
        %v397 = vsel %vm269, 1, 0
        %v398 = vsel %vm270, 1, 0
        %v399 = vsel %vm271, 1, 0
        %v400 = vsel %vm272, 1, 0
        %v401 = vsel %vm273, 1, 0
        %v402 = vsel %vm274, 1, 0
        %v403 = vsel %vm275, 1, 0
        %v404 = vsel %vm276, 1, 0
        %v405 = vsel %vm277, 1, 0
        %v406 = vsel %vm278, 1, 0
        %v407 = vsel %vm279, 1, 0
        %v408 = vsel %vm280, 1, 0
        %v409 = vsel %vm281, 1, 0
        %v410 = vsel %vm282, 1, 0
        %v411 = vsel %vm283, 1, 0
        %v412 = vsel %vm284, 1, 0
        %v413 = vsel %vm285, 1, 0
        %v414 = vsel %vm286, 1, 0
        %v415 = vsel %vm287, 1, 0
        %v416 = vsel %vm288, 1, 0
        %v417 = vsel %vm289, 1, 0
        %v418 = vsel %vm290, 1, 0
        %v419 = vsel %vm291, 1, 0
        %v420 = vsel %vm292, 1, 0
        %v421 = vsel %vm293, 1, 0
        %v422 = vsel %vm294, 1, 0
        %v423 = vsel %vm295, 1, 0
        %v424 = vsel %vm296, 1, 0
        %v425 = vsel %vm297, 1, 0
        %v426 = vsel %vm298, 1, 0
        %v427 = vsel %vm299, 1, 0
        %v428 = vsel %vm300, 1, 0
        %v429 = vsel %vm301, 1, 0
        %v430 = vsel %vm302, 1, 0
        %v431 = vsel %vm303, 1, 0
        %v432 = vsel %vm304, 1, 0
        %v433 = vsel %vm305, 1, 0
        %v434 = vsel %vm306, 1, 0
        %v435 = vsel %vm307, 1, 0
        %v436 = vsel %vm308, 1, 0
        %v437 = vsel %vm309, 1, 0
        %v438 = vsel %vm310, 1, 0
        %v439 = vsel %vm311, 1, 0
        %v440 = vsel %vm312, 1, 0
        %v441 = vsel %vm313, 1, 0
        %v442 = vsel %vm314, 1, 0
        %v443 = vsel %vm315, 1, 0
        %v444 = vsel %vm316, 1, 0
        %v445 = vsel %vm317, 1, 0
        %v446 = vsel %vm318, 1, 0
        %v447 = vsel %vm319, 1, 0
        %v448 = vsel %vm320, 1, 0
        %v449 = vsel %vm321, 1, 0
        %v450 = vsel %vm322, 1, 0
        %v451 = vsel %vm323, 1, 0
        %v452 = vsel %vm324, 1, 0
        %v453 = vsel %vm325, 1, 0
        %v454 = vsel %vm326, 1, 0
        %v455 = vsel %vm327, 1, 0
        %v456 = vsel %vm328, 1, 0
        %v457 = vsel %vm329, 1, 0
        %v458 = vsel %vm330, 1, 0
        %v459 = vsel %vm331, 1, 0
        %v460 = vsel %vm332, 1, 0
        %v461 = vsel %vm333, 1, 0
        %v462 = vsel %vm334, 1, 0
        %v463 = vsel %vm335, 1, 0
        %v464 = vsel %vm336, 1, 0
        %v465 = vsel %vm337, 1, 0
        %v466 = vsel %vm338, 1, 0
        %v467 = vsel %vm339, 1, 0
        %v468 = vsel %vm340, 1, 0
        %v469 = vsel %vm341, 1, 0
        %v470 = vsel %vm342, 1, 0
        %v471 = vsel %vm343, 1, 0
        %v472 = vsel %vm344, 1, 0
        %v473 = vsel %vm345, 1, 0
        %v474 = vsel %vm346, 1, 0
        %v475 = vsel %vm347, 1, 0
        %v476 = vsel %vm348, 1, 0
        %v477 = vsel %vm349, 1, 0
        %v478 = vsel %vm350, 1, 0
        %v479 = vsel %vm351, 1, 0
        %v480 = vsel %vm352, 1, 0
        %v481 = vsel %vm353, 1, 0
        %v482 = vsel %vm354, 1, 0
        %v483 = vsel %vm355, 1, 0
        %v484 = vsel %vm356, 1, 0
        %v485 = vsel %vm357, 1, 0
        %v486 = vsel %vm358, 1, 0
        %v487 = vsel %vm359, 1, 0
        %v488 = vsel %vm360, 1, 0
        %v489 = vsel %vm361, 1, 0
        %v490 = vsel %vm362, 1, 0
        %v491 = vsel %vm363, 1, 0
        %v492 = vsel %vm364, 1, 0
        %v493 = vsel %vm365, 1, 0
        %v494 = vsel %vm366, 1, 0
        %v495 = vsel %vm367, 1, 0
        %v496 = vsel %vm368, 1, 0
        %v497 = vsel %vm369, 1, 0
        %v498 = vsel %vm370, 1, 0
        %v499 = vsel %vm371, 1, 0
        %v500 = vsel %vm372, 1, 0
        %v501 = vsel %vm373, 1, 0
        %v502 = vsel %vm374, 1, 0
        %v503 = vsel %vm375, 1, 0
        %v504 = vsel %vm376, 1, 0
        %v505 = vsel %vm377, 1, 0
        %v506 = vsel %vm378, 1, 0
        %v507 = vsel %vm379, 1, 0
        %v508 = vsel %vm380, 1, 0
        %v509 = vsel %vm381, 1, 0
        %v510 = vsel %vm382, 1, 0
        %v511 = vsel %vm383, 1, 0
        %v512 = vsel %vm384, 1, 0
        %v513 = vsel %vm385, 1, 0
        %v514 = vsel %vm386, 1, 0
        %v515 = vsel %vm387, 1, 0
        %v516 = vsel %vm388, 1, 0
        %v517 = vcvt.s32.f32 %v389
        %v518 = vcvt.s32.f32 %v390
        %v519 = vcvt.s32.f32 %v391
        %v520 = vcvt.s32.f32 %v392
        %v521 = vcvt.s32.f32 %v393
        %v522 = vcvt.s32.f32 %v394
        %v523 = vcvt.s32.f32 %v395
        %v524 = vcvt.s32.f32 %v396
        %v525 = vcvt.s32.f32 %v397
        %v526 = vcvt.s32.f32 %v398
        %v527 = vcvt.s32.f32 %v399
        %v528 = vcvt.s32.f32 %v400
        %v529 = vcvt.s32.f32 %v401
        %v530 = vcvt.s32.f32 %v402
        %v531 = vcvt.s32.f32 %v403
        %v532 = vcvt.s32.f32 %v404
        %v533 = vcvt.s32.f32 %v405
        %v534 = vcvt.s32.f32 %v406
        %v535 = vcvt.s32.f32 %v407
        %v536 = vcvt.s32.f32 %v408
        %v537 = vcvt.s32.f32 %v409
        %v538 = vcvt.s32.f32 %v410
        %v539 = vcvt.s32.f32 %v411
        %v540 = vcvt.s32.f32 %v412
        %v541 = vcvt.s32.f32 %v413
        %v542 = vcvt.s32.f32 %v414
        %v543 = vcvt.s32.f32 %v415
        %v544 = vcvt.s32.f32 %v416
        %v545 = vcvt.s32.f32 %v417
        %v546 = vcvt.s32.f32 %v418
        %v547 = vcvt.s32.f32 %v419
        %v548 = vcvt.s32.f32 %v420
        %v549 = vcvt.s32.f32 %v421
        %v550 = vcvt.s32.f32 %v422
        %v551 = vcvt.s32.f32 %v423
        %v552 = vcvt.s32.f32 %v424
        %v553 = vcvt.s32.f32 %v425
        %v554 = vcvt.s32.f32 %v426
        %v555 = vcvt.s32.f32 %v427
        %v556 = vcvt.s32.f32 %v428
        %v557 = vcvt.s32.f32 %v429
        %v558 = vcvt.s32.f32 %v430
        %v559 = vcvt.s32.f32 %v431
        %v560 = vcvt.s32.f32 %v432
        %v561 = vcvt.s32.f32 %v433
        %v562 = vcvt.s32.f32 %v434
        %v563 = vcvt.s32.f32 %v435
        %v564 = vcvt.s32.f32 %v436
        %v565 = vcvt.s32.f32 %v437
        %v566 = vcvt.s32.f32 %v438
        %v567 = vcvt.s32.f32 %v439
        %v568 = vcvt.s32.f32 %v440
        %v569 = vcvt.s32.f32 %v441
        %v570 = vcvt.s32.f32 %v442
        %v571 = vcvt.s32.f32 %v443
        %v572 = vcvt.s32.f32 %v444
        %v573 = vcvt.s32.f32 %v445
        %v574 = vcvt.s32.f32 %v446
        %v575 = vcvt.s32.f32 %v447
        %v576 = vcvt.s32.f32 %v448
        %v577 = vcvt.s32.f32 %v449
        %v578 = vcvt.s32.f32 %v450
        %v579 = vcvt.s32.f32 %v451
        %v580 = vcvt.s32.f32 %v452
        %v581 = vcvt.s32.f32 %v453
        %v582 = vcvt.s32.f32 %v454
        %v583 = vcvt.s32.f32 %v455
        %v584 = vcvt.s32.f32 %v456
        %v585 = vcvt.s32.f32 %v457
        %v586 = vcvt.s32.f32 %v458
        %v587 = vcvt.s32.f32 %v459
        %v588 = vcvt.s32.f32 %v460
        %v589 = vcvt.s32.f32 %v461
        %v590 = vcvt.s32.f32 %v462
        %v591 = vcvt.s32.f32 %v463
        %v592 = vcvt.s32.f32 %v464
        %v593 = vcvt.s32.f32 %v465
        %v594 = vcvt.s32.f32 %v466
        %v595 = vcvt.s32.f32 %v467
        %v596 = vcvt.s32.f32 %v468
        %v597 = vcvt.s32.f32 %v469
        %v598 = vcvt.s32.f32 %v470
        %v599 = vcvt.s32.f32 %v471
        %v600 = vcvt.s32.f32 %v472
        %v601 = vcvt.s32.f32 %v473
        %v602 = vcvt.s32.f32 %v474
        %v603 = vcvt.s32.f32 %v475
        %v604 = vcvt.s32.f32 %v476
        %v605 = vcvt.s32.f32 %v477
        %v606 = vcvt.s32.f32 %v478
        %v607 = vcvt.s32.f32 %v479
        %v608 = vcvt.s32.f32 %v480
        %v609 = vcvt.s32.f32 %v481
        %v610 = vcvt.s32.f32 %v482
        %v611 = vcvt.s32.f32 %v483
        %v612 = vcvt.s32.f32 %v484
        %v613 = vcvt.s32.f32 %v485
        %v614 = vcvt.s32.f32 %v486
        %v615 = vcvt.s32.f32 %v487
        %v616 = vcvt.s32.f32 %v488
        %v617 = vcvt.s32.f32 %v489
        %v618 = vcvt.s32.f32 %v490
        %v619 = vcvt.s32.f32 %v491
        %v620 = vcvt.s32.f32 %v492
        %v621 = vcvt.s32.f32 %v493
        %v622 = vcvt.s32.f32 %v494
        %v623 = vcvt.s32.f32 %v495
        %v624 = vcvt.s32.f32 %v496
        %v625 = vcvt.s32.f32 %v497
        %v626 = vcvt.s32.f32 %v498
        %v627 = vcvt.s32.f32 %v499
        %v628 = vcvt.s32.f32 %v500
        %v629 = vcvt.s32.f32 %v501
        %v630 = vcvt.s32.f32 %v502
        %v631 = vcvt.s32.f32 %v503
        %v632 = vcvt.s32.f32 %v504
        %v633 = vcvt.s32.f32 %v505
        %v634 = vcvt.s32.f32 %v506
        %v635 = vcvt.s32.f32 %v507
        %v636 = vcvt.s32.f32 %v508
        %v637 = vcvt.s32.f32 %v509
        %v638 = vcvt.s32.f32 %v510
        %v639 = vcvt.s32.f32 %v511
        %v640 = vcvt.s32.f32 %v512
        %v641 = vcvt.s32.f32 %v513
        %v642 = vcvt.s32.f32 %v514
        %v643 = vcvt.s32.f32 %v515
        %v644 = vcvt.s32.f32 %v516
        %v645 = vadd.f32 %v517, 0.0
        %v646 = vadd.f32 %v518, 0.0
        %v647 = vadd.f32 %v519, 0.0
        %v648 = vadd.f32 %v520, 0.0
        %v649 = vadd.f32 %v521, 0.0
        %v650 = vadd.f32 %v522, 0.0
        %v651 = vadd.f32 %v523, 0.0
        %v652 = vadd.f32 %v524, 0.0
        %v653 = vadd.f32 %v525, 0.0
        %v654 = vadd.f32 %v526, 0.0
        %v655 = vadd.f32 %v527, 0.0
        %v656 = vadd.f32 %v528, 0.0
        %v657 = vadd.f32 %v529, 0.0
        %v658 = vadd.f32 %v530, 0.0
        %v659 = vadd.f32 %v531, 0.0
        %v660 = vadd.f32 %v532, 0.0
        %v661 = vadd.f32 %v533, 0.0
        %v662 = vadd.f32 %v534, 0.0
        %v663 = vadd.f32 %v535, 0.0
        %v664 = vadd.f32 %v536, 0.0
        %v665 = vadd.f32 %v537, 0.0
        %v666 = vadd.f32 %v538, 0.0
        %v667 = vadd.f32 %v539, 0.0
        %v668 = vadd.f32 %v540, 0.0
        %v669 = vadd.f32 %v541, 0.0
        %v670 = vadd.f32 %v542, 0.0
        %v671 = vadd.f32 %v543, 0.0
        %v672 = vadd.f32 %v544, 0.0
        %v673 = vadd.f32 %v545, 0.0
        %v674 = vadd.f32 %v546, 0.0
        %v675 = vadd.f32 %v547, 0.0
        %v676 = vadd.f32 %v548, 0.0
        %v677 = vadd.f32 %v549, 0.0
        %v678 = vadd.f32 %v550, 0.0
        %v679 = vadd.f32 %v551, 0.0
        %v680 = vadd.f32 %v552, 0.0
        %v681 = vadd.f32 %v553, 0.0
        %v682 = vadd.f32 %v554, 0.0
        %v683 = vadd.f32 %v555, 0.0
        %v684 = vadd.f32 %v556, 0.0
        %v685 = vadd.f32 %v557, 0.0
        %v686 = vadd.f32 %v558, 0.0
        %v687 = vadd.f32 %v559, 0.0
        %v688 = vadd.f32 %v560, 0.0
        %v689 = vadd.f32 %v561, 0.0
        %v690 = vadd.f32 %v562, 0.0
        %v691 = vadd.f32 %v563, 0.0
        %v692 = vadd.f32 %v564, 0.0
        %v693 = vadd.f32 %v565, 0.0
        %v694 = vadd.f32 %v566, 0.0
        %v695 = vadd.f32 %v567, 0.0
        %v696 = vadd.f32 %v568, 0.0
        %v697 = vadd.f32 %v569, 0.0
        %v698 = vadd.f32 %v570, 0.0
        %v699 = vadd.f32 %v571, 0.0
        %v700 = vadd.f32 %v572, 0.0
        %v701 = vadd.f32 %v573, 0.0
        %v702 = vadd.f32 %v574, 0.0
        %v703 = vadd.f32 %v575, 0.0
        %v704 = vadd.f32 %v576, 0.0
        %v705 = vadd.f32 %v577, 0.0
        %v706 = vadd.f32 %v578, 0.0
        %v707 = vadd.f32 %v579, 0.0
        %v708 = vadd.f32 %v580, 0.0
        %v709 = vadd.f32 %v581, 0.0
        %v710 = vadd.f32 %v582, 0.0
        %v711 = vadd.f32 %v583, 0.0
        %v712 = vadd.f32 %v584, 0.0
        %v713 = vadd.f32 %v585, 0.0
        %v714 = vadd.f32 %v586, 0.0
        %v715 = vadd.f32 %v587, 0.0
        %v716 = vadd.f32 %v588, 0.0
        %v717 = vadd.f32 %v589, 0.0
        %v718 = vadd.f32 %v590, 0.0
        %v719 = vadd.f32 %v591, 0.0
        %v720 = vadd.f32 %v592, 0.0
        %v721 = vadd.f32 %v593, 0.0
        %v722 = vadd.f32 %v594, 0.0
        %v723 = vadd.f32 %v595, 0.0
        %v724 = vadd.f32 %v596, 0.0
        %v725 = vadd.f32 %v597, 0.0
        %v726 = vadd.f32 %v598, 0.0
        %v727 = vadd.f32 %v599, 0.0
        %v728 = vadd.f32 %v600, 0.0
        %v729 = vadd.f32 %v601, 0.0
        %v730 = vadd.f32 %v602, 0.0
        %v731 = vadd.f32 %v603, 0.0
        %v732 = vadd.f32 %v604, 0.0
        %v733 = vadd.f32 %v605, 0.0
        %v734 = vadd.f32 %v606, 0.0
        %v735 = vadd.f32 %v607, 0.0
        %v736 = vadd.f32 %v608, 0.0
        %v737 = vadd.f32 %v609, 0.0
        %v738 = vadd.f32 %v610, 0.0
        %v739 = vadd.f32 %v611, 0.0
        %v740 = vadd.f32 %v612, 0.0
        %v741 = vadd.f32 %v613, 0.0
        %v742 = vadd.f32 %v614, 0.0
        %v743 = vadd.f32 %v615, 0.0
        %v744 = vadd.f32 %v616, 0.0
        %v745 = vadd.f32 %v617, 0.0
        %v746 = vadd.f32 %v618, 0.0
        %v747 = vadd.f32 %v619, 0.0
        %v748 = vadd.f32 %v620, 0.0
        %v749 = vadd.f32 %v621, 0.0
        %v750 = vadd.f32 %v622, 0.0
        %v751 = vadd.f32 %v623, 0.0
        %v752 = vadd.f32 %v624, 0.0
        %v753 = vadd.f32 %v625, 0.0
        %v754 = vadd.f32 %v626, 0.0
        %v755 = vadd.f32 %v627, 0.0
        %v756 = vadd.f32 %v628, 0.0
        %v757 = vadd.f32 %v629, 0.0
        %v758 = vadd.f32 %v630, 0.0
        %v759 = vadd.f32 %v631, 0.0
        %v760 = vadd.f32 %v632, 0.0
        %v761 = vadd.f32 %v633, 0.0
        %v762 = vadd.f32 %v634, 0.0
        %v763 = vadd.f32 %v635, 0.0
        %v764 = vadd.f32 %v636, 0.0
        %v765 = vadd.f32 %v637, 0.0
        %v766 = vadd.f32 %v638, 0.0
        %v767 = vadd.f32 %v639, 0.0
        %v768 = vadd.f32 %v640, 0.0
        %v769 = vadd.f32 %v641, 0.0
        %v770 = vadd.f32 %v642, 0.0
        %v771 = vadd.f32 %v643, 0.0
        %v772 = vadd.f32 %v644, 0.0
        %v773 = vadd.s32 %v188, 64
        %v774 = vadd.s32 %v189, 64
        %v775 = vadd.s32 %v190, 64
        %v776 = vadd.s32 %v191, 64
        %v777 = vadd.s32 %v192, 64
        %v778 = vadd.s32 %v193, 64
        %v779 = vadd.s32 %v194, 64
        %v780 = vadd.s32 %v195, 64
        %v781 = vadd.s32 %v196, 64
        %v782 = vadd.s32 %v197, 64
        %v783 = vadd.s32 %v198, 64
        %v784 = vadd.s32 %v199, 64
        %v785 = vadd.s32 %v200, 64
        %v786 = vadd.s32 %v201, 64
        %v787 = vadd.s32 %v202, 64
        %v788 = vadd.s32 %v203, 64
        %789 = vset.pattern.permute.xlu0 1
        %790 = vperm.xlu0 %789, %v773
        %v791 = vpop.permute.xlu0 %790
        %792 = vset.pattern.permute.xlu0 1
        %793 = vperm.xlu0 %792, %v774
        %v794 = vpop.permute.xlu0 %793
        %795 = vset.pattern.permute.xlu0 1
        %796 = vperm.xlu0 %795, %v775
        %v797 = vpop.permute.xlu0 %796
        %798 = vset.pattern.permute.xlu0 1
        %799 = vperm.xlu0 %798, %v776
        %v800 = vpop.permute.xlu0 %799
        %801 = vset.pattern.permute.xlu0 1
        %802 = vperm.xlu0 %801, %v777
        %v803 = vpop.permute.xlu0 %802
        %804 = vset.pattern.permute.xlu0 1
        %805 = vperm.xlu0 %804, %v778
        %v806 = vpop.permute.xlu0 %805
        %807 = vset.pattern.permute.xlu0 1
        %808 = vperm.xlu0 %807, %v779
        %v809 = vpop.permute.xlu0 %808
        %810 = vset.pattern.permute.xlu0 1
        %811 = vperm.xlu0 %810, %v780
        %v812 = vpop.permute.xlu0 %811
        %813 = vset.pattern.permute.xlu0 1
        %814 = vperm.xlu0 %813, %v781
        %v815 = vpop.permute.xlu0 %814
        %816 = vset.pattern.permute.xlu0 1
        %817 = vperm.xlu0 %816, %v782
        %v818 = vpop.permute.xlu0 %817
        %819 = vset.pattern.permute.xlu0 1
        %820 = vperm.xlu0 %819, %v783
        %v821 = vpop.permute.xlu0 %820
        %822 = vset.pattern.permute.xlu0 1
        %823 = vperm.xlu0 %822, %v784
        %v824 = vpop.permute.xlu0 %823
        %825 = vset.pattern.permute.xlu0 1
        %826 = vperm.xlu0 %825, %v785
        %v827 = vpop.permute.xlu0 %826
        %828 = vset.pattern.permute.xlu0 1
        %829 = vperm.xlu0 %828, %v786
        %v830 = vpop.permute.xlu0 %829
        %831 = vset.pattern.permute.xlu0 1
        %832 = vperm.xlu0 %831, %v787
        %v833 = vpop.permute.xlu0 %832
        %834 = vset.pattern.permute.xlu0 1
        %835 = vperm.xlu0 %834, %v788
        %v836 = vpop.permute.xlu0 %835
        %vm837 = vcmp.eq.s32.totalorder %v205, %v791
        %vm838 = vcmp.eq.s32.totalorder %v206, %v791
        %vm839 = vcmp.eq.s32.totalorder %v207, %v791
        %vm840 = vcmp.eq.s32.totalorder %v208, %v791
        %vm841 = vcmp.eq.s32.totalorder %v209, %v791
        %vm842 = vcmp.eq.s32.totalorder %v210, %v791
        %vm843 = vcmp.eq.s32.totalorder %v211, %v791
        %vm844 = vcmp.eq.s32.totalorder %v212, %v791
        %vm845 = vcmp.eq.s32.totalorder %v205, %v794
        %vm846 = vcmp.eq.s32.totalorder %v206, %v794
        %vm847 = vcmp.eq.s32.totalorder %v207, %v794
        %vm848 = vcmp.eq.s32.totalorder %v208, %v794
        %vm849 = vcmp.eq.s32.totalorder %v209, %v794
        %vm850 = vcmp.eq.s32.totalorder %v210, %v794
        %vm851 = vcmp.eq.s32.totalorder %v211, %v794
        %vm852 = vcmp.eq.s32.totalorder %v212, %v794
        %vm853 = vcmp.eq.s32.totalorder %v205, %v797
        %vm854 = vcmp.eq.s32.totalorder %v206, %v797
        %vm855 = vcmp.eq.s32.totalorder %v207, %v797
        %vm856 = vcmp.eq.s32.totalorder %v208, %v797
        %vm857 = vcmp.eq.s32.totalorder %v209, %v797
        %vm858 = vcmp.eq.s32.totalorder %v210, %v797
        %vm859 = vcmp.eq.s32.totalorder %v211, %v797
        %vm860 = vcmp.eq.s32.totalorder %v212, %v797
        %vm861 = vcmp.eq.s32.totalorder %v205, %v800
        %vm862 = vcmp.eq.s32.totalorder %v206, %v800
        %vm863 = vcmp.eq.s32.totalorder %v207, %v800
        %vm864 = vcmp.eq.s32.totalorder %v208, %v800
        %vm865 = vcmp.eq.s32.totalorder %v209, %v800
        %vm866 = vcmp.eq.s32.totalorder %v210, %v800
        %vm867 = vcmp.eq.s32.totalorder %v211, %v800
        %vm868 = vcmp.eq.s32.totalorder %v212, %v800
        %vm869 = vcmp.eq.s32.totalorder %v205, %v803
        %vm870 = vcmp.eq.s32.totalorder %v206, %v803
        %vm871 = vcmp.eq.s32.totalorder %v207, %v803
        %vm872 = vcmp.eq.s32.totalorder %v208, %v803
        %vm873 = vcmp.eq.s32.totalorder %v209, %v803
        %vm874 = vcmp.eq.s32.totalorder %v210, %v803
        %vm875 = vcmp.eq.s32.totalorder %v211, %v803
        %vm876 = vcmp.eq.s32.totalorder %v212, %v803
        %vm877 = vcmp.eq.s32.totalorder %v205, %v806
        %vm878 = vcmp.eq.s32.totalorder %v206, %v806
        %vm879 = vcmp.eq.s32.totalorder %v207, %v806
        %vm880 = vcmp.eq.s32.totalorder %v208, %v806
        %vm881 = vcmp.eq.s32.totalorder %v209, %v806
        %vm882 = vcmp.eq.s32.totalorder %v210, %v806
        %vm883 = vcmp.eq.s32.totalorder %v211, %v806
        %vm884 = vcmp.eq.s32.totalorder %v212, %v806
        %vm885 = vcmp.eq.s32.totalorder %v205, %v809
        %vm886 = vcmp.eq.s32.totalorder %v206, %v809
        %vm887 = vcmp.eq.s32.totalorder %v207, %v809
        %vm888 = vcmp.eq.s32.totalorder %v208, %v809
        %vm889 = vcmp.eq.s32.totalorder %v209, %v809
        %vm890 = vcmp.eq.s32.totalorder %v210, %v809
        %vm891 = vcmp.eq.s32.totalorder %v211, %v809
        %vm892 = vcmp.eq.s32.totalorder %v212, %v809
        %vm893 = vcmp.eq.s32.totalorder %v205, %v812
        %vm894 = vcmp.eq.s32.totalorder %v206, %v812
        %vm895 = vcmp.eq.s32.totalorder %v207, %v812
        %vm896 = vcmp.eq.s32.totalorder %v208, %v812
        %vm897 = vcmp.eq.s32.totalorder %v209, %v812
        %vm898 = vcmp.eq.s32.totalorder %v210, %v812
        %vm899 = vcmp.eq.s32.totalorder %v211, %v812
        %vm900 = vcmp.eq.s32.totalorder %v212, %v812
        %vm901 = vcmp.eq.s32.totalorder %v205, %v815
        %vm902 = vcmp.eq.s32.totalorder %v206, %v815
        %vm903 = vcmp.eq.s32.totalorder %v207, %v815
        %vm904 = vcmp.eq.s32.totalorder %v208, %v815
        %vm905 = vcmp.eq.s32.totalorder %v209, %v815
        %vm906 = vcmp.eq.s32.totalorder %v210, %v815
        %vm907 = vcmp.eq.s32.totalorder %v211, %v815
        %vm908 = vcmp.eq.s32.totalorder %v212, %v815
        %vm909 = vcmp.eq.s32.totalorder %v205, %v818
        %vm910 = vcmp.eq.s32.totalorder %v206, %v818
        %vm911 = vcmp.eq.s32.totalorder %v207, %v818
        %vm912 = vcmp.eq.s32.totalorder %v208, %v818
        %vm913 = vcmp.eq.s32.totalorder %v209, %v818
        %vm914 = vcmp.eq.s32.totalorder %v210, %v818
        %vm915 = vcmp.eq.s32.totalorder %v211, %v818
        %vm916 = vcmp.eq.s32.totalorder %v212, %v818
        %vm917 = vcmp.eq.s32.totalorder %v205, %v821
        %vm918 = vcmp.eq.s32.totalorder %v206, %v821
        %vm919 = vcmp.eq.s32.totalorder %v207, %v821
        %vm920 = vcmp.eq.s32.totalorder %v208, %v821
        %vm921 = vcmp.eq.s32.totalorder %v209, %v821
        %vm922 = vcmp.eq.s32.totalorder %v210, %v821
        %vm923 = vcmp.eq.s32.totalorder %v211, %v821
        %vm924 = vcmp.eq.s32.totalorder %v212, %v821
        %vm925 = vcmp.eq.s32.totalorder %v205, %v824
        %vm926 = vcmp.eq.s32.totalorder %v206, %v824
        %vm927 = vcmp.eq.s32.totalorder %v207, %v824
        %vm928 = vcmp.eq.s32.totalorder %v208, %v824
        %vm929 = vcmp.eq.s32.totalorder %v209, %v824
        %vm930 = vcmp.eq.s32.totalorder %v210, %v824
        %vm931 = vcmp.eq.s32.totalorder %v211, %v824
        %vm932 = vcmp.eq.s32.totalorder %v212, %v824
        %vm933 = vcmp.eq.s32.totalorder %v205, %v827
        %vm934 = vcmp.eq.s32.totalorder %v206, %v827
        %vm935 = vcmp.eq.s32.totalorder %v207, %v827
        %vm936 = vcmp.eq.s32.totalorder %v208, %v827
        %vm937 = vcmp.eq.s32.totalorder %v209, %v827
        %vm938 = vcmp.eq.s32.totalorder %v210, %v827
        %vm939 = vcmp.eq.s32.totalorder %v211, %v827
        %vm940 = vcmp.eq.s32.totalorder %v212, %v827
        %vm941 = vcmp.eq.s32.totalorder %v205, %v830
        %vm942 = vcmp.eq.s32.totalorder %v206, %v830
        %vm943 = vcmp.eq.s32.totalorder %v207, %v830
        %vm944 = vcmp.eq.s32.totalorder %v208, %v830
        %vm945 = vcmp.eq.s32.totalorder %v209, %v830
        %vm946 = vcmp.eq.s32.totalorder %v210, %v830
        %vm947 = vcmp.eq.s32.totalorder %v211, %v830
        %vm948 = vcmp.eq.s32.totalorder %v212, %v830
        %vm949 = vcmp.eq.s32.totalorder %v205, %v833
        %vm950 = vcmp.eq.s32.totalorder %v206, %v833
        %vm951 = vcmp.eq.s32.totalorder %v207, %v833
        %vm952 = vcmp.eq.s32.totalorder %v208, %v833
        %vm953 = vcmp.eq.s32.totalorder %v209, %v833
        %vm954 = vcmp.eq.s32.totalorder %v210, %v833
        %vm955 = vcmp.eq.s32.totalorder %v211, %v833
        %vm956 = vcmp.eq.s32.totalorder %v212, %v833
        %vm957 = vcmp.eq.s32.totalorder %v205, %v836
        %vm958 = vcmp.eq.s32.totalorder %v206, %v836
        %vm959 = vcmp.eq.s32.totalorder %v207, %v836
        %vm960 = vcmp.eq.s32.totalorder %v208, %v836
        %vm961 = vcmp.eq.s32.totalorder %v209, %v836
        %vm962 = vcmp.eq.s32.totalorder %v210, %v836
        %vm963 = vcmp.eq.s32.totalorder %v211, %v836
        %vm964 = vcmp.eq.s32.totalorder %v212, %v836
        %v965 = vsel %vm837, 1, 0
        %v966 = vsel %vm838, 1, 0
        %v967 = vsel %vm839, 1, 0
        %v968 = vsel %vm840, 1, 0
        %v969 = vsel %vm841, 1, 0
        %v970 = vsel %vm842, 1, 0
        %v971 = vsel %vm843, 1, 0
        %v972 = vsel %vm844, 1, 0
        %v973 = vsel %vm845, 1, 0
        %v974 = vsel %vm846, 1, 0
        %v975 = vsel %vm847, 1, 0
        %v976 = vsel %vm848, 1, 0
        %v977 = vsel %vm849, 1, 0
        %v978 = vsel %vm850, 1, 0
        %v979 = vsel %vm851, 1, 0
        %v980 = vsel %vm852, 1, 0
        %v981 = vsel %vm853, 1, 0
        %v982 = vsel %vm854, 1, 0
        %v983 = vsel %vm855, 1, 0
        %v984 = vsel %vm856, 1, 0
        %v985 = vsel %vm857, 1, 0
        %v986 = vsel %vm858, 1, 0
        %v987 = vsel %vm859, 1, 0
        %v988 = vsel %vm860, 1, 0
        %v989 = vsel %vm861, 1, 0
        %v990 = vsel %vm862, 1, 0
        %v991 = vsel %vm863, 1, 0
        %v992 = vsel %vm864, 1, 0
        %v993 = vsel %vm865, 1, 0
        %v994 = vsel %vm866, 1, 0
        %v995 = vsel %vm867, 1, 0
        %v996 = vsel %vm868, 1, 0
        %v997 = vsel %vm869, 1, 0
        %v998 = vsel %vm870, 1, 0
        %v999 = vsel %vm871, 1, 0
        %v1000 = vsel %vm872, 1, 0
        %v1001 = vsel %vm873, 1, 0
        %v1002 = vsel %vm874, 1, 0
        %v1003 = vsel %vm875, 1, 0
        %v1004 = vsel %vm876, 1, 0
        %v1005 = vsel %vm877, 1, 0
        %v1006 = vsel %vm878, 1, 0
        %v1007 = vsel %vm879, 1, 0
        %v1008 = vsel %vm880, 1, 0
        %v1009 = vsel %vm881, 1, 0
        %v1010 = vsel %vm882, 1, 0
        %v1011 = vsel %vm883, 1, 0
        %v1012 = vsel %vm884, 1, 0
        %v1013 = vsel %vm885, 1, 0
        %v1014 = vsel %vm886, 1, 0
        %v1015 = vsel %vm887, 1, 0
        %v1016 = vsel %vm888, 1, 0
        %v1017 = vsel %vm889, 1, 0
        %v1018 = vsel %vm890, 1, 0
        %v1019 = vsel %vm891, 1, 0
        %v1020 = vsel %vm892, 1, 0
        %v1021 = vsel %vm893, 1, 0
        %v1022 = vsel %vm894, 1, 0
        %v1023 = vsel %vm895, 1, 0
        %v1024 = vsel %vm896, 1, 0
        %v1025 = vsel %vm897, 1, 0
        %v1026 = vsel %vm898, 1, 0
        %v1027 = vsel %vm899, 1, 0
        %v1028 = vsel %vm900, 1, 0
        %v1029 = vsel %vm901, 1, 0
        %v1030 = vsel %vm902, 1, 0
        %v1031 = vsel %vm903, 1, 0
        %v1032 = vsel %vm904, 1, 0
        %v1033 = vsel %vm905, 1, 0
        %v1034 = vsel %vm906, 1, 0
        %v1035 = vsel %vm907, 1, 0
        %v1036 = vsel %vm908, 1, 0
        %v1037 = vsel %vm909, 1, 0
        %v1038 = vsel %vm910, 1, 0
        %v1039 = vsel %vm911, 1, 0
        %v1040 = vsel %vm912, 1, 0
        %v1041 = vsel %vm913, 1, 0
        %v1042 = vsel %vm914, 1, 0
        %v1043 = vsel %vm915, 1, 0
        %v1044 = vsel %vm916, 1, 0
        %v1045 = vsel %vm917, 1, 0
        %v1046 = vsel %vm918, 1, 0
        %v1047 = vsel %vm919, 1, 0
        %v1048 = vsel %vm920, 1, 0
        %v1049 = vsel %vm921, 1, 0
        %v1050 = vsel %vm922, 1, 0
        %v1051 = vsel %vm923, 1, 0
        %v1052 = vsel %vm924, 1, 0
        %v1053 = vsel %vm925, 1, 0
        %v1054 = vsel %vm926, 1, 0
        %v1055 = vsel %vm927, 1, 0
        %v1056 = vsel %vm928, 1, 0
        %v1057 = vsel %vm929, 1, 0
        %v1058 = vsel %vm930, 1, 0
        %v1059 = vsel %vm931, 1, 0
        %v1060 = vsel %vm932, 1, 0
        %v1061 = vsel %vm933, 1, 0
        %v1062 = vsel %vm934, 1, 0
        %v1063 = vsel %vm935, 1, 0
        %v1064 = vsel %vm936, 1, 0
        %v1065 = vsel %vm937, 1, 0
        %v1066 = vsel %vm938, 1, 0
        %v1067 = vsel %vm939, 1, 0
        %v1068 = vsel %vm940, 1, 0
        %v1069 = vsel %vm941, 1, 0
        %v1070 = vsel %vm942, 1, 0
        %v1071 = vsel %vm943, 1, 0
        %v1072 = vsel %vm944, 1, 0
        %v1073 = vsel %vm945, 1, 0
        %v1074 = vsel %vm946, 1, 0
        %v1075 = vsel %vm947, 1, 0
        %v1076 = vsel %vm948, 1, 0
        %v1077 = vsel %vm949, 1, 0
        %v1078 = vsel %vm950, 1, 0
        %v1079 = vsel %vm951, 1, 0
        %v1080 = vsel %vm952, 1, 0
        %v1081 = vsel %vm953, 1, 0
        %v1082 = vsel %vm954, 1, 0
        %v1083 = vsel %vm955, 1, 0
        %v1084 = vsel %vm956, 1, 0
        %v1085 = vsel %vm957, 1, 0
        %v1086 = vsel %vm958, 1, 0
        %v1087 = vsel %vm959, 1, 0
        %v1088 = vsel %vm960, 1, 0
        %v1089 = vsel %vm961, 1, 0
        %v1090 = vsel %vm962, 1, 0
        %v1091 = vsel %vm963, 1, 0
        %v1092 = vsel %vm964, 1, 0
        %v1093 = vcvt.s32.f32 %v965
        %v1094 = vcvt.s32.f32 %v966
        %v1095 = vcvt.s32.f32 %v967
        %v1096 = vcvt.s32.f32 %v968
        %v1097 = vcvt.s32.f32 %v969
        %v1098 = vcvt.s32.f32 %v970
        %v1099 = vcvt.s32.f32 %v971
        %v1100 = vcvt.s32.f32 %v972
        %v1101 = vcvt.s32.f32 %v973
        %v1102 = vcvt.s32.f32 %v974
        %v1103 = vcvt.s32.f32 %v975
        %v1104 = vcvt.s32.f32 %v976
        %v1105 = vcvt.s32.f32 %v977
        %v1106 = vcvt.s32.f32 %v978
        %v1107 = vcvt.s32.f32 %v979
        %v1108 = vcvt.s32.f32 %v980
        %v1109 = vcvt.s32.f32 %v981
        %v1110 = vcvt.s32.f32 %v982
        %v1111 = vcvt.s32.f32 %v983
        %v1112 = vcvt.s32.f32 %v984
        %v1113 = vcvt.s32.f32 %v985
        %v1114 = vcvt.s32.f32 %v986
        %v1115 = vcvt.s32.f32 %v987
        %v1116 = vcvt.s32.f32 %v988
        %v1117 = vcvt.s32.f32 %v989
        %v1118 = vcvt.s32.f32 %v990
        %v1119 = vcvt.s32.f32 %v991
        %v1120 = vcvt.s32.f32 %v992
        %v1121 = vcvt.s32.f32 %v993
        %v1122 = vcvt.s32.f32 %v994
        %v1123 = vcvt.s32.f32 %v995
        %v1124 = vcvt.s32.f32 %v996
        %v1125 = vcvt.s32.f32 %v997
        %v1126 = vcvt.s32.f32 %v998
        %v1127 = vcvt.s32.f32 %v999
        %v1128 = vcvt.s32.f32 %v1000
        %v1129 = vcvt.s32.f32 %v1001
        %v1130 = vcvt.s32.f32 %v1002
        %v1131 = vcvt.s32.f32 %v1003
        %v1132 = vcvt.s32.f32 %v1004
        %v1133 = vcvt.s32.f32 %v1005
        %v1134 = vcvt.s32.f32 %v1006
        %v1135 = vcvt.s32.f32 %v1007
        %v1136 = vcvt.s32.f32 %v1008
        %v1137 = vcvt.s32.f32 %v1009
        %v1138 = vcvt.s32.f32 %v1010
        %v1139 = vcvt.s32.f32 %v1011
        %v1140 = vcvt.s32.f32 %v1012
        %v1141 = vcvt.s32.f32 %v1013
        %v1142 = vcvt.s32.f32 %v1014
        %v1143 = vcvt.s32.f32 %v1015
        %v1144 = vcvt.s32.f32 %v1016
        %v1145 = vcvt.s32.f32 %v1017
        %v1146 = vcvt.s32.f32 %v1018
        %v1147 = vcvt.s32.f32 %v1019
        %v1148 = vcvt.s32.f32 %v1020
        %v1149 = vcvt.s32.f32 %v1021
        %v1150 = vcvt.s32.f32 %v1022
        %v1151 = vcvt.s32.f32 %v1023
        %v1152 = vcvt.s32.f32 %v1024
        %v1153 = vcvt.s32.f32 %v1025
        %v1154 = vcvt.s32.f32 %v1026
        %v1155 = vcvt.s32.f32 %v1027
        %v1156 = vcvt.s32.f32 %v1028
        %v1157 = vcvt.s32.f32 %v1029
        %v1158 = vcvt.s32.f32 %v1030
        %v1159 = vcvt.s32.f32 %v1031
        %v1160 = vcvt.s32.f32 %v1032
        %v1161 = vcvt.s32.f32 %v1033
        %v1162 = vcvt.s32.f32 %v1034
        %v1163 = vcvt.s32.f32 %v1035
        %v1164 = vcvt.s32.f32 %v1036
        %v1165 = vcvt.s32.f32 %v1037
        %v1166 = vcvt.s32.f32 %v1038
        %v1167 = vcvt.s32.f32 %v1039
        %v1168 = vcvt.s32.f32 %v1040
        %v1169 = vcvt.s32.f32 %v1041
        %v1170 = vcvt.s32.f32 %v1042
        %v1171 = vcvt.s32.f32 %v1043
        %v1172 = vcvt.s32.f32 %v1044
        %v1173 = vcvt.s32.f32 %v1045
        %v1174 = vcvt.s32.f32 %v1046
        %v1175 = vcvt.s32.f32 %v1047
        %v1176 = vcvt.s32.f32 %v1048
        %v1177 = vcvt.s32.f32 %v1049
        %v1178 = vcvt.s32.f32 %v1050
        %v1179 = vcvt.s32.f32 %v1051
        %v1180 = vcvt.s32.f32 %v1052
        %v1181 = vcvt.s32.f32 %v1053
        %v1182 = vcvt.s32.f32 %v1054
        %v1183 = vcvt.s32.f32 %v1055
        %v1184 = vcvt.s32.f32 %v1056
        %v1185 = vcvt.s32.f32 %v1057
        %v1186 = vcvt.s32.f32 %v1058
        %v1187 = vcvt.s32.f32 %v1059
        %v1188 = vcvt.s32.f32 %v1060
        %v1189 = vcvt.s32.f32 %v1061
        %v1190 = vcvt.s32.f32 %v1062
        %v1191 = vcvt.s32.f32 %v1063
        %v1192 = vcvt.s32.f32 %v1064
        %v1193 = vcvt.s32.f32 %v1065
        %v1194 = vcvt.s32.f32 %v1066
        %v1195 = vcvt.s32.f32 %v1067
        %v1196 = vcvt.s32.f32 %v1068
        %v1197 = vcvt.s32.f32 %v1069
        %v1198 = vcvt.s32.f32 %v1070
        %v1199 = vcvt.s32.f32 %v1071
        %v1200 = vcvt.s32.f32 %v1072
        %v1201 = vcvt.s32.f32 %v1073
        %v1202 = vcvt.s32.f32 %v1074
        %v1203 = vcvt.s32.f32 %v1075
        %v1204 = vcvt.s32.f32 %v1076
        %v1205 = vcvt.s32.f32 %v1077
        %v1206 = vcvt.s32.f32 %v1078
        %v1207 = vcvt.s32.f32 %v1079
        %v1208 = vcvt.s32.f32 %v1080
        %v1209 = vcvt.s32.f32 %v1081
        %v1210 = vcvt.s32.f32 %v1082
        %v1211 = vcvt.s32.f32 %v1083
        %v1212 = vcvt.s32.f32 %v1084
        %v1213 = vcvt.s32.f32 %v1085
        %v1214 = vcvt.s32.f32 %v1086
        %v1215 = vcvt.s32.f32 %v1087
        %v1216 = vcvt.s32.f32 %v1088
        %v1217 = vcvt.s32.f32 %v1089
        %v1218 = vcvt.s32.f32 %v1090
        %v1219 = vcvt.s32.f32 %v1091
        %v1220 = vcvt.s32.f32 %v1092
        %v1221 = vadd.f32 %v645, %v1093
        %v1222 = vadd.f32 %v646, %v1094
        %v1223 = vadd.f32 %v647, %v1095
        %v1224 = vadd.f32 %v648, %v1096
        %v1225 = vadd.f32 %v649, %v1097
        %v1226 = vadd.f32 %v650, %v1098
        %v1227 = vadd.f32 %v651, %v1099
        %v1228 = vadd.f32 %v652, %v1100
        %v1229 = vadd.f32 %v653, %v1101
        %v1230 = vadd.f32 %v654, %v1102
        %v1231 = vadd.f32 %v655, %v1103
        %v1232 = vadd.f32 %v656, %v1104
        %v1233 = vadd.f32 %v657, %v1105
        %v1234 = vadd.f32 %v658, %v1106
        %v1235 = vadd.f32 %v659, %v1107
        %v1236 = vadd.f32 %v660, %v1108
        %v1237 = vadd.f32 %v661, %v1109
        %v1238 = vadd.f32 %v662, %v1110
        %v1239 = vadd.f32 %v663, %v1111
        %v1240 = vadd.f32 %v664, %v1112
        %v1241 = vadd.f32 %v665, %v1113
        %v1242 = vadd.f32 %v666, %v1114
        %v1243 = vadd.f32 %v667, %v1115
        %v1244 = vadd.f32 %v668, %v1116
        %v1245 = vadd.f32 %v669, %v1117
        %v1246 = vadd.f32 %v670, %v1118
        %v1247 = vadd.f32 %v671, %v1119
        %v1248 = vadd.f32 %v672, %v1120
        %v1249 = vadd.f32 %v673, %v1121
        %v1250 = vadd.f32 %v674, %v1122
        %v1251 = vadd.f32 %v675, %v1123
        %v1252 = vadd.f32 %v676, %v1124
        %v1253 = vadd.f32 %v677, %v1125
        %v1254 = vadd.f32 %v678, %v1126
        %v1255 = vadd.f32 %v679, %v1127
        %v1256 = vadd.f32 %v680, %v1128
        %v1257 = vadd.f32 %v681, %v1129
        %v1258 = vadd.f32 %v682, %v1130
        %v1259 = vadd.f32 %v683, %v1131
        %v1260 = vadd.f32 %v684, %v1132
        %v1261 = vadd.f32 %v685, %v1133
        %v1262 = vadd.f32 %v686, %v1134
        %v1263 = vadd.f32 %v687, %v1135
        %v1264 = vadd.f32 %v688, %v1136
        %v1265 = vadd.f32 %v689, %v1137
        %v1266 = vadd.f32 %v690, %v1138
        %v1267 = vadd.f32 %v691, %v1139
        %v1268 = vadd.f32 %v692, %v1140
        %v1269 = vadd.f32 %v693, %v1141
        %v1270 = vadd.f32 %v694, %v1142
        %v1271 = vadd.f32 %v695, %v1143
        %v1272 = vadd.f32 %v696, %v1144
        %v1273 = vadd.f32 %v697, %v1145
        %v1274 = vadd.f32 %v698, %v1146
        %v1275 = vadd.f32 %v699, %v1147
        %v1276 = vadd.f32 %v700, %v1148
        %v1277 = vadd.f32 %v701, %v1149
        %v1278 = vadd.f32 %v702, %v1150
        %v1279 = vadd.f32 %v703, %v1151
        %v1280 = vadd.f32 %v704, %v1152
        %v1281 = vadd.f32 %v705, %v1153
        %v1282 = vadd.f32 %v706, %v1154
        %v1283 = vadd.f32 %v707, %v1155
        %v1284 = vadd.f32 %v708, %v1156
        %v1285 = vadd.f32 %v709, %v1157
        %v1286 = vadd.f32 %v710, %v1158
        %v1287 = vadd.f32 %v711, %v1159
        %v1288 = vadd.f32 %v712, %v1160
        %v1289 = vadd.f32 %v713, %v1161
        %v1290 = vadd.f32 %v714, %v1162
        %v1291 = vadd.f32 %v715, %v1163
        %v1292 = vadd.f32 %v716, %v1164
        %v1293 = vadd.f32 %v717, %v1165
        %v1294 = vadd.f32 %v718, %v1166
        %v1295 = vadd.f32 %v719, %v1167
        %v1296 = vadd.f32 %v720, %v1168
        %v1297 = vadd.f32 %v721, %v1169
        %v1298 = vadd.f32 %v722, %v1170
        %v1299 = vadd.f32 %v723, %v1171
        %v1300 = vadd.f32 %v724, %v1172
        %v1301 = vadd.f32 %v725, %v1173
        %v1302 = vadd.f32 %v726, %v1174
        %v1303 = vadd.f32 %v727, %v1175
        %v1304 = vadd.f32 %v728, %v1176
        %v1305 = vadd.f32 %v729, %v1177
        %v1306 = vadd.f32 %v730, %v1178
        %v1307 = vadd.f32 %v731, %v1179
        %v1308 = vadd.f32 %v732, %v1180
        %v1309 = vadd.f32 %v733, %v1181
        %v1310 = vadd.f32 %v734, %v1182
        %v1311 = vadd.f32 %v735, %v1183
        %v1312 = vadd.f32 %v736, %v1184
        %v1313 = vadd.f32 %v737, %v1185
        %v1314 = vadd.f32 %v738, %v1186
        %v1315 = vadd.f32 %v739, %v1187
        %v1316 = vadd.f32 %v740, %v1188
        %v1317 = vadd.f32 %v741, %v1189
        %v1318 = vadd.f32 %v742, %v1190
        %v1319 = vadd.f32 %v743, %v1191
        %v1320 = vadd.f32 %v744, %v1192
        %v1321 = vadd.f32 %v745, %v1193
        %v1322 = vadd.f32 %v746, %v1194
        %v1323 = vadd.f32 %v747, %v1195
        %v1324 = vadd.f32 %v748, %v1196
        %v1325 = vadd.f32 %v749, %v1197
        %v1326 = vadd.f32 %v750, %v1198
        %v1327 = vadd.f32 %v751, %v1199
        %v1328 = vadd.f32 %v752, %v1200
        %v1329 = vadd.f32 %v753, %v1201
        %v1330 = vadd.f32 %v754, %v1202
        %v1331 = vadd.f32 %v755, %v1203
        %v1332 = vadd.f32 %v756, %v1204
        %v1333 = vadd.f32 %v757, %v1205
        %v1334 = vadd.f32 %v758, %v1206
        %v1335 = vadd.f32 %v759, %v1207
        %v1336 = vadd.f32 %v760, %v1208
        %v1337 = vadd.f32 %v761, %v1209
        %v1338 = vadd.f32 %v762, %v1210
        %v1339 = vadd.f32 %v763, %v1211
        %v1340 = vadd.f32 %v764, %v1212
        %v1341 = vadd.f32 %v765, %v1213
        %v1342 = vadd.f32 %v766, %v1214
        %v1343 = vadd.f32 %v767, %v1215
        %v1344 = vadd.f32 %v768, %v1216
        %v1345 = vadd.f32 %v769, %v1217
        %v1346 = vadd.f32 %v770, %v1218
        %v1347 = vadd.f32 %v771, %v1219
        %v1348 = vadd.f32 %v772, %v1220
        %v1349 = vadd.s32 %v188, 128
        %v1350 = vadd.s32 %v189, 128
        %v1351 = vadd.s32 %v190, 128
        %v1352 = vadd.s32 %v191, 128
        %v1353 = vadd.s32 %v192, 128
        %v1354 = vadd.s32 %v193, 128
        %v1355 = vadd.s32 %v194, 128
        %v1356 = vadd.s32 %v195, 128
        %v1357 = vadd.s32 %v196, 128
        %v1358 = vadd.s32 %v197, 128
        %v1359 = vadd.s32 %v198, 128
        %v1360 = vadd.s32 %v199, 128
        %v1361 = vadd.s32 %v200, 128
        %v1362 = vadd.s32 %v201, 128
        %v1363 = vadd.s32 %v202, 128
        %v1364 = vadd.s32 %v203, 128
        %1365 = vset.pattern.permute.xlu0 2
        %1366 = vperm.xlu0 %1365, %v1349
        %v1367 = vpop.permute.xlu0 %1366
        %1368 = vset.pattern.permute.xlu0 2
        %1369 = vperm.xlu0 %1368, %v1350
        %v1370 = vpop.permute.xlu0 %1369
        %1371 = vset.pattern.permute.xlu0 2
        %1372 = vperm.xlu0 %1371, %v1351
        %v1373 = vpop.permute.xlu0 %1372
        %1374 = vset.pattern.permute.xlu0 2
        %1375 = vperm.xlu0 %1374, %v1352
        %v1376 = vpop.permute.xlu0 %1375
        %1377 = vset.pattern.permute.xlu0 2
        %1378 = vperm.xlu0 %1377, %v1353
        %v1379 = vpop.permute.xlu0 %1378
        %1380 = vset.pattern.permute.xlu0 2
        %1381 = vperm.xlu0 %1380, %v1354
        %v1382 = vpop.permute.xlu0 %1381
        %1383 = vset.pattern.permute.xlu0 2
        %1384 = vperm.xlu0 %1383, %v1355
        %v1385 = vpop.permute.xlu0 %1384
        %1386 = vset.pattern.permute.xlu0 2
        %1387 = vperm.xlu0 %1386, %v1356
        %v1388 = vpop.permute.xlu0 %1387
        %1389 = vset.pattern.permute.xlu0 2
        %1390 = vperm.xlu0 %1389, %v1357
        %v1391 = vpop.permute.xlu0 %1390
        %1392 = vset.pattern.permute.xlu0 2
        %1393 = vperm.xlu0 %1392, %v1358
        %v1394 = vpop.permute.xlu0 %1393
        %1395 = vset.pattern.permute.xlu0 2
        %1396 = vperm.xlu0 %1395, %v1359
        %v1397 = vpop.permute.xlu0 %1396
        %1398 = vset.pattern.permute.xlu0 2
        %1399 = vperm.xlu0 %1398, %v1360
        %v1400 = vpop.permute.xlu0 %1399
        %1401 = vset.pattern.permute.xlu0 2
        %1402 = vperm.xlu0 %1401, %v1361
        %v1403 = vpop.permute.xlu0 %1402
        %1404 = vset.pattern.permute.xlu0 2
        %1405 = vperm.xlu0 %1404, %v1362
        %v1406 = vpop.permute.xlu0 %1405
        %1407 = vset.pattern.permute.xlu0 2
        %1408 = vperm.xlu0 %1407, %v1363
        %v1409 = vpop.permute.xlu0 %1408
        %1410 = vset.pattern.permute.xlu0 2
        %1411 = vperm.xlu0 %1410, %v1364
        %v1412 = vpop.permute.xlu0 %1411
        %vm1413 = vcmp.eq.s32.totalorder %v205, %v1367
        %vm1414 = vcmp.eq.s32.totalorder %v206, %v1367
        %vm1415 = vcmp.eq.s32.totalorder %v207, %v1367
        %vm1416 = vcmp.eq.s32.totalorder %v208, %v1367
        %vm1417 = vcmp.eq.s32.totalorder %v209, %v1367
        %vm1418 = vcmp.eq.s32.totalorder %v210, %v1367
        %vm1419 = vcmp.eq.s32.totalorder %v211, %v1367
        %vm1420 = vcmp.eq.s32.totalorder %v212, %v1367
        %vm1421 = vcmp.eq.s32.totalorder %v205, %v1370
        %vm1422 = vcmp.eq.s32.totalorder %v206, %v1370
        %vm1423 = vcmp.eq.s32.totalorder %v207, %v1370
        %vm1424 = vcmp.eq.s32.totalorder %v208, %v1370
        %vm1425 = vcmp.eq.s32.totalorder %v209, %v1370
        %vm1426 = vcmp.eq.s32.totalorder %v210, %v1370
        %vm1427 = vcmp.eq.s32.totalorder %v211, %v1370
        %vm1428 = vcmp.eq.s32.totalorder %v212, %v1370
        %vm1429 = vcmp.eq.s32.totalorder %v205, %v1373
        %vm1430 = vcmp.eq.s32.totalorder %v206, %v1373
        %vm1431 = vcmp.eq.s32.totalorder %v207, %v1373
        %vm1432 = vcmp.eq.s32.totalorder %v208, %v1373
        %vm1433 = vcmp.eq.s32.totalorder %v209, %v1373
        %vm1434 = vcmp.eq.s32.totalorder %v210, %v1373
        %vm1435 = vcmp.eq.s32.totalorder %v211, %v1373
        %vm1436 = vcmp.eq.s32.totalorder %v212, %v1373
        %vm1437 = vcmp.eq.s32.totalorder %v205, %v1376
        %vm1438 = vcmp.eq.s32.totalorder %v206, %v1376
        %vm1439 = vcmp.eq.s32.totalorder %v207, %v1376
        %vm1440 = vcmp.eq.s32.totalorder %v208, %v1376
        %vm1441 = vcmp.eq.s32.totalorder %v209, %v1376
        %vm1442 = vcmp.eq.s32.totalorder %v210, %v1376
        %vm1443 = vcmp.eq.s32.totalorder %v211, %v1376
        %vm1444 = vcmp.eq.s32.totalorder %v212, %v1376
        %vm1445 = vcmp.eq.s32.totalorder %v205, %v1379
        %vm1446 = vcmp.eq.s32.totalorder %v206, %v1379
        %vm1447 = vcmp.eq.s32.totalorder %v207, %v1379
        %vm1448 = vcmp.eq.s32.totalorder %v208, %v1379
        %vm1449 = vcmp.eq.s32.totalorder %v209, %v1379
        %vm1450 = vcmp.eq.s32.totalorder %v210, %v1379
        %vm1451 = vcmp.eq.s32.totalorder %v211, %v1379
        %vm1452 = vcmp.eq.s32.totalorder %v212, %v1379
        %vm1453 = vcmp.eq.s32.totalorder %v205, %v1382
        %vm1454 = vcmp.eq.s32.totalorder %v206, %v1382
        %vm1455 = vcmp.eq.s32.totalorder %v207, %v1382
        %vm1456 = vcmp.eq.s32.totalorder %v208, %v1382
        %vm1457 = vcmp.eq.s32.totalorder %v209, %v1382
        %vm1458 = vcmp.eq.s32.totalorder %v210, %v1382
        %vm1459 = vcmp.eq.s32.totalorder %v211, %v1382
        %vm1460 = vcmp.eq.s32.totalorder %v212, %v1382
        %vm1461 = vcmp.eq.s32.totalorder %v205, %v1385
        %vm1462 = vcmp.eq.s32.totalorder %v206, %v1385
        %vm1463 = vcmp.eq.s32.totalorder %v207, %v1385
        %vm1464 = vcmp.eq.s32.totalorder %v208, %v1385
        %vm1465 = vcmp.eq.s32.totalorder %v209, %v1385
        %vm1466 = vcmp.eq.s32.totalorder %v210, %v1385
        %vm1467 = vcmp.eq.s32.totalorder %v211, %v1385
        %vm1468 = vcmp.eq.s32.totalorder %v212, %v1385
        %vm1469 = vcmp.eq.s32.totalorder %v205, %v1388
        %vm1470 = vcmp.eq.s32.totalorder %v206, %v1388
        %vm1471 = vcmp.eq.s32.totalorder %v207, %v1388
        %vm1472 = vcmp.eq.s32.totalorder %v208, %v1388
        %vm1473 = vcmp.eq.s32.totalorder %v209, %v1388
        %vm1474 = vcmp.eq.s32.totalorder %v210, %v1388
        %vm1475 = vcmp.eq.s32.totalorder %v211, %v1388
        %vm1476 = vcmp.eq.s32.totalorder %v212, %v1388
        %vm1477 = vcmp.eq.s32.totalorder %v205, %v1391
        %vm1478 = vcmp.eq.s32.totalorder %v206, %v1391
        %vm1479 = vcmp.eq.s32.totalorder %v207, %v1391
        %vm1480 = vcmp.eq.s32.totalorder %v208, %v1391
        %vm1481 = vcmp.eq.s32.totalorder %v209, %v1391
        %vm1482 = vcmp.eq.s32.totalorder %v210, %v1391
        %vm1483 = vcmp.eq.s32.totalorder %v211, %v1391
        %vm1484 = vcmp.eq.s32.totalorder %v212, %v1391
        %vm1485 = vcmp.eq.s32.totalorder %v205, %v1394
        %vm1486 = vcmp.eq.s32.totalorder %v206, %v1394
        %vm1487 = vcmp.eq.s32.totalorder %v207, %v1394
        %vm1488 = vcmp.eq.s32.totalorder %v208, %v1394
        %vm1489 = vcmp.eq.s32.totalorder %v209, %v1394
        %vm1490 = vcmp.eq.s32.totalorder %v210, %v1394
        %vm1491 = vcmp.eq.s32.totalorder %v211, %v1394
        %vm1492 = vcmp.eq.s32.totalorder %v212, %v1394
        %vm1493 = vcmp.eq.s32.totalorder %v205, %v1397
        %vm1494 = vcmp.eq.s32.totalorder %v206, %v1397
        %vm1495 = vcmp.eq.s32.totalorder %v207, %v1397
        %vm1496 = vcmp.eq.s32.totalorder %v208, %v1397
        %vm1497 = vcmp.eq.s32.totalorder %v209, %v1397
        %vm1498 = vcmp.eq.s32.totalorder %v210, %v1397
        %vm1499 = vcmp.eq.s32.totalorder %v211, %v1397
        %vm1500 = vcmp.eq.s32.totalorder %v212, %v1397
        %vm1501 = vcmp.eq.s32.totalorder %v205, %v1400
        %vm1502 = vcmp.eq.s32.totalorder %v206, %v1400
        %vm1503 = vcmp.eq.s32.totalorder %v207, %v1400
        %vm1504 = vcmp.eq.s32.totalorder %v208, %v1400
        %vm1505 = vcmp.eq.s32.totalorder %v209, %v1400
        %vm1506 = vcmp.eq.s32.totalorder %v210, %v1400
        %vm1507 = vcmp.eq.s32.totalorder %v211, %v1400
        %vm1508 = vcmp.eq.s32.totalorder %v212, %v1400
        %vm1509 = vcmp.eq.s32.totalorder %v205, %v1403
        %vm1510 = vcmp.eq.s32.totalorder %v206, %v1403
        %vm1511 = vcmp.eq.s32.totalorder %v207, %v1403
        %vm1512 = vcmp.eq.s32.totalorder %v208, %v1403
        %vm1513 = vcmp.eq.s32.totalorder %v209, %v1403
        %vm1514 = vcmp.eq.s32.totalorder %v210, %v1403
        %vm1515 = vcmp.eq.s32.totalorder %v211, %v1403
        %vm1516 = vcmp.eq.s32.totalorder %v212, %v1403
        %vm1517 = vcmp.eq.s32.totalorder %v205, %v1406
        %vm1518 = vcmp.eq.s32.totalorder %v206, %v1406
        %vm1519 = vcmp.eq.s32.totalorder %v207, %v1406
        %vm1520 = vcmp.eq.s32.totalorder %v208, %v1406
        %vm1521 = vcmp.eq.s32.totalorder %v209, %v1406
        %vm1522 = vcmp.eq.s32.totalorder %v210, %v1406
        %vm1523 = vcmp.eq.s32.totalorder %v211, %v1406
        %vm1524 = vcmp.eq.s32.totalorder %v212, %v1406
        %vm1525 = vcmp.eq.s32.totalorder %v205, %v1409
        %vm1526 = vcmp.eq.s32.totalorder %v206, %v1409
        %vm1527 = vcmp.eq.s32.totalorder %v207, %v1409
        %vm1528 = vcmp.eq.s32.totalorder %v208, %v1409
        %vm1529 = vcmp.eq.s32.totalorder %v209, %v1409
        %vm1530 = vcmp.eq.s32.totalorder %v210, %v1409
        %vm1531 = vcmp.eq.s32.totalorder %v211, %v1409
        %vm1532 = vcmp.eq.s32.totalorder %v212, %v1409
        %vm1533 = vcmp.eq.s32.totalorder %v205, %v1412
        %vm1534 = vcmp.eq.s32.totalorder %v206, %v1412
        %vm1535 = vcmp.eq.s32.totalorder %v207, %v1412
        %vm1536 = vcmp.eq.s32.totalorder %v208, %v1412
        %vm1537 = vcmp.eq.s32.totalorder %v209, %v1412
        %vm1538 = vcmp.eq.s32.totalorder %v210, %v1412
        %vm1539 = vcmp.eq.s32.totalorder %v211, %v1412
        %vm1540 = vcmp.eq.s32.totalorder %v212, %v1412
        %v1541 = vsel %vm1413, 1, 0
        %v1542 = vsel %vm1414, 1, 0
        %v1543 = vsel %vm1415, 1, 0
        %v1544 = vsel %vm1416, 1, 0
        %v1545 = vsel %vm1417, 1, 0
        %v1546 = vsel %vm1418, 1, 0
        %v1547 = vsel %vm1419, 1, 0
        %v1548 = vsel %vm1420, 1, 0
        %v1549 = vsel %vm1421, 1, 0
        %v1550 = vsel %vm1422, 1, 0
        %v1551 = vsel %vm1423, 1, 0
        %v1552 = vsel %vm1424, 1, 0
        %v1553 = vsel %vm1425, 1, 0
        %v1554 = vsel %vm1426, 1, 0
        %v1555 = vsel %vm1427, 1, 0
        %v1556 = vsel %vm1428, 1, 0
        %v1557 = vsel %vm1429, 1, 0
        %v1558 = vsel %vm1430, 1, 0
        %v1559 = vsel %vm1431, 1, 0
        %v1560 = vsel %vm1432, 1, 0
        %v1561 = vsel %vm1433, 1, 0
        %v1562 = vsel %vm1434, 1, 0
        %v1563 = vsel %vm1435, 1, 0
        %v1564 = vsel %vm1436, 1, 0
        %v1565 = vsel %vm1437, 1, 0
        %v1566 = vsel %vm1438, 1, 0
        %v1567 = vsel %vm1439, 1, 0
        %v1568 = vsel %vm1440, 1, 0
        %v1569 = vsel %vm1441, 1, 0
        %v1570 = vsel %vm1442, 1, 0
        %v1571 = vsel %vm1443, 1, 0
        %v1572 = vsel %vm1444, 1, 0
        %v1573 = vsel %vm1445, 1, 0
        %v1574 = vsel %vm1446, 1, 0
        %v1575 = vsel %vm1447, 1, 0
        %v1576 = vsel %vm1448, 1, 0
        %v1577 = vsel %vm1449, 1, 0
        %v1578 = vsel %vm1450, 1, 0
        %v1579 = vsel %vm1451, 1, 0
        %v1580 = vsel %vm1452, 1, 0
        %v1581 = vsel %vm1453, 1, 0
        %v1582 = vsel %vm1454, 1, 0
        %v1583 = vsel %vm1455, 1, 0
        %v1584 = vsel %vm1456, 1, 0
        %v1585 = vsel %vm1457, 1, 0
        %v1586 = vsel %vm1458, 1, 0
        %v1587 = vsel %vm1459, 1, 0
        %v1588 = vsel %vm1460, 1, 0
        %v1589 = vsel %vm1461, 1, 0
        %v1590 = vsel %vm1462, 1, 0
        %v1591 = vsel %vm1463, 1, 0
        %v1592 = vsel %vm1464, 1, 0
        %v1593 = vsel %vm1465, 1, 0
        %v1594 = vsel %vm1466, 1, 0
        %v1595 = vsel %vm1467, 1, 0
        %v1596 = vsel %vm1468, 1, 0
        %v1597 = vsel %vm1469, 1, 0
        %v1598 = vsel %vm1470, 1, 0
        %v1599 = vsel %vm1471, 1, 0
        %v1600 = vsel %vm1472, 1, 0
        %v1601 = vsel %vm1473, 1, 0
        %v1602 = vsel %vm1474, 1, 0
        %v1603 = vsel %vm1475, 1, 0
        %v1604 = vsel %vm1476, 1, 0
        %v1605 = vsel %vm1477, 1, 0
        %v1606 = vsel %vm1478, 1, 0
        %v1607 = vsel %vm1479, 1, 0
        %v1608 = vsel %vm1480, 1, 0
        %v1609 = vsel %vm1481, 1, 0
        %v1610 = vsel %vm1482, 1, 0
        %v1611 = vsel %vm1483, 1, 0
        %v1612 = vsel %vm1484, 1, 0
        %v1613 = vsel %vm1485, 1, 0
        %v1614 = vsel %vm1486, 1, 0
        %v1615 = vsel %vm1487, 1, 0
        %v1616 = vsel %vm1488, 1, 0
        %v1617 = vsel %vm1489, 1, 0
        %v1618 = vsel %vm1490, 1, 0
        %v1619 = vsel %vm1491, 1, 0
        %v1620 = vsel %vm1492, 1, 0
        %v1621 = vsel %vm1493, 1, 0
        %v1622 = vsel %vm1494, 1, 0
        %v1623 = vsel %vm1495, 1, 0
        %v1624 = vsel %vm1496, 1, 0
        %v1625 = vsel %vm1497, 1, 0
        %v1626 = vsel %vm1498, 1, 0
        %v1627 = vsel %vm1499, 1, 0
        %v1628 = vsel %vm1500, 1, 0
        %v1629 = vsel %vm1501, 1, 0
        %v1630 = vsel %vm1502, 1, 0
        %v1631 = vsel %vm1503, 1, 0
        %v1632 = vsel %vm1504, 1, 0
        %v1633 = vsel %vm1505, 1, 0
        %v1634 = vsel %vm1506, 1, 0
        %v1635 = vsel %vm1507, 1, 0
        %v1636 = vsel %vm1508, 1, 0
        %v1637 = vsel %vm1509, 1, 0
        %v1638 = vsel %vm1510, 1, 0
        %v1639 = vsel %vm1511, 1, 0
        %v1640 = vsel %vm1512, 1, 0
        %v1641 = vsel %vm1513, 1, 0
        %v1642 = vsel %vm1514, 1, 0
        %v1643 = vsel %vm1515, 1, 0
        %v1644 = vsel %vm1516, 1, 0
        %v1645 = vsel %vm1517, 1, 0
        %v1646 = vsel %vm1518, 1, 0
        %v1647 = vsel %vm1519, 1, 0
        %v1648 = vsel %vm1520, 1, 0
        %v1649 = vsel %vm1521, 1, 0
        %v1650 = vsel %vm1522, 1, 0
        %v1651 = vsel %vm1523, 1, 0
        %v1652 = vsel %vm1524, 1, 0
        %v1653 = vsel %vm1525, 1, 0
        %v1654 = vsel %vm1526, 1, 0
        %v1655 = vsel %vm1527, 1, 0
        %v1656 = vsel %vm1528, 1, 0
        %v1657 = vsel %vm1529, 1, 0
        %v1658 = vsel %vm1530, 1, 0
        %v1659 = vsel %vm1531, 1, 0
        %v1660 = vsel %vm1532, 1, 0
        %v1661 = vsel %vm1533, 1, 0
        %v1662 = vsel %vm1534, 1, 0
        %v1663 = vsel %vm1535, 1, 0
        %v1664 = vsel %vm1536, 1, 0
        %v1665 = vsel %vm1537, 1, 0
        %v1666 = vsel %vm1538, 1, 0
        %v1667 = vsel %vm1539, 1, 0
        %v1668 = vsel %vm1540, 1, 0
        %v1669 = vcvt.s32.f32 %v1541
        %v1670 = vcvt.s32.f32 %v1542
        %v1671 = vcvt.s32.f32 %v1543
        %v1672 = vcvt.s32.f32 %v1544
        %v1673 = vcvt.s32.f32 %v1545
        %v1674 = vcvt.s32.f32 %v1546
        %v1675 = vcvt.s32.f32 %v1547
        %v1676 = vcvt.s32.f32 %v1548
        %v1677 = vcvt.s32.f32 %v1549
        %v1678 = vcvt.s32.f32 %v1550
        %v1679 = vcvt.s32.f32 %v1551
        %v1680 = vcvt.s32.f32 %v1552
        %v1681 = vcvt.s32.f32 %v1553
        %v1682 = vcvt.s32.f32 %v1554
        %v1683 = vcvt.s32.f32 %v1555
        %v1684 = vcvt.s32.f32 %v1556
        %v1685 = vcvt.s32.f32 %v1557
        %v1686 = vcvt.s32.f32 %v1558
        %v1687 = vcvt.s32.f32 %v1559
        %v1688 = vcvt.s32.f32 %v1560
        %v1689 = vcvt.s32.f32 %v1561
        %v1690 = vcvt.s32.f32 %v1562
        %v1691 = vcvt.s32.f32 %v1563
        %v1692 = vcvt.s32.f32 %v1564
        %v1693 = vcvt.s32.f32 %v1565
        %v1694 = vcvt.s32.f32 %v1566
        %v1695 = vcvt.s32.f32 %v1567
        %v1696 = vcvt.s32.f32 %v1568
        %v1697 = vcvt.s32.f32 %v1569
        %v1698 = vcvt.s32.f32 %v1570
        %v1699 = vcvt.s32.f32 %v1571
        %v1700 = vcvt.s32.f32 %v1572
        %v1701 = vcvt.s32.f32 %v1573
        %v1702 = vcvt.s32.f32 %v1574
        %v1703 = vcvt.s32.f32 %v1575
        %v1704 = vcvt.s32.f32 %v1576
        %v1705 = vcvt.s32.f32 %v1577
        %v1706 = vcvt.s32.f32 %v1578
        %v1707 = vcvt.s32.f32 %v1579
        %v1708 = vcvt.s32.f32 %v1580
        %v1709 = vcvt.s32.f32 %v1581
        %v1710 = vcvt.s32.f32 %v1582
        %v1711 = vcvt.s32.f32 %v1583
        %v1712 = vcvt.s32.f32 %v1584
        %v1713 = vcvt.s32.f32 %v1585
        %v1714 = vcvt.s32.f32 %v1586
        %v1715 = vcvt.s32.f32 %v1587
        %v1716 = vcvt.s32.f32 %v1588
        %v1717 = vcvt.s32.f32 %v1589
        %v1718 = vcvt.s32.f32 %v1590
        %v1719 = vcvt.s32.f32 %v1591
        %v1720 = vcvt.s32.f32 %v1592
        %v1721 = vcvt.s32.f32 %v1593
        %v1722 = vcvt.s32.f32 %v1594
        %v1723 = vcvt.s32.f32 %v1595
        %v1724 = vcvt.s32.f32 %v1596
        %v1725 = vcvt.s32.f32 %v1597
        %v1726 = vcvt.s32.f32 %v1598
        %v1727 = vcvt.s32.f32 %v1599
        %v1728 = vcvt.s32.f32 %v1600
        %v1729 = vcvt.s32.f32 %v1601
        %v1730 = vcvt.s32.f32 %v1602
        %v1731 = vcvt.s32.f32 %v1603
        %v1732 = vcvt.s32.f32 %v1604
        %v1733 = vcvt.s32.f32 %v1605
        %v1734 = vcvt.s32.f32 %v1606
        %v1735 = vcvt.s32.f32 %v1607
        %v1736 = vcvt.s32.f32 %v1608
        %v1737 = vcvt.s32.f32 %v1609
        %v1738 = vcvt.s32.f32 %v1610
        %v1739 = vcvt.s32.f32 %v1611
        %v1740 = vcvt.s32.f32 %v1612
        %v1741 = vcvt.s32.f32 %v1613
        %v1742 = vcvt.s32.f32 %v1614
        %v1743 = vcvt.s32.f32 %v1615
        %v1744 = vcvt.s32.f32 %v1616
        %v1745 = vcvt.s32.f32 %v1617
        %v1746 = vcvt.s32.f32 %v1618
        %v1747 = vcvt.s32.f32 %v1619
        %v1748 = vcvt.s32.f32 %v1620
        %v1749 = vcvt.s32.f32 %v1621
        %v1750 = vcvt.s32.f32 %v1622
        %v1751 = vcvt.s32.f32 %v1623
        %v1752 = vcvt.s32.f32 %v1624
        %v1753 = vcvt.s32.f32 %v1625
        %v1754 = vcvt.s32.f32 %v1626
        %v1755 = vcvt.s32.f32 %v1627
        %v1756 = vcvt.s32.f32 %v1628
        %v1757 = vcvt.s32.f32 %v1629
        %v1758 = vcvt.s32.f32 %v1630
        %v1759 = vcvt.s32.f32 %v1631
        %v1760 = vcvt.s32.f32 %v1632
        %v1761 = vcvt.s32.f32 %v1633
        %v1762 = vcvt.s32.f32 %v1634
        %v1763 = vcvt.s32.f32 %v1635
        %v1764 = vcvt.s32.f32 %v1636
        %v1765 = vcvt.s32.f32 %v1637
        %v1766 = vcvt.s32.f32 %v1638
        %v1767 = vcvt.s32.f32 %v1639
        %v1768 = vcvt.s32.f32 %v1640
        %v1769 = vcvt.s32.f32 %v1641
        %v1770 = vcvt.s32.f32 %v1642
        %v1771 = vcvt.s32.f32 %v1643
        %v1772 = vcvt.s32.f32 %v1644
        %v1773 = vcvt.s32.f32 %v1645
        %v1774 = vcvt.s32.f32 %v1646
        %v1775 = vcvt.s32.f32 %v1647
        %v1776 = vcvt.s32.f32 %v1648
        %v1777 = vcvt.s32.f32 %v1649
        %v1778 = vcvt.s32.f32 %v1650
        %v1779 = vcvt.s32.f32 %v1651
        %v1780 = vcvt.s32.f32 %v1652
        %v1781 = vcvt.s32.f32 %v1653
        %v1782 = vcvt.s32.f32 %v1654
        %v1783 = vcvt.s32.f32 %v1655
        %v1784 = vcvt.s32.f32 %v1656
        %v1785 = vcvt.s32.f32 %v1657
        %v1786 = vcvt.s32.f32 %v1658
        %v1787 = vcvt.s32.f32 %v1659
        %v1788 = vcvt.s32.f32 %v1660
        %v1789 = vcvt.s32.f32 %v1661
        %v1790 = vcvt.s32.f32 %v1662
        %v1791 = vcvt.s32.f32 %v1663
        %v1792 = vcvt.s32.f32 %v1664
        %v1793 = vcvt.s32.f32 %v1665
        %v1794 = vcvt.s32.f32 %v1666
        %v1795 = vcvt.s32.f32 %v1667
        %v1796 = vcvt.s32.f32 %v1668
        %v1797 = vadd.f32 %v1221, %v1669
        %v1798 = vadd.f32 %v1222, %v1670
        %v1799 = vadd.f32 %v1223, %v1671
        %v1800 = vadd.f32 %v1224, %v1672
        %v1801 = vadd.f32 %v1225, %v1673
        %v1802 = vadd.f32 %v1226, %v1674
        %v1803 = vadd.f32 %v1227, %v1675
        %v1804 = vadd.f32 %v1228, %v1676
        %v1805 = vadd.f32 %v1229, %v1677
        %v1806 = vadd.f32 %v1230, %v1678
        %v1807 = vadd.f32 %v1231, %v1679
        %v1808 = vadd.f32 %v1232, %v1680
        %v1809 = vadd.f32 %v1233, %v1681
        %v1810 = vadd.f32 %v1234, %v1682
        %v1811 = vadd.f32 %v1235, %v1683
        %v1812 = vadd.f32 %v1236, %v1684
        %v1813 = vadd.f32 %v1237, %v1685
        %v1814 = vadd.f32 %v1238, %v1686
        %v1815 = vadd.f32 %v1239, %v1687
        %v1816 = vadd.f32 %v1240, %v1688
        %v1817 = vadd.f32 %v1241, %v1689
        %v1818 = vadd.f32 %v1242, %v1690
        %v1819 = vadd.f32 %v1243, %v1691
        %v1820 = vadd.f32 %v1244, %v1692
        %v1821 = vadd.f32 %v1245, %v1693
        %v1822 = vadd.f32 %v1246, %v1694
        %v1823 = vadd.f32 %v1247, %v1695
        %v1824 = vadd.f32 %v1248, %v1696
        %v1825 = vadd.f32 %v1249, %v1697
        %v1826 = vadd.f32 %v1250, %v1698
        %v1827 = vadd.f32 %v1251, %v1699
        %v1828 = vadd.f32 %v1252, %v1700
        %v1829 = vadd.f32 %v1253, %v1701
        %v1830 = vadd.f32 %v1254, %v1702
        %v1831 = vadd.f32 %v1255, %v1703
        %v1832 = vadd.f32 %v1256, %v1704
        %v1833 = vadd.f32 %v1257, %v1705
        %v1834 = vadd.f32 %v1258, %v1706
        %v1835 = vadd.f32 %v1259, %v1707
        %v1836 = vadd.f32 %v1260, %v1708
        %v1837 = vadd.f32 %v1261, %v1709
        %v1838 = vadd.f32 %v1262, %v1710
        %v1839 = vadd.f32 %v1263, %v1711
        %v1840 = vadd.f32 %v1264, %v1712
        %v1841 = vadd.f32 %v1265, %v1713
        %v1842 = vadd.f32 %v1266, %v1714
        %v1843 = vadd.f32 %v1267, %v1715
        %v1844 = vadd.f32 %v1268, %v1716
        %v1845 = vadd.f32 %v1269, %v1717
        %v1846 = vadd.f32 %v1270, %v1718
        %v1847 = vadd.f32 %v1271, %v1719
        %v1848 = vadd.f32 %v1272, %v1720
        %v1849 = vadd.f32 %v1273, %v1721
        %v1850 = vadd.f32 %v1274, %v1722
        %v1851 = vadd.f32 %v1275, %v1723
        %v1852 = vadd.f32 %v1276, %v1724
        %v1853 = vadd.f32 %v1277, %v1725
        %v1854 = vadd.f32 %v1278, %v1726
        %v1855 = vadd.f32 %v1279, %v1727
        %v1856 = vadd.f32 %v1280, %v1728
        %v1857 = vadd.f32 %v1281, %v1729
        %v1858 = vadd.f32 %v1282, %v1730
        %v1859 = vadd.f32 %v1283, %v1731
        %v1860 = vadd.f32 %v1284, %v1732
        %v1861 = vadd.f32 %v1285, %v1733
        %v1862 = vadd.f32 %v1286, %v1734
        %v1863 = vadd.f32 %v1287, %v1735
        %v1864 = vadd.f32 %v1288, %v1736
        %v1865 = vadd.f32 %v1289, %v1737
        %v1866 = vadd.f32 %v1290, %v1738
        %v1867 = vadd.f32 %v1291, %v1739
        %v1868 = vadd.f32 %v1292, %v1740
        %v1869 = vadd.f32 %v1293, %v1741
        %v1870 = vadd.f32 %v1294, %v1742
        %v1871 = vadd.f32 %v1295, %v1743
        %v1872 = vadd.f32 %v1296, %v1744
        %v1873 = vadd.f32 %v1297, %v1745
        %v1874 = vadd.f32 %v1298, %v1746
        %v1875 = vadd.f32 %v1299, %v1747
        %v1876 = vadd.f32 %v1300, %v1748
        %v1877 = vadd.f32 %v1301, %v1749
        %v1878 = vadd.f32 %v1302, %v1750
        %v1879 = vadd.f32 %v1303, %v1751
        %v1880 = vadd.f32 %v1304, %v1752
        %v1881 = vadd.f32 %v1305, %v1753
        %v1882 = vadd.f32 %v1306, %v1754
        %v1883 = vadd.f32 %v1307, %v1755
        %v1884 = vadd.f32 %v1308, %v1756
        %v1885 = vadd.f32 %v1309, %v1757
        %v1886 = vadd.f32 %v1310, %v1758
        %v1887 = vadd.f32 %v1311, %v1759
        %v1888 = vadd.f32 %v1312, %v1760
        %v1889 = vadd.f32 %v1313, %v1761
        %v1890 = vadd.f32 %v1314, %v1762
        %v1891 = vadd.f32 %v1315, %v1763
        %v1892 = vadd.f32 %v1316, %v1764
        %v1893 = vadd.f32 %v1317, %v1765
        %v1894 = vadd.f32 %v1318, %v1766
        %v1895 = vadd.f32 %v1319, %v1767
        %v1896 = vadd.f32 %v1320, %v1768
        %v1897 = vadd.f32 %v1321, %v1769
        %v1898 = vadd.f32 %v1322, %v1770
        %v1899 = vadd.f32 %v1323, %v1771
        %v1900 = vadd.f32 %v1324, %v1772
        %v1901 = vadd.f32 %v1325, %v1773
        %v1902 = vadd.f32 %v1326, %v1774
        %v1903 = vadd.f32 %v1327, %v1775
        %v1904 = vadd.f32 %v1328, %v1776
        %v1905 = vadd.f32 %v1329, %v1777
        %v1906 = vadd.f32 %v1330, %v1778
        %v1907 = vadd.f32 %v1331, %v1779
        %v1908 = vadd.f32 %v1332, %v1780
        %v1909 = vadd.f32 %v1333, %v1781
        %v1910 = vadd.f32 %v1334, %v1782
        %v1911 = vadd.f32 %v1335, %v1783
        %v1912 = vadd.f32 %v1336, %v1784
        %v1913 = vadd.f32 %v1337, %v1785
        %v1914 = vadd.f32 %v1338, %v1786
        %v1915 = vadd.f32 %v1339, %v1787
        %v1916 = vadd.f32 %v1340, %v1788
        %v1917 = vadd.f32 %v1341, %v1789
        %v1918 = vadd.f32 %v1342, %v1790
        %v1919 = vadd.f32 %v1343, %v1791
        %v1920 = vadd.f32 %v1344, %v1792
        %v1921 = vadd.f32 %v1345, %v1793
        %v1922 = vadd.f32 %v1346, %v1794
        %v1923 = vadd.f32 %v1347, %v1795
        %v1924 = vadd.f32 %v1348, %v1796
        %v1925 = vadd.s32 %v188, 192
        %v1926 = vadd.s32 %v189, 192
        %v1927 = vadd.s32 %v190, 192
        %v1928 = vadd.s32 %v191, 192
        %v1929 = vadd.s32 %v192, 192
        %v1930 = vadd.s32 %v193, 192
        %v1931 = vadd.s32 %v194, 192
        %v1932 = vadd.s32 %v195, 192
        %v1933 = vadd.s32 %v196, 192
        %v1934 = vadd.s32 %v197, 192
        %v1935 = vadd.s32 %v198, 192
        %v1936 = vadd.s32 %v199, 192
        %v1937 = vadd.s32 %v200, 192
        %v1938 = vadd.s32 %v201, 192
        %v1939 = vadd.s32 %v202, 192
        %v1940 = vadd.s32 %v203, 192
        %1941 = vset.pattern.permute.xlu0 3
        %1942 = vperm.xlu0 %1941, %v1925
        %v1943 = vpop.permute.xlu0 %1942
        %1944 = vset.pattern.permute.xlu0 3
        %1945 = vperm.xlu0 %1944, %v1926
        %v1946 = vpop.permute.xlu0 %1945
        %1947 = vset.pattern.permute.xlu0 3
        %1948 = vperm.xlu0 %1947, %v1927
        %v1949 = vpop.permute.xlu0 %1948
        %1950 = vset.pattern.permute.xlu0 3
        %1951 = vperm.xlu0 %1950, %v1928
        %v1952 = vpop.permute.xlu0 %1951
        %1953 = vset.pattern.permute.xlu0 3
        %1954 = vperm.xlu0 %1953, %v1929
        %v1955 = vpop.permute.xlu0 %1954
        %1956 = vset.pattern.permute.xlu0 3
        %1957 = vperm.xlu0 %1956, %v1930
        %v1958 = vpop.permute.xlu0 %1957
        %1959 = vset.pattern.permute.xlu0 3
        %1960 = vperm.xlu0 %1959, %v1931
        %v1961 = vpop.permute.xlu0 %1960
        %1962 = vset.pattern.permute.xlu0 3
        %1963 = vperm.xlu0 %1962, %v1932
        %v1964 = vpop.permute.xlu0 %1963
        %1965 = vset.pattern.permute.xlu0 3
        %1966 = vperm.xlu0 %1965, %v1933
        %v1967 = vpop.permute.xlu0 %1966
        %1968 = vset.pattern.permute.xlu0 3
        %1969 = vperm.xlu0 %1968, %v1934
        %v1970 = vpop.permute.xlu0 %1969
        %1971 = vset.pattern.permute.xlu0 3
        %1972 = vperm.xlu0 %1971, %v1935
        %v1973 = vpop.permute.xlu0 %1972
        %1974 = vset.pattern.permute.xlu0 3
        %1975 = vperm.xlu0 %1974, %v1936
        %v1976 = vpop.permute.xlu0 %1975
        %1977 = vset.pattern.permute.xlu0 3
        %1978 = vperm.xlu0 %1977, %v1937
        %v1979 = vpop.permute.xlu0 %1978
        %1980 = vset.pattern.permute.xlu0 3
        %1981 = vperm.xlu0 %1980, %v1938
        %v1982 = vpop.permute.xlu0 %1981
        %1983 = vset.pattern.permute.xlu0 3
        %1984 = vperm.xlu0 %1983, %v1939
        %v1985 = vpop.permute.xlu0 %1984
        %1986 = vset.pattern.permute.xlu0 3
        %1987 = vperm.xlu0 %1986, %v1940
        %v1988 = vpop.permute.xlu0 %1987
        %vm1989 = vcmp.eq.s32.totalorder %v205, %v1943
        %vm1990 = vcmp.eq.s32.totalorder %v206, %v1943
        %vm1991 = vcmp.eq.s32.totalorder %v207, %v1943
        %vm1992 = vcmp.eq.s32.totalorder %v208, %v1943
        %vm1993 = vcmp.eq.s32.totalorder %v209, %v1943
        %vm1994 = vcmp.eq.s32.totalorder %v210, %v1943
        %vm1995 = vcmp.eq.s32.totalorder %v211, %v1943
        %vm1996 = vcmp.eq.s32.totalorder %v212, %v1943
        %vm1997 = vcmp.eq.s32.totalorder %v205, %v1946
        %vm1998 = vcmp.eq.s32.totalorder %v206, %v1946
        %vm1999 = vcmp.eq.s32.totalorder %v207, %v1946
        %vm2000 = vcmp.eq.s32.totalorder %v208, %v1946
        %vm2001 = vcmp.eq.s32.totalorder %v209, %v1946
        %vm2002 = vcmp.eq.s32.totalorder %v210, %v1946
        %vm2003 = vcmp.eq.s32.totalorder %v211, %v1946
        %vm2004 = vcmp.eq.s32.totalorder %v212, %v1946
        %vm2005 = vcmp.eq.s32.totalorder %v205, %v1949
        %vm2006 = vcmp.eq.s32.totalorder %v206, %v1949
        %vm2007 = vcmp.eq.s32.totalorder %v207, %v1949
        %vm2008 = vcmp.eq.s32.totalorder %v208, %v1949
        %vm2009 = vcmp.eq.s32.totalorder %v209, %v1949
        %vm2010 = vcmp.eq.s32.totalorder %v210, %v1949
        %vm2011 = vcmp.eq.s32.totalorder %v211, %v1949
        %vm2012 = vcmp.eq.s32.totalorder %v212, %v1949
        %vm2013 = vcmp.eq.s32.totalorder %v205, %v1952
        %vm2014 = vcmp.eq.s32.totalorder %v206, %v1952
        %vm2015 = vcmp.eq.s32.totalorder %v207, %v1952
        %vm2016 = vcmp.eq.s32.totalorder %v208, %v1952
        %vm2017 = vcmp.eq.s32.totalorder %v209, %v1952
        %vm2018 = vcmp.eq.s32.totalorder %v210, %v1952
        %vm2019 = vcmp.eq.s32.totalorder %v211, %v1952
        %vm2020 = vcmp.eq.s32.totalorder %v212, %v1952
        %vm2021 = vcmp.eq.s32.totalorder %v205, %v1955
        %vm2022 = vcmp.eq.s32.totalorder %v206, %v1955
        %vm2023 = vcmp.eq.s32.totalorder %v207, %v1955
        %vm2024 = vcmp.eq.s32.totalorder %v208, %v1955
        %vm2025 = vcmp.eq.s32.totalorder %v209, %v1955
        %vm2026 = vcmp.eq.s32.totalorder %v210, %v1955
        %vm2027 = vcmp.eq.s32.totalorder %v211, %v1955
        %vm2028 = vcmp.eq.s32.totalorder %v212, %v1955
        %vm2029 = vcmp.eq.s32.totalorder %v205, %v1958
        %vm2030 = vcmp.eq.s32.totalorder %v206, %v1958
        %vm2031 = vcmp.eq.s32.totalorder %v207, %v1958
        %vm2032 = vcmp.eq.s32.totalorder %v208, %v1958
        %vm2033 = vcmp.eq.s32.totalorder %v209, %v1958
        %vm2034 = vcmp.eq.s32.totalorder %v210, %v1958
        %vm2035 = vcmp.eq.s32.totalorder %v211, %v1958
        %vm2036 = vcmp.eq.s32.totalorder %v212, %v1958
        %vm2037 = vcmp.eq.s32.totalorder %v205, %v1961
        %vm2038 = vcmp.eq.s32.totalorder %v206, %v1961
        %vm2039 = vcmp.eq.s32.totalorder %v207, %v1961
        %vm2040 = vcmp.eq.s32.totalorder %v208, %v1961
        %vm2041 = vcmp.eq.s32.totalorder %v209, %v1961
        %vm2042 = vcmp.eq.s32.totalorder %v210, %v1961
        %vm2043 = vcmp.eq.s32.totalorder %v211, %v1961
        %vm2044 = vcmp.eq.s32.totalorder %v212, %v1961
        %vm2045 = vcmp.eq.s32.totalorder %v205, %v1964
        %vm2046 = vcmp.eq.s32.totalorder %v206, %v1964
        %vm2047 = vcmp.eq.s32.totalorder %v207, %v1964
        %vm2048 = vcmp.eq.s32.totalorder %v208, %v1964
        %vm2049 = vcmp.eq.s32.totalorder %v209, %v1964
        %vm2050 = vcmp.eq.s32.totalorder %v210, %v1964
        %vm2051 = vcmp.eq.s32.totalorder %v211, %v1964
        %vm2052 = vcmp.eq.s32.totalorder %v212, %v1964
        %vm2053 = vcmp.eq.s32.totalorder %v205, %v1967
        %vm2054 = vcmp.eq.s32.totalorder %v206, %v1967
        %vm2055 = vcmp.eq.s32.totalorder %v207, %v1967
        %vm2056 = vcmp.eq.s32.totalorder %v208, %v1967
        %vm2057 = vcmp.eq.s32.totalorder %v209, %v1967
        %vm2058 = vcmp.eq.s32.totalorder %v210, %v1967
        %vm2059 = vcmp.eq.s32.totalorder %v211, %v1967
        %vm2060 = vcmp.eq.s32.totalorder %v212, %v1967
        %vm2061 = vcmp.eq.s32.totalorder %v205, %v1970
        %vm2062 = vcmp.eq.s32.totalorder %v206, %v1970
        %vm2063 = vcmp.eq.s32.totalorder %v207, %v1970
        %vm2064 = vcmp.eq.s32.totalorder %v208, %v1970
        %vm2065 = vcmp.eq.s32.totalorder %v209, %v1970
        %vm2066 = vcmp.eq.s32.totalorder %v210, %v1970
        %vm2067 = vcmp.eq.s32.totalorder %v211, %v1970
        %vm2068 = vcmp.eq.s32.totalorder %v212, %v1970
        %vm2069 = vcmp.eq.s32.totalorder %v205, %v1973
        %vm2070 = vcmp.eq.s32.totalorder %v206, %v1973
        %vm2071 = vcmp.eq.s32.totalorder %v207, %v1973
        %vm2072 = vcmp.eq.s32.totalorder %v208, %v1973
        %vm2073 = vcmp.eq.s32.totalorder %v209, %v1973
        %vm2074 = vcmp.eq.s32.totalorder %v210, %v1973
        %vm2075 = vcmp.eq.s32.totalorder %v211, %v1973
        %vm2076 = vcmp.eq.s32.totalorder %v212, %v1973
        %vm2077 = vcmp.eq.s32.totalorder %v205, %v1976
        %vm2078 = vcmp.eq.s32.totalorder %v206, %v1976
        %vm2079 = vcmp.eq.s32.totalorder %v207, %v1976
        %vm2080 = vcmp.eq.s32.totalorder %v208, %v1976
        %vm2081 = vcmp.eq.s32.totalorder %v209, %v1976
        %vm2082 = vcmp.eq.s32.totalorder %v210, %v1976
        %vm2083 = vcmp.eq.s32.totalorder %v211, %v1976
        %vm2084 = vcmp.eq.s32.totalorder %v212, %v1976
        %vm2085 = vcmp.eq.s32.totalorder %v205, %v1979
        %vm2086 = vcmp.eq.s32.totalorder %v206, %v1979
        %vm2087 = vcmp.eq.s32.totalorder %v207, %v1979
        %vm2088 = vcmp.eq.s32.totalorder %v208, %v1979
        %vm2089 = vcmp.eq.s32.totalorder %v209, %v1979
        %vm2090 = vcmp.eq.s32.totalorder %v210, %v1979
        %vm2091 = vcmp.eq.s32.totalorder %v211, %v1979
        %vm2092 = vcmp.eq.s32.totalorder %v212, %v1979
        %vm2093 = vcmp.eq.s32.totalorder %v205, %v1982
        %vm2094 = vcmp.eq.s32.totalorder %v206, %v1982
        %vm2095 = vcmp.eq.s32.totalorder %v207, %v1982
        %vm2096 = vcmp.eq.s32.totalorder %v208, %v1982
        %vm2097 = vcmp.eq.s32.totalorder %v209, %v1982
        %vm2098 = vcmp.eq.s32.totalorder %v210, %v1982
        %vm2099 = vcmp.eq.s32.totalorder %v211, %v1982
        %vm2100 = vcmp.eq.s32.totalorder %v212, %v1982
        %vm2101 = vcmp.eq.s32.totalorder %v205, %v1985
        %vm2102 = vcmp.eq.s32.totalorder %v206, %v1985
        %vm2103 = vcmp.eq.s32.totalorder %v207, %v1985
        %vm2104 = vcmp.eq.s32.totalorder %v208, %v1985
        %vm2105 = vcmp.eq.s32.totalorder %v209, %v1985
        %vm2106 = vcmp.eq.s32.totalorder %v210, %v1985
        %vm2107 = vcmp.eq.s32.totalorder %v211, %v1985
        %vm2108 = vcmp.eq.s32.totalorder %v212, %v1985
        %vm2109 = vcmp.eq.s32.totalorder %v205, %v1988
        %vm2110 = vcmp.eq.s32.totalorder %v206, %v1988
        %vm2111 = vcmp.eq.s32.totalorder %v207, %v1988
        %vm2112 = vcmp.eq.s32.totalorder %v208, %v1988
        %vm2113 = vcmp.eq.s32.totalorder %v209, %v1988
        %vm2114 = vcmp.eq.s32.totalorder %v210, %v1988
        %vm2115 = vcmp.eq.s32.totalorder %v211, %v1988
        %vm2116 = vcmp.eq.s32.totalorder %v212, %v1988
        %v2117 = vsel %vm1989, 1, 0
        %v2118 = vsel %vm1990, 1, 0
        %v2119 = vsel %vm1991, 1, 0
        %v2120 = vsel %vm1992, 1, 0
        %v2121 = vsel %vm1993, 1, 0
        %v2122 = vsel %vm1994, 1, 0
        %v2123 = vsel %vm1995, 1, 0
        %v2124 = vsel %vm1996, 1, 0
        %v2125 = vsel %vm1997, 1, 0
        %v2126 = vsel %vm1998, 1, 0
        %v2127 = vsel %vm1999, 1, 0
        %v2128 = vsel %vm2000, 1, 0
        %v2129 = vsel %vm2001, 1, 0
        %v2130 = vsel %vm2002, 1, 0
        %v2131 = vsel %vm2003, 1, 0
        %v2132 = vsel %vm2004, 1, 0
        %v2133 = vsel %vm2005, 1, 0
        %v2134 = vsel %vm2006, 1, 0
        %v2135 = vsel %vm2007, 1, 0
        %v2136 = vsel %vm2008, 1, 0
        %v2137 = vsel %vm2009, 1, 0
        %v2138 = vsel %vm2010, 1, 0
        %v2139 = vsel %vm2011, 1, 0
        %v2140 = vsel %vm2012, 1, 0
        %v2141 = vsel %vm2013, 1, 0
        %v2142 = vsel %vm2014, 1, 0
        %v2143 = vsel %vm2015, 1, 0
        %v2144 = vsel %vm2016, 1, 0
        %v2145 = vsel %vm2017, 1, 0
        %v2146 = vsel %vm2018, 1, 0
        %v2147 = vsel %vm2019, 1, 0
        %v2148 = vsel %vm2020, 1, 0
        %v2149 = vsel %vm2021, 1, 0
        %v2150 = vsel %vm2022, 1, 0
        %v2151 = vsel %vm2023, 1, 0
        %v2152 = vsel %vm2024, 1, 0
        %v2153 = vsel %vm2025, 1, 0
        %v2154 = vsel %vm2026, 1, 0
        %v2155 = vsel %vm2027, 1, 0
        %v2156 = vsel %vm2028, 1, 0
        %v2157 = vsel %vm2029, 1, 0
        %v2158 = vsel %vm2030, 1, 0
        %v2159 = vsel %vm2031, 1, 0
        %v2160 = vsel %vm2032, 1, 0
        %v2161 = vsel %vm2033, 1, 0
        %v2162 = vsel %vm2034, 1, 0
        %v2163 = vsel %vm2035, 1, 0
        %v2164 = vsel %vm2036, 1, 0
        %v2165 = vsel %vm2037, 1, 0
        %v2166 = vsel %vm2038, 1, 0
        %v2167 = vsel %vm2039, 1, 0
        %v2168 = vsel %vm2040, 1, 0
        %v2169 = vsel %vm2041, 1, 0
        %v2170 = vsel %vm2042, 1, 0
        %v2171 = vsel %vm2043, 1, 0
        %v2172 = vsel %vm2044, 1, 0
        %v2173 = vsel %vm2045, 1, 0
        %v2174 = vsel %vm2046, 1, 0
        %v2175 = vsel %vm2047, 1, 0
        %v2176 = vsel %vm2048, 1, 0
        %v2177 = vsel %vm2049, 1, 0
        %v2178 = vsel %vm2050, 1, 0
        %v2179 = vsel %vm2051, 1, 0
        %v2180 = vsel %vm2052, 1, 0
        %v2181 = vsel %vm2053, 1, 0
        %v2182 = vsel %vm2054, 1, 0
        %v2183 = vsel %vm2055, 1, 0
        %v2184 = vsel %vm2056, 1, 0
        %v2185 = vsel %vm2057, 1, 0
        %v2186 = vsel %vm2058, 1, 0
        %v2187 = vsel %vm2059, 1, 0
        %v2188 = vsel %vm2060, 1, 0
        %v2189 = vsel %vm2061, 1, 0
        %v2190 = vsel %vm2062, 1, 0
        %v2191 = vsel %vm2063, 1, 0
        %v2192 = vsel %vm2064, 1, 0
        %v2193 = vsel %vm2065, 1, 0
        %v2194 = vsel %vm2066, 1, 0
        %v2195 = vsel %vm2067, 1, 0
        %v2196 = vsel %vm2068, 1, 0
        %v2197 = vsel %vm2069, 1, 0
        %v2198 = vsel %vm2070, 1, 0
        %v2199 = vsel %vm2071, 1, 0
        %v2200 = vsel %vm2072, 1, 0
        %v2201 = vsel %vm2073, 1, 0
        %v2202 = vsel %vm2074, 1, 0
        %v2203 = vsel %vm2075, 1, 0
        %v2204 = vsel %vm2076, 1, 0
        %v2205 = vsel %vm2077, 1, 0
        %v2206 = vsel %vm2078, 1, 0
        %v2207 = vsel %vm2079, 1, 0
        %v2208 = vsel %vm2080, 1, 0
        %v2209 = vsel %vm2081, 1, 0
        %v2210 = vsel %vm2082, 1, 0
        %v2211 = vsel %vm2083, 1, 0
        %v2212 = vsel %vm2084, 1, 0
        %v2213 = vsel %vm2085, 1, 0
        %v2214 = vsel %vm2086, 1, 0
        %v2215 = vsel %vm2087, 1, 0
        %v2216 = vsel %vm2088, 1, 0
        %v2217 = vsel %vm2089, 1, 0
        %v2218 = vsel %vm2090, 1, 0
        %v2219 = vsel %vm2091, 1, 0
        %v2220 = vsel %vm2092, 1, 0
        %v2221 = vsel %vm2093, 1, 0
        %v2222 = vsel %vm2094, 1, 0
        %v2223 = vsel %vm2095, 1, 0
        %v2224 = vsel %vm2096, 1, 0
        %v2225 = vsel %vm2097, 1, 0
        %v2226 = vsel %vm2098, 1, 0
        %v2227 = vsel %vm2099, 1, 0
        %v2228 = vsel %vm2100, 1, 0
        %v2229 = vsel %vm2101, 1, 0
        %v2230 = vsel %vm2102, 1, 0
        %v2231 = vsel %vm2103, 1, 0
        %v2232 = vsel %vm2104, 1, 0
        %v2233 = vsel %vm2105, 1, 0
        %v2234 = vsel %vm2106, 1, 0
        %v2235 = vsel %vm2107, 1, 0
        %v2236 = vsel %vm2108, 1, 0
        %v2237 = vsel %vm2109, 1, 0
        %v2238 = vsel %vm2110, 1, 0
        %v2239 = vsel %vm2111, 1, 0
        %v2240 = vsel %vm2112, 1, 0
        %v2241 = vsel %vm2113, 1, 0
        %v2242 = vsel %vm2114, 1, 0
        %v2243 = vsel %vm2115, 1, 0
        %v2244 = vsel %vm2116, 1, 0
        %v2245 = vcvt.s32.f32 %v2117
        %v2246 = vcvt.s32.f32 %v2118
        %v2247 = vcvt.s32.f32 %v2119
        %v2248 = vcvt.s32.f32 %v2120
        %v2249 = vcvt.s32.f32 %v2121
        %v2250 = vcvt.s32.f32 %v2122
        %v2251 = vcvt.s32.f32 %v2123
        %v2252 = vcvt.s32.f32 %v2124
        %v2253 = vcvt.s32.f32 %v2125
        %v2254 = vcvt.s32.f32 %v2126
        %v2255 = vcvt.s32.f32 %v2127
        %v2256 = vcvt.s32.f32 %v2128
        %v2257 = vcvt.s32.f32 %v2129
        %v2258 = vcvt.s32.f32 %v2130
        %v2259 = vcvt.s32.f32 %v2131
        %v2260 = vcvt.s32.f32 %v2132
        %v2261 = vcvt.s32.f32 %v2133
        %v2262 = vcvt.s32.f32 %v2134
        %v2263 = vcvt.s32.f32 %v2135
        %v2264 = vcvt.s32.f32 %v2136
        %v2265 = vcvt.s32.f32 %v2137
        %v2266 = vcvt.s32.f32 %v2138
        %v2267 = vcvt.s32.f32 %v2139
        %v2268 = vcvt.s32.f32 %v2140
        %v2269 = vcvt.s32.f32 %v2141
        %v2270 = vcvt.s32.f32 %v2142
        %v2271 = vcvt.s32.f32 %v2143
        %v2272 = vcvt.s32.f32 %v2144
        %v2273 = vcvt.s32.f32 %v2145
        %v2274 = vcvt.s32.f32 %v2146
        %v2275 = vcvt.s32.f32 %v2147
        %v2276 = vcvt.s32.f32 %v2148
        %v2277 = vcvt.s32.f32 %v2149
        %v2278 = vcvt.s32.f32 %v2150
        %v2279 = vcvt.s32.f32 %v2151
        %v2280 = vcvt.s32.f32 %v2152
        %v2281 = vcvt.s32.f32 %v2153
        %v2282 = vcvt.s32.f32 %v2154
        %v2283 = vcvt.s32.f32 %v2155
        %v2284 = vcvt.s32.f32 %v2156
        %v2285 = vcvt.s32.f32 %v2157
        %v2286 = vcvt.s32.f32 %v2158
        %v2287 = vcvt.s32.f32 %v2159
        %v2288 = vcvt.s32.f32 %v2160
        %v2289 = vcvt.s32.f32 %v2161
        %v2290 = vcvt.s32.f32 %v2162
        %v2291 = vcvt.s32.f32 %v2163
        %v2292 = vcvt.s32.f32 %v2164
        %v2293 = vcvt.s32.f32 %v2165
        %v2294 = vcvt.s32.f32 %v2166
        %v2295 = vcvt.s32.f32 %v2167
        %v2296 = vcvt.s32.f32 %v2168
        %v2297 = vcvt.s32.f32 %v2169
        %v2298 = vcvt.s32.f32 %v2170
        %v2299 = vcvt.s32.f32 %v2171
        %v2300 = vcvt.s32.f32 %v2172
        %v2301 = vcvt.s32.f32 %v2173
        %v2302 = vcvt.s32.f32 %v2174
        %v2303 = vcvt.s32.f32 %v2175
        %v2304 = vcvt.s32.f32 %v2176
        %v2305 = vcvt.s32.f32 %v2177
        %v2306 = vcvt.s32.f32 %v2178
        %v2307 = vcvt.s32.f32 %v2179
        %v2308 = vcvt.s32.f32 %v2180
        %v2309 = vcvt.s32.f32 %v2181
        %v2310 = vcvt.s32.f32 %v2182
        %v2311 = vcvt.s32.f32 %v2183
        %v2312 = vcvt.s32.f32 %v2184
        %v2313 = vcvt.s32.f32 %v2185
        %v2314 = vcvt.s32.f32 %v2186
        %v2315 = vcvt.s32.f32 %v2187
        %v2316 = vcvt.s32.f32 %v2188
        %v2317 = vcvt.s32.f32 %v2189
        %v2318 = vcvt.s32.f32 %v2190
        %v2319 = vcvt.s32.f32 %v2191
        %v2320 = vcvt.s32.f32 %v2192
        %v2321 = vcvt.s32.f32 %v2193
        %v2322 = vcvt.s32.f32 %v2194
        %v2323 = vcvt.s32.f32 %v2195
        %v2324 = vcvt.s32.f32 %v2196
        %v2325 = vcvt.s32.f32 %v2197
        %v2326 = vcvt.s32.f32 %v2198
        %v2327 = vcvt.s32.f32 %v2199
        %v2328 = vcvt.s32.f32 %v2200
        %v2329 = vcvt.s32.f32 %v2201
        %v2330 = vcvt.s32.f32 %v2202
        %v2331 = vcvt.s32.f32 %v2203
        %v2332 = vcvt.s32.f32 %v2204
        %v2333 = vcvt.s32.f32 %v2205
        %v2334 = vcvt.s32.f32 %v2206
        %v2335 = vcvt.s32.f32 %v2207
        %v2336 = vcvt.s32.f32 %v2208
        %v2337 = vcvt.s32.f32 %v2209
        %v2338 = vcvt.s32.f32 %v2210
        %v2339 = vcvt.s32.f32 %v2211
        %v2340 = vcvt.s32.f32 %v2212
        %v2341 = vcvt.s32.f32 %v2213
        %v2342 = vcvt.s32.f32 %v2214
        %v2343 = vcvt.s32.f32 %v2215
        %v2344 = vcvt.s32.f32 %v2216
        %v2345 = vcvt.s32.f32 %v2217
        %v2346 = vcvt.s32.f32 %v2218
        %v2347 = vcvt.s32.f32 %v2219
        %v2348 = vcvt.s32.f32 %v2220
        %v2349 = vcvt.s32.f32 %v2221
        %v2350 = vcvt.s32.f32 %v2222
        %v2351 = vcvt.s32.f32 %v2223
        %v2352 = vcvt.s32.f32 %v2224
        %v2353 = vcvt.s32.f32 %v2225
        %v2354 = vcvt.s32.f32 %v2226
        %v2355 = vcvt.s32.f32 %v2227
        %v2356 = vcvt.s32.f32 %v2228
        %v2357 = vcvt.s32.f32 %v2229
        %v2358 = vcvt.s32.f32 %v2230
        %v2359 = vcvt.s32.f32 %v2231
        %v2360 = vcvt.s32.f32 %v2232
        %v2361 = vcvt.s32.f32 %v2233
        %v2362 = vcvt.s32.f32 %v2234
        %v2363 = vcvt.s32.f32 %v2235
        %v2364 = vcvt.s32.f32 %v2236
        %v2365 = vcvt.s32.f32 %v2237
        %v2366 = vcvt.s32.f32 %v2238
        %v2367 = vcvt.s32.f32 %v2239
        %v2368 = vcvt.s32.f32 %v2240
        %v2369 = vcvt.s32.f32 %v2241
        %v2370 = vcvt.s32.f32 %v2242
        %v2371 = vcvt.s32.f32 %v2243
        %v2372 = vcvt.s32.f32 %v2244
        %v2373 = vadd.f32 %v1797, %v2245
        %v2374 = vadd.f32 %v1798, %v2246
        %v2375 = vadd.f32 %v1799, %v2247
        %v2376 = vadd.f32 %v1800, %v2248
        %v2377 = vadd.f32 %v1801, %v2249
        %v2378 = vadd.f32 %v1802, %v2250
        %v2379 = vadd.f32 %v1803, %v2251
        %v2380 = vadd.f32 %v1804, %v2252
        %v2381 = vadd.f32 %v1805, %v2253
        %v2382 = vadd.f32 %v1806, %v2254
        %v2383 = vadd.f32 %v1807, %v2255
        %v2384 = vadd.f32 %v1808, %v2256
        %v2385 = vadd.f32 %v1809, %v2257
        %v2386 = vadd.f32 %v1810, %v2258
        %v2387 = vadd.f32 %v1811, %v2259
        %v2388 = vadd.f32 %v1812, %v2260
        %v2389 = vadd.f32 %v1813, %v2261
        %v2390 = vadd.f32 %v1814, %v2262
        %v2391 = vadd.f32 %v1815, %v2263
        %v2392 = vadd.f32 %v1816, %v2264
        %v2393 = vadd.f32 %v1817, %v2265
        %v2394 = vadd.f32 %v1818, %v2266
        %v2395 = vadd.f32 %v1819, %v2267
        %v2396 = vadd.f32 %v1820, %v2268
        %v2397 = vadd.f32 %v1821, %v2269
        %v2398 = vadd.f32 %v1822, %v2270
        %v2399 = vadd.f32 %v1823, %v2271
        %v2400 = vadd.f32 %v1824, %v2272
        %v2401 = vadd.f32 %v1825, %v2273
        %v2402 = vadd.f32 %v1826, %v2274
        %v2403 = vadd.f32 %v1827, %v2275
        %v2404 = vadd.f32 %v1828, %v2276
        %v2405 = vadd.f32 %v1829, %v2277
        %v2406 = vadd.f32 %v1830, %v2278
        %v2407 = vadd.f32 %v1831, %v2279
        %v2408 = vadd.f32 %v1832, %v2280
        %v2409 = vadd.f32 %v1833, %v2281
        %v2410 = vadd.f32 %v1834, %v2282
        %v2411 = vadd.f32 %v1835, %v2283
        %v2412 = vadd.f32 %v1836, %v2284
        %v2413 = vadd.f32 %v1837, %v2285
        %v2414 = vadd.f32 %v1838, %v2286
        %v2415 = vadd.f32 %v1839, %v2287
        %v2416 = vadd.f32 %v1840, %v2288
        %v2417 = vadd.f32 %v1841, %v2289
        %v2418 = vadd.f32 %v1842, %v2290
        %v2419 = vadd.f32 %v1843, %v2291
        %v2420 = vadd.f32 %v1844, %v2292
        %v2421 = vadd.f32 %v1845, %v2293
        %v2422 = vadd.f32 %v1846, %v2294
        %v2423 = vadd.f32 %v1847, %v2295
        %v2424 = vadd.f32 %v1848, %v2296
        %v2425 = vadd.f32 %v1849, %v2297
        %v2426 = vadd.f32 %v1850, %v2298
        %v2427 = vadd.f32 %v1851, %v2299
        %v2428 = vadd.f32 %v1852, %v2300
        %v2429 = vadd.f32 %v1853, %v2301
        %v2430 = vadd.f32 %v1854, %v2302
        %v2431 = vadd.f32 %v1855, %v2303
        %v2432 = vadd.f32 %v1856, %v2304
        %v2433 = vadd.f32 %v1857, %v2305
        %v2434 = vadd.f32 %v1858, %v2306
        %v2435 = vadd.f32 %v1859, %v2307
        %v2436 = vadd.f32 %v1860, %v2308
        %v2437 = vadd.f32 %v1861, %v2309
        %v2438 = vadd.f32 %v1862, %v2310
        %v2439 = vadd.f32 %v1863, %v2311
        %v2440 = vadd.f32 %v1864, %v2312
        %v2441 = vadd.f32 %v1865, %v2313
        %v2442 = vadd.f32 %v1866, %v2314
        %v2443 = vadd.f32 %v1867, %v2315
        %v2444 = vadd.f32 %v1868, %v2316
        %v2445 = vadd.f32 %v1869, %v2317
        %v2446 = vadd.f32 %v1870, %v2318
        %v2447 = vadd.f32 %v1871, %v2319
        %v2448 = vadd.f32 %v1872, %v2320
        %v2449 = vadd.f32 %v1873, %v2321
        %v2450 = vadd.f32 %v1874, %v2322
        %v2451 = vadd.f32 %v1875, %v2323
        %v2452 = vadd.f32 %v1876, %v2324
        %v2453 = vadd.f32 %v1877, %v2325
        %v2454 = vadd.f32 %v1878, %v2326
        %v2455 = vadd.f32 %v1879, %v2327
        %v2456 = vadd.f32 %v1880, %v2328
        %v2457 = vadd.f32 %v1881, %v2329
        %v2458 = vadd.f32 %v1882, %v2330
        %v2459 = vadd.f32 %v1883, %v2331
        %v2460 = vadd.f32 %v1884, %v2332
        %v2461 = vadd.f32 %v1885, %v2333
        %v2462 = vadd.f32 %v1886, %v2334
        %v2463 = vadd.f32 %v1887, %v2335
        %v2464 = vadd.f32 %v1888, %v2336
        %v2465 = vadd.f32 %v1889, %v2337
        %v2466 = vadd.f32 %v1890, %v2338
        %v2467 = vadd.f32 %v1891, %v2339
        %v2468 = vadd.f32 %v1892, %v2340
        %v2469 = vadd.f32 %v1893, %v2341
        %v2470 = vadd.f32 %v1894, %v2342
        %v2471 = vadd.f32 %v1895, %v2343
        %v2472 = vadd.f32 %v1896, %v2344
        %v2473 = vadd.f32 %v1897, %v2345
        %v2474 = vadd.f32 %v1898, %v2346
        %v2475 = vadd.f32 %v1899, %v2347
        %v2476 = vadd.f32 %v1900, %v2348
        %v2477 = vadd.f32 %v1901, %v2349
        %v2478 = vadd.f32 %v1902, %v2350
        %v2479 = vadd.f32 %v1903, %v2351
        %v2480 = vadd.f32 %v1904, %v2352
        %v2481 = vadd.f32 %v1905, %v2353
        %v2482 = vadd.f32 %v1906, %v2354
        %v2483 = vadd.f32 %v1907, %v2355
        %v2484 = vadd.f32 %v1908, %v2356
        %v2485 = vadd.f32 %v1909, %v2357
        %v2486 = vadd.f32 %v1910, %v2358
        %v2487 = vadd.f32 %v1911, %v2359
        %v2488 = vadd.f32 %v1912, %v2360
        %v2489 = vadd.f32 %v1913, %v2361
        %v2490 = vadd.f32 %v1914, %v2362
        %v2491 = vadd.f32 %v1915, %v2363
        %v2492 = vadd.f32 %v1916, %v2364
        %v2493 = vadd.f32 %v1917, %v2365
        %v2494 = vadd.f32 %v1918, %v2366
        %v2495 = vadd.f32 %v1919, %v2367
        %v2496 = vadd.f32 %v1920, %v2368
        %v2497 = vadd.f32 %v1921, %v2369
        %v2498 = vadd.f32 %v1922, %v2370
        %v2499 = vadd.f32 %v1923, %v2371
        %v2500 = vadd.f32 %v1924, %v2372
        %v2501 = vadd.s32 %v188, 256
        %v2502 = vadd.s32 %v189, 256
        %v2503 = vadd.s32 %v190, 256
        %v2504 = vadd.s32 %v191, 256
        %v2505 = vadd.s32 %v192, 256
        %v2506 = vadd.s32 %v193, 256
        %v2507 = vadd.s32 %v194, 256
        %v2508 = vadd.s32 %v195, 256
        %v2509 = vadd.s32 %v196, 256
        %v2510 = vadd.s32 %v197, 256
        %v2511 = vadd.s32 %v198, 256
        %v2512 = vadd.s32 %v199, 256
        %v2513 = vadd.s32 %v200, 256
        %v2514 = vadd.s32 %v201, 256
        %v2515 = vadd.s32 %v202, 256
        %v2516 = vadd.s32 %v203, 256
        %2517 = vset.pattern.permute.xlu0 4
        %2518 = vperm.xlu0 %2517, %v2501
        %v2519 = vpop.permute.xlu0 %2518
        %2520 = vset.pattern.permute.xlu0 4
        %2521 = vperm.xlu0 %2520, %v2502
        %v2522 = vpop.permute.xlu0 %2521
        %2523 = vset.pattern.permute.xlu0 4
        %2524 = vperm.xlu0 %2523, %v2503
        %v2525 = vpop.permute.xlu0 %2524
        %2526 = vset.pattern.permute.xlu0 4
        %2527 = vperm.xlu0 %2526, %v2504
        %v2528 = vpop.permute.xlu0 %2527
        %2529 = vset.pattern.permute.xlu0 4
        %2530 = vperm.xlu0 %2529, %v2505
        %v2531 = vpop.permute.xlu0 %2530
        %2532 = vset.pattern.permute.xlu0 4
        %2533 = vperm.xlu0 %2532, %v2506
        %v2534 = vpop.permute.xlu0 %2533
        %2535 = vset.pattern.permute.xlu0 4
        %2536 = vperm.xlu0 %2535, %v2507
        %v2537 = vpop.permute.xlu0 %2536
        %2538 = vset.pattern.permute.xlu0 4
        %2539 = vperm.xlu0 %2538, %v2508
        %v2540 = vpop.permute.xlu0 %2539
        %2541 = vset.pattern.permute.xlu0 4
        %2542 = vperm.xlu0 %2541, %v2509
        %v2543 = vpop.permute.xlu0 %2542
        %2544 = vset.pattern.permute.xlu0 4
        %2545 = vperm.xlu0 %2544, %v2510
        %v2546 = vpop.permute.xlu0 %2545
        %2547 = vset.pattern.permute.xlu0 4
        %2548 = vperm.xlu0 %2547, %v2511
        %v2549 = vpop.permute.xlu0 %2548
        %2550 = vset.pattern.permute.xlu0 4
        %2551 = vperm.xlu0 %2550, %v2512
        %v2552 = vpop.permute.xlu0 %2551
        %2553 = vset.pattern.permute.xlu0 4
        %2554 = vperm.xlu0 %2553, %v2513
        %v2555 = vpop.permute.xlu0 %2554
        %2556 = vset.pattern.permute.xlu0 4
        %2557 = vperm.xlu0 %2556, %v2514
        %v2558 = vpop.permute.xlu0 %2557
        %2559 = vset.pattern.permute.xlu0 4
        %2560 = vperm.xlu0 %2559, %v2515
        %v2561 = vpop.permute.xlu0 %2560
        %2562 = vset.pattern.permute.xlu0 4
        %2563 = vperm.xlu0 %2562, %v2516
        %v2564 = vpop.permute.xlu0 %2563
        %vm2565 = vcmp.eq.s32.totalorder %v205, %v2519
        %vm2566 = vcmp.eq.s32.totalorder %v206, %v2519
        %vm2567 = vcmp.eq.s32.totalorder %v207, %v2519
        %vm2568 = vcmp.eq.s32.totalorder %v208, %v2519
        %vm2569 = vcmp.eq.s32.totalorder %v209, %v2519
        %vm2570 = vcmp.eq.s32.totalorder %v210, %v2519
        %vm2571 = vcmp.eq.s32.totalorder %v211, %v2519
        %vm2572 = vcmp.eq.s32.totalorder %v212, %v2519
        %vm2573 = vcmp.eq.s32.totalorder %v205, %v2522
        %vm2574 = vcmp.eq.s32.totalorder %v206, %v2522
        %vm2575 = vcmp.eq.s32.totalorder %v207, %v2522
        %vm2576 = vcmp.eq.s32.totalorder %v208, %v2522
        %vm2577 = vcmp.eq.s32.totalorder %v209, %v2522
        %vm2578 = vcmp.eq.s32.totalorder %v210, %v2522
        %vm2579 = vcmp.eq.s32.totalorder %v211, %v2522
        %vm2580 = vcmp.eq.s32.totalorder %v212, %v2522
        %vm2581 = vcmp.eq.s32.totalorder %v205, %v2525
        %vm2582 = vcmp.eq.s32.totalorder %v206, %v2525
        %vm2583 = vcmp.eq.s32.totalorder %v207, %v2525
        %vm2584 = vcmp.eq.s32.totalorder %v208, %v2525
        %vm2585 = vcmp.eq.s32.totalorder %v209, %v2525
        %vm2586 = vcmp.eq.s32.totalorder %v210, %v2525
        %vm2587 = vcmp.eq.s32.totalorder %v211, %v2525
        %vm2588 = vcmp.eq.s32.totalorder %v212, %v2525
        %vm2589 = vcmp.eq.s32.totalorder %v205, %v2528
        %vm2590 = vcmp.eq.s32.totalorder %v206, %v2528
        %vm2591 = vcmp.eq.s32.totalorder %v207, %v2528
        %vm2592 = vcmp.eq.s32.totalorder %v208, %v2528
        %vm2593 = vcmp.eq.s32.totalorder %v209, %v2528
        %vm2594 = vcmp.eq.s32.totalorder %v210, %v2528
        %vm2595 = vcmp.eq.s32.totalorder %v211, %v2528
        %vm2596 = vcmp.eq.s32.totalorder %v212, %v2528
        %vm2597 = vcmp.eq.s32.totalorder %v205, %v2531
        %vm2598 = vcmp.eq.s32.totalorder %v206, %v2531
        %vm2599 = vcmp.eq.s32.totalorder %v207, %v2531
        %vm2600 = vcmp.eq.s32.totalorder %v208, %v2531
        %vm2601 = vcmp.eq.s32.totalorder %v209, %v2531
        %vm2602 = vcmp.eq.s32.totalorder %v210, %v2531
        %vm2603 = vcmp.eq.s32.totalorder %v211, %v2531
        %vm2604 = vcmp.eq.s32.totalorder %v212, %v2531
        %vm2605 = vcmp.eq.s32.totalorder %v205, %v2534
        %vm2606 = vcmp.eq.s32.totalorder %v206, %v2534
        %vm2607 = vcmp.eq.s32.totalorder %v207, %v2534
        %vm2608 = vcmp.eq.s32.totalorder %v208, %v2534
        %vm2609 = vcmp.eq.s32.totalorder %v209, %v2534
        %vm2610 = vcmp.eq.s32.totalorder %v210, %v2534
        %vm2611 = vcmp.eq.s32.totalorder %v211, %v2534
        %vm2612 = vcmp.eq.s32.totalorder %v212, %v2534
        %vm2613 = vcmp.eq.s32.totalorder %v205, %v2537
        %vm2614 = vcmp.eq.s32.totalorder %v206, %v2537
        %vm2615 = vcmp.eq.s32.totalorder %v207, %v2537
        %vm2616 = vcmp.eq.s32.totalorder %v208, %v2537
        %vm2617 = vcmp.eq.s32.totalorder %v209, %v2537
        %vm2618 = vcmp.eq.s32.totalorder %v210, %v2537
        %vm2619 = vcmp.eq.s32.totalorder %v211, %v2537
        %vm2620 = vcmp.eq.s32.totalorder %v212, %v2537
        %vm2621 = vcmp.eq.s32.totalorder %v205, %v2540
        %vm2622 = vcmp.eq.s32.totalorder %v206, %v2540
        %vm2623 = vcmp.eq.s32.totalorder %v207, %v2540
        %vm2624 = vcmp.eq.s32.totalorder %v208, %v2540
        %vm2625 = vcmp.eq.s32.totalorder %v209, %v2540
        %vm2626 = vcmp.eq.s32.totalorder %v210, %v2540
        %vm2627 = vcmp.eq.s32.totalorder %v211, %v2540
        %vm2628 = vcmp.eq.s32.totalorder %v212, %v2540
        %vm2629 = vcmp.eq.s32.totalorder %v205, %v2543
        %vm2630 = vcmp.eq.s32.totalorder %v206, %v2543
        %vm2631 = vcmp.eq.s32.totalorder %v207, %v2543
        %vm2632 = vcmp.eq.s32.totalorder %v208, %v2543
        %vm2633 = vcmp.eq.s32.totalorder %v209, %v2543
        %vm2634 = vcmp.eq.s32.totalorder %v210, %v2543
        %vm2635 = vcmp.eq.s32.totalorder %v211, %v2543
        %vm2636 = vcmp.eq.s32.totalorder %v212, %v2543
        %vm2637 = vcmp.eq.s32.totalorder %v205, %v2546
        %vm2638 = vcmp.eq.s32.totalorder %v206, %v2546
        %vm2639 = vcmp.eq.s32.totalorder %v207, %v2546
        %vm2640 = vcmp.eq.s32.totalorder %v208, %v2546
        %vm2641 = vcmp.eq.s32.totalorder %v209, %v2546
        %vm2642 = vcmp.eq.s32.totalorder %v210, %v2546
        %vm2643 = vcmp.eq.s32.totalorder %v211, %v2546
        %vm2644 = vcmp.eq.s32.totalorder %v212, %v2546
        %vm2645 = vcmp.eq.s32.totalorder %v205, %v2549
        %vm2646 = vcmp.eq.s32.totalorder %v206, %v2549
        %vm2647 = vcmp.eq.s32.totalorder %v207, %v2549
        %vm2648 = vcmp.eq.s32.totalorder %v208, %v2549
        %vm2649 = vcmp.eq.s32.totalorder %v209, %v2549
        %vm2650 = vcmp.eq.s32.totalorder %v210, %v2549
        %vm2651 = vcmp.eq.s32.totalorder %v211, %v2549
        %vm2652 = vcmp.eq.s32.totalorder %v212, %v2549
        %vm2653 = vcmp.eq.s32.totalorder %v205, %v2552
        %vm2654 = vcmp.eq.s32.totalorder %v206, %v2552
        %vm2655 = vcmp.eq.s32.totalorder %v207, %v2552
        %vm2656 = vcmp.eq.s32.totalorder %v208, %v2552
        %vm2657 = vcmp.eq.s32.totalorder %v209, %v2552
        %vm2658 = vcmp.eq.s32.totalorder %v210, %v2552
        %vm2659 = vcmp.eq.s32.totalorder %v211, %v2552
        %vm2660 = vcmp.eq.s32.totalorder %v212, %v2552
        %vm2661 = vcmp.eq.s32.totalorder %v205, %v2555
        %vm2662 = vcmp.eq.s32.totalorder %v206, %v2555
        %vm2663 = vcmp.eq.s32.totalorder %v207, %v2555
        %vm2664 = vcmp.eq.s32.totalorder %v208, %v2555
        %vm2665 = vcmp.eq.s32.totalorder %v209, %v2555
        %vm2666 = vcmp.eq.s32.totalorder %v210, %v2555
        %vm2667 = vcmp.eq.s32.totalorder %v211, %v2555
        %vm2668 = vcmp.eq.s32.totalorder %v212, %v2555
        %vm2669 = vcmp.eq.s32.totalorder %v205, %v2558
        %vm2670 = vcmp.eq.s32.totalorder %v206, %v2558
        %vm2671 = vcmp.eq.s32.totalorder %v207, %v2558
        %vm2672 = vcmp.eq.s32.totalorder %v208, %v2558
        %vm2673 = vcmp.eq.s32.totalorder %v209, %v2558
        %vm2674 = vcmp.eq.s32.totalorder %v210, %v2558
        %vm2675 = vcmp.eq.s32.totalorder %v211, %v2558
        %vm2676 = vcmp.eq.s32.totalorder %v212, %v2558
        %vm2677 = vcmp.eq.s32.totalorder %v205, %v2561
        %vm2678 = vcmp.eq.s32.totalorder %v206, %v2561
        %vm2679 = vcmp.eq.s32.totalorder %v207, %v2561
        %vm2680 = vcmp.eq.s32.totalorder %v208, %v2561
        %vm2681 = vcmp.eq.s32.totalorder %v209, %v2561
        %vm2682 = vcmp.eq.s32.totalorder %v210, %v2561
        %vm2683 = vcmp.eq.s32.totalorder %v211, %v2561
        %vm2684 = vcmp.eq.s32.totalorder %v212, %v2561
        %vm2685 = vcmp.eq.s32.totalorder %v205, %v2564
        %vm2686 = vcmp.eq.s32.totalorder %v206, %v2564
        %vm2687 = vcmp.eq.s32.totalorder %v207, %v2564
        %vm2688 = vcmp.eq.s32.totalorder %v208, %v2564
        %vm2689 = vcmp.eq.s32.totalorder %v209, %v2564
        %vm2690 = vcmp.eq.s32.totalorder %v210, %v2564
        %vm2691 = vcmp.eq.s32.totalorder %v211, %v2564
        %vm2692 = vcmp.eq.s32.totalorder %v212, %v2564
        %v2693 = vsel %vm2565, 1, 0
        %v2694 = vsel %vm2566, 1, 0
        %v2695 = vsel %vm2567, 1, 0
        %v2696 = vsel %vm2568, 1, 0
        %v2697 = vsel %vm2569, 1, 0
        %v2698 = vsel %vm2570, 1, 0
        %v2699 = vsel %vm2571, 1, 0
        %v2700 = vsel %vm2572, 1, 0
        %v2701 = vsel %vm2573, 1, 0
        %v2702 = vsel %vm2574, 1, 0
        %v2703 = vsel %vm2575, 1, 0
        %v2704 = vsel %vm2576, 1, 0
        %v2705 = vsel %vm2577, 1, 0
        %v2706 = vsel %vm2578, 1, 0
        %v2707 = vsel %vm2579, 1, 0
        %v2708 = vsel %vm2580, 1, 0
        %v2709 = vsel %vm2581, 1, 0
        %v2710 = vsel %vm2582, 1, 0
        %v2711 = vsel %vm2583, 1, 0
        %v2712 = vsel %vm2584, 1, 0
        %v2713 = vsel %vm2585, 1, 0
        %v2714 = vsel %vm2586, 1, 0
        %v2715 = vsel %vm2587, 1, 0
        %v2716 = vsel %vm2588, 1, 0
        %v2717 = vsel %vm2589, 1, 0
        %v2718 = vsel %vm2590, 1, 0
        %v2719 = vsel %vm2591, 1, 0
        %v2720 = vsel %vm2592, 1, 0
        %v2721 = vsel %vm2593, 1, 0
        %v2722 = vsel %vm2594, 1, 0
        %v2723 = vsel %vm2595, 1, 0
        %v2724 = vsel %vm2596, 1, 0
        %v2725 = vsel %vm2597, 1, 0
        %v2726 = vsel %vm2598, 1, 0
        %v2727 = vsel %vm2599, 1, 0
        %v2728 = vsel %vm2600, 1, 0
        %v2729 = vsel %vm2601, 1, 0
        %v2730 = vsel %vm2602, 1, 0
        %v2731 = vsel %vm2603, 1, 0
        %v2732 = vsel %vm2604, 1, 0
        %v2733 = vsel %vm2605, 1, 0
        %v2734 = vsel %vm2606, 1, 0
        %v2735 = vsel %vm2607, 1, 0
        %v2736 = vsel %vm2608, 1, 0
        %v2737 = vsel %vm2609, 1, 0
        %v2738 = vsel %vm2610, 1, 0
        %v2739 = vsel %vm2611, 1, 0
        %v2740 = vsel %vm2612, 1, 0
        %v2741 = vsel %vm2613, 1, 0
        %v2742 = vsel %vm2614, 1, 0
        %v2743 = vsel %vm2615, 1, 0
        %v2744 = vsel %vm2616, 1, 0
        %v2745 = vsel %vm2617, 1, 0
        %v2746 = vsel %vm2618, 1, 0
        %v2747 = vsel %vm2619, 1, 0
        %v2748 = vsel %vm2620, 1, 0
        %v2749 = vsel %vm2621, 1, 0
        %v2750 = vsel %vm2622, 1, 0
        %v2751 = vsel %vm2623, 1, 0
        %v2752 = vsel %vm2624, 1, 0
        %v2753 = vsel %vm2625, 1, 0
        %v2754 = vsel %vm2626, 1, 0
        %v2755 = vsel %vm2627, 1, 0
        %v2756 = vsel %vm2628, 1, 0
        %v2757 = vsel %vm2629, 1, 0
        %v2758 = vsel %vm2630, 1, 0
        %v2759 = vsel %vm2631, 1, 0
        %v2760 = vsel %vm2632, 1, 0
        %v2761 = vsel %vm2633, 1, 0
        %v2762 = vsel %vm2634, 1, 0
        %v2763 = vsel %vm2635, 1, 0
        %v2764 = vsel %vm2636, 1, 0
        %v2765 = vsel %vm2637, 1, 0
        %v2766 = vsel %vm2638, 1, 0
        %v2767 = vsel %vm2639, 1, 0
        %v2768 = vsel %vm2640, 1, 0
        %v2769 = vsel %vm2641, 1, 0
        %v2770 = vsel %vm2642, 1, 0
        %v2771 = vsel %vm2643, 1, 0
        %v2772 = vsel %vm2644, 1, 0
        %v2773 = vsel %vm2645, 1, 0
        %v2774 = vsel %vm2646, 1, 0
        %v2775 = vsel %vm2647, 1, 0
        %v2776 = vsel %vm2648, 1, 0
        %v2777 = vsel %vm2649, 1, 0
        %v2778 = vsel %vm2650, 1, 0
        %v2779 = vsel %vm2651, 1, 0
        %v2780 = vsel %vm2652, 1, 0
        %v2781 = vsel %vm2653, 1, 0
        %v2782 = vsel %vm2654, 1, 0
        %v2783 = vsel %vm2655, 1, 0
        %v2784 = vsel %vm2656, 1, 0
        %v2785 = vsel %vm2657, 1, 0
        %v2786 = vsel %vm2658, 1, 0
        %v2787 = vsel %vm2659, 1, 0
        %v2788 = vsel %vm2660, 1, 0
        %v2789 = vsel %vm2661, 1, 0
        %v2790 = vsel %vm2662, 1, 0
        %v2791 = vsel %vm2663, 1, 0
        %v2792 = vsel %vm2664, 1, 0
        %v2793 = vsel %vm2665, 1, 0
        %v2794 = vsel %vm2666, 1, 0
        %v2795 = vsel %vm2667, 1, 0
        %v2796 = vsel %vm2668, 1, 0
        %v2797 = vsel %vm2669, 1, 0
        %v2798 = vsel %vm2670, 1, 0
        %v2799 = vsel %vm2671, 1, 0
        %v2800 = vsel %vm2672, 1, 0
        %v2801 = vsel %vm2673, 1, 0
        %v2802 = vsel %vm2674, 1, 0
        %v2803 = vsel %vm2675, 1, 0
        %v2804 = vsel %vm2676, 1, 0
        %v2805 = vsel %vm2677, 1, 0
        %v2806 = vsel %vm2678, 1, 0
        %v2807 = vsel %vm2679, 1, 0
        %v2808 = vsel %vm2680, 1, 0
        %v2809 = vsel %vm2681, 1, 0
        %v2810 = vsel %vm2682, 1, 0
        %v2811 = vsel %vm2683, 1, 0
        %v2812 = vsel %vm2684, 1, 0
        %v2813 = vsel %vm2685, 1, 0
        %v2814 = vsel %vm2686, 1, 0
        %v2815 = vsel %vm2687, 1, 0
        %v2816 = vsel %vm2688, 1, 0
        %v2817 = vsel %vm2689, 1, 0
        %v2818 = vsel %vm2690, 1, 0
        %v2819 = vsel %vm2691, 1, 0
        %v2820 = vsel %vm2692, 1, 0
        %v2821 = vcvt.s32.f32 %v2693
        %v2822 = vcvt.s32.f32 %v2694
        %v2823 = vcvt.s32.f32 %v2695
        %v2824 = vcvt.s32.f32 %v2696
        %v2825 = vcvt.s32.f32 %v2697
        %v2826 = vcvt.s32.f32 %v2698
        %v2827 = vcvt.s32.f32 %v2699
        %v2828 = vcvt.s32.f32 %v2700
        %v2829 = vcvt.s32.f32 %v2701
        %v2830 = vcvt.s32.f32 %v2702
        %v2831 = vcvt.s32.f32 %v2703
        %v2832 = vcvt.s32.f32 %v2704
        %v2833 = vcvt.s32.f32 %v2705
        %v2834 = vcvt.s32.f32 %v2706
        %v2835 = vcvt.s32.f32 %v2707
        %v2836 = vcvt.s32.f32 %v2708
        %v2837 = vcvt.s32.f32 %v2709
        %v2838 = vcvt.s32.f32 %v2710
        %v2839 = vcvt.s32.f32 %v2711
        %v2840 = vcvt.s32.f32 %v2712
        %v2841 = vcvt.s32.f32 %v2713
        %v2842 = vcvt.s32.f32 %v2714
        %v2843 = vcvt.s32.f32 %v2715
        %v2844 = vcvt.s32.f32 %v2716
        %v2845 = vcvt.s32.f32 %v2717
        %v2846 = vcvt.s32.f32 %v2718
        %v2847 = vcvt.s32.f32 %v2719
        %v2848 = vcvt.s32.f32 %v2720
        %v2849 = vcvt.s32.f32 %v2721
        %v2850 = vcvt.s32.f32 %v2722
        %v2851 = vcvt.s32.f32 %v2723
        %v2852 = vcvt.s32.f32 %v2724
        %v2853 = vcvt.s32.f32 %v2725
        %v2854 = vcvt.s32.f32 %v2726
        %v2855 = vcvt.s32.f32 %v2727
        %v2856 = vcvt.s32.f32 %v2728
        %v2857 = vcvt.s32.f32 %v2729
        %v2858 = vcvt.s32.f32 %v2730
        %v2859 = vcvt.s32.f32 %v2731
        %v2860 = vcvt.s32.f32 %v2732
        %v2861 = vcvt.s32.f32 %v2733
        %v2862 = vcvt.s32.f32 %v2734
        %v2863 = vcvt.s32.f32 %v2735
        %v2864 = vcvt.s32.f32 %v2736
        %v2865 = vcvt.s32.f32 %v2737
        %v2866 = vcvt.s32.f32 %v2738
        %v2867 = vcvt.s32.f32 %v2739
        %v2868 = vcvt.s32.f32 %v2740
        %v2869 = vcvt.s32.f32 %v2741
        %v2870 = vcvt.s32.f32 %v2742
        %v2871 = vcvt.s32.f32 %v2743
        %v2872 = vcvt.s32.f32 %v2744
        %v2873 = vcvt.s32.f32 %v2745
        %v2874 = vcvt.s32.f32 %v2746
        %v2875 = vcvt.s32.f32 %v2747
        %v2876 = vcvt.s32.f32 %v2748
        %v2877 = vcvt.s32.f32 %v2749
        %v2878 = vcvt.s32.f32 %v2750
        %v2879 = vcvt.s32.f32 %v2751
        %v2880 = vcvt.s32.f32 %v2752
        %v2881 = vcvt.s32.f32 %v2753
        %v2882 = vcvt.s32.f32 %v2754
        %v2883 = vcvt.s32.f32 %v2755
        %v2884 = vcvt.s32.f32 %v2756
        %v2885 = vcvt.s32.f32 %v2757
        %v2886 = vcvt.s32.f32 %v2758
        %v2887 = vcvt.s32.f32 %v2759
        %v2888 = vcvt.s32.f32 %v2760
        %v2889 = vcvt.s32.f32 %v2761
        %v2890 = vcvt.s32.f32 %v2762
        %v2891 = vcvt.s32.f32 %v2763
        %v2892 = vcvt.s32.f32 %v2764
        %v2893 = vcvt.s32.f32 %v2765
        %v2894 = vcvt.s32.f32 %v2766
        %v2895 = vcvt.s32.f32 %v2767
        %v2896 = vcvt.s32.f32 %v2768
        %v2897 = vcvt.s32.f32 %v2769
        %v2898 = vcvt.s32.f32 %v2770
        %v2899 = vcvt.s32.f32 %v2771
        %v2900 = vcvt.s32.f32 %v2772
        %v2901 = vcvt.s32.f32 %v2773
        %v2902 = vcvt.s32.f32 %v2774
        %v2903 = vcvt.s32.f32 %v2775
        %v2904 = vcvt.s32.f32 %v2776
        %v2905 = vcvt.s32.f32 %v2777
        %v2906 = vcvt.s32.f32 %v2778
        %v2907 = vcvt.s32.f32 %v2779
        %v2908 = vcvt.s32.f32 %v2780
        %v2909 = vcvt.s32.f32 %v2781
        %v2910 = vcvt.s32.f32 %v2782
        %v2911 = vcvt.s32.f32 %v2783
        %v2912 = vcvt.s32.f32 %v2784
        %v2913 = vcvt.s32.f32 %v2785
        %v2914 = vcvt.s32.f32 %v2786
        %v2915 = vcvt.s32.f32 %v2787
        %v2916 = vcvt.s32.f32 %v2788
        %v2917 = vcvt.s32.f32 %v2789
        %v2918 = vcvt.s32.f32 %v2790
        %v2919 = vcvt.s32.f32 %v2791
        %v2920 = vcvt.s32.f32 %v2792
        %v2921 = vcvt.s32.f32 %v2793
        %v2922 = vcvt.s32.f32 %v2794
        %v2923 = vcvt.s32.f32 %v2795
        %v2924 = vcvt.s32.f32 %v2796
        %v2925 = vcvt.s32.f32 %v2797
        %v2926 = vcvt.s32.f32 %v2798
        %v2927 = vcvt.s32.f32 %v2799
        %v2928 = vcvt.s32.f32 %v2800
        %v2929 = vcvt.s32.f32 %v2801
        %v2930 = vcvt.s32.f32 %v2802
        %v2931 = vcvt.s32.f32 %v2803
        %v2932 = vcvt.s32.f32 %v2804
        %v2933 = vcvt.s32.f32 %v2805
        %v2934 = vcvt.s32.f32 %v2806
        %v2935 = vcvt.s32.f32 %v2807
        %v2936 = vcvt.s32.f32 %v2808
        %v2937 = vcvt.s32.f32 %v2809
        %v2938 = vcvt.s32.f32 %v2810
        %v2939 = vcvt.s32.f32 %v2811
        %v2940 = vcvt.s32.f32 %v2812
        %v2941 = vcvt.s32.f32 %v2813
        %v2942 = vcvt.s32.f32 %v2814
        %v2943 = vcvt.s32.f32 %v2815
        %v2944 = vcvt.s32.f32 %v2816
        %v2945 = vcvt.s32.f32 %v2817
        %v2946 = vcvt.s32.f32 %v2818
        %v2947 = vcvt.s32.f32 %v2819
        %v2948 = vcvt.s32.f32 %v2820
        %v2949 = vadd.f32 %v2373, %v2821
        %v2950 = vadd.f32 %v2374, %v2822
        %v2951 = vadd.f32 %v2375, %v2823
        %v2952 = vadd.f32 %v2376, %v2824
        %v2953 = vadd.f32 %v2377, %v2825
        %v2954 = vadd.f32 %v2378, %v2826
        %v2955 = vadd.f32 %v2379, %v2827
        %v2956 = vadd.f32 %v2380, %v2828
        %v2957 = vadd.f32 %v2381, %v2829
        %v2958 = vadd.f32 %v2382, %v2830
        %v2959 = vadd.f32 %v2383, %v2831
        %v2960 = vadd.f32 %v2384, %v2832
        %v2961 = vadd.f32 %v2385, %v2833
        %v2962 = vadd.f32 %v2386, %v2834
        %v2963 = vadd.f32 %v2387, %v2835
        %v2964 = vadd.f32 %v2388, %v2836
        %v2965 = vadd.f32 %v2389, %v2837
        %v2966 = vadd.f32 %v2390, %v2838
        %v2967 = vadd.f32 %v2391, %v2839
        %v2968 = vadd.f32 %v2392, %v2840
        %v2969 = vadd.f32 %v2393, %v2841
        %v2970 = vadd.f32 %v2394, %v2842
        %v2971 = vadd.f32 %v2395, %v2843
        %v2972 = vadd.f32 %v2396, %v2844
        %v2973 = vadd.f32 %v2397, %v2845
        %v2974 = vadd.f32 %v2398, %v2846
        %v2975 = vadd.f32 %v2399, %v2847
        %v2976 = vadd.f32 %v2400, %v2848
        %v2977 = vadd.f32 %v2401, %v2849
        %v2978 = vadd.f32 %v2402, %v2850
        %v2979 = vadd.f32 %v2403, %v2851
        %v2980 = vadd.f32 %v2404, %v2852
        %v2981 = vadd.f32 %v2405, %v2853
        %v2982 = vadd.f32 %v2406, %v2854
        %v2983 = vadd.f32 %v2407, %v2855
        %v2984 = vadd.f32 %v2408, %v2856
        %v2985 = vadd.f32 %v2409, %v2857
        %v2986 = vadd.f32 %v2410, %v2858
        %v2987 = vadd.f32 %v2411, %v2859
        %v2988 = vadd.f32 %v2412, %v2860
        %v2989 = vadd.f32 %v2413, %v2861
        %v2990 = vadd.f32 %v2414, %v2862
        %v2991 = vadd.f32 %v2415, %v2863
        %v2992 = vadd.f32 %v2416, %v2864
        %v2993 = vadd.f32 %v2417, %v2865
        %v2994 = vadd.f32 %v2418, %v2866
        %v2995 = vadd.f32 %v2419, %v2867
        %v2996 = vadd.f32 %v2420, %v2868
        %v2997 = vadd.f32 %v2421, %v2869
        %v2998 = vadd.f32 %v2422, %v2870
        %v2999 = vadd.f32 %v2423, %v2871
        %v3000 = vadd.f32 %v2424, %v2872
        %v3001 = vadd.f32 %v2425, %v2873
        %v3002 = vadd.f32 %v2426, %v2874
        %v3003 = vadd.f32 %v2427, %v2875
        %v3004 = vadd.f32 %v2428, %v2876
        %v3005 = vadd.f32 %v2429, %v2877
        %v3006 = vadd.f32 %v2430, %v2878
        %v3007 = vadd.f32 %v2431, %v2879
        %v3008 = vadd.f32 %v2432, %v2880
        %v3009 = vadd.f32 %v2433, %v2881
        %v3010 = vadd.f32 %v2434, %v2882
        %v3011 = vadd.f32 %v2435, %v2883
        %v3012 = vadd.f32 %v2436, %v2884
        %v3013 = vadd.f32 %v2437, %v2885
        %v3014 = vadd.f32 %v2438, %v2886
        %v3015 = vadd.f32 %v2439, %v2887
        %v3016 = vadd.f32 %v2440, %v2888
        %v3017 = vadd.f32 %v2441, %v2889
        %v3018 = vadd.f32 %v2442, %v2890
        %v3019 = vadd.f32 %v2443, %v2891
        %v3020 = vadd.f32 %v2444, %v2892
        %v3021 = vadd.f32 %v2445, %v2893
        %v3022 = vadd.f32 %v2446, %v2894
        %v3023 = vadd.f32 %v2447, %v2895
        %v3024 = vadd.f32 %v2448, %v2896
        %v3025 = vadd.f32 %v2449, %v2897
        %v3026 = vadd.f32 %v2450, %v2898
        %v3027 = vadd.f32 %v2451, %v2899
        %v3028 = vadd.f32 %v2452, %v2900
        %v3029 = vadd.f32 %v2453, %v2901
        %v3030 = vadd.f32 %v2454, %v2902
        %v3031 = vadd.f32 %v2455, %v2903
        %v3032 = vadd.f32 %v2456, %v2904
        %v3033 = vadd.f32 %v2457, %v2905
        %v3034 = vadd.f32 %v2458, %v2906
        %v3035 = vadd.f32 %v2459, %v2907
        %v3036 = vadd.f32 %v2460, %v2908
        %v3037 = vadd.f32 %v2461, %v2909
        %v3038 = vadd.f32 %v2462, %v2910
        %v3039 = vadd.f32 %v2463, %v2911
        %v3040 = vadd.f32 %v2464, %v2912
        %v3041 = vadd.f32 %v2465, %v2913
        %v3042 = vadd.f32 %v2466, %v2914
        %v3043 = vadd.f32 %v2467, %v2915
        %v3044 = vadd.f32 %v2468, %v2916
        %v3045 = vadd.f32 %v2469, %v2917
        %v3046 = vadd.f32 %v2470, %v2918
        %v3047 = vadd.f32 %v2471, %v2919
        %v3048 = vadd.f32 %v2472, %v2920
        %v3049 = vadd.f32 %v2473, %v2921
        %v3050 = vadd.f32 %v2474, %v2922
        %v3051 = vadd.f32 %v2475, %v2923
        %v3052 = vadd.f32 %v2476, %v2924
        %v3053 = vadd.f32 %v2477, %v2925
        %v3054 = vadd.f32 %v2478, %v2926
        %v3055 = vadd.f32 %v2479, %v2927
        %v3056 = vadd.f32 %v2480, %v2928
        %v3057 = vadd.f32 %v2481, %v2929
        %v3058 = vadd.f32 %v2482, %v2930
        %v3059 = vadd.f32 %v2483, %v2931
        %v3060 = vadd.f32 %v2484, %v2932
        %v3061 = vadd.f32 %v2485, %v2933
        %v3062 = vadd.f32 %v2486, %v2934
        %v3063 = vadd.f32 %v2487, %v2935
        %v3064 = vadd.f32 %v2488, %v2936
        %v3065 = vadd.f32 %v2489, %v2937
        %v3066 = vadd.f32 %v2490, %v2938
        %v3067 = vadd.f32 %v2491, %v2939
        %v3068 = vadd.f32 %v2492, %v2940
        %v3069 = vadd.f32 %v2493, %v2941
        %v3070 = vadd.f32 %v2494, %v2942
        %v3071 = vadd.f32 %v2495, %v2943
        %v3072 = vadd.f32 %v2496, %v2944
        %v3073 = vadd.f32 %v2497, %v2945
        %v3074 = vadd.f32 %v2498, %v2946
        %v3075 = vadd.f32 %v2499, %v2947
        %v3076 = vadd.f32 %v2500, %v2948
        %v3077 = vadd.s32 %v188, 320
        %v3078 = vadd.s32 %v189, 320
        %v3079 = vadd.s32 %v190, 320
        %v3080 = vadd.s32 %v191, 320
        %v3081 = vadd.s32 %v192, 320
        %v3082 = vadd.s32 %v193, 320
        %v3083 = vadd.s32 %v194, 320
        %v3084 = vadd.s32 %v195, 320
        %v3085 = vadd.s32 %v196, 320
        %v3086 = vadd.s32 %v197, 320
        %v3087 = vadd.s32 %v198, 320
        %v3088 = vadd.s32 %v199, 320
        %v3089 = vadd.s32 %v200, 320
        %v3090 = vadd.s32 %v201, 320
        %v3091 = vadd.s32 %v202, 320
        %v3092 = vadd.s32 %v203, 320
        %3093 = vset.pattern.permute.xlu0 5
        %3094 = vperm.xlu0 %3093, %v3077
        %v3095 = vpop.permute.xlu0 %3094
        %3096 = vset.pattern.permute.xlu0 5
        %3097 = vperm.xlu0 %3096, %v3078
        %v3098 = vpop.permute.xlu0 %3097
        %3099 = vset.pattern.permute.xlu0 5
        %3100 = vperm.xlu0 %3099, %v3079
        %v3101 = vpop.permute.xlu0 %3100
        %3102 = vset.pattern.permute.xlu0 5
        %3103 = vperm.xlu0 %3102, %v3080
        %v3104 = vpop.permute.xlu0 %3103
        %3105 = vset.pattern.permute.xlu0 5
        %3106 = vperm.xlu0 %3105, %v3081
        %v3107 = vpop.permute.xlu0 %3106
        %3108 = vset.pattern.permute.xlu0 5
        %3109 = vperm.xlu0 %3108, %v3082
        %v3110 = vpop.permute.xlu0 %3109
        %3111 = vset.pattern.permute.xlu0 5
        %3112 = vperm.xlu0 %3111, %v3083
        %v3113 = vpop.permute.xlu0 %3112
        %3114 = vset.pattern.permute.xlu0 5
        %3115 = vperm.xlu0 %3114, %v3084
        %v3116 = vpop.permute.xlu0 %3115
        %3117 = vset.pattern.permute.xlu0 5
        %3118 = vperm.xlu0 %3117, %v3085
        %v3119 = vpop.permute.xlu0 %3118
        %3120 = vset.pattern.permute.xlu0 5
        %3121 = vperm.xlu0 %3120, %v3086
        %v3122 = vpop.permute.xlu0 %3121
        %3123 = vset.pattern.permute.xlu0 5
        %3124 = vperm.xlu0 %3123, %v3087
        %v3125 = vpop.permute.xlu0 %3124
        %3126 = vset.pattern.permute.xlu0 5
        %3127 = vperm.xlu0 %3126, %v3088
        %v3128 = vpop.permute.xlu0 %3127
        %3129 = vset.pattern.permute.xlu0 5
        %3130 = vperm.xlu0 %3129, %v3089
        %v3131 = vpop.permute.xlu0 %3130
        %3132 = vset.pattern.permute.xlu0 5
        %3133 = vperm.xlu0 %3132, %v3090
        %v3134 = vpop.permute.xlu0 %3133
        %3135 = vset.pattern.permute.xlu0 5
        %3136 = vperm.xlu0 %3135, %v3091
        %v3137 = vpop.permute.xlu0 %3136
        %3138 = vset.pattern.permute.xlu0 5
        %3139 = vperm.xlu0 %3138, %v3092
        %v3140 = vpop.permute.xlu0 %3139
        %vm3141 = vcmp.eq.s32.totalorder %v205, %v3095
        %vm3142 = vcmp.eq.s32.totalorder %v206, %v3095
        %vm3143 = vcmp.eq.s32.totalorder %v207, %v3095
        %vm3144 = vcmp.eq.s32.totalorder %v208, %v3095
        %vm3145 = vcmp.eq.s32.totalorder %v209, %v3095
        %vm3146 = vcmp.eq.s32.totalorder %v210, %v3095
        %vm3147 = vcmp.eq.s32.totalorder %v211, %v3095
        %vm3148 = vcmp.eq.s32.totalorder %v212, %v3095
        %vm3149 = vcmp.eq.s32.totalorder %v205, %v3098
        %vm3150 = vcmp.eq.s32.totalorder %v206, %v3098
        %vm3151 = vcmp.eq.s32.totalorder %v207, %v3098
        %vm3152 = vcmp.eq.s32.totalorder %v208, %v3098
        %vm3153 = vcmp.eq.s32.totalorder %v209, %v3098
        %vm3154 = vcmp.eq.s32.totalorder %v210, %v3098
        %vm3155 = vcmp.eq.s32.totalorder %v211, %v3098
        %vm3156 = vcmp.eq.s32.totalorder %v212, %v3098
        %vm3157 = vcmp.eq.s32.totalorder %v205, %v3101
        %vm3158 = vcmp.eq.s32.totalorder %v206, %v3101
        %vm3159 = vcmp.eq.s32.totalorder %v207, %v3101
        %vm3160 = vcmp.eq.s32.totalorder %v208, %v3101
        %vm3161 = vcmp.eq.s32.totalorder %v209, %v3101
        %vm3162 = vcmp.eq.s32.totalorder %v210, %v3101
        %vm3163 = vcmp.eq.s32.totalorder %v211, %v3101
        %vm3164 = vcmp.eq.s32.totalorder %v212, %v3101
        %vm3165 = vcmp.eq.s32.totalorder %v205, %v3104
        %vm3166 = vcmp.eq.s32.totalorder %v206, %v3104
        %vm3167 = vcmp.eq.s32.totalorder %v207, %v3104
        %vm3168 = vcmp.eq.s32.totalorder %v208, %v3104
        %vm3169 = vcmp.eq.s32.totalorder %v209, %v3104
        %vm3170 = vcmp.eq.s32.totalorder %v210, %v3104
        %vm3171 = vcmp.eq.s32.totalorder %v211, %v3104
        %vm3172 = vcmp.eq.s32.totalorder %v212, %v3104
        %vm3173 = vcmp.eq.s32.totalorder %v205, %v3107
        %vm3174 = vcmp.eq.s32.totalorder %v206, %v3107
        %vm3175 = vcmp.eq.s32.totalorder %v207, %v3107
        %vm3176 = vcmp.eq.s32.totalorder %v208, %v3107
        %vm3177 = vcmp.eq.s32.totalorder %v209, %v3107
        %vm3178 = vcmp.eq.s32.totalorder %v210, %v3107
        %vm3179 = vcmp.eq.s32.totalorder %v211, %v3107
        %vm3180 = vcmp.eq.s32.totalorder %v212, %v3107
        %vm3181 = vcmp.eq.s32.totalorder %v205, %v3110
        %vm3182 = vcmp.eq.s32.totalorder %v206, %v3110
        %vm3183 = vcmp.eq.s32.totalorder %v207, %v3110
        %vm3184 = vcmp.eq.s32.totalorder %v208, %v3110
        %vm3185 = vcmp.eq.s32.totalorder %v209, %v3110
        %vm3186 = vcmp.eq.s32.totalorder %v210, %v3110
        %vm3187 = vcmp.eq.s32.totalorder %v211, %v3110
        %vm3188 = vcmp.eq.s32.totalorder %v212, %v3110
        %vm3189 = vcmp.eq.s32.totalorder %v205, %v3113
        %vm3190 = vcmp.eq.s32.totalorder %v206, %v3113
        %vm3191 = vcmp.eq.s32.totalorder %v207, %v3113
        %vm3192 = vcmp.eq.s32.totalorder %v208, %v3113
        %vm3193 = vcmp.eq.s32.totalorder %v209, %v3113
        %vm3194 = vcmp.eq.s32.totalorder %v210, %v3113
        %vm3195 = vcmp.eq.s32.totalorder %v211, %v3113
        %vm3196 = vcmp.eq.s32.totalorder %v212, %v3113
        %vm3197 = vcmp.eq.s32.totalorder %v205, %v3116
        %vm3198 = vcmp.eq.s32.totalorder %v206, %v3116
        %vm3199 = vcmp.eq.s32.totalorder %v207, %v3116
        %vm3200 = vcmp.eq.s32.totalorder %v208, %v3116
        %vm3201 = vcmp.eq.s32.totalorder %v209, %v3116
        %vm3202 = vcmp.eq.s32.totalorder %v210, %v3116
        %vm3203 = vcmp.eq.s32.totalorder %v211, %v3116
        %vm3204 = vcmp.eq.s32.totalorder %v212, %v3116
        %vm3205 = vcmp.eq.s32.totalorder %v205, %v3119
        %vm3206 = vcmp.eq.s32.totalorder %v206, %v3119
        %vm3207 = vcmp.eq.s32.totalorder %v207, %v3119
        %vm3208 = vcmp.eq.s32.totalorder %v208, %v3119
        %vm3209 = vcmp.eq.s32.totalorder %v209, %v3119
        %vm3210 = vcmp.eq.s32.totalorder %v210, %v3119
        %vm3211 = vcmp.eq.s32.totalorder %v211, %v3119
        %vm3212 = vcmp.eq.s32.totalorder %v212, %v3119
        %vm3213 = vcmp.eq.s32.totalorder %v205, %v3122
        %vm3214 = vcmp.eq.s32.totalorder %v206, %v3122
        %vm3215 = vcmp.eq.s32.totalorder %v207, %v3122
        %vm3216 = vcmp.eq.s32.totalorder %v208, %v3122
        %vm3217 = vcmp.eq.s32.totalorder %v209, %v3122
        %vm3218 = vcmp.eq.s32.totalorder %v210, %v3122
        %vm3219 = vcmp.eq.s32.totalorder %v211, %v3122
        %vm3220 = vcmp.eq.s32.totalorder %v212, %v3122
        %vm3221 = vcmp.eq.s32.totalorder %v205, %v3125
        %vm3222 = vcmp.eq.s32.totalorder %v206, %v3125
        %vm3223 = vcmp.eq.s32.totalorder %v207, %v3125
        %vm3224 = vcmp.eq.s32.totalorder %v208, %v3125
        %vm3225 = vcmp.eq.s32.totalorder %v209, %v3125
        %vm3226 = vcmp.eq.s32.totalorder %v210, %v3125
        %vm3227 = vcmp.eq.s32.totalorder %v211, %v3125
        %vm3228 = vcmp.eq.s32.totalorder %v212, %v3125
        %vm3229 = vcmp.eq.s32.totalorder %v205, %v3128
        %vm3230 = vcmp.eq.s32.totalorder %v206, %v3128
        %vm3231 = vcmp.eq.s32.totalorder %v207, %v3128
        %vm3232 = vcmp.eq.s32.totalorder %v208, %v3128
        %vm3233 = vcmp.eq.s32.totalorder %v209, %v3128
        %vm3234 = vcmp.eq.s32.totalorder %v210, %v3128
        %vm3235 = vcmp.eq.s32.totalorder %v211, %v3128
        %vm3236 = vcmp.eq.s32.totalorder %v212, %v3128
        %vm3237 = vcmp.eq.s32.totalorder %v205, %v3131
        %vm3238 = vcmp.eq.s32.totalorder %v206, %v3131
        %vm3239 = vcmp.eq.s32.totalorder %v207, %v3131
        %vm3240 = vcmp.eq.s32.totalorder %v208, %v3131
        %vm3241 = vcmp.eq.s32.totalorder %v209, %v3131
        %vm3242 = vcmp.eq.s32.totalorder %v210, %v3131
        %vm3243 = vcmp.eq.s32.totalorder %v211, %v3131
        %vm3244 = vcmp.eq.s32.totalorder %v212, %v3131
        %vm3245 = vcmp.eq.s32.totalorder %v205, %v3134
        %vm3246 = vcmp.eq.s32.totalorder %v206, %v3134
        %vm3247 = vcmp.eq.s32.totalorder %v207, %v3134
        %vm3248 = vcmp.eq.s32.totalorder %v208, %v3134
        %vm3249 = vcmp.eq.s32.totalorder %v209, %v3134
        %vm3250 = vcmp.eq.s32.totalorder %v210, %v3134
        %vm3251 = vcmp.eq.s32.totalorder %v211, %v3134
        %vm3252 = vcmp.eq.s32.totalorder %v212, %v3134
        %vm3253 = vcmp.eq.s32.totalorder %v205, %v3137
        %vm3254 = vcmp.eq.s32.totalorder %v206, %v3137
        %vm3255 = vcmp.eq.s32.totalorder %v207, %v3137
        %vm3256 = vcmp.eq.s32.totalorder %v208, %v3137
        %vm3257 = vcmp.eq.s32.totalorder %v209, %v3137
        %vm3258 = vcmp.eq.s32.totalorder %v210, %v3137
        %vm3259 = vcmp.eq.s32.totalorder %v211, %v3137
        %vm3260 = vcmp.eq.s32.totalorder %v212, %v3137
        %vm3261 = vcmp.eq.s32.totalorder %v205, %v3140
        %vm3262 = vcmp.eq.s32.totalorder %v206, %v3140
        %vm3263 = vcmp.eq.s32.totalorder %v207, %v3140
        %vm3264 = vcmp.eq.s32.totalorder %v208, %v3140
        %vm3265 = vcmp.eq.s32.totalorder %v209, %v3140
        %vm3266 = vcmp.eq.s32.totalorder %v210, %v3140
        %vm3267 = vcmp.eq.s32.totalorder %v211, %v3140
        %vm3268 = vcmp.eq.s32.totalorder %v212, %v3140
        %v3269 = vsel %vm3141, 1, 0
        %v3270 = vsel %vm3142, 1, 0
        %v3271 = vsel %vm3143, 1, 0
        %v3272 = vsel %vm3144, 1, 0
        %v3273 = vsel %vm3145, 1, 0
        %v3274 = vsel %vm3146, 1, 0
        %v3275 = vsel %vm3147, 1, 0
        %v3276 = vsel %vm3148, 1, 0
        %v3277 = vsel %vm3149, 1, 0
        %v3278 = vsel %vm3150, 1, 0
        %v3279 = vsel %vm3151, 1, 0
        %v3280 = vsel %vm3152, 1, 0
        %v3281 = vsel %vm3153, 1, 0
        %v3282 = vsel %vm3154, 1, 0
        %v3283 = vsel %vm3155, 1, 0
        %v3284 = vsel %vm3156, 1, 0
        %v3285 = vsel %vm3157, 1, 0
        %v3286 = vsel %vm3158, 1, 0
        %v3287 = vsel %vm3159, 1, 0
        %v3288 = vsel %vm3160, 1, 0
        %v3289 = vsel %vm3161, 1, 0
        %v3290 = vsel %vm3162, 1, 0
        %v3291 = vsel %vm3163, 1, 0
        %v3292 = vsel %vm3164, 1, 0
        %v3293 = vsel %vm3165, 1, 0
        %v3294 = vsel %vm3166, 1, 0
        %v3295 = vsel %vm3167, 1, 0
        %v3296 = vsel %vm3168, 1, 0
        %v3297 = vsel %vm3169, 1, 0
        %v3298 = vsel %vm3170, 1, 0
        %v3299 = vsel %vm3171, 1, 0
        %v3300 = vsel %vm3172, 1, 0
        %v3301 = vsel %vm3173, 1, 0
        %v3302 = vsel %vm3174, 1, 0
        %v3303 = vsel %vm3175, 1, 0
        %v3304 = vsel %vm3176, 1, 0
        %v3305 = vsel %vm3177, 1, 0
        %v3306 = vsel %vm3178, 1, 0
        %v3307 = vsel %vm3179, 1, 0
        %v3308 = vsel %vm3180, 1, 0
        %v3309 = vsel %vm3181, 1, 0
        %v3310 = vsel %vm3182, 1, 0
        %v3311 = vsel %vm3183, 1, 0
        %v3312 = vsel %vm3184, 1, 0
        %v3313 = vsel %vm3185, 1, 0
        %v3314 = vsel %vm3186, 1, 0
        %v3315 = vsel %vm3187, 1, 0
        %v3316 = vsel %vm3188, 1, 0
        %v3317 = vsel %vm3189, 1, 0
        %v3318 = vsel %vm3190, 1, 0
        %v3319 = vsel %vm3191, 1, 0
        %v3320 = vsel %vm3192, 1, 0
        %v3321 = vsel %vm3193, 1, 0
        %v3322 = vsel %vm3194, 1, 0
        %v3323 = vsel %vm3195, 1, 0
        %v3324 = vsel %vm3196, 1, 0
        %v3325 = vsel %vm3197, 1, 0
        %v3326 = vsel %vm3198, 1, 0
        %v3327 = vsel %vm3199, 1, 0
        %v3328 = vsel %vm3200, 1, 0
        %v3329 = vsel %vm3201, 1, 0
        %v3330 = vsel %vm3202, 1, 0
        %v3331 = vsel %vm3203, 1, 0
        %v3332 = vsel %vm3204, 1, 0
        %v3333 = vsel %vm3205, 1, 0
        %v3334 = vsel %vm3206, 1, 0
        %v3335 = vsel %vm3207, 1, 0
        %v3336 = vsel %vm3208, 1, 0
        %v3337 = vsel %vm3209, 1, 0
        %v3338 = vsel %vm3210, 1, 0
        %v3339 = vsel %vm3211, 1, 0
        %v3340 = vsel %vm3212, 1, 0
        %v3341 = vsel %vm3213, 1, 0
        %v3342 = vsel %vm3214, 1, 0
        %v3343 = vsel %vm3215, 1, 0
        %v3344 = vsel %vm3216, 1, 0
        %v3345 = vsel %vm3217, 1, 0
        %v3346 = vsel %vm3218, 1, 0
        %v3347 = vsel %vm3219, 1, 0
        %v3348 = vsel %vm3220, 1, 0
        %v3349 = vsel %vm3221, 1, 0
        %v3350 = vsel %vm3222, 1, 0
        %v3351 = vsel %vm3223, 1, 0
        %v3352 = vsel %vm3224, 1, 0
        %v3353 = vsel %vm3225, 1, 0
        %v3354 = vsel %vm3226, 1, 0
        %v3355 = vsel %vm3227, 1, 0
        %v3356 = vsel %vm3228, 1, 0
        %v3357 = vsel %vm3229, 1, 0
        %v3358 = vsel %vm3230, 1, 0
        %v3359 = vsel %vm3231, 1, 0
        %v3360 = vsel %vm3232, 1, 0
        %v3361 = vsel %vm3233, 1, 0
        %v3362 = vsel %vm3234, 1, 0
        %v3363 = vsel %vm3235, 1, 0
        %v3364 = vsel %vm3236, 1, 0
        %v3365 = vsel %vm3237, 1, 0
        %v3366 = vsel %vm3238, 1, 0
        %v3367 = vsel %vm3239, 1, 0
        %v3368 = vsel %vm3240, 1, 0
        %v3369 = vsel %vm3241, 1, 0
        %v3370 = vsel %vm3242, 1, 0
        %v3371 = vsel %vm3243, 1, 0
        %v3372 = vsel %vm3244, 1, 0
        %v3373 = vsel %vm3245, 1, 0
        %v3374 = vsel %vm3246, 1, 0
        %v3375 = vsel %vm3247, 1, 0
        %v3376 = vsel %vm3248, 1, 0
        %v3377 = vsel %vm3249, 1, 0
        %v3378 = vsel %vm3250, 1, 0
        %v3379 = vsel %vm3251, 1, 0
        %v3380 = vsel %vm3252, 1, 0
        %v3381 = vsel %vm3253, 1, 0
        %v3382 = vsel %vm3254, 1, 0
        %v3383 = vsel %vm3255, 1, 0
        %v3384 = vsel %vm3256, 1, 0
        %v3385 = vsel %vm3257, 1, 0
        %v3386 = vsel %vm3258, 1, 0
        %v3387 = vsel %vm3259, 1, 0
        %v3388 = vsel %vm3260, 1, 0
        %v3389 = vsel %vm3261, 1, 0
        %v3390 = vsel %vm3262, 1, 0
        %v3391 = vsel %vm3263, 1, 0
        %v3392 = vsel %vm3264, 1, 0
        %v3393 = vsel %vm3265, 1, 0
        %v3394 = vsel %vm3266, 1, 0
        %v3395 = vsel %vm3267, 1, 0
        %v3396 = vsel %vm3268, 1, 0
        %v3397 = vcvt.s32.f32 %v3269
        %v3398 = vcvt.s32.f32 %v3270
        %v3399 = vcvt.s32.f32 %v3271
        %v3400 = vcvt.s32.f32 %v3272
        %v3401 = vcvt.s32.f32 %v3273
        %v3402 = vcvt.s32.f32 %v3274
        %v3403 = vcvt.s32.f32 %v3275
        %v3404 = vcvt.s32.f32 %v3276
        %v3405 = vcvt.s32.f32 %v3277
        %v3406 = vcvt.s32.f32 %v3278
        %v3407 = vcvt.s32.f32 %v3279
        %v3408 = vcvt.s32.f32 %v3280
        %v3409 = vcvt.s32.f32 %v3281
        %v3410 = vcvt.s32.f32 %v3282
        %v3411 = vcvt.s32.f32 %v3283
        %v3412 = vcvt.s32.f32 %v3284
        %v3413 = vcvt.s32.f32 %v3285
        %v3414 = vcvt.s32.f32 %v3286
        %v3415 = vcvt.s32.f32 %v3287
        %v3416 = vcvt.s32.f32 %v3288
        %v3417 = vcvt.s32.f32 %v3289
        %v3418 = vcvt.s32.f32 %v3290
        %v3419 = vcvt.s32.f32 %v3291
        %v3420 = vcvt.s32.f32 %v3292
        %v3421 = vcvt.s32.f32 %v3293
        %v3422 = vcvt.s32.f32 %v3294
        %v3423 = vcvt.s32.f32 %v3295
        %v3424 = vcvt.s32.f32 %v3296
        %v3425 = vcvt.s32.f32 %v3297
        %v3426 = vcvt.s32.f32 %v3298
        %v3427 = vcvt.s32.f32 %v3299
        %v3428 = vcvt.s32.f32 %v3300
        %v3429 = vcvt.s32.f32 %v3301
        %v3430 = vcvt.s32.f32 %v3302
        %v3431 = vcvt.s32.f32 %v3303
        %v3432 = vcvt.s32.f32 %v3304
        %v3433 = vcvt.s32.f32 %v3305
        %v3434 = vcvt.s32.f32 %v3306
        %v3435 = vcvt.s32.f32 %v3307
        %v3436 = vcvt.s32.f32 %v3308
        %v3437 = vcvt.s32.f32 %v3309
        %v3438 = vcvt.s32.f32 %v3310
        %v3439 = vcvt.s32.f32 %v3311
        %v3440 = vcvt.s32.f32 %v3312
        %v3441 = vcvt.s32.f32 %v3313
        %v3442 = vcvt.s32.f32 %v3314
        %v3443 = vcvt.s32.f32 %v3315
        %v3444 = vcvt.s32.f32 %v3316
        %v3445 = vcvt.s32.f32 %v3317
        %v3446 = vcvt.s32.f32 %v3318
        %v3447 = vcvt.s32.f32 %v3319
        %v3448 = vcvt.s32.f32 %v3320
        %v3449 = vcvt.s32.f32 %v3321
        %v3450 = vcvt.s32.f32 %v3322
        %v3451 = vcvt.s32.f32 %v3323
        %v3452 = vcvt.s32.f32 %v3324
        %v3453 = vcvt.s32.f32 %v3325
        %v3454 = vcvt.s32.f32 %v3326
        %v3455 = vcvt.s32.f32 %v3327
        %v3456 = vcvt.s32.f32 %v3328
        %v3457 = vcvt.s32.f32 %v3329
        %v3458 = vcvt.s32.f32 %v3330
        %v3459 = vcvt.s32.f32 %v3331
        %v3460 = vcvt.s32.f32 %v3332
        %v3461 = vcvt.s32.f32 %v3333
        %v3462 = vcvt.s32.f32 %v3334
        %v3463 = vcvt.s32.f32 %v3335
        %v3464 = vcvt.s32.f32 %v3336
        %v3465 = vcvt.s32.f32 %v3337
        %v3466 = vcvt.s32.f32 %v3338
        %v3467 = vcvt.s32.f32 %v3339
        %v3468 = vcvt.s32.f32 %v3340
        %v3469 = vcvt.s32.f32 %v3341
        %v3470 = vcvt.s32.f32 %v3342
        %v3471 = vcvt.s32.f32 %v3343
        %v3472 = vcvt.s32.f32 %v3344
        %v3473 = vcvt.s32.f32 %v3345
        %v3474 = vcvt.s32.f32 %v3346
        %v3475 = vcvt.s32.f32 %v3347
        %v3476 = vcvt.s32.f32 %v3348
        %v3477 = vcvt.s32.f32 %v3349
        %v3478 = vcvt.s32.f32 %v3350
        %v3479 = vcvt.s32.f32 %v3351
        %v3480 = vcvt.s32.f32 %v3352
        %v3481 = vcvt.s32.f32 %v3353
        %v3482 = vcvt.s32.f32 %v3354
        %v3483 = vcvt.s32.f32 %v3355
        %v3484 = vcvt.s32.f32 %v3356
        %v3485 = vcvt.s32.f32 %v3357
        %v3486 = vcvt.s32.f32 %v3358
        %v3487 = vcvt.s32.f32 %v3359
        %v3488 = vcvt.s32.f32 %v3360
        %v3489 = vcvt.s32.f32 %v3361
        %v3490 = vcvt.s32.f32 %v3362
        %v3491 = vcvt.s32.f32 %v3363
        %v3492 = vcvt.s32.f32 %v3364
        %v3493 = vcvt.s32.f32 %v3365
        %v3494 = vcvt.s32.f32 %v3366
        %v3495 = vcvt.s32.f32 %v3367
        %v3496 = vcvt.s32.f32 %v3368
        %v3497 = vcvt.s32.f32 %v3369
        %v3498 = vcvt.s32.f32 %v3370
        %v3499 = vcvt.s32.f32 %v3371
        %v3500 = vcvt.s32.f32 %v3372
        %v3501 = vcvt.s32.f32 %v3373
        %v3502 = vcvt.s32.f32 %v3374
        %v3503 = vcvt.s32.f32 %v3375
        %v3504 = vcvt.s32.f32 %v3376
        %v3505 = vcvt.s32.f32 %v3377
        %v3506 = vcvt.s32.f32 %v3378
        %v3507 = vcvt.s32.f32 %v3379
        %v3508 = vcvt.s32.f32 %v3380
        %v3509 = vcvt.s32.f32 %v3381
        %v3510 = vcvt.s32.f32 %v3382
        %v3511 = vcvt.s32.f32 %v3383
        %v3512 = vcvt.s32.f32 %v3384
        %v3513 = vcvt.s32.f32 %v3385
        %v3514 = vcvt.s32.f32 %v3386
        %v3515 = vcvt.s32.f32 %v3387
        %v3516 = vcvt.s32.f32 %v3388
        %v3517 = vcvt.s32.f32 %v3389
        %v3518 = vcvt.s32.f32 %v3390
        %v3519 = vcvt.s32.f32 %v3391
        %v3520 = vcvt.s32.f32 %v3392
        %v3521 = vcvt.s32.f32 %v3393
        %v3522 = vcvt.s32.f32 %v3394
        %v3523 = vcvt.s32.f32 %v3395
        %v3524 = vcvt.s32.f32 %v3396
        %v3525 = vadd.f32 %v2949, %v3397
        %v3526 = vadd.f32 %v2950, %v3398
        %v3527 = vadd.f32 %v2951, %v3399
        %v3528 = vadd.f32 %v2952, %v3400
        %v3529 = vadd.f32 %v2953, %v3401
        %v3530 = vadd.f32 %v2954, %v3402
        %v3531 = vadd.f32 %v2955, %v3403
        %v3532 = vadd.f32 %v2956, %v3404
        %v3533 = vadd.f32 %v2957, %v3405
        %v3534 = vadd.f32 %v2958, %v3406
        %v3535 = vadd.f32 %v2959, %v3407
        %v3536 = vadd.f32 %v2960, %v3408
        %v3537 = vadd.f32 %v2961, %v3409
        %v3538 = vadd.f32 %v2962, %v3410
        %v3539 = vadd.f32 %v2963, %v3411
        %v3540 = vadd.f32 %v2964, %v3412
        %v3541 = vadd.f32 %v2965, %v3413
        %v3542 = vadd.f32 %v2966, %v3414
        %v3543 = vadd.f32 %v2967, %v3415
        %v3544 = vadd.f32 %v2968, %v3416
        %v3545 = vadd.f32 %v2969, %v3417
        %v3546 = vadd.f32 %v2970, %v3418
        %v3547 = vadd.f32 %v2971, %v3419
        %v3548 = vadd.f32 %v2972, %v3420
        %v3549 = vadd.f32 %v2973, %v3421
        %v3550 = vadd.f32 %v2974, %v3422
        %v3551 = vadd.f32 %v2975, %v3423
        %v3552 = vadd.f32 %v2976, %v3424
        %v3553 = vadd.f32 %v2977, %v3425
        %v3554 = vadd.f32 %v2978, %v3426
        %v3555 = vadd.f32 %v2979, %v3427
        %v3556 = vadd.f32 %v2980, %v3428
        %v3557 = vadd.f32 %v2981, %v3429
        %v3558 = vadd.f32 %v2982, %v3430
        %v3559 = vadd.f32 %v2983, %v3431
        %v3560 = vadd.f32 %v2984, %v3432
        %v3561 = vadd.f32 %v2985, %v3433
        %v3562 = vadd.f32 %v2986, %v3434
        %v3563 = vadd.f32 %v2987, %v3435
        %v3564 = vadd.f32 %v2988, %v3436
        %v3565 = vadd.f32 %v2989, %v3437
        %v3566 = vadd.f32 %v2990, %v3438
        %v3567 = vadd.f32 %v2991, %v3439
        %v3568 = vadd.f32 %v2992, %v3440
        %v3569 = vadd.f32 %v2993, %v3441
        %v3570 = vadd.f32 %v2994, %v3442
        %v3571 = vadd.f32 %v2995, %v3443
        %v3572 = vadd.f32 %v2996, %v3444
        %v3573 = vadd.f32 %v2997, %v3445
        %v3574 = vadd.f32 %v2998, %v3446
        %v3575 = vadd.f32 %v2999, %v3447
        %v3576 = vadd.f32 %v3000, %v3448
        %v3577 = vadd.f32 %v3001, %v3449
        %v3578 = vadd.f32 %v3002, %v3450
        %v3579 = vadd.f32 %v3003, %v3451
        %v3580 = vadd.f32 %v3004, %v3452
        %v3581 = vadd.f32 %v3005, %v3453
        %v3582 = vadd.f32 %v3006, %v3454
        %v3583 = vadd.f32 %v3007, %v3455
        %v3584 = vadd.f32 %v3008, %v3456
        %v3585 = vadd.f32 %v3009, %v3457
        %v3586 = vadd.f32 %v3010, %v3458
        %v3587 = vadd.f32 %v3011, %v3459
        %v3588 = vadd.f32 %v3012, %v3460
        %v3589 = vadd.f32 %v3013, %v3461
        %v3590 = vadd.f32 %v3014, %v3462
        %v3591 = vadd.f32 %v3015, %v3463
        %v3592 = vadd.f32 %v3016, %v3464
        %v3593 = vadd.f32 %v3017, %v3465
        %v3594 = vadd.f32 %v3018, %v3466
        %v3595 = vadd.f32 %v3019, %v3467
        %v3596 = vadd.f32 %v3020, %v3468
        %v3597 = vadd.f32 %v3021, %v3469
        %v3598 = vadd.f32 %v3022, %v3470
        %v3599 = vadd.f32 %v3023, %v3471
        %v3600 = vadd.f32 %v3024, %v3472
        %v3601 = vadd.f32 %v3025, %v3473
        %v3602 = vadd.f32 %v3026, %v3474
        %v3603 = vadd.f32 %v3027, %v3475
        %v3604 = vadd.f32 %v3028, %v3476
        %v3605 = vadd.f32 %v3029, %v3477
        %v3606 = vadd.f32 %v3030, %v3478
        %v3607 = vadd.f32 %v3031, %v3479
        %v3608 = vadd.f32 %v3032, %v3480
        %v3609 = vadd.f32 %v3033, %v3481
        %v3610 = vadd.f32 %v3034, %v3482
        %v3611 = vadd.f32 %v3035, %v3483
        %v3612 = vadd.f32 %v3036, %v3484
        %v3613 = vadd.f32 %v3037, %v3485
        %v3614 = vadd.f32 %v3038, %v3486
        %v3615 = vadd.f32 %v3039, %v3487
        %v3616 = vadd.f32 %v3040, %v3488
        %v3617 = vadd.f32 %v3041, %v3489
        %v3618 = vadd.f32 %v3042, %v3490
        %v3619 = vadd.f32 %v3043, %v3491
        %v3620 = vadd.f32 %v3044, %v3492
        %v3621 = vadd.f32 %v3045, %v3493
        %v3622 = vadd.f32 %v3046, %v3494
        %v3623 = vadd.f32 %v3047, %v3495
        %v3624 = vadd.f32 %v3048, %v3496
        %v3625 = vadd.f32 %v3049, %v3497
        %v3626 = vadd.f32 %v3050, %v3498
        %v3627 = vadd.f32 %v3051, %v3499
        %v3628 = vadd.f32 %v3052, %v3500
        %v3629 = vadd.f32 %v3053, %v3501
        %v3630 = vadd.f32 %v3054, %v3502
        %v3631 = vadd.f32 %v3055, %v3503
        %v3632 = vadd.f32 %v3056, %v3504
        %v3633 = vadd.f32 %v3057, %v3505
        %v3634 = vadd.f32 %v3058, %v3506
        %v3635 = vadd.f32 %v3059, %v3507
        %v3636 = vadd.f32 %v3060, %v3508
        %v3637 = vadd.f32 %v3061, %v3509
        %v3638 = vadd.f32 %v3062, %v3510
        %v3639 = vadd.f32 %v3063, %v3511
        %v3640 = vadd.f32 %v3064, %v3512
        %v3641 = vadd.f32 %v3065, %v3513
        %v3642 = vadd.f32 %v3066, %v3514
        %v3643 = vadd.f32 %v3067, %v3515
        %v3644 = vadd.f32 %v3068, %v3516
        %v3645 = vadd.f32 %v3069, %v3517
        %v3646 = vadd.f32 %v3070, %v3518
        %v3647 = vadd.f32 %v3071, %v3519
        %v3648 = vadd.f32 %v3072, %v3520
        %v3649 = vadd.f32 %v3073, %v3521
        %v3650 = vadd.f32 %v3074, %v3522
        %v3651 = vadd.f32 %v3075, %v3523
        %v3652 = vadd.f32 %v3076, %v3524
        %v3653 = vadd.s32 %v188, 384
        %v3654 = vadd.s32 %v189, 384
        %v3655 = vadd.s32 %v190, 384
        %v3656 = vadd.s32 %v191, 384
        %v3657 = vadd.s32 %v192, 384
        %v3658 = vadd.s32 %v193, 384
        %v3659 = vadd.s32 %v194, 384
        %v3660 = vadd.s32 %v195, 384
        %v3661 = vadd.s32 %v196, 384
        %v3662 = vadd.s32 %v197, 384
        %v3663 = vadd.s32 %v198, 384
        %v3664 = vadd.s32 %v199, 384
        %v3665 = vadd.s32 %v200, 384
        %v3666 = vadd.s32 %v201, 384
        %v3667 = vadd.s32 %v202, 384
        %v3668 = vadd.s32 %v203, 384
        %3669 = vset.pattern.permute.xlu0 6
        %3670 = vperm.xlu0 %3669, %v3653
        %v3671 = vpop.permute.xlu0 %3670
        %3672 = vset.pattern.permute.xlu0 6
        %3673 = vperm.xlu0 %3672, %v3654
        %v3674 = vpop.permute.xlu0 %3673
        %3675 = vset.pattern.permute.xlu0 6
        %3676 = vperm.xlu0 %3675, %v3655
        %v3677 = vpop.permute.xlu0 %3676
        %3678 = vset.pattern.permute.xlu0 6
        %3679 = vperm.xlu0 %3678, %v3656
        %v3680 = vpop.permute.xlu0 %3679
        %3681 = vset.pattern.permute.xlu0 6
        %3682 = vperm.xlu0 %3681, %v3657
        %v3683 = vpop.permute.xlu0 %3682
        %3684 = vset.pattern.permute.xlu0 6
        %3685 = vperm.xlu0 %3684, %v3658
        %v3686 = vpop.permute.xlu0 %3685
        %3687 = vset.pattern.permute.xlu0 6
        %3688 = vperm.xlu0 %3687, %v3659
        %v3689 = vpop.permute.xlu0 %3688
        %3690 = vset.pattern.permute.xlu0 6
        %3691 = vperm.xlu0 %3690, %v3660
        %v3692 = vpop.permute.xlu0 %3691
        %3693 = vset.pattern.permute.xlu0 6
        %3694 = vperm.xlu0 %3693, %v3661
        %v3695 = vpop.permute.xlu0 %3694
        %3696 = vset.pattern.permute.xlu0 6
        %3697 = vperm.xlu0 %3696, %v3662
        %v3698 = vpop.permute.xlu0 %3697
        %3699 = vset.pattern.permute.xlu0 6
        %3700 = vperm.xlu0 %3699, %v3663
        %v3701 = vpop.permute.xlu0 %3700
        %3702 = vset.pattern.permute.xlu0 6
        %3703 = vperm.xlu0 %3702, %v3664
        %v3704 = vpop.permute.xlu0 %3703
        %3705 = vset.pattern.permute.xlu0 6
        %3706 = vperm.xlu0 %3705, %v3665
        %v3707 = vpop.permute.xlu0 %3706
        %3708 = vset.pattern.permute.xlu0 6
        %3709 = vperm.xlu0 %3708, %v3666
        %v3710 = vpop.permute.xlu0 %3709
        %3711 = vset.pattern.permute.xlu0 6
        %3712 = vperm.xlu0 %3711, %v3667
        %v3713 = vpop.permute.xlu0 %3712
        %3714 = vset.pattern.permute.xlu0 6
        %3715 = vperm.xlu0 %3714, %v3668
        %v3716 = vpop.permute.xlu0 %3715
        %vm3717 = vcmp.eq.s32.totalorder %v205, %v3671
        %vm3718 = vcmp.eq.s32.totalorder %v206, %v3671
        %vm3719 = vcmp.eq.s32.totalorder %v207, %v3671
        %vm3720 = vcmp.eq.s32.totalorder %v208, %v3671
        %vm3721 = vcmp.eq.s32.totalorder %v209, %v3671
        %vm3722 = vcmp.eq.s32.totalorder %v210, %v3671
        %vm3723 = vcmp.eq.s32.totalorder %v211, %v3671
        %vm3724 = vcmp.eq.s32.totalorder %v212, %v3671
        %vm3725 = vcmp.eq.s32.totalorder %v205, %v3674
        %vm3726 = vcmp.eq.s32.totalorder %v206, %v3674
        %vm3727 = vcmp.eq.s32.totalorder %v207, %v3674
        %vm3728 = vcmp.eq.s32.totalorder %v208, %v3674
        %vm3729 = vcmp.eq.s32.totalorder %v209, %v3674
        %vm3730 = vcmp.eq.s32.totalorder %v210, %v3674
        %vm3731 = vcmp.eq.s32.totalorder %v211, %v3674
        %vm3732 = vcmp.eq.s32.totalorder %v212, %v3674
        %vm3733 = vcmp.eq.s32.totalorder %v205, %v3677
        %vm3734 = vcmp.eq.s32.totalorder %v206, %v3677
        %vm3735 = vcmp.eq.s32.totalorder %v207, %v3677
        %vm3736 = vcmp.eq.s32.totalorder %v208, %v3677
        %vm3737 = vcmp.eq.s32.totalorder %v209, %v3677
        %vm3738 = vcmp.eq.s32.totalorder %v210, %v3677
        %vm3739 = vcmp.eq.s32.totalorder %v211, %v3677
        %vm3740 = vcmp.eq.s32.totalorder %v212, %v3677
        %vm3741 = vcmp.eq.s32.totalorder %v205, %v3680
        %vm3742 = vcmp.eq.s32.totalorder %v206, %v3680
        %vm3743 = vcmp.eq.s32.totalorder %v207, %v3680
        %vm3744 = vcmp.eq.s32.totalorder %v208, %v3680
        %vm3745 = vcmp.eq.s32.totalorder %v209, %v3680
        %vm3746 = vcmp.eq.s32.totalorder %v210, %v3680
        %vm3747 = vcmp.eq.s32.totalorder %v211, %v3680
        %vm3748 = vcmp.eq.s32.totalorder %v212, %v3680
        %vm3749 = vcmp.eq.s32.totalorder %v205, %v3683
        %vm3750 = vcmp.eq.s32.totalorder %v206, %v3683
        %vm3751 = vcmp.eq.s32.totalorder %v207, %v3683
        %vm3752 = vcmp.eq.s32.totalorder %v208, %v3683
        %vm3753 = vcmp.eq.s32.totalorder %v209, %v3683
        %vm3754 = vcmp.eq.s32.totalorder %v210, %v3683
        %vm3755 = vcmp.eq.s32.totalorder %v211, %v3683
        %vm3756 = vcmp.eq.s32.totalorder %v212, %v3683
        %vm3757 = vcmp.eq.s32.totalorder %v205, %v3686
        %vm3758 = vcmp.eq.s32.totalorder %v206, %v3686
        %vm3759 = vcmp.eq.s32.totalorder %v207, %v3686
        %vm3760 = vcmp.eq.s32.totalorder %v208, %v3686
        %vm3761 = vcmp.eq.s32.totalorder %v209, %v3686
        %vm3762 = vcmp.eq.s32.totalorder %v210, %v3686
        %vm3763 = vcmp.eq.s32.totalorder %v211, %v3686
        %vm3764 = vcmp.eq.s32.totalorder %v212, %v3686
        %vm3765 = vcmp.eq.s32.totalorder %v205, %v3689
        %vm3766 = vcmp.eq.s32.totalorder %v206, %v3689
        %vm3767 = vcmp.eq.s32.totalorder %v207, %v3689
        %vm3768 = vcmp.eq.s32.totalorder %v208, %v3689
        %vm3769 = vcmp.eq.s32.totalorder %v209, %v3689
        %vm3770 = vcmp.eq.s32.totalorder %v210, %v3689
        %vm3771 = vcmp.eq.s32.totalorder %v211, %v3689
        %vm3772 = vcmp.eq.s32.totalorder %v212, %v3689
        %vm3773 = vcmp.eq.s32.totalorder %v205, %v3692
        %vm3774 = vcmp.eq.s32.totalorder %v206, %v3692
        %vm3775 = vcmp.eq.s32.totalorder %v207, %v3692
        %vm3776 = vcmp.eq.s32.totalorder %v208, %v3692
        %vm3777 = vcmp.eq.s32.totalorder %v209, %v3692
        %vm3778 = vcmp.eq.s32.totalorder %v210, %v3692
        %vm3779 = vcmp.eq.s32.totalorder %v211, %v3692
        %vm3780 = vcmp.eq.s32.totalorder %v212, %v3692
        %vm3781 = vcmp.eq.s32.totalorder %v205, %v3695
        %vm3782 = vcmp.eq.s32.totalorder %v206, %v3695
        %vm3783 = vcmp.eq.s32.totalorder %v207, %v3695
        %vm3784 = vcmp.eq.s32.totalorder %v208, %v3695
        %vm3785 = vcmp.eq.s32.totalorder %v209, %v3695
        %vm3786 = vcmp.eq.s32.totalorder %v210, %v3695
        %vm3787 = vcmp.eq.s32.totalorder %v211, %v3695
        %vm3788 = vcmp.eq.s32.totalorder %v212, %v3695
        %vm3789 = vcmp.eq.s32.totalorder %v205, %v3698
        %vm3790 = vcmp.eq.s32.totalorder %v206, %v3698
        %vm3791 = vcmp.eq.s32.totalorder %v207, %v3698
        %vm3792 = vcmp.eq.s32.totalorder %v208, %v3698
        %vm3793 = vcmp.eq.s32.totalorder %v209, %v3698
        %vm3794 = vcmp.eq.s32.totalorder %v210, %v3698
        %vm3795 = vcmp.eq.s32.totalorder %v211, %v3698
        %vm3796 = vcmp.eq.s32.totalorder %v212, %v3698
        %vm3797 = vcmp.eq.s32.totalorder %v205, %v3701
        %vm3798 = vcmp.eq.s32.totalorder %v206, %v3701
        %vm3799 = vcmp.eq.s32.totalorder %v207, %v3701
        %vm3800 = vcmp.eq.s32.totalorder %v208, %v3701
        %vm3801 = vcmp.eq.s32.totalorder %v209, %v3701
        %vm3802 = vcmp.eq.s32.totalorder %v210, %v3701
        %vm3803 = vcmp.eq.s32.totalorder %v211, %v3701
        %vm3804 = vcmp.eq.s32.totalorder %v212, %v3701
        %vm3805 = vcmp.eq.s32.totalorder %v205, %v3704
        %vm3806 = vcmp.eq.s32.totalorder %v206, %v3704
        %vm3807 = vcmp.eq.s32.totalorder %v207, %v3704
        %vm3808 = vcmp.eq.s32.totalorder %v208, %v3704
        %vm3809 = vcmp.eq.s32.totalorder %v209, %v3704
        %vm3810 = vcmp.eq.s32.totalorder %v210, %v3704
        %vm3811 = vcmp.eq.s32.totalorder %v211, %v3704
        %vm3812 = vcmp.eq.s32.totalorder %v212, %v3704
        %vm3813 = vcmp.eq.s32.totalorder %v205, %v3707
        %vm3814 = vcmp.eq.s32.totalorder %v206, %v3707
        %vm3815 = vcmp.eq.s32.totalorder %v207, %v3707
        %vm3816 = vcmp.eq.s32.totalorder %v208, %v3707
        %vm3817 = vcmp.eq.s32.totalorder %v209, %v3707
        %vm3818 = vcmp.eq.s32.totalorder %v210, %v3707
        %vm3819 = vcmp.eq.s32.totalorder %v211, %v3707
        %vm3820 = vcmp.eq.s32.totalorder %v212, %v3707
        %vm3821 = vcmp.eq.s32.totalorder %v205, %v3710
        %vm3822 = vcmp.eq.s32.totalorder %v206, %v3710
        %vm3823 = vcmp.eq.s32.totalorder %v207, %v3710
        %vm3824 = vcmp.eq.s32.totalorder %v208, %v3710
        %vm3825 = vcmp.eq.s32.totalorder %v209, %v3710
        %vm3826 = vcmp.eq.s32.totalorder %v210, %v3710
        %vm3827 = vcmp.eq.s32.totalorder %v211, %v3710
        %vm3828 = vcmp.eq.s32.totalorder %v212, %v3710
        %vm3829 = vcmp.eq.s32.totalorder %v205, %v3713
        %vm3830 = vcmp.eq.s32.totalorder %v206, %v3713
        %vm3831 = vcmp.eq.s32.totalorder %v207, %v3713
        %vm3832 = vcmp.eq.s32.totalorder %v208, %v3713
        %vm3833 = vcmp.eq.s32.totalorder %v209, %v3713
        %vm3834 = vcmp.eq.s32.totalorder %v210, %v3713
        %vm3835 = vcmp.eq.s32.totalorder %v211, %v3713
        %vm3836 = vcmp.eq.s32.totalorder %v212, %v3713
        %vm3837 = vcmp.eq.s32.totalorder %v205, %v3716
        %vm3838 = vcmp.eq.s32.totalorder %v206, %v3716
        %vm3839 = vcmp.eq.s32.totalorder %v207, %v3716
        %vm3840 = vcmp.eq.s32.totalorder %v208, %v3716
        %vm3841 = vcmp.eq.s32.totalorder %v209, %v3716
        %vm3842 = vcmp.eq.s32.totalorder %v210, %v3716
        %vm3843 = vcmp.eq.s32.totalorder %v211, %v3716
        %vm3844 = vcmp.eq.s32.totalorder %v212, %v3716
        %v3845 = vsel %vm3717, 1, 0
        %v3846 = vsel %vm3718, 1, 0
        %v3847 = vsel %vm3719, 1, 0
        %v3848 = vsel %vm3720, 1, 0
        %v3849 = vsel %vm3721, 1, 0
        %v3850 = vsel %vm3722, 1, 0
        %v3851 = vsel %vm3723, 1, 0
        %v3852 = vsel %vm3724, 1, 0
        %v3853 = vsel %vm3725, 1, 0
        %v3854 = vsel %vm3726, 1, 0
        %v3855 = vsel %vm3727, 1, 0
        %v3856 = vsel %vm3728, 1, 0
        %v3857 = vsel %vm3729, 1, 0
        %v3858 = vsel %vm3730, 1, 0
        %v3859 = vsel %vm3731, 1, 0
        %v3860 = vsel %vm3732, 1, 0
        %v3861 = vsel %vm3733, 1, 0
        %v3862 = vsel %vm3734, 1, 0
        %v3863 = vsel %vm3735, 1, 0
        %v3864 = vsel %vm3736, 1, 0
        %v3865 = vsel %vm3737, 1, 0
        %v3866 = vsel %vm3738, 1, 0
        %v3867 = vsel %vm3739, 1, 0
        %v3868 = vsel %vm3740, 1, 0
        %v3869 = vsel %vm3741, 1, 0
        %v3870 = vsel %vm3742, 1, 0
        %v3871 = vsel %vm3743, 1, 0
        %v3872 = vsel %vm3744, 1, 0
        %v3873 = vsel %vm3745, 1, 0
        %v3874 = vsel %vm3746, 1, 0
        %v3875 = vsel %vm3747, 1, 0
        %v3876 = vsel %vm3748, 1, 0
        %v3877 = vsel %vm3749, 1, 0
        %v3878 = vsel %vm3750, 1, 0
        %v3879 = vsel %vm3751, 1, 0
        %v3880 = vsel %vm3752, 1, 0
        %v3881 = vsel %vm3753, 1, 0
        %v3882 = vsel %vm3754, 1, 0
        %v3883 = vsel %vm3755, 1, 0
        %v3884 = vsel %vm3756, 1, 0
        %v3885 = vsel %vm3757, 1, 0
        %v3886 = vsel %vm3758, 1, 0
        %v3887 = vsel %vm3759, 1, 0
        %v3888 = vsel %vm3760, 1, 0
        %v3889 = vsel %vm3761, 1, 0
        %v3890 = vsel %vm3762, 1, 0
        %v3891 = vsel %vm3763, 1, 0
        %v3892 = vsel %vm3764, 1, 0
        %v3893 = vsel %vm3765, 1, 0
        %v3894 = vsel %vm3766, 1, 0
        %v3895 = vsel %vm3767, 1, 0
        %v3896 = vsel %vm3768, 1, 0
        %v3897 = vsel %vm3769, 1, 0
        %v3898 = vsel %vm3770, 1, 0
        %v3899 = vsel %vm3771, 1, 0
        %v3900 = vsel %vm3772, 1, 0
        %v3901 = vsel %vm3773, 1, 0
        %v3902 = vsel %vm3774, 1, 0
        %v3903 = vsel %vm3775, 1, 0
        %v3904 = vsel %vm3776, 1, 0
        %v3905 = vsel %vm3777, 1, 0
        %v3906 = vsel %vm3778, 1, 0
        %v3907 = vsel %vm3779, 1, 0
        %v3908 = vsel %vm3780, 1, 0
        %v3909 = vsel %vm3781, 1, 0
        %v3910 = vsel %vm3782, 1, 0
        %v3911 = vsel %vm3783, 1, 0
        %v3912 = vsel %vm3784, 1, 0
        %v3913 = vsel %vm3785, 1, 0
        %v3914 = vsel %vm3786, 1, 0
        %v3915 = vsel %vm3787, 1, 0
        %v3916 = vsel %vm3788, 1, 0
        %v3917 = vsel %vm3789, 1, 0
        %v3918 = vsel %vm3790, 1, 0
        %v3919 = vsel %vm3791, 1, 0
        %v3920 = vsel %vm3792, 1, 0
        %v3921 = vsel %vm3793, 1, 0
        %v3922 = vsel %vm3794, 1, 0
        %v3923 = vsel %vm3795, 1, 0
        %v3924 = vsel %vm3796, 1, 0
        %v3925 = vsel %vm3797, 1, 0
        %v3926 = vsel %vm3798, 1, 0
        %v3927 = vsel %vm3799, 1, 0
        %v3928 = vsel %vm3800, 1, 0
        %v3929 = vsel %vm3801, 1, 0
        %v3930 = vsel %vm3802, 1, 0
        %v3931 = vsel %vm3803, 1, 0
        %v3932 = vsel %vm3804, 1, 0
        %v3933 = vsel %vm3805, 1, 0
        %v3934 = vsel %vm3806, 1, 0
        %v3935 = vsel %vm3807, 1, 0
        %v3936 = vsel %vm3808, 1, 0
        %v3937 = vsel %vm3809, 1, 0
        %v3938 = vsel %vm3810, 1, 0
        %v3939 = vsel %vm3811, 1, 0
        %v3940 = vsel %vm3812, 1, 0
        %v3941 = vsel %vm3813, 1, 0
        %v3942 = vsel %vm3814, 1, 0
        %v3943 = vsel %vm3815, 1, 0
        %v3944 = vsel %vm3816, 1, 0
        %v3945 = vsel %vm3817, 1, 0
        %v3946 = vsel %vm3818, 1, 0
        %v3947 = vsel %vm3819, 1, 0
        %v3948 = vsel %vm3820, 1, 0
        %v3949 = vsel %vm3821, 1, 0
        %v3950 = vsel %vm3822, 1, 0
        %v3951 = vsel %vm3823, 1, 0
        %v3952 = vsel %vm3824, 1, 0
        %v3953 = vsel %vm3825, 1, 0
        %v3954 = vsel %vm3826, 1, 0
        %v3955 = vsel %vm3827, 1, 0
        %v3956 = vsel %vm3828, 1, 0
        %v3957 = vsel %vm3829, 1, 0
        %v3958 = vsel %vm3830, 1, 0
        %v3959 = vsel %vm3831, 1, 0
        %v3960 = vsel %vm3832, 1, 0
        %v3961 = vsel %vm3833, 1, 0
        %v3962 = vsel %vm3834, 1, 0
        %v3963 = vsel %vm3835, 1, 0
        %v3964 = vsel %vm3836, 1, 0
        %v3965 = vsel %vm3837, 1, 0
        %v3966 = vsel %vm3838, 1, 0
        %v3967 = vsel %vm3839, 1, 0
        %v3968 = vsel %vm3840, 1, 0
        %v3969 = vsel %vm3841, 1, 0
        %v3970 = vsel %vm3842, 1, 0
        %v3971 = vsel %vm3843, 1, 0
        %v3972 = vsel %vm3844, 1, 0
        %v3973 = vcvt.s32.f32 %v3845
        %v3974 = vcvt.s32.f32 %v3846
        %v3975 = vcvt.s32.f32 %v3847
        %v3976 = vcvt.s32.f32 %v3848
        %v3977 = vcvt.s32.f32 %v3849
        %v3978 = vcvt.s32.f32 %v3850
        %v3979 = vcvt.s32.f32 %v3851
        %v3980 = vcvt.s32.f32 %v3852
        %v3981 = vcvt.s32.f32 %v3853
        %v3982 = vcvt.s32.f32 %v3854
        %v3983 = vcvt.s32.f32 %v3855
        %v3984 = vcvt.s32.f32 %v3856
        %v3985 = vcvt.s32.f32 %v3857
        %v3986 = vcvt.s32.f32 %v3858
        %v3987 = vcvt.s32.f32 %v3859
        %v3988 = vcvt.s32.f32 %v3860
        %v3989 = vcvt.s32.f32 %v3861
        %v3990 = vcvt.s32.f32 %v3862
        %v3991 = vcvt.s32.f32 %v3863
        %v3992 = vcvt.s32.f32 %v3864
        %v3993 = vcvt.s32.f32 %v3865
        %v3994 = vcvt.s32.f32 %v3866
        %v3995 = vcvt.s32.f32 %v3867
        %v3996 = vcvt.s32.f32 %v3868
        %v3997 = vcvt.s32.f32 %v3869
        %v3998 = vcvt.s32.f32 %v3870
        %v3999 = vcvt.s32.f32 %v3871
        %v4000 = vcvt.s32.f32 %v3872
        %v4001 = vcvt.s32.f32 %v3873
        %v4002 = vcvt.s32.f32 %v3874
        %v4003 = vcvt.s32.f32 %v3875
        %v4004 = vcvt.s32.f32 %v3876
        %v4005 = vcvt.s32.f32 %v3877
        %v4006 = vcvt.s32.f32 %v3878
        %v4007 = vcvt.s32.f32 %v3879
        %v4008 = vcvt.s32.f32 %v3880
        %v4009 = vcvt.s32.f32 %v3881
        %v4010 = vcvt.s32.f32 %v3882
        %v4011 = vcvt.s32.f32 %v3883
        %v4012 = vcvt.s32.f32 %v3884
        %v4013 = vcvt.s32.f32 %v3885
        %v4014 = vcvt.s32.f32 %v3886
        %v4015 = vcvt.s32.f32 %v3887
        %v4016 = vcvt.s32.f32 %v3888
        %v4017 = vcvt.s32.f32 %v3889
        %v4018 = vcvt.s32.f32 %v3890
        %v4019 = vcvt.s32.f32 %v3891
        %v4020 = vcvt.s32.f32 %v3892
        %v4021 = vcvt.s32.f32 %v3893
        %v4022 = vcvt.s32.f32 %v3894
        %v4023 = vcvt.s32.f32 %v3895
        %v4024 = vcvt.s32.f32 %v3896
        %v4025 = vcvt.s32.f32 %v3897
        %v4026 = vcvt.s32.f32 %v3898
        %v4027 = vcvt.s32.f32 %v3899
        %v4028 = vcvt.s32.f32 %v3900
        %v4029 = vcvt.s32.f32 %v3901
        %v4030 = vcvt.s32.f32 %v3902
        %v4031 = vcvt.s32.f32 %v3903
        %v4032 = vcvt.s32.f32 %v3904
        %v4033 = vcvt.s32.f32 %v3905
        %v4034 = vcvt.s32.f32 %v3906
        %v4035 = vcvt.s32.f32 %v3907
        %v4036 = vcvt.s32.f32 %v3908
        %v4037 = vcvt.s32.f32 %v3909
        %v4038 = vcvt.s32.f32 %v3910
        %v4039 = vcvt.s32.f32 %v3911
        %v4040 = vcvt.s32.f32 %v3912
        %v4041 = vcvt.s32.f32 %v3913
        %v4042 = vcvt.s32.f32 %v3914
        %v4043 = vcvt.s32.f32 %v3915
        %v4044 = vcvt.s32.f32 %v3916
        %v4045 = vcvt.s32.f32 %v3917
        %v4046 = vcvt.s32.f32 %v3918
        %v4047 = vcvt.s32.f32 %v3919
        %v4048 = vcvt.s32.f32 %v3920
        %v4049 = vcvt.s32.f32 %v3921
        %v4050 = vcvt.s32.f32 %v3922
        %v4051 = vcvt.s32.f32 %v3923
        %v4052 = vcvt.s32.f32 %v3924
        %v4053 = vcvt.s32.f32 %v3925
        %v4054 = vcvt.s32.f32 %v3926
        %v4055 = vcvt.s32.f32 %v3927
        %v4056 = vcvt.s32.f32 %v3928
        %v4057 = vcvt.s32.f32 %v3929
        %v4058 = vcvt.s32.f32 %v3930
        %v4059 = vcvt.s32.f32 %v3931
        %v4060 = vcvt.s32.f32 %v3932
        %v4061 = vcvt.s32.f32 %v3933
        %v4062 = vcvt.s32.f32 %v3934
        %v4063 = vcvt.s32.f32 %v3935
        %v4064 = vcvt.s32.f32 %v3936
        %v4065 = vcvt.s32.f32 %v3937
        %v4066 = vcvt.s32.f32 %v3938
        %v4067 = vcvt.s32.f32 %v3939
        %v4068 = vcvt.s32.f32 %v3940
        %v4069 = vcvt.s32.f32 %v3941
        %v4070 = vcvt.s32.f32 %v3942
        %v4071 = vcvt.s32.f32 %v3943
        %v4072 = vcvt.s32.f32 %v3944
        %v4073 = vcvt.s32.f32 %v3945
        %v4074 = vcvt.s32.f32 %v3946
        %v4075 = vcvt.s32.f32 %v3947
        %v4076 = vcvt.s32.f32 %v3948
        %v4077 = vcvt.s32.f32 %v3949
        %v4078 = vcvt.s32.f32 %v3950
        %v4079 = vcvt.s32.f32 %v3951
        %v4080 = vcvt.s32.f32 %v3952
        %v4081 = vcvt.s32.f32 %v3953
        %v4082 = vcvt.s32.f32 %v3954
        %v4083 = vcvt.s32.f32 %v3955
        %v4084 = vcvt.s32.f32 %v3956
        %v4085 = vcvt.s32.f32 %v3957
        %v4086 = vcvt.s32.f32 %v3958
        %v4087 = vcvt.s32.f32 %v3959
        %v4088 = vcvt.s32.f32 %v3960
        %v4089 = vcvt.s32.f32 %v3961
        %v4090 = vcvt.s32.f32 %v3962
        %v4091 = vcvt.s32.f32 %v3963
        %v4092 = vcvt.s32.f32 %v3964
        %v4093 = vcvt.s32.f32 %v3965
        %v4094 = vcvt.s32.f32 %v3966
        %v4095 = vcvt.s32.f32 %v3967
        %v4096 = vcvt.s32.f32 %v3968
        %v4097 = vcvt.s32.f32 %v3969
        %v4098 = vcvt.s32.f32 %v3970
        %v4099 = vcvt.s32.f32 %v3971
        %v4100 = vcvt.s32.f32 %v3972
        %v4101 = vadd.f32 %v3525, %v3973
        %v4102 = vadd.f32 %v3526, %v3974
        %v4103 = vadd.f32 %v3527, %v3975
        %v4104 = vadd.f32 %v3528, %v3976
        %v4105 = vadd.f32 %v3529, %v3977
        %v4106 = vadd.f32 %v3530, %v3978
        %v4107 = vadd.f32 %v3531, %v3979
        %v4108 = vadd.f32 %v3532, %v3980
        %v4109 = vadd.f32 %v3533, %v3981
        %v4110 = vadd.f32 %v3534, %v3982
        %v4111 = vadd.f32 %v3535, %v3983
        %v4112 = vadd.f32 %v3536, %v3984
        %v4113 = vadd.f32 %v3537, %v3985
        %v4114 = vadd.f32 %v3538, %v3986
        %v4115 = vadd.f32 %v3539, %v3987
        %v4116 = vadd.f32 %v3540, %v3988
        %v4117 = vadd.f32 %v3541, %v3989
        %v4118 = vadd.f32 %v3542, %v3990
        %v4119 = vadd.f32 %v3543, %v3991
        %v4120 = vadd.f32 %v3544, %v3992
        %v4121 = vadd.f32 %v3545, %v3993
        %v4122 = vadd.f32 %v3546, %v3994
        %v4123 = vadd.f32 %v3547, %v3995
        %v4124 = vadd.f32 %v3548, %v3996
        %v4125 = vadd.f32 %v3549, %v3997
        %v4126 = vadd.f32 %v3550, %v3998
        %v4127 = vadd.f32 %v3551, %v3999
        %v4128 = vadd.f32 %v3552, %v4000
        %v4129 = vadd.f32 %v3553, %v4001
        %v4130 = vadd.f32 %v3554, %v4002
        %v4131 = vadd.f32 %v3555, %v4003
        %v4132 = vadd.f32 %v3556, %v4004
        %v4133 = vadd.f32 %v3557, %v4005
        %v4134 = vadd.f32 %v3558, %v4006
        %v4135 = vadd.f32 %v3559, %v4007
        %v4136 = vadd.f32 %v3560, %v4008
        %v4137 = vadd.f32 %v3561, %v4009
        %v4138 = vadd.f32 %v3562, %v4010
        %v4139 = vadd.f32 %v3563, %v4011
        %v4140 = vadd.f32 %v3564, %v4012
        %v4141 = vadd.f32 %v3565, %v4013
        %v4142 = vadd.f32 %v3566, %v4014
        %v4143 = vadd.f32 %v3567, %v4015
        %v4144 = vadd.f32 %v3568, %v4016
        %v4145 = vadd.f32 %v3569, %v4017
        %v4146 = vadd.f32 %v3570, %v4018
        %v4147 = vadd.f32 %v3571, %v4019
        %v4148 = vadd.f32 %v3572, %v4020
        %v4149 = vadd.f32 %v3573, %v4021
        %v4150 = vadd.f32 %v3574, %v4022
        %v4151 = vadd.f32 %v3575, %v4023
        %v4152 = vadd.f32 %v3576, %v4024
        %v4153 = vadd.f32 %v3577, %v4025
        %v4154 = vadd.f32 %v3578, %v4026
        %v4155 = vadd.f32 %v3579, %v4027
        %v4156 = vadd.f32 %v3580, %v4028
        %v4157 = vadd.f32 %v3581, %v4029
        %v4158 = vadd.f32 %v3582, %v4030
        %v4159 = vadd.f32 %v3583, %v4031
        %v4160 = vadd.f32 %v3584, %v4032
        %v4161 = vadd.f32 %v3585, %v4033
        %v4162 = vadd.f32 %v3586, %v4034
        %v4163 = vadd.f32 %v3587, %v4035
        %v4164 = vadd.f32 %v3588, %v4036
        %v4165 = vadd.f32 %v3589, %v4037
        %v4166 = vadd.f32 %v3590, %v4038
        %v4167 = vadd.f32 %v3591, %v4039
        %v4168 = vadd.f32 %v3592, %v4040
        %v4169 = vadd.f32 %v3593, %v4041
        %v4170 = vadd.f32 %v3594, %v4042
        %v4171 = vadd.f32 %v3595, %v4043
        %v4172 = vadd.f32 %v3596, %v4044
        %v4173 = vadd.f32 %v3597, %v4045
        %v4174 = vadd.f32 %v3598, %v4046
        %v4175 = vadd.f32 %v3599, %v4047
        %v4176 = vadd.f32 %v3600, %v4048
        %v4177 = vadd.f32 %v3601, %v4049
        %v4178 = vadd.f32 %v3602, %v4050
        %v4179 = vadd.f32 %v3603, %v4051
        %v4180 = vadd.f32 %v3604, %v4052
        %v4181 = vadd.f32 %v3605, %v4053
        %v4182 = vadd.f32 %v3606, %v4054
        %v4183 = vadd.f32 %v3607, %v4055
        %v4184 = vadd.f32 %v3608, %v4056
        %v4185 = vadd.f32 %v3609, %v4057
        %v4186 = vadd.f32 %v3610, %v4058
        %v4187 = vadd.f32 %v3611, %v4059
        %v4188 = vadd.f32 %v3612, %v4060
        %v4189 = vadd.f32 %v3613, %v4061
        %v4190 = vadd.f32 %v3614, %v4062
        %v4191 = vadd.f32 %v3615, %v4063
        %v4192 = vadd.f32 %v3616, %v4064
        %v4193 = vadd.f32 %v3617, %v4065
        %v4194 = vadd.f32 %v3618, %v4066
        %v4195 = vadd.f32 %v3619, %v4067
        %v4196 = vadd.f32 %v3620, %v4068
        %v4197 = vadd.f32 %v3621, %v4069
        %v4198 = vadd.f32 %v3622, %v4070
        %v4199 = vadd.f32 %v3623, %v4071
        %v4200 = vadd.f32 %v3624, %v4072
        %v4201 = vadd.f32 %v3625, %v4073
        %v4202 = vadd.f32 %v3626, %v4074
        %v4203 = vadd.f32 %v3627, %v4075
        %v4204 = vadd.f32 %v3628, %v4076
        %v4205 = vadd.f32 %v3629, %v4077
        %v4206 = vadd.f32 %v3630, %v4078
        %v4207 = vadd.f32 %v3631, %v4079
        %v4208 = vadd.f32 %v3632, %v4080
        %v4209 = vadd.f32 %v3633, %v4081
        %v4210 = vadd.f32 %v3634, %v4082
        %v4211 = vadd.f32 %v3635, %v4083
        %v4212 = vadd.f32 %v3636, %v4084
        %v4213 = vadd.f32 %v3637, %v4085
        %v4214 = vadd.f32 %v3638, %v4086
        %v4215 = vadd.f32 %v3639, %v4087
        %v4216 = vadd.f32 %v3640, %v4088
        %v4217 = vadd.f32 %v3641, %v4089
        %v4218 = vadd.f32 %v3642, %v4090
        %v4219 = vadd.f32 %v3643, %v4091
        %v4220 = vadd.f32 %v3644, %v4092
        %v4221 = vadd.f32 %v3645, %v4093
        %v4222 = vadd.f32 %v3646, %v4094
        %v4223 = vadd.f32 %v3647, %v4095
        %v4224 = vadd.f32 %v3648, %v4096
        %v4225 = vadd.f32 %v3649, %v4097
        %v4226 = vadd.f32 %v3650, %v4098
        %v4227 = vadd.f32 %v3651, %v4099
        %v4228 = vadd.f32 %v3652, %v4100
        %v4229 = vadd.s32 %v188, 448
        %v4230 = vadd.s32 %v189, 448
        %v4231 = vadd.s32 %v190, 448
        %v4232 = vadd.s32 %v191, 448
        %v4233 = vadd.s32 %v192, 448
        %v4234 = vadd.s32 %v193, 448
        %v4235 = vadd.s32 %v194, 448
        %v4236 = vadd.s32 %v195, 448
        %v4237 = vadd.s32 %v196, 448
        %v4238 = vadd.s32 %v197, 448
        %v4239 = vadd.s32 %v198, 448
        %v4240 = vadd.s32 %v199, 448
        %v4241 = vadd.s32 %v200, 448
        %v4242 = vadd.s32 %v201, 448
        %v4243 = vadd.s32 %v202, 448
        %v4244 = vadd.s32 %v203, 448
        %4245 = vset.pattern.permute.xlu0 7
        %4246 = vperm.xlu0 %4245, %v4229
        %v4247 = vpop.permute.xlu0 %4246
        %4248 = vset.pattern.permute.xlu0 7
        %4249 = vperm.xlu0 %4248, %v4230
        %v4250 = vpop.permute.xlu0 %4249
        %4251 = vset.pattern.permute.xlu0 7
        %4252 = vperm.xlu0 %4251, %v4231
        %v4253 = vpop.permute.xlu0 %4252
        %4254 = vset.pattern.permute.xlu0 7
        %4255 = vperm.xlu0 %4254, %v4232
        %v4256 = vpop.permute.xlu0 %4255
        %4257 = vset.pattern.permute.xlu0 7
        %4258 = vperm.xlu0 %4257, %v4233
        %v4259 = vpop.permute.xlu0 %4258
        %4260 = vset.pattern.permute.xlu0 7
        %4261 = vperm.xlu0 %4260, %v4234
        %v4262 = vpop.permute.xlu0 %4261
        %4263 = vset.pattern.permute.xlu0 7
        %4264 = vperm.xlu0 %4263, %v4235
        %v4265 = vpop.permute.xlu0 %4264
        %4266 = vset.pattern.permute.xlu0 7
        %4267 = vperm.xlu0 %4266, %v4236
        %v4268 = vpop.permute.xlu0 %4267
        %4269 = vset.pattern.permute.xlu0 7
        %4270 = vperm.xlu0 %4269, %v4237
        %v4271 = vpop.permute.xlu0 %4270
        %4272 = vset.pattern.permute.xlu0 7
        %4273 = vperm.xlu0 %4272, %v4238
        %v4274 = vpop.permute.xlu0 %4273
        %4275 = vset.pattern.permute.xlu0 7
        %4276 = vperm.xlu0 %4275, %v4239
        %v4277 = vpop.permute.xlu0 %4276
        %4278 = vset.pattern.permute.xlu0 7
        %4279 = vperm.xlu0 %4278, %v4240
        %v4280 = vpop.permute.xlu0 %4279
        %4281 = vset.pattern.permute.xlu0 7
        %4282 = vperm.xlu0 %4281, %v4241
        %v4283 = vpop.permute.xlu0 %4282
        %4284 = vset.pattern.permute.xlu0 7
        %4285 = vperm.xlu0 %4284, %v4242
        %v4286 = vpop.permute.xlu0 %4285
        %4287 = vset.pattern.permute.xlu0 7
        %4288 = vperm.xlu0 %4287, %v4243
        %v4289 = vpop.permute.xlu0 %4288
        %4290 = vset.pattern.permute.xlu0 7
        %4291 = vperm.xlu0 %4290, %v4244
        %v4292 = vpop.permute.xlu0 %4291
        %vm4293 = vcmp.eq.s32.totalorder %v205, %v4247
        %vm4294 = vcmp.eq.s32.totalorder %v206, %v4247
        %vm4295 = vcmp.eq.s32.totalorder %v207, %v4247
        %vm4296 = vcmp.eq.s32.totalorder %v208, %v4247
        %vm4297 = vcmp.eq.s32.totalorder %v209, %v4247
        %vm4298 = vcmp.eq.s32.totalorder %v210, %v4247
        %vm4299 = vcmp.eq.s32.totalorder %v211, %v4247
        %vm4300 = vcmp.eq.s32.totalorder %v212, %v4247
        %vm4301 = vcmp.eq.s32.totalorder %v205, %v4250
        %vm4302 = vcmp.eq.s32.totalorder %v206, %v4250
        %vm4303 = vcmp.eq.s32.totalorder %v207, %v4250
        %vm4304 = vcmp.eq.s32.totalorder %v208, %v4250
        %vm4305 = vcmp.eq.s32.totalorder %v209, %v4250
        %vm4306 = vcmp.eq.s32.totalorder %v210, %v4250
        %vm4307 = vcmp.eq.s32.totalorder %v211, %v4250
        %vm4308 = vcmp.eq.s32.totalorder %v212, %v4250
        %vm4309 = vcmp.eq.s32.totalorder %v205, %v4253
        %vm4310 = vcmp.eq.s32.totalorder %v206, %v4253
        %vm4311 = vcmp.eq.s32.totalorder %v207, %v4253
        %vm4312 = vcmp.eq.s32.totalorder %v208, %v4253
        %vm4313 = vcmp.eq.s32.totalorder %v209, %v4253
        %vm4314 = vcmp.eq.s32.totalorder %v210, %v4253
        %vm4315 = vcmp.eq.s32.totalorder %v211, %v4253
        %vm4316 = vcmp.eq.s32.totalorder %v212, %v4253
        %vm4317 = vcmp.eq.s32.totalorder %v205, %v4256
        %vm4318 = vcmp.eq.s32.totalorder %v206, %v4256
        %vm4319 = vcmp.eq.s32.totalorder %v207, %v4256
        %vm4320 = vcmp.eq.s32.totalorder %v208, %v4256
        %vm4321 = vcmp.eq.s32.totalorder %v209, %v4256
        %vm4322 = vcmp.eq.s32.totalorder %v210, %v4256
        %vm4323 = vcmp.eq.s32.totalorder %v211, %v4256
        %vm4324 = vcmp.eq.s32.totalorder %v212, %v4256
        %vm4325 = vcmp.eq.s32.totalorder %v205, %v4259
        %vm4326 = vcmp.eq.s32.totalorder %v206, %v4259
        %vm4327 = vcmp.eq.s32.totalorder %v207, %v4259
        %vm4328 = vcmp.eq.s32.totalorder %v208, %v4259
        %vm4329 = vcmp.eq.s32.totalorder %v209, %v4259
        %vm4330 = vcmp.eq.s32.totalorder %v210, %v4259
        %vm4331 = vcmp.eq.s32.totalorder %v211, %v4259
        %vm4332 = vcmp.eq.s32.totalorder %v212, %v4259
        %vm4333 = vcmp.eq.s32.totalorder %v205, %v4262
        %vm4334 = vcmp.eq.s32.totalorder %v206, %v4262
        %vm4335 = vcmp.eq.s32.totalorder %v207, %v4262
        %vm4336 = vcmp.eq.s32.totalorder %v208, %v4262
        %vm4337 = vcmp.eq.s32.totalorder %v209, %v4262
        %vm4338 = vcmp.eq.s32.totalorder %v210, %v4262
        %vm4339 = vcmp.eq.s32.totalorder %v211, %v4262
        %vm4340 = vcmp.eq.s32.totalorder %v212, %v4262
        %vm4341 = vcmp.eq.s32.totalorder %v205, %v4265
        %vm4342 = vcmp.eq.s32.totalorder %v206, %v4265
        %vm4343 = vcmp.eq.s32.totalorder %v207, %v4265
        %vm4344 = vcmp.eq.s32.totalorder %v208, %v4265
        %vm4345 = vcmp.eq.s32.totalorder %v209, %v4265
        %vm4346 = vcmp.eq.s32.totalorder %v210, %v4265
        %vm4347 = vcmp.eq.s32.totalorder %v211, %v4265
        %vm4348 = vcmp.eq.s32.totalorder %v212, %v4265
        %vm4349 = vcmp.eq.s32.totalorder %v205, %v4268
        %vm4350 = vcmp.eq.s32.totalorder %v206, %v4268
        %vm4351 = vcmp.eq.s32.totalorder %v207, %v4268
        %vm4352 = vcmp.eq.s32.totalorder %v208, %v4268
        %vm4353 = vcmp.eq.s32.totalorder %v209, %v4268
        %vm4354 = vcmp.eq.s32.totalorder %v210, %v4268
        %vm4355 = vcmp.eq.s32.totalorder %v211, %v4268
        %vm4356 = vcmp.eq.s32.totalorder %v212, %v4268
        %vm4357 = vcmp.eq.s32.totalorder %v205, %v4271
        %vm4358 = vcmp.eq.s32.totalorder %v206, %v4271
        %vm4359 = vcmp.eq.s32.totalorder %v207, %v4271
        %vm4360 = vcmp.eq.s32.totalorder %v208, %v4271
        %vm4361 = vcmp.eq.s32.totalorder %v209, %v4271
        %vm4362 = vcmp.eq.s32.totalorder %v210, %v4271
        %vm4363 = vcmp.eq.s32.totalorder %v211, %v4271
        %vm4364 = vcmp.eq.s32.totalorder %v212, %v4271
        %vm4365 = vcmp.eq.s32.totalorder %v205, %v4274
        %vm4366 = vcmp.eq.s32.totalorder %v206, %v4274
        %vm4367 = vcmp.eq.s32.totalorder %v207, %v4274
        %vm4368 = vcmp.eq.s32.totalorder %v208, %v4274
        %vm4369 = vcmp.eq.s32.totalorder %v209, %v4274
        %vm4370 = vcmp.eq.s32.totalorder %v210, %v4274
        %vm4371 = vcmp.eq.s32.totalorder %v211, %v4274
        %vm4372 = vcmp.eq.s32.totalorder %v212, %v4274
        %vm4373 = vcmp.eq.s32.totalorder %v205, %v4277
        %vm4374 = vcmp.eq.s32.totalorder %v206, %v4277
        %vm4375 = vcmp.eq.s32.totalorder %v207, %v4277
        %vm4376 = vcmp.eq.s32.totalorder %v208, %v4277
        %vm4377 = vcmp.eq.s32.totalorder %v209, %v4277
        %vm4378 = vcmp.eq.s32.totalorder %v210, %v4277
        %vm4379 = vcmp.eq.s32.totalorder %v211, %v4277
        %vm4380 = vcmp.eq.s32.totalorder %v212, %v4277
        %vm4381 = vcmp.eq.s32.totalorder %v205, %v4280
        %vm4382 = vcmp.eq.s32.totalorder %v206, %v4280
        %vm4383 = vcmp.eq.s32.totalorder %v207, %v4280
        %vm4384 = vcmp.eq.s32.totalorder %v208, %v4280
        %vm4385 = vcmp.eq.s32.totalorder %v209, %v4280
        %vm4386 = vcmp.eq.s32.totalorder %v210, %v4280
        %vm4387 = vcmp.eq.s32.totalorder %v211, %v4280
        %vm4388 = vcmp.eq.s32.totalorder %v212, %v4280
        %vm4389 = vcmp.eq.s32.totalorder %v205, %v4283
        %vm4390 = vcmp.eq.s32.totalorder %v206, %v4283
        %vm4391 = vcmp.eq.s32.totalorder %v207, %v4283
        %vm4392 = vcmp.eq.s32.totalorder %v208, %v4283
        %vm4393 = vcmp.eq.s32.totalorder %v209, %v4283
        %vm4394 = vcmp.eq.s32.totalorder %v210, %v4283
        %vm4395 = vcmp.eq.s32.totalorder %v211, %v4283
        %vm4396 = vcmp.eq.s32.totalorder %v212, %v4283
        %vm4397 = vcmp.eq.s32.totalorder %v205, %v4286
        %vm4398 = vcmp.eq.s32.totalorder %v206, %v4286
        %vm4399 = vcmp.eq.s32.totalorder %v207, %v4286
        %vm4400 = vcmp.eq.s32.totalorder %v208, %v4286
        %vm4401 = vcmp.eq.s32.totalorder %v209, %v4286
        %vm4402 = vcmp.eq.s32.totalorder %v210, %v4286
        %vm4403 = vcmp.eq.s32.totalorder %v211, %v4286
        %vm4404 = vcmp.eq.s32.totalorder %v212, %v4286
        %vm4405 = vcmp.eq.s32.totalorder %v205, %v4289
        %vm4406 = vcmp.eq.s32.totalorder %v206, %v4289
        %vm4407 = vcmp.eq.s32.totalorder %v207, %v4289
        %vm4408 = vcmp.eq.s32.totalorder %v208, %v4289
        %vm4409 = vcmp.eq.s32.totalorder %v209, %v4289
        %vm4410 = vcmp.eq.s32.totalorder %v210, %v4289
        %vm4411 = vcmp.eq.s32.totalorder %v211, %v4289
        %vm4412 = vcmp.eq.s32.totalorder %v212, %v4289
        %vm4413 = vcmp.eq.s32.totalorder %v205, %v4292
        %vm4414 = vcmp.eq.s32.totalorder %v206, %v4292
        %vm4415 = vcmp.eq.s32.totalorder %v207, %v4292
        %vm4416 = vcmp.eq.s32.totalorder %v208, %v4292
        %vm4417 = vcmp.eq.s32.totalorder %v209, %v4292
        %vm4418 = vcmp.eq.s32.totalorder %v210, %v4292
        %vm4419 = vcmp.eq.s32.totalorder %v211, %v4292
        %vm4420 = vcmp.eq.s32.totalorder %v212, %v4292
        %v4421 = vsel %vm4293, 1, 0
        %v4422 = vsel %vm4294, 1, 0
        %v4423 = vsel %vm4295, 1, 0
        %v4424 = vsel %vm4296, 1, 0
        %v4425 = vsel %vm4297, 1, 0
        %v4426 = vsel %vm4298, 1, 0
        %v4427 = vsel %vm4299, 1, 0
        %v4428 = vsel %vm4300, 1, 0
        %v4429 = vsel %vm4301, 1, 0
        %v4430 = vsel %vm4302, 1, 0
        %v4431 = vsel %vm4303, 1, 0
        %v4432 = vsel %vm4304, 1, 0
        %v4433 = vsel %vm4305, 1, 0
        %v4434 = vsel %vm4306, 1, 0
        %v4435 = vsel %vm4307, 1, 0
        %v4436 = vsel %vm4308, 1, 0
        %v4437 = vsel %vm4309, 1, 0
        %v4438 = vsel %vm4310, 1, 0
        %v4439 = vsel %vm4311, 1, 0
        %v4440 = vsel %vm4312, 1, 0
        %v4441 = vsel %vm4313, 1, 0
        %v4442 = vsel %vm4314, 1, 0
        %v4443 = vsel %vm4315, 1, 0
        %v4444 = vsel %vm4316, 1, 0
        %v4445 = vsel %vm4317, 1, 0
        %v4446 = vsel %vm4318, 1, 0
        %v4447 = vsel %vm4319, 1, 0
        %v4448 = vsel %vm4320, 1, 0
        %v4449 = vsel %vm4321, 1, 0
        %v4450 = vsel %vm4322, 1, 0
        %v4451 = vsel %vm4323, 1, 0
        %v4452 = vsel %vm4324, 1, 0
        %v4453 = vsel %vm4325, 1, 0
        %v4454 = vsel %vm4326, 1, 0
        %v4455 = vsel %vm4327, 1, 0
        %v4456 = vsel %vm4328, 1, 0
        %v4457 = vsel %vm4329, 1, 0
        %v4458 = vsel %vm4330, 1, 0
        %v4459 = vsel %vm4331, 1, 0
        %v4460 = vsel %vm4332, 1, 0
        %v4461 = vsel %vm4333, 1, 0
        %v4462 = vsel %vm4334, 1, 0
        %v4463 = vsel %vm4335, 1, 0
        %v4464 = vsel %vm4336, 1, 0
        %v4465 = vsel %vm4337, 1, 0
        %v4466 = vsel %vm4338, 1, 0
        %v4467 = vsel %vm4339, 1, 0
        %v4468 = vsel %vm4340, 1, 0
        %v4469 = vsel %vm4341, 1, 0
        %v4470 = vsel %vm4342, 1, 0
        %v4471 = vsel %vm4343, 1, 0
        %v4472 = vsel %vm4344, 1, 0
        %v4473 = vsel %vm4345, 1, 0
        %v4474 = vsel %vm4346, 1, 0
        %v4475 = vsel %vm4347, 1, 0
        %v4476 = vsel %vm4348, 1, 0
        %v4477 = vsel %vm4349, 1, 0
        %v4478 = vsel %vm4350, 1, 0
        %v4479 = vsel %vm4351, 1, 0
        %v4480 = vsel %vm4352, 1, 0
        %v4481 = vsel %vm4353, 1, 0
        %v4482 = vsel %vm4354, 1, 0
        %v4483 = vsel %vm4355, 1, 0
        %v4484 = vsel %vm4356, 1, 0
        %v4485 = vsel %vm4357, 1, 0
        %v4486 = vsel %vm4358, 1, 0
        %v4487 = vsel %vm4359, 1, 0
        %v4488 = vsel %vm4360, 1, 0
        %v4489 = vsel %vm4361, 1, 0
        %v4490 = vsel %vm4362, 1, 0
        %v4491 = vsel %vm4363, 1, 0
        %v4492 = vsel %vm4364, 1, 0
        %v4493 = vsel %vm4365, 1, 0
        %v4494 = vsel %vm4366, 1, 0
        %v4495 = vsel %vm4367, 1, 0
        %v4496 = vsel %vm4368, 1, 0
        %v4497 = vsel %vm4369, 1, 0
        %v4498 = vsel %vm4370, 1, 0
        %v4499 = vsel %vm4371, 1, 0
        %v4500 = vsel %vm4372, 1, 0
        %v4501 = vsel %vm4373, 1, 0
        %v4502 = vsel %vm4374, 1, 0
        %v4503 = vsel %vm4375, 1, 0
        %v4504 = vsel %vm4376, 1, 0
        %v4505 = vsel %vm4377, 1, 0
        %v4506 = vsel %vm4378, 1, 0
        %v4507 = vsel %vm4379, 1, 0
        %v4508 = vsel %vm4380, 1, 0
        %v4509 = vsel %vm4381, 1, 0
        %v4510 = vsel %vm4382, 1, 0
        %v4511 = vsel %vm4383, 1, 0
        %v4512 = vsel %vm4384, 1, 0
        %v4513 = vsel %vm4385, 1, 0
        %v4514 = vsel %vm4386, 1, 0
        %v4515 = vsel %vm4387, 1, 0
        %v4516 = vsel %vm4388, 1, 0
        %v4517 = vsel %vm4389, 1, 0
        %v4518 = vsel %vm4390, 1, 0
        %v4519 = vsel %vm4391, 1, 0
        %v4520 = vsel %vm4392, 1, 0
        %v4521 = vsel %vm4393, 1, 0
        %v4522 = vsel %vm4394, 1, 0
        %v4523 = vsel %vm4395, 1, 0
        %v4524 = vsel %vm4396, 1, 0
        %v4525 = vsel %vm4397, 1, 0
        %v4526 = vsel %vm4398, 1, 0
        %v4527 = vsel %vm4399, 1, 0
        %v4528 = vsel %vm4400, 1, 0
        %v4529 = vsel %vm4401, 1, 0
        %v4530 = vsel %vm4402, 1, 0
        %v4531 = vsel %vm4403, 1, 0
        %v4532 = vsel %vm4404, 1, 0
        %v4533 = vsel %vm4405, 1, 0
        %v4534 = vsel %vm4406, 1, 0
        %v4535 = vsel %vm4407, 1, 0
        %v4536 = vsel %vm4408, 1, 0
        %v4537 = vsel %vm4409, 1, 0
        %v4538 = vsel %vm4410, 1, 0
        %v4539 = vsel %vm4411, 1, 0
        %v4540 = vsel %vm4412, 1, 0
        %v4541 = vsel %vm4413, 1, 0
        %v4542 = vsel %vm4414, 1, 0
        %v4543 = vsel %vm4415, 1, 0
        %v4544 = vsel %vm4416, 1, 0
        %v4545 = vsel %vm4417, 1, 0
        %v4546 = vsel %vm4418, 1, 0
        %v4547 = vsel %vm4419, 1, 0
        %v4548 = vsel %vm4420, 1, 0
        %v4549 = vcvt.s32.f32 %v4421
        %v4550 = vcvt.s32.f32 %v4422
        %v4551 = vcvt.s32.f32 %v4423
        %v4552 = vcvt.s32.f32 %v4424
        %v4553 = vcvt.s32.f32 %v4425
        %v4554 = vcvt.s32.f32 %v4426
        %v4555 = vcvt.s32.f32 %v4427
        %v4556 = vcvt.s32.f32 %v4428
        %v4557 = vcvt.s32.f32 %v4429
        %v4558 = vcvt.s32.f32 %v4430
        %v4559 = vcvt.s32.f32 %v4431
        %v4560 = vcvt.s32.f32 %v4432
        %v4561 = vcvt.s32.f32 %v4433
        %v4562 = vcvt.s32.f32 %v4434
        %v4563 = vcvt.s32.f32 %v4435
        %v4564 = vcvt.s32.f32 %v4436
        %v4565 = vcvt.s32.f32 %v4437
        %v4566 = vcvt.s32.f32 %v4438
        %v4567 = vcvt.s32.f32 %v4439
        %v4568 = vcvt.s32.f32 %v4440
        %v4569 = vcvt.s32.f32 %v4441
        %v4570 = vcvt.s32.f32 %v4442
        %v4571 = vcvt.s32.f32 %v4443
        %v4572 = vcvt.s32.f32 %v4444
        %v4573 = vcvt.s32.f32 %v4445
        %v4574 = vcvt.s32.f32 %v4446
        %v4575 = vcvt.s32.f32 %v4447
        %v4576 = vcvt.s32.f32 %v4448
        %v4577 = vcvt.s32.f32 %v4449
        %v4578 = vcvt.s32.f32 %v4450
        %v4579 = vcvt.s32.f32 %v4451
        %v4580 = vcvt.s32.f32 %v4452
        %v4581 = vcvt.s32.f32 %v4453
        %v4582 = vcvt.s32.f32 %v4454
        %v4583 = vcvt.s32.f32 %v4455
        %v4584 = vcvt.s32.f32 %v4456
        %v4585 = vcvt.s32.f32 %v4457
        %v4586 = vcvt.s32.f32 %v4458
        %v4587 = vcvt.s32.f32 %v4459
        %v4588 = vcvt.s32.f32 %v4460
        %v4589 = vcvt.s32.f32 %v4461
        %v4590 = vcvt.s32.f32 %v4462
        %v4591 = vcvt.s32.f32 %v4463
        %v4592 = vcvt.s32.f32 %v4464
        %v4593 = vcvt.s32.f32 %v4465
        %v4594 = vcvt.s32.f32 %v4466
        %v4595 = vcvt.s32.f32 %v4467
        %v4596 = vcvt.s32.f32 %v4468
        %v4597 = vcvt.s32.f32 %v4469
        %v4598 = vcvt.s32.f32 %v4470
        %v4599 = vcvt.s32.f32 %v4471
        %v4600 = vcvt.s32.f32 %v4472
        %v4601 = vcvt.s32.f32 %v4473
        %v4602 = vcvt.s32.f32 %v4474
        %v4603 = vcvt.s32.f32 %v4475
        %v4604 = vcvt.s32.f32 %v4476
        %v4605 = vcvt.s32.f32 %v4477
        %v4606 = vcvt.s32.f32 %v4478
        %v4607 = vcvt.s32.f32 %v4479
        %v4608 = vcvt.s32.f32 %v4480
        %v4609 = vcvt.s32.f32 %v4481
        %v4610 = vcvt.s32.f32 %v4482
        %v4611 = vcvt.s32.f32 %v4483
        %v4612 = vcvt.s32.f32 %v4484
        %v4613 = vcvt.s32.f32 %v4485
        %v4614 = vcvt.s32.f32 %v4486
        %v4615 = vcvt.s32.f32 %v4487
        %v4616 = vcvt.s32.f32 %v4488
        %v4617 = vcvt.s32.f32 %v4489
        %v4618 = vcvt.s32.f32 %v4490
        %v4619 = vcvt.s32.f32 %v4491
        %v4620 = vcvt.s32.f32 %v4492
        %v4621 = vcvt.s32.f32 %v4493
        %v4622 = vcvt.s32.f32 %v4494
        %v4623 = vcvt.s32.f32 %v4495
        %v4624 = vcvt.s32.f32 %v4496
        %v4625 = vcvt.s32.f32 %v4497
        %v4626 = vcvt.s32.f32 %v4498
        %v4627 = vcvt.s32.f32 %v4499
        %v4628 = vcvt.s32.f32 %v4500
        %v4629 = vcvt.s32.f32 %v4501
        %v4630 = vcvt.s32.f32 %v4502
        %v4631 = vcvt.s32.f32 %v4503
        %v4632 = vcvt.s32.f32 %v4504
        %v4633 = vcvt.s32.f32 %v4505
        %v4634 = vcvt.s32.f32 %v4506
        %v4635 = vcvt.s32.f32 %v4507
        %v4636 = vcvt.s32.f32 %v4508
        %v4637 = vcvt.s32.f32 %v4509
        %v4638 = vcvt.s32.f32 %v4510
        %v4639 = vcvt.s32.f32 %v4511
        %v4640 = vcvt.s32.f32 %v4512
        %v4641 = vcvt.s32.f32 %v4513
        %v4642 = vcvt.s32.f32 %v4514
        %v4643 = vcvt.s32.f32 %v4515
        %v4644 = vcvt.s32.f32 %v4516
        %v4645 = vcvt.s32.f32 %v4517
        %v4646 = vcvt.s32.f32 %v4518
        %v4647 = vcvt.s32.f32 %v4519
        %v4648 = vcvt.s32.f32 %v4520
        %v4649 = vcvt.s32.f32 %v4521
        %v4650 = vcvt.s32.f32 %v4522
        %v4651 = vcvt.s32.f32 %v4523
        %v4652 = vcvt.s32.f32 %v4524
        %v4653 = vcvt.s32.f32 %v4525
        %v4654 = vcvt.s32.f32 %v4526
        %v4655 = vcvt.s32.f32 %v4527
        %v4656 = vcvt.s32.f32 %v4528
        %v4657 = vcvt.s32.f32 %v4529
        %v4658 = vcvt.s32.f32 %v4530
        %v4659 = vcvt.s32.f32 %v4531
        %v4660 = vcvt.s32.f32 %v4532
        %v4661 = vcvt.s32.f32 %v4533
        %v4662 = vcvt.s32.f32 %v4534
        %v4663 = vcvt.s32.f32 %v4535
        %v4664 = vcvt.s32.f32 %v4536
        %v4665 = vcvt.s32.f32 %v4537
        %v4666 = vcvt.s32.f32 %v4538
        %v4667 = vcvt.s32.f32 %v4539
        %v4668 = vcvt.s32.f32 %v4540
        %v4669 = vcvt.s32.f32 %v4541
        %v4670 = vcvt.s32.f32 %v4542
        %v4671 = vcvt.s32.f32 %v4543
        %v4672 = vcvt.s32.f32 %v4544
        %v4673 = vcvt.s32.f32 %v4545
        %v4674 = vcvt.s32.f32 %v4546
        %v4675 = vcvt.s32.f32 %v4547
        %v4676 = vcvt.s32.f32 %v4548
        %v4677 = vadd.f32 %v4101, %v4549
        %v4678 = vadd.f32 %v4102, %v4550
        %v4679 = vadd.f32 %v4103, %v4551
        %v4680 = vadd.f32 %v4104, %v4552
        %v4681 = vadd.f32 %v4105, %v4553
        %v4682 = vadd.f32 %v4106, %v4554
        %v4683 = vadd.f32 %v4107, %v4555
        %v4684 = vadd.f32 %v4108, %v4556
        %v4685 = vadd.f32 %v4109, %v4557
        %v4686 = vadd.f32 %v4110, %v4558
        %v4687 = vadd.f32 %v4111, %v4559
        %v4688 = vadd.f32 %v4112, %v4560
        %v4689 = vadd.f32 %v4113, %v4561
        %v4690 = vadd.f32 %v4114, %v4562
        %v4691 = vadd.f32 %v4115, %v4563
        %v4692 = vadd.f32 %v4116, %v4564
        %v4693 = vadd.f32 %v4117, %v4565
        %v4694 = vadd.f32 %v4118, %v4566
        %v4695 = vadd.f32 %v4119, %v4567
        %v4696 = vadd.f32 %v4120, %v4568
        %v4697 = vadd.f32 %v4121, %v4569
        %v4698 = vadd.f32 %v4122, %v4570
        %v4699 = vadd.f32 %v4123, %v4571
        %v4700 = vadd.f32 %v4124, %v4572
        %v4701 = vadd.f32 %v4125, %v4573
        %v4702 = vadd.f32 %v4126, %v4574
        %v4703 = vadd.f32 %v4127, %v4575
        %v4704 = vadd.f32 %v4128, %v4576
        %v4705 = vadd.f32 %v4129, %v4577
        %v4706 = vadd.f32 %v4130, %v4578
        %v4707 = vadd.f32 %v4131, %v4579
        %v4708 = vadd.f32 %v4132, %v4580
        %v4709 = vadd.f32 %v4133, %v4581
        %v4710 = vadd.f32 %v4134, %v4582
        %v4711 = vadd.f32 %v4135, %v4583
        %v4712 = vadd.f32 %v4136, %v4584
        %v4713 = vadd.f32 %v4137, %v4585
        %v4714 = vadd.f32 %v4138, %v4586
        %v4715 = vadd.f32 %v4139, %v4587
        %v4716 = vadd.f32 %v4140, %v4588
        %v4717 = vadd.f32 %v4141, %v4589
        %v4718 = vadd.f32 %v4142, %v4590
        %v4719 = vadd.f32 %v4143, %v4591
        %v4720 = vadd.f32 %v4144, %v4592
        %v4721 = vadd.f32 %v4145, %v4593
        %v4722 = vadd.f32 %v4146, %v4594
        %v4723 = vadd.f32 %v4147, %v4595
        %v4724 = vadd.f32 %v4148, %v4596
        %v4725 = vadd.f32 %v4149, %v4597
        %v4726 = vadd.f32 %v4150, %v4598
        %v4727 = vadd.f32 %v4151, %v4599
        %v4728 = vadd.f32 %v4152, %v4600
        %v4729 = vadd.f32 %v4153, %v4601
        %v4730 = vadd.f32 %v4154, %v4602
        %v4731 = vadd.f32 %v4155, %v4603
        %v4732 = vadd.f32 %v4156, %v4604
        %v4733 = vadd.f32 %v4157, %v4605
        %v4734 = vadd.f32 %v4158, %v4606
        %v4735 = vadd.f32 %v4159, %v4607
        %v4736 = vadd.f32 %v4160, %v4608
        %v4737 = vadd.f32 %v4161, %v4609
        %v4738 = vadd.f32 %v4162, %v4610
        %v4739 = vadd.f32 %v4163, %v4611
        %v4740 = vadd.f32 %v4164, %v4612
        %v4741 = vadd.f32 %v4165, %v4613
        %v4742 = vadd.f32 %v4166, %v4614
        %v4743 = vadd.f32 %v4167, %v4615
        %v4744 = vadd.f32 %v4168, %v4616
        %v4745 = vadd.f32 %v4169, %v4617
        %v4746 = vadd.f32 %v4170, %v4618
        %v4747 = vadd.f32 %v4171, %v4619
        %v4748 = vadd.f32 %v4172, %v4620
        %v4749 = vadd.f32 %v4173, %v4621
        %v4750 = vadd.f32 %v4174, %v4622
        %v4751 = vadd.f32 %v4175, %v4623
        %v4752 = vadd.f32 %v4176, %v4624
        %v4753 = vadd.f32 %v4177, %v4625
        %v4754 = vadd.f32 %v4178, %v4626
        %v4755 = vadd.f32 %v4179, %v4627
        %v4756 = vadd.f32 %v4180, %v4628
        %v4757 = vadd.f32 %v4181, %v4629
        %v4758 = vadd.f32 %v4182, %v4630
        %v4759 = vadd.f32 %v4183, %v4631
        %v4760 = vadd.f32 %v4184, %v4632
        %v4761 = vadd.f32 %v4185, %v4633
        %v4762 = vadd.f32 %v4186, %v4634
        %v4763 = vadd.f32 %v4187, %v4635
        %v4764 = vadd.f32 %v4188, %v4636
        %v4765 = vadd.f32 %v4189, %v4637
        %v4766 = vadd.f32 %v4190, %v4638
        %v4767 = vadd.f32 %v4191, %v4639
        %v4768 = vadd.f32 %v4192, %v4640
        %v4769 = vadd.f32 %v4193, %v4641
        %v4770 = vadd.f32 %v4194, %v4642
        %v4771 = vadd.f32 %v4195, %v4643
        %v4772 = vadd.f32 %v4196, %v4644
        %v4773 = vadd.f32 %v4197, %v4645
        %v4774 = vadd.f32 %v4198, %v4646
        %v4775 = vadd.f32 %v4199, %v4647
        %v4776 = vadd.f32 %v4200, %v4648
        %v4777 = vadd.f32 %v4201, %v4649
        %v4778 = vadd.f32 %v4202, %v4650
        %v4779 = vadd.f32 %v4203, %v4651
        %v4780 = vadd.f32 %v4204, %v4652
        %v4781 = vadd.f32 %v4205, %v4653
        %v4782 = vadd.f32 %v4206, %v4654
        %v4783 = vadd.f32 %v4207, %v4655
        %v4784 = vadd.f32 %v4208, %v4656
        %v4785 = vadd.f32 %v4209, %v4657
        %v4786 = vadd.f32 %v4210, %v4658
        %v4787 = vadd.f32 %v4211, %v4659
        %v4788 = vadd.f32 %v4212, %v4660
        %v4789 = vadd.f32 %v4213, %v4661
        %v4790 = vadd.f32 %v4214, %v4662
        %v4791 = vadd.f32 %v4215, %v4663
        %v4792 = vadd.f32 %v4216, %v4664
        %v4793 = vadd.f32 %v4217, %v4665
        %v4794 = vadd.f32 %v4218, %v4666
        %v4795 = vadd.f32 %v4219, %v4667
        %v4796 = vadd.f32 %v4220, %v4668
        %v4797 = vadd.f32 %v4221, %v4669
        %v4798 = vadd.f32 %v4222, %v4670
        %v4799 = vadd.f32 %v4223, %v4671
        %v4800 = vadd.f32 %v4224, %v4672
        %v4801 = vadd.f32 %v4225, %v4673
        %v4802 = vadd.f32 %v4226, %v4674
        %v4803 = vadd.f32 %v4227, %v4675
        %v4804 = vadd.f32 %v4228, %v4676
        %v4805 = vadd.s32 %v188, 512
        %v4806 = vadd.s32 %v189, 512
        %v4807 = vadd.s32 %v190, 512
        %v4808 = vadd.s32 %v191, 512
        %v4809 = vadd.s32 %v192, 512
        %v4810 = vadd.s32 %v193, 512
        %v4811 = vadd.s32 %v194, 512
        %v4812 = vadd.s32 %v195, 512
        %v4813 = vadd.s32 %v196, 512
        %v4814 = vadd.s32 %v197, 512
        %v4815 = vadd.s32 %v198, 512
        %v4816 = vadd.s32 %v199, 512
        %v4817 = vadd.s32 %v200, 512
        %v4818 = vadd.s32 %v201, 512
        %v4819 = vadd.s32 %v202, 512
        %v4820 = vadd.s32 %v203, 512
        %4821 = vset.pattern.permute.xlu0 8
        %4822 = vperm.xlu0 %4821, %v4805
        %v4823 = vpop.permute.xlu0 %4822
        %4824 = vset.pattern.permute.xlu0 8
        %4825 = vperm.xlu0 %4824, %v4806
        %v4826 = vpop.permute.xlu0 %4825
        %4827 = vset.pattern.permute.xlu0 8
        %4828 = vperm.xlu0 %4827, %v4807
        %v4829 = vpop.permute.xlu0 %4828
        %4830 = vset.pattern.permute.xlu0 8
        %4831 = vperm.xlu0 %4830, %v4808
        %v4832 = vpop.permute.xlu0 %4831
        %4833 = vset.pattern.permute.xlu0 8
        %4834 = vperm.xlu0 %4833, %v4809
        %v4835 = vpop.permute.xlu0 %4834
        %4836 = vset.pattern.permute.xlu0 8
        %4837 = vperm.xlu0 %4836, %v4810
        %v4838 = vpop.permute.xlu0 %4837
        %4839 = vset.pattern.permute.xlu0 8
        %4840 = vperm.xlu0 %4839, %v4811
        %v4841 = vpop.permute.xlu0 %4840
        %4842 = vset.pattern.permute.xlu0 8
        %4843 = vperm.xlu0 %4842, %v4812
        %v4844 = vpop.permute.xlu0 %4843
        %4845 = vset.pattern.permute.xlu0 8
        %4846 = vperm.xlu0 %4845, %v4813
        %v4847 = vpop.permute.xlu0 %4846
        %4848 = vset.pattern.permute.xlu0 8
        %4849 = vperm.xlu0 %4848, %v4814
        %v4850 = vpop.permute.xlu0 %4849
        %4851 = vset.pattern.permute.xlu0 8
        %4852 = vperm.xlu0 %4851, %v4815
        %v4853 = vpop.permute.xlu0 %4852
        %4854 = vset.pattern.permute.xlu0 8
        %4855 = vperm.xlu0 %4854, %v4816
        %v4856 = vpop.permute.xlu0 %4855
        %4857 = vset.pattern.permute.xlu0 8
        %4858 = vperm.xlu0 %4857, %v4817
        %v4859 = vpop.permute.xlu0 %4858
        %4860 = vset.pattern.permute.xlu0 8
        %4861 = vperm.xlu0 %4860, %v4818
        %v4862 = vpop.permute.xlu0 %4861
        %4863 = vset.pattern.permute.xlu0 8
        %4864 = vperm.xlu0 %4863, %v4819
        %v4865 = vpop.permute.xlu0 %4864
        %4866 = vset.pattern.permute.xlu0 8
        %4867 = vperm.xlu0 %4866, %v4820
        %v4868 = vpop.permute.xlu0 %4867
        %vm4869 = vcmp.eq.s32.totalorder %v205, %v4823
        %vm4870 = vcmp.eq.s32.totalorder %v206, %v4823
        %vm4871 = vcmp.eq.s32.totalorder %v207, %v4823
        %vm4872 = vcmp.eq.s32.totalorder %v208, %v4823
        %vm4873 = vcmp.eq.s32.totalorder %v209, %v4823
        %vm4874 = vcmp.eq.s32.totalorder %v210, %v4823
        %vm4875 = vcmp.eq.s32.totalorder %v211, %v4823
        %vm4876 = vcmp.eq.s32.totalorder %v212, %v4823
        %vm4877 = vcmp.eq.s32.totalorder %v205, %v4826
        %vm4878 = vcmp.eq.s32.totalorder %v206, %v4826
        %vm4879 = vcmp.eq.s32.totalorder %v207, %v4826
        %vm4880 = vcmp.eq.s32.totalorder %v208, %v4826
        %vm4881 = vcmp.eq.s32.totalorder %v209, %v4826
        %vm4882 = vcmp.eq.s32.totalorder %v210, %v4826
        %vm4883 = vcmp.eq.s32.totalorder %v211, %v4826
        %vm4884 = vcmp.eq.s32.totalorder %v212, %v4826
        %vm4885 = vcmp.eq.s32.totalorder %v205, %v4829
        %vm4886 = vcmp.eq.s32.totalorder %v206, %v4829
        %vm4887 = vcmp.eq.s32.totalorder %v207, %v4829
        %vm4888 = vcmp.eq.s32.totalorder %v208, %v4829
        %vm4889 = vcmp.eq.s32.totalorder %v209, %v4829
        %vm4890 = vcmp.eq.s32.totalorder %v210, %v4829
        %vm4891 = vcmp.eq.s32.totalorder %v211, %v4829
        %vm4892 = vcmp.eq.s32.totalorder %v212, %v4829
        %vm4893 = vcmp.eq.s32.totalorder %v205, %v4832
        %vm4894 = vcmp.eq.s32.totalorder %v206, %v4832
        %vm4895 = vcmp.eq.s32.totalorder %v207, %v4832
        %vm4896 = vcmp.eq.s32.totalorder %v208, %v4832
        %vm4897 = vcmp.eq.s32.totalorder %v209, %v4832
        %vm4898 = vcmp.eq.s32.totalorder %v210, %v4832
        %vm4899 = vcmp.eq.s32.totalorder %v211, %v4832
        %vm4900 = vcmp.eq.s32.totalorder %v212, %v4832
        %vm4901 = vcmp.eq.s32.totalorder %v205, %v4835
        %vm4902 = vcmp.eq.s32.totalorder %v206, %v4835
        %vm4903 = vcmp.eq.s32.totalorder %v207, %v4835
        %vm4904 = vcmp.eq.s32.totalorder %v208, %v4835
        %vm4905 = vcmp.eq.s32.totalorder %v209, %v4835
        %vm4906 = vcmp.eq.s32.totalorder %v210, %v4835
        %vm4907 = vcmp.eq.s32.totalorder %v211, %v4835
        %vm4908 = vcmp.eq.s32.totalorder %v212, %v4835
        %vm4909 = vcmp.eq.s32.totalorder %v205, %v4838
        %vm4910 = vcmp.eq.s32.totalorder %v206, %v4838
        %vm4911 = vcmp.eq.s32.totalorder %v207, %v4838
        %vm4912 = vcmp.eq.s32.totalorder %v208, %v4838
        %vm4913 = vcmp.eq.s32.totalorder %v209, %v4838
        %vm4914 = vcmp.eq.s32.totalorder %v210, %v4838
        %vm4915 = vcmp.eq.s32.totalorder %v211, %v4838
        %vm4916 = vcmp.eq.s32.totalorder %v212, %v4838
        %vm4917 = vcmp.eq.s32.totalorder %v205, %v4841
        %vm4918 = vcmp.eq.s32.totalorder %v206, %v4841
        %vm4919 = vcmp.eq.s32.totalorder %v207, %v4841
        %vm4920 = vcmp.eq.s32.totalorder %v208, %v4841
        %vm4921 = vcmp.eq.s32.totalorder %v209, %v4841
        %vm4922 = vcmp.eq.s32.totalorder %v210, %v4841
        %vm4923 = vcmp.eq.s32.totalorder %v211, %v4841
        %vm4924 = vcmp.eq.s32.totalorder %v212, %v4841
        %vm4925 = vcmp.eq.s32.totalorder %v205, %v4844
        %vm4926 = vcmp.eq.s32.totalorder %v206, %v4844
        %vm4927 = vcmp.eq.s32.totalorder %v207, %v4844
        %vm4928 = vcmp.eq.s32.totalorder %v208, %v4844
        %vm4929 = vcmp.eq.s32.totalorder %v209, %v4844
        %vm4930 = vcmp.eq.s32.totalorder %v210, %v4844
        %vm4931 = vcmp.eq.s32.totalorder %v211, %v4844
        %vm4932 = vcmp.eq.s32.totalorder %v212, %v4844
        %vm4933 = vcmp.eq.s32.totalorder %v205, %v4847
        %vm4934 = vcmp.eq.s32.totalorder %v206, %v4847
        %vm4935 = vcmp.eq.s32.totalorder %v207, %v4847
        %vm4936 = vcmp.eq.s32.totalorder %v208, %v4847
        %vm4937 = vcmp.eq.s32.totalorder %v209, %v4847
        %vm4938 = vcmp.eq.s32.totalorder %v210, %v4847
        %vm4939 = vcmp.eq.s32.totalorder %v211, %v4847
        %vm4940 = vcmp.eq.s32.totalorder %v212, %v4847
        %vm4941 = vcmp.eq.s32.totalorder %v205, %v4850
        %vm4942 = vcmp.eq.s32.totalorder %v206, %v4850
        %vm4943 = vcmp.eq.s32.totalorder %v207, %v4850
        %vm4944 = vcmp.eq.s32.totalorder %v208, %v4850
        %vm4945 = vcmp.eq.s32.totalorder %v209, %v4850
        %vm4946 = vcmp.eq.s32.totalorder %v210, %v4850
        %vm4947 = vcmp.eq.s32.totalorder %v211, %v4850
        %vm4948 = vcmp.eq.s32.totalorder %v212, %v4850
        %vm4949 = vcmp.eq.s32.totalorder %v205, %v4853
        %vm4950 = vcmp.eq.s32.totalorder %v206, %v4853
        %vm4951 = vcmp.eq.s32.totalorder %v207, %v4853
        %vm4952 = vcmp.eq.s32.totalorder %v208, %v4853
        %vm4953 = vcmp.eq.s32.totalorder %v209, %v4853
        %vm4954 = vcmp.eq.s32.totalorder %v210, %v4853
        %vm4955 = vcmp.eq.s32.totalorder %v211, %v4853
        %vm4956 = vcmp.eq.s32.totalorder %v212, %v4853
        %vm4957 = vcmp.eq.s32.totalorder %v205, %v4856
        %vm4958 = vcmp.eq.s32.totalorder %v206, %v4856
        %vm4959 = vcmp.eq.s32.totalorder %v207, %v4856
        %vm4960 = vcmp.eq.s32.totalorder %v208, %v4856
        %vm4961 = vcmp.eq.s32.totalorder %v209, %v4856
        %vm4962 = vcmp.eq.s32.totalorder %v210, %v4856
        %vm4963 = vcmp.eq.s32.totalorder %v211, %v4856
        %vm4964 = vcmp.eq.s32.totalorder %v212, %v4856
        %vm4965 = vcmp.eq.s32.totalorder %v205, %v4859
        %vm4966 = vcmp.eq.s32.totalorder %v206, %v4859
        %vm4967 = vcmp.eq.s32.totalorder %v207, %v4859
        %vm4968 = vcmp.eq.s32.totalorder %v208, %v4859
        %vm4969 = vcmp.eq.s32.totalorder %v209, %v4859
        %vm4970 = vcmp.eq.s32.totalorder %v210, %v4859
        %vm4971 = vcmp.eq.s32.totalorder %v211, %v4859
        %vm4972 = vcmp.eq.s32.totalorder %v212, %v4859
        %vm4973 = vcmp.eq.s32.totalorder %v205, %v4862
        %vm4974 = vcmp.eq.s32.totalorder %v206, %v4862
        %vm4975 = vcmp.eq.s32.totalorder %v207, %v4862
        %vm4976 = vcmp.eq.s32.totalorder %v208, %v4862
        %vm4977 = vcmp.eq.s32.totalorder %v209, %v4862
        %vm4978 = vcmp.eq.s32.totalorder %v210, %v4862
        %vm4979 = vcmp.eq.s32.totalorder %v211, %v4862
        %vm4980 = vcmp.eq.s32.totalorder %v212, %v4862
        %vm4981 = vcmp.eq.s32.totalorder %v205, %v4865
        %vm4982 = vcmp.eq.s32.totalorder %v206, %v4865
        %vm4983 = vcmp.eq.s32.totalorder %v207, %v4865
        %vm4984 = vcmp.eq.s32.totalorder %v208, %v4865
        %vm4985 = vcmp.eq.s32.totalorder %v209, %v4865
        %vm4986 = vcmp.eq.s32.totalorder %v210, %v4865
        %vm4987 = vcmp.eq.s32.totalorder %v211, %v4865
        %vm4988 = vcmp.eq.s32.totalorder %v212, %v4865
        %vm4989 = vcmp.eq.s32.totalorder %v205, %v4868
        %vm4990 = vcmp.eq.s32.totalorder %v206, %v4868
        %vm4991 = vcmp.eq.s32.totalorder %v207, %v4868
        %vm4992 = vcmp.eq.s32.totalorder %v208, %v4868
        %vm4993 = vcmp.eq.s32.totalorder %v209, %v4868
        %vm4994 = vcmp.eq.s32.totalorder %v210, %v4868
        %vm4995 = vcmp.eq.s32.totalorder %v211, %v4868
        %vm4996 = vcmp.eq.s32.totalorder %v212, %v4868
        %v4997 = vsel %vm4869, 1, 0
        %v4998 = vsel %vm4870, 1, 0
        %v4999 = vsel %vm4871, 1, 0
        %v5000 = vsel %vm4872, 1, 0
        %v5001 = vsel %vm4873, 1, 0
        %v5002 = vsel %vm4874, 1, 0
        %v5003 = vsel %vm4875, 1, 0
        %v5004 = vsel %vm4876, 1, 0
        %v5005 = vsel %vm4877, 1, 0
        %v5006 = vsel %vm4878, 1, 0
        %v5007 = vsel %vm4879, 1, 0
        %v5008 = vsel %vm4880, 1, 0
        %v5009 = vsel %vm4881, 1, 0
        %v5010 = vsel %vm4882, 1, 0
        %v5011 = vsel %vm4883, 1, 0
        %v5012 = vsel %vm4884, 1, 0
        %v5013 = vsel %vm4885, 1, 0
        %v5014 = vsel %vm4886, 1, 0
        %v5015 = vsel %vm4887, 1, 0
        %v5016 = vsel %vm4888, 1, 0
        %v5017 = vsel %vm4889, 1, 0
        %v5018 = vsel %vm4890, 1, 0
        %v5019 = vsel %vm4891, 1, 0
        %v5020 = vsel %vm4892, 1, 0
        %v5021 = vsel %vm4893, 1, 0
        %v5022 = vsel %vm4894, 1, 0
        %v5023 = vsel %vm4895, 1, 0
        %v5024 = vsel %vm4896, 1, 0
        %v5025 = vsel %vm4897, 1, 0
        %v5026 = vsel %vm4898, 1, 0
        %v5027 = vsel %vm4899, 1, 0
        %v5028 = vsel %vm4900, 1, 0
        %v5029 = vsel %vm4901, 1, 0
        %v5030 = vsel %vm4902, 1, 0
        %v5031 = vsel %vm4903, 1, 0
        %v5032 = vsel %vm4904, 1, 0
        %v5033 = vsel %vm4905, 1, 0
        %v5034 = vsel %vm4906, 1, 0
        %v5035 = vsel %vm4907, 1, 0
        %v5036 = vsel %vm4908, 1, 0
        %v5037 = vsel %vm4909, 1, 0
        %v5038 = vsel %vm4910, 1, 0
        %v5039 = vsel %vm4911, 1, 0
        %v5040 = vsel %vm4912, 1, 0
        %v5041 = vsel %vm4913, 1, 0
        %v5042 = vsel %vm4914, 1, 0
        %v5043 = vsel %vm4915, 1, 0
        %v5044 = vsel %vm4916, 1, 0
        %v5045 = vsel %vm4917, 1, 0
        %v5046 = vsel %vm4918, 1, 0
        %v5047 = vsel %vm4919, 1, 0
        %v5048 = vsel %vm4920, 1, 0
        %v5049 = vsel %vm4921, 1, 0
        %v5050 = vsel %vm4922, 1, 0
        %v5051 = vsel %vm4923, 1, 0
        %v5052 = vsel %vm4924, 1, 0
        %v5053 = vsel %vm4925, 1, 0
        %v5054 = vsel %vm4926, 1, 0
        %v5055 = vsel %vm4927, 1, 0
        %v5056 = vsel %vm4928, 1, 0
        %v5057 = vsel %vm4929, 1, 0
        %v5058 = vsel %vm4930, 1, 0
        %v5059 = vsel %vm4931, 1, 0
        %v5060 = vsel %vm4932, 1, 0
        %v5061 = vsel %vm4933, 1, 0
        %v5062 = vsel %vm4934, 1, 0
        %v5063 = vsel %vm4935, 1, 0
        %v5064 = vsel %vm4936, 1, 0
        %v5065 = vsel %vm4937, 1, 0
        %v5066 = vsel %vm4938, 1, 0
        %v5067 = vsel %vm4939, 1, 0
        %v5068 = vsel %vm4940, 1, 0
        %v5069 = vsel %vm4941, 1, 0
        %v5070 = vsel %vm4942, 1, 0
        %v5071 = vsel %vm4943, 1, 0
        %v5072 = vsel %vm4944, 1, 0
        %v5073 = vsel %vm4945, 1, 0
        %v5074 = vsel %vm4946, 1, 0
        %v5075 = vsel %vm4947, 1, 0
        %v5076 = vsel %vm4948, 1, 0
        %v5077 = vsel %vm4949, 1, 0
        %v5078 = vsel %vm4950, 1, 0
        %v5079 = vsel %vm4951, 1, 0
        %v5080 = vsel %vm4952, 1, 0
        %v5081 = vsel %vm4953, 1, 0
        %v5082 = vsel %vm4954, 1, 0
        %v5083 = vsel %vm4955, 1, 0
        %v5084 = vsel %vm4956, 1, 0
        %v5085 = vsel %vm4957, 1, 0
        %v5086 = vsel %vm4958, 1, 0
        %v5087 = vsel %vm4959, 1, 0
        %v5088 = vsel %vm4960, 1, 0
        %v5089 = vsel %vm4961, 1, 0
        %v5090 = vsel %vm4962, 1, 0
        %v5091 = vsel %vm4963, 1, 0
        %v5092 = vsel %vm4964, 1, 0
        %v5093 = vsel %vm4965, 1, 0
        %v5094 = vsel %vm4966, 1, 0
        %v5095 = vsel %vm4967, 1, 0
        %v5096 = vsel %vm4968, 1, 0
        %v5097 = vsel %vm4969, 1, 0
        %v5098 = vsel %vm4970, 1, 0
        %v5099 = vsel %vm4971, 1, 0
        %v5100 = vsel %vm4972, 1, 0
        %v5101 = vsel %vm4973, 1, 0
        %v5102 = vsel %vm4974, 1, 0
        %v5103 = vsel %vm4975, 1, 0
        %v5104 = vsel %vm4976, 1, 0
        %v5105 = vsel %vm4977, 1, 0
        %v5106 = vsel %vm4978, 1, 0
        %v5107 = vsel %vm4979, 1, 0
        %v5108 = vsel %vm4980, 1, 0
        %v5109 = vsel %vm4981, 1, 0
        %v5110 = vsel %vm4982, 1, 0
        %v5111 = vsel %vm4983, 1, 0
        %v5112 = vsel %vm4984, 1, 0
        %v5113 = vsel %vm4985, 1, 0
        %v5114 = vsel %vm4986, 1, 0
        %v5115 = vsel %vm4987, 1, 0
        %v5116 = vsel %vm4988, 1, 0
        %v5117 = vsel %vm4989, 1, 0
        %v5118 = vsel %vm4990, 1, 0
        %v5119 = vsel %vm4991, 1, 0
        %v5120 = vsel %vm4992, 1, 0
        %v5121 = vsel %vm4993, 1, 0
        %v5122 = vsel %vm4994, 1, 0
        %v5123 = vsel %vm4995, 1, 0
        %v5124 = vsel %vm4996, 1, 0
        %v5125 = vcvt.s32.f32 %v4997
        %v5126 = vcvt.s32.f32 %v4998
        %v5127 = vcvt.s32.f32 %v4999
        %v5128 = vcvt.s32.f32 %v5000
        %v5129 = vcvt.s32.f32 %v5001
        %v5130 = vcvt.s32.f32 %v5002
        %v5131 = vcvt.s32.f32 %v5003
        %v5132 = vcvt.s32.f32 %v5004
        %v5133 = vcvt.s32.f32 %v5005
        %v5134 = vcvt.s32.f32 %v5006
        %v5135 = vcvt.s32.f32 %v5007
        %v5136 = vcvt.s32.f32 %v5008
        %v5137 = vcvt.s32.f32 %v5009
        %v5138 = vcvt.s32.f32 %v5010
        %v5139 = vcvt.s32.f32 %v5011
        %v5140 = vcvt.s32.f32 %v5012
        %v5141 = vcvt.s32.f32 %v5013
        %v5142 = vcvt.s32.f32 %v5014
        %v5143 = vcvt.s32.f32 %v5015
        %v5144 = vcvt.s32.f32 %v5016
        %v5145 = vcvt.s32.f32 %v5017
        %v5146 = vcvt.s32.f32 %v5018
        %v5147 = vcvt.s32.f32 %v5019
        %v5148 = vcvt.s32.f32 %v5020
        %v5149 = vcvt.s32.f32 %v5021
        %v5150 = vcvt.s32.f32 %v5022
        %v5151 = vcvt.s32.f32 %v5023
        %v5152 = vcvt.s32.f32 %v5024
        %v5153 = vcvt.s32.f32 %v5025
        %v5154 = vcvt.s32.f32 %v5026
        %v5155 = vcvt.s32.f32 %v5027
        %v5156 = vcvt.s32.f32 %v5028
        %v5157 = vcvt.s32.f32 %v5029
        %v5158 = vcvt.s32.f32 %v5030
        %v5159 = vcvt.s32.f32 %v5031
        %v5160 = vcvt.s32.f32 %v5032
        %v5161 = vcvt.s32.f32 %v5033
        %v5162 = vcvt.s32.f32 %v5034
        %v5163 = vcvt.s32.f32 %v5035
        %v5164 = vcvt.s32.f32 %v5036
        %v5165 = vcvt.s32.f32 %v5037
        %v5166 = vcvt.s32.f32 %v5038
        %v5167 = vcvt.s32.f32 %v5039
        %v5168 = vcvt.s32.f32 %v5040
        %v5169 = vcvt.s32.f32 %v5041
        %v5170 = vcvt.s32.f32 %v5042
        %v5171 = vcvt.s32.f32 %v5043
        %v5172 = vcvt.s32.f32 %v5044
        %v5173 = vcvt.s32.f32 %v5045
        %v5174 = vcvt.s32.f32 %v5046
        %v5175 = vcvt.s32.f32 %v5047
        %v5176 = vcvt.s32.f32 %v5048
        %v5177 = vcvt.s32.f32 %v5049
        %v5178 = vcvt.s32.f32 %v5050
        %v5179 = vcvt.s32.f32 %v5051
        %v5180 = vcvt.s32.f32 %v5052
        %v5181 = vcvt.s32.f32 %v5053
        %v5182 = vcvt.s32.f32 %v5054
        %v5183 = vcvt.s32.f32 %v5055
        %v5184 = vcvt.s32.f32 %v5056
        %v5185 = vcvt.s32.f32 %v5057
        %v5186 = vcvt.s32.f32 %v5058
        %v5187 = vcvt.s32.f32 %v5059
        %v5188 = vcvt.s32.f32 %v5060
        %v5189 = vcvt.s32.f32 %v5061
        %v5190 = vcvt.s32.f32 %v5062
        %v5191 = vcvt.s32.f32 %v5063
        %v5192 = vcvt.s32.f32 %v5064
        %v5193 = vcvt.s32.f32 %v5065
        %v5194 = vcvt.s32.f32 %v5066
        %v5195 = vcvt.s32.f32 %v5067
        %v5196 = vcvt.s32.f32 %v5068
        %v5197 = vcvt.s32.f32 %v5069
        %v5198 = vcvt.s32.f32 %v5070
        %v5199 = vcvt.s32.f32 %v5071
        %v5200 = vcvt.s32.f32 %v5072
        %v5201 = vcvt.s32.f32 %v5073
        %v5202 = vcvt.s32.f32 %v5074
        %v5203 = vcvt.s32.f32 %v5075
        %v5204 = vcvt.s32.f32 %v5076
        %v5205 = vcvt.s32.f32 %v5077
        %v5206 = vcvt.s32.f32 %v5078
        %v5207 = vcvt.s32.f32 %v5079
        %v5208 = vcvt.s32.f32 %v5080
        %v5209 = vcvt.s32.f32 %v5081
        %v5210 = vcvt.s32.f32 %v5082
        %v5211 = vcvt.s32.f32 %v5083
        %v5212 = vcvt.s32.f32 %v5084
        %v5213 = vcvt.s32.f32 %v5085
        %v5214 = vcvt.s32.f32 %v5086
        %v5215 = vcvt.s32.f32 %v5087
        %v5216 = vcvt.s32.f32 %v5088
        %v5217 = vcvt.s32.f32 %v5089
        %v5218 = vcvt.s32.f32 %v5090
        %v5219 = vcvt.s32.f32 %v5091
        %v5220 = vcvt.s32.f32 %v5092
        %v5221 = vcvt.s32.f32 %v5093
        %v5222 = vcvt.s32.f32 %v5094
        %v5223 = vcvt.s32.f32 %v5095
        %v5224 = vcvt.s32.f32 %v5096
        %v5225 = vcvt.s32.f32 %v5097
        %v5226 = vcvt.s32.f32 %v5098
        %v5227 = vcvt.s32.f32 %v5099
        %v5228 = vcvt.s32.f32 %v5100
        %v5229 = vcvt.s32.f32 %v5101
        %v5230 = vcvt.s32.f32 %v5102
        %v5231 = vcvt.s32.f32 %v5103
        %v5232 = vcvt.s32.f32 %v5104
        %v5233 = vcvt.s32.f32 %v5105
        %v5234 = vcvt.s32.f32 %v5106
        %v5235 = vcvt.s32.f32 %v5107
        %v5236 = vcvt.s32.f32 %v5108
        %v5237 = vcvt.s32.f32 %v5109
        %v5238 = vcvt.s32.f32 %v5110
        %v5239 = vcvt.s32.f32 %v5111
        %v5240 = vcvt.s32.f32 %v5112
        %v5241 = vcvt.s32.f32 %v5113
        %v5242 = vcvt.s32.f32 %v5114
        %v5243 = vcvt.s32.f32 %v5115
        %v5244 = vcvt.s32.f32 %v5116
        %v5245 = vcvt.s32.f32 %v5117
        %v5246 = vcvt.s32.f32 %v5118
        %v5247 = vcvt.s32.f32 %v5119
        %v5248 = vcvt.s32.f32 %v5120
        %v5249 = vcvt.s32.f32 %v5121
        %v5250 = vcvt.s32.f32 %v5122
        %v5251 = vcvt.s32.f32 %v5123
        %v5252 = vcvt.s32.f32 %v5124
        %v5253 = vadd.f32 %v4677, %v5125
        %v5254 = vadd.f32 %v4678, %v5126
        %v5255 = vadd.f32 %v4679, %v5127
        %v5256 = vadd.f32 %v4680, %v5128
        %v5257 = vadd.f32 %v4681, %v5129
        %v5258 = vadd.f32 %v4682, %v5130
        %v5259 = vadd.f32 %v4683, %v5131
        %v5260 = vadd.f32 %v4684, %v5132
        %v5261 = vadd.f32 %v4685, %v5133
        %v5262 = vadd.f32 %v4686, %v5134
        %v5263 = vadd.f32 %v4687, %v5135
        %v5264 = vadd.f32 %v4688, %v5136
        %v5265 = vadd.f32 %v4689, %v5137
        %v5266 = vadd.f32 %v4690, %v5138
        %v5267 = vadd.f32 %v4691, %v5139
        %v5268 = vadd.f32 %v4692, %v5140
        %v5269 = vadd.f32 %v4693, %v5141
        %v5270 = vadd.f32 %v4694, %v5142
        %v5271 = vadd.f32 %v4695, %v5143
        %v5272 = vadd.f32 %v4696, %v5144
        %v5273 = vadd.f32 %v4697, %v5145
        %v5274 = vadd.f32 %v4698, %v5146
        %v5275 = vadd.f32 %v4699, %v5147
        %v5276 = vadd.f32 %v4700, %v5148
        %v5277 = vadd.f32 %v4701, %v5149
        %v5278 = vadd.f32 %v4702, %v5150
        %v5279 = vadd.f32 %v4703, %v5151
        %v5280 = vadd.f32 %v4704, %v5152
        %v5281 = vadd.f32 %v4705, %v5153
        %v5282 = vadd.f32 %v4706, %v5154
        %v5283 = vadd.f32 %v4707, %v5155
        %v5284 = vadd.f32 %v4708, %v5156
        %v5285 = vadd.f32 %v4709, %v5157
        %v5286 = vadd.f32 %v4710, %v5158
        %v5287 = vadd.f32 %v4711, %v5159
        %v5288 = vadd.f32 %v4712, %v5160
        %v5289 = vadd.f32 %v4713, %v5161
        %v5290 = vadd.f32 %v4714, %v5162
        %v5291 = vadd.f32 %v4715, %v5163
        %v5292 = vadd.f32 %v4716, %v5164
        %v5293 = vadd.f32 %v4717, %v5165
        %v5294 = vadd.f32 %v4718, %v5166
        %v5295 = vadd.f32 %v4719, %v5167
        %v5296 = vadd.f32 %v4720, %v5168
        %v5297 = vadd.f32 %v4721, %v5169
        %v5298 = vadd.f32 %v4722, %v5170
        %v5299 = vadd.f32 %v4723, %v5171
        %v5300 = vadd.f32 %v4724, %v5172
        %v5301 = vadd.f32 %v4725, %v5173
        %v5302 = vadd.f32 %v4726, %v5174
        %v5303 = vadd.f32 %v4727, %v5175
        %v5304 = vadd.f32 %v4728, %v5176
        %v5305 = vadd.f32 %v4729, %v5177
        %v5306 = vadd.f32 %v4730, %v5178
        %v5307 = vadd.f32 %v4731, %v5179
        %v5308 = vadd.f32 %v4732, %v5180
        %v5309 = vadd.f32 %v4733, %v5181
        %v5310 = vadd.f32 %v4734, %v5182
        %v5311 = vadd.f32 %v4735, %v5183
        %v5312 = vadd.f32 %v4736, %v5184
        %v5313 = vadd.f32 %v4737, %v5185
        %v5314 = vadd.f32 %v4738, %v5186
        %v5315 = vadd.f32 %v4739, %v5187
        %v5316 = vadd.f32 %v4740, %v5188
        %v5317 = vadd.f32 %v4741, %v5189
        %v5318 = vadd.f32 %v4742, %v5190
        %v5319 = vadd.f32 %v4743, %v5191
        %v5320 = vadd.f32 %v4744, %v5192
        %v5321 = vadd.f32 %v4745, %v5193
        %v5322 = vadd.f32 %v4746, %v5194
        %v5323 = vadd.f32 %v4747, %v5195
        %v5324 = vadd.f32 %v4748, %v5196
        %v5325 = vadd.f32 %v4749, %v5197
        %v5326 = vadd.f32 %v4750, %v5198
        %v5327 = vadd.f32 %v4751, %v5199
        %v5328 = vadd.f32 %v4752, %v5200
        %v5329 = vadd.f32 %v4753, %v5201
        %v5330 = vadd.f32 %v4754, %v5202
        %v5331 = vadd.f32 %v4755, %v5203
        %v5332 = vadd.f32 %v4756, %v5204
        %v5333 = vadd.f32 %v4757, %v5205
        %v5334 = vadd.f32 %v4758, %v5206
        %v5335 = vadd.f32 %v4759, %v5207
        %v5336 = vadd.f32 %v4760, %v5208
        %v5337 = vadd.f32 %v4761, %v5209
        %v5338 = vadd.f32 %v4762, %v5210
        %v5339 = vadd.f32 %v4763, %v5211
        %v5340 = vadd.f32 %v4764, %v5212
        %v5341 = vadd.f32 %v4765, %v5213
        %v5342 = vadd.f32 %v4766, %v5214
        %v5343 = vadd.f32 %v4767, %v5215
        %v5344 = vadd.f32 %v4768, %v5216
        %v5345 = vadd.f32 %v4769, %v5217
        %v5346 = vadd.f32 %v4770, %v5218
        %v5347 = vadd.f32 %v4771, %v5219
        %v5348 = vadd.f32 %v4772, %v5220
        %v5349 = vadd.f32 %v4773, %v5221
        %v5350 = vadd.f32 %v4774, %v5222
        %v5351 = vadd.f32 %v4775, %v5223
        %v5352 = vadd.f32 %v4776, %v5224
        %v5353 = vadd.f32 %v4777, %v5225
        %v5354 = vadd.f32 %v4778, %v5226
        %v5355 = vadd.f32 %v4779, %v5227
        %v5356 = vadd.f32 %v4780, %v5228
        %v5357 = vadd.f32 %v4781, %v5229
        %v5358 = vadd.f32 %v4782, %v5230
        %v5359 = vadd.f32 %v4783, %v5231
        %v5360 = vadd.f32 %v4784, %v5232
        %v5361 = vadd.f32 %v4785, %v5233
        %v5362 = vadd.f32 %v4786, %v5234
        %v5363 = vadd.f32 %v4787, %v5235
        %v5364 = vadd.f32 %v4788, %v5236
        %v5365 = vadd.f32 %v4789, %v5237
        %v5366 = vadd.f32 %v4790, %v5238
        %v5367 = vadd.f32 %v4791, %v5239
        %v5368 = vadd.f32 %v4792, %v5240
        %v5369 = vadd.f32 %v4793, %v5241
        %v5370 = vadd.f32 %v4794, %v5242
        %v5371 = vadd.f32 %v4795, %v5243
        %v5372 = vadd.f32 %v4796, %v5244
        %v5373 = vadd.f32 %v4797, %v5245
        %v5374 = vadd.f32 %v4798, %v5246
        %v5375 = vadd.f32 %v4799, %v5247
        %v5376 = vadd.f32 %v4800, %v5248
        %v5377 = vadd.f32 %v4801, %v5249
        %v5378 = vadd.f32 %v4802, %v5250
        %v5379 = vadd.f32 %v4803, %v5251
        %v5380 = vadd.f32 %v4804, %v5252
        %v5381 = vadd.s32 %v188, 576
        %v5382 = vadd.s32 %v189, 576
        %v5383 = vadd.s32 %v190, 576
        %v5384 = vadd.s32 %v191, 576
        %v5385 = vadd.s32 %v192, 576
        %v5386 = vadd.s32 %v193, 576
        %v5387 = vadd.s32 %v194, 576
        %v5388 = vadd.s32 %v195, 576
        %v5389 = vadd.s32 %v196, 576
        %v5390 = vadd.s32 %v197, 576
        %v5391 = vadd.s32 %v198, 576
        %v5392 = vadd.s32 %v199, 576
        %v5393 = vadd.s32 %v200, 576
        %v5394 = vadd.s32 %v201, 576
        %v5395 = vadd.s32 %v202, 576
        %v5396 = vadd.s32 %v203, 576
        %5397 = vset.pattern.permute.xlu0 9
        %5398 = vperm.xlu0 %5397, %v5381
        %v5399 = vpop.permute.xlu0 %5398
        %5400 = vset.pattern.permute.xlu0 9
        %5401 = vperm.xlu0 %5400, %v5382
        %v5402 = vpop.permute.xlu0 %5401
        %5403 = vset.pattern.permute.xlu0 9
        %5404 = vperm.xlu0 %5403, %v5383
        %v5405 = vpop.permute.xlu0 %5404
        %5406 = vset.pattern.permute.xlu0 9
        %5407 = vperm.xlu0 %5406, %v5384
        %v5408 = vpop.permute.xlu0 %5407
        %5409 = vset.pattern.permute.xlu0 9
        %5410 = vperm.xlu0 %5409, %v5385
        %v5411 = vpop.permute.xlu0 %5410
        %5412 = vset.pattern.permute.xlu0 9
        %5413 = vperm.xlu0 %5412, %v5386
        %v5414 = vpop.permute.xlu0 %5413
        %5415 = vset.pattern.permute.xlu0 9
        %5416 = vperm.xlu0 %5415, %v5387
        %v5417 = vpop.permute.xlu0 %5416
        %5418 = vset.pattern.permute.xlu0 9
        %5419 = vperm.xlu0 %5418, %v5388
        %v5420 = vpop.permute.xlu0 %5419
        %5421 = vset.pattern.permute.xlu0 9
        %5422 = vperm.xlu0 %5421, %v5389
        %v5423 = vpop.permute.xlu0 %5422
        %5424 = vset.pattern.permute.xlu0 9
        %5425 = vperm.xlu0 %5424, %v5390
        %v5426 = vpop.permute.xlu0 %5425
        %5427 = vset.pattern.permute.xlu0 9
        %5428 = vperm.xlu0 %5427, %v5391
        %v5429 = vpop.permute.xlu0 %5428
        %5430 = vset.pattern.permute.xlu0 9
        %5431 = vperm.xlu0 %5430, %v5392
        %v5432 = vpop.permute.xlu0 %5431
        %5433 = vset.pattern.permute.xlu0 9
        %5434 = vperm.xlu0 %5433, %v5393
        %v5435 = vpop.permute.xlu0 %5434
        %5436 = vset.pattern.permute.xlu0 9
        %5437 = vperm.xlu0 %5436, %v5394
        %v5438 = vpop.permute.xlu0 %5437
        %5439 = vset.pattern.permute.xlu0 9
        %5440 = vperm.xlu0 %5439, %v5395
        %v5441 = vpop.permute.xlu0 %5440
        %5442 = vset.pattern.permute.xlu0 9
        %5443 = vperm.xlu0 %5442, %v5396
        %v5444 = vpop.permute.xlu0 %5443
        %vm5445 = vcmp.eq.s32.totalorder %v205, %v5399
        %vm5446 = vcmp.eq.s32.totalorder %v206, %v5399
        %vm5447 = vcmp.eq.s32.totalorder %v207, %v5399
        %vm5448 = vcmp.eq.s32.totalorder %v208, %v5399
        %vm5449 = vcmp.eq.s32.totalorder %v209, %v5399
        %vm5450 = vcmp.eq.s32.totalorder %v210, %v5399
        %vm5451 = vcmp.eq.s32.totalorder %v211, %v5399
        %vm5452 = vcmp.eq.s32.totalorder %v212, %v5399
        %vm5453 = vcmp.eq.s32.totalorder %v205, %v5402
        %vm5454 = vcmp.eq.s32.totalorder %v206, %v5402
        %vm5455 = vcmp.eq.s32.totalorder %v207, %v5402
        %vm5456 = vcmp.eq.s32.totalorder %v208, %v5402
        %vm5457 = vcmp.eq.s32.totalorder %v209, %v5402
        %vm5458 = vcmp.eq.s32.totalorder %v210, %v5402
        %vm5459 = vcmp.eq.s32.totalorder %v211, %v5402
        %vm5460 = vcmp.eq.s32.totalorder %v212, %v5402
        %vm5461 = vcmp.eq.s32.totalorder %v205, %v5405
        %vm5462 = vcmp.eq.s32.totalorder %v206, %v5405
        %vm5463 = vcmp.eq.s32.totalorder %v207, %v5405
        %vm5464 = vcmp.eq.s32.totalorder %v208, %v5405
        %vm5465 = vcmp.eq.s32.totalorder %v209, %v5405
        %vm5466 = vcmp.eq.s32.totalorder %v210, %v5405
        %vm5467 = vcmp.eq.s32.totalorder %v211, %v5405
        %vm5468 = vcmp.eq.s32.totalorder %v212, %v5405
        %vm5469 = vcmp.eq.s32.totalorder %v205, %v5408
        %vm5470 = vcmp.eq.s32.totalorder %v206, %v5408
        %vm5471 = vcmp.eq.s32.totalorder %v207, %v5408
        %vm5472 = vcmp.eq.s32.totalorder %v208, %v5408
        %vm5473 = vcmp.eq.s32.totalorder %v209, %v5408
        %vm5474 = vcmp.eq.s32.totalorder %v210, %v5408
        %vm5475 = vcmp.eq.s32.totalorder %v211, %v5408
        %vm5476 = vcmp.eq.s32.totalorder %v212, %v5408
        %vm5477 = vcmp.eq.s32.totalorder %v205, %v5411
        %vm5478 = vcmp.eq.s32.totalorder %v206, %v5411
        %vm5479 = vcmp.eq.s32.totalorder %v207, %v5411
        %vm5480 = vcmp.eq.s32.totalorder %v208, %v5411
        %vm5481 = vcmp.eq.s32.totalorder %v209, %v5411
        %vm5482 = vcmp.eq.s32.totalorder %v210, %v5411
        %vm5483 = vcmp.eq.s32.totalorder %v211, %v5411
        %vm5484 = vcmp.eq.s32.totalorder %v212, %v5411
        %vm5485 = vcmp.eq.s32.totalorder %v205, %v5414
        %vm5486 = vcmp.eq.s32.totalorder %v206, %v5414
        %vm5487 = vcmp.eq.s32.totalorder %v207, %v5414
        %vm5488 = vcmp.eq.s32.totalorder %v208, %v5414
        %vm5489 = vcmp.eq.s32.totalorder %v209, %v5414
        %vm5490 = vcmp.eq.s32.totalorder %v210, %v5414
        %vm5491 = vcmp.eq.s32.totalorder %v211, %v5414
        %vm5492 = vcmp.eq.s32.totalorder %v212, %v5414
        %vm5493 = vcmp.eq.s32.totalorder %v205, %v5417
        %vm5494 = vcmp.eq.s32.totalorder %v206, %v5417
        %vm5495 = vcmp.eq.s32.totalorder %v207, %v5417
        %vm5496 = vcmp.eq.s32.totalorder %v208, %v5417
        %vm5497 = vcmp.eq.s32.totalorder %v209, %v5417
        %vm5498 = vcmp.eq.s32.totalorder %v210, %v5417
        %vm5499 = vcmp.eq.s32.totalorder %v211, %v5417
        %vm5500 = vcmp.eq.s32.totalorder %v212, %v5417
        %vm5501 = vcmp.eq.s32.totalorder %v205, %v5420
        %vm5502 = vcmp.eq.s32.totalorder %v206, %v5420
        %vm5503 = vcmp.eq.s32.totalorder %v207, %v5420
        %vm5504 = vcmp.eq.s32.totalorder %v208, %v5420
        %vm5505 = vcmp.eq.s32.totalorder %v209, %v5420
        %vm5506 = vcmp.eq.s32.totalorder %v210, %v5420
        %vm5507 = vcmp.eq.s32.totalorder %v211, %v5420
        %vm5508 = vcmp.eq.s32.totalorder %v212, %v5420
        %vm5509 = vcmp.eq.s32.totalorder %v205, %v5423
        %vm5510 = vcmp.eq.s32.totalorder %v206, %v5423
        %vm5511 = vcmp.eq.s32.totalorder %v207, %v5423
        %vm5512 = vcmp.eq.s32.totalorder %v208, %v5423
        %vm5513 = vcmp.eq.s32.totalorder %v209, %v5423
        %vm5514 = vcmp.eq.s32.totalorder %v210, %v5423
        %vm5515 = vcmp.eq.s32.totalorder %v211, %v5423
        %vm5516 = vcmp.eq.s32.totalorder %v212, %v5423
        %vm5517 = vcmp.eq.s32.totalorder %v205, %v5426
        %vm5518 = vcmp.eq.s32.totalorder %v206, %v5426
        %vm5519 = vcmp.eq.s32.totalorder %v207, %v5426
        %vm5520 = vcmp.eq.s32.totalorder %v208, %v5426
        %vm5521 = vcmp.eq.s32.totalorder %v209, %v5426
        %vm5522 = vcmp.eq.s32.totalorder %v210, %v5426
        %vm5523 = vcmp.eq.s32.totalorder %v211, %v5426
        %vm5524 = vcmp.eq.s32.totalorder %v212, %v5426
        %vm5525 = vcmp.eq.s32.totalorder %v205, %v5429
        %vm5526 = vcmp.eq.s32.totalorder %v206, %v5429
        %vm5527 = vcmp.eq.s32.totalorder %v207, %v5429
        %vm5528 = vcmp.eq.s32.totalorder %v208, %v5429
        %vm5529 = vcmp.eq.s32.totalorder %v209, %v5429
        %vm5530 = vcmp.eq.s32.totalorder %v210, %v5429
        %vm5531 = vcmp.eq.s32.totalorder %v211, %v5429
        %vm5532 = vcmp.eq.s32.totalorder %v212, %v5429
        %vm5533 = vcmp.eq.s32.totalorder %v205, %v5432
        %vm5534 = vcmp.eq.s32.totalorder %v206, %v5432
        %vm5535 = vcmp.eq.s32.totalorder %v207, %v5432
        %vm5536 = vcmp.eq.s32.totalorder %v208, %v5432
        %vm5537 = vcmp.eq.s32.totalorder %v209, %v5432
        %vm5538 = vcmp.eq.s32.totalorder %v210, %v5432
        %vm5539 = vcmp.eq.s32.totalorder %v211, %v5432
        %vm5540 = vcmp.eq.s32.totalorder %v212, %v5432
        %vm5541 = vcmp.eq.s32.totalorder %v205, %v5435
        %vm5542 = vcmp.eq.s32.totalorder %v206, %v5435
        %vm5543 = vcmp.eq.s32.totalorder %v207, %v5435
        %vm5544 = vcmp.eq.s32.totalorder %v208, %v5435
        %vm5545 = vcmp.eq.s32.totalorder %v209, %v5435
        %vm5546 = vcmp.eq.s32.totalorder %v210, %v5435
        %vm5547 = vcmp.eq.s32.totalorder %v211, %v5435
        %vm5548 = vcmp.eq.s32.totalorder %v212, %v5435
        %vm5549 = vcmp.eq.s32.totalorder %v205, %v5438
        %vm5550 = vcmp.eq.s32.totalorder %v206, %v5438
        %vm5551 = vcmp.eq.s32.totalorder %v207, %v5438
        %vm5552 = vcmp.eq.s32.totalorder %v208, %v5438
        %vm5553 = vcmp.eq.s32.totalorder %v209, %v5438
        %vm5554 = vcmp.eq.s32.totalorder %v210, %v5438
        %vm5555 = vcmp.eq.s32.totalorder %v211, %v5438
        %vm5556 = vcmp.eq.s32.totalorder %v212, %v5438
        %vm5557 = vcmp.eq.s32.totalorder %v205, %v5441
        %vm5558 = vcmp.eq.s32.totalorder %v206, %v5441
        %vm5559 = vcmp.eq.s32.totalorder %v207, %v5441
        %vm5560 = vcmp.eq.s32.totalorder %v208, %v5441
        %vm5561 = vcmp.eq.s32.totalorder %v209, %v5441
        %vm5562 = vcmp.eq.s32.totalorder %v210, %v5441
        %vm5563 = vcmp.eq.s32.totalorder %v211, %v5441
        %vm5564 = vcmp.eq.s32.totalorder %v212, %v5441
        %vm5565 = vcmp.eq.s32.totalorder %v205, %v5444
        %vm5566 = vcmp.eq.s32.totalorder %v206, %v5444
        %vm5567 = vcmp.eq.s32.totalorder %v207, %v5444
        %vm5568 = vcmp.eq.s32.totalorder %v208, %v5444
        %vm5569 = vcmp.eq.s32.totalorder %v209, %v5444
        %vm5570 = vcmp.eq.s32.totalorder %v210, %v5444
        %vm5571 = vcmp.eq.s32.totalorder %v211, %v5444
        %vm5572 = vcmp.eq.s32.totalorder %v212, %v5444
        %v5573 = vsel %vm5445, 1, 0
        %v5574 = vsel %vm5446, 1, 0
        %v5575 = vsel %vm5447, 1, 0
        %v5576 = vsel %vm5448, 1, 0
        %v5577 = vsel %vm5449, 1, 0
        %v5578 = vsel %vm5450, 1, 0
        %v5579 = vsel %vm5451, 1, 0
        %v5580 = vsel %vm5452, 1, 0
        %v5581 = vsel %vm5453, 1, 0
        %v5582 = vsel %vm5454, 1, 0
        %v5583 = vsel %vm5455, 1, 0
        %v5584 = vsel %vm5456, 1, 0
        %v5585 = vsel %vm5457, 1, 0
        %v5586 = vsel %vm5458, 1, 0
        %v5587 = vsel %vm5459, 1, 0
        %v5588 = vsel %vm5460, 1, 0
        %v5589 = vsel %vm5461, 1, 0
        %v5590 = vsel %vm5462, 1, 0
        %v5591 = vsel %vm5463, 1, 0
        %v5592 = vsel %vm5464, 1, 0
        %v5593 = vsel %vm5465, 1, 0
        %v5594 = vsel %vm5466, 1, 0
        %v5595 = vsel %vm5467, 1, 0
        %v5596 = vsel %vm5468, 1, 0
        %v5597 = vsel %vm5469, 1, 0
        %v5598 = vsel %vm5470, 1, 0
        %v5599 = vsel %vm5471, 1, 0
        %v5600 = vsel %vm5472, 1, 0
        %v5601 = vsel %vm5473, 1, 0
        %v5602 = vsel %vm5474, 1, 0
        %v5603 = vsel %vm5475, 1, 0
        %v5604 = vsel %vm5476, 1, 0
        %v5605 = vsel %vm5477, 1, 0
        %v5606 = vsel %vm5478, 1, 0
        %v5607 = vsel %vm5479, 1, 0
        %v5608 = vsel %vm5480, 1, 0
        %v5609 = vsel %vm5481, 1, 0
        %v5610 = vsel %vm5482, 1, 0
        %v5611 = vsel %vm5483, 1, 0
        %v5612 = vsel %vm5484, 1, 0
        %v5613 = vsel %vm5485, 1, 0
        %v5614 = vsel %vm5486, 1, 0
        %v5615 = vsel %vm5487, 1, 0
        %v5616 = vsel %vm5488, 1, 0
        %v5617 = vsel %vm5489, 1, 0
        %v5618 = vsel %vm5490, 1, 0
        %v5619 = vsel %vm5491, 1, 0
        %v5620 = vsel %vm5492, 1, 0
        %v5621 = vsel %vm5493, 1, 0
        %v5622 = vsel %vm5494, 1, 0
        %v5623 = vsel %vm5495, 1, 0
        %v5624 = vsel %vm5496, 1, 0
        %v5625 = vsel %vm5497, 1, 0
        %v5626 = vsel %vm5498, 1, 0
        %v5627 = vsel %vm5499, 1, 0
        %v5628 = vsel %vm5500, 1, 0
        %v5629 = vsel %vm5501, 1, 0
        %v5630 = vsel %vm5502, 1, 0
        %v5631 = vsel %vm5503, 1, 0
        %v5632 = vsel %vm5504, 1, 0
        %v5633 = vsel %vm5505, 1, 0
        %v5634 = vsel %vm5506, 1, 0
        %v5635 = vsel %vm5507, 1, 0
        %v5636 = vsel %vm5508, 1, 0
        %v5637 = vsel %vm5509, 1, 0
        %v5638 = vsel %vm5510, 1, 0
        %v5639 = vsel %vm5511, 1, 0
        %v5640 = vsel %vm5512, 1, 0
        %v5641 = vsel %vm5513, 1, 0
        %v5642 = vsel %vm5514, 1, 0
        %v5643 = vsel %vm5515, 1, 0
        %v5644 = vsel %vm5516, 1, 0
        %v5645 = vsel %vm5517, 1, 0
        %v5646 = vsel %vm5518, 1, 0
        %v5647 = vsel %vm5519, 1, 0
        %v5648 = vsel %vm5520, 1, 0
        %v5649 = vsel %vm5521, 1, 0
        %v5650 = vsel %vm5522, 1, 0
        %v5651 = vsel %vm5523, 1, 0
        %v5652 = vsel %vm5524, 1, 0
        %v5653 = vsel %vm5525, 1, 0
        %v5654 = vsel %vm5526, 1, 0
        %v5655 = vsel %vm5527, 1, 0
        %v5656 = vsel %vm5528, 1, 0
        %v5657 = vsel %vm5529, 1, 0
        %v5658 = vsel %vm5530, 1, 0
        %v5659 = vsel %vm5531, 1, 0
        %v5660 = vsel %vm5532, 1, 0
        %v5661 = vsel %vm5533, 1, 0
        %v5662 = vsel %vm5534, 1, 0
        %v5663 = vsel %vm5535, 1, 0
        %v5664 = vsel %vm5536, 1, 0
        %v5665 = vsel %vm5537, 1, 0
        %v5666 = vsel %vm5538, 1, 0
        %v5667 = vsel %vm5539, 1, 0
        %v5668 = vsel %vm5540, 1, 0
        %v5669 = vsel %vm5541, 1, 0
        %v5670 = vsel %vm5542, 1, 0
        %v5671 = vsel %vm5543, 1, 0
        %v5672 = vsel %vm5544, 1, 0
        %v5673 = vsel %vm5545, 1, 0
        %v5674 = vsel %vm5546, 1, 0
        %v5675 = vsel %vm5547, 1, 0
        %v5676 = vsel %vm5548, 1, 0
        %v5677 = vsel %vm5549, 1, 0
        %v5678 = vsel %vm5550, 1, 0
        %v5679 = vsel %vm5551, 1, 0
        %v5680 = vsel %vm5552, 1, 0
        %v5681 = vsel %vm5553, 1, 0
        %v5682 = vsel %vm5554, 1, 0
        %v5683 = vsel %vm5555, 1, 0
        %v5684 = vsel %vm5556, 1, 0
        %v5685 = vsel %vm5557, 1, 0
        %v5686 = vsel %vm5558, 1, 0
        %v5687 = vsel %vm5559, 1, 0
        %v5688 = vsel %vm5560, 1, 0
        %v5689 = vsel %vm5561, 1, 0
        %v5690 = vsel %vm5562, 1, 0
        %v5691 = vsel %vm5563, 1, 0
        %v5692 = vsel %vm5564, 1, 0
        %v5693 = vsel %vm5565, 1, 0
        %v5694 = vsel %vm5566, 1, 0
        %v5695 = vsel %vm5567, 1, 0
        %v5696 = vsel %vm5568, 1, 0
        %v5697 = vsel %vm5569, 1, 0
        %v5698 = vsel %vm5570, 1, 0
        %v5699 = vsel %vm5571, 1, 0
        %v5700 = vsel %vm5572, 1, 0
        %v5701 = vcvt.s32.f32 %v5573
        %v5702 = vcvt.s32.f32 %v5574
        %v5703 = vcvt.s32.f32 %v5575
        %v5704 = vcvt.s32.f32 %v5576
        %v5705 = vcvt.s32.f32 %v5577
        %v5706 = vcvt.s32.f32 %v5578
        %v5707 = vcvt.s32.f32 %v5579
        %v5708 = vcvt.s32.f32 %v5580
        %v5709 = vcvt.s32.f32 %v5581
        %v5710 = vcvt.s32.f32 %v5582
        %v5711 = vcvt.s32.f32 %v5583
        %v5712 = vcvt.s32.f32 %v5584
        %v5713 = vcvt.s32.f32 %v5585
        %v5714 = vcvt.s32.f32 %v5586
        %v5715 = vcvt.s32.f32 %v5587
        %v5716 = vcvt.s32.f32 %v5588
        %v5717 = vcvt.s32.f32 %v5589
        %v5718 = vcvt.s32.f32 %v5590
        %v5719 = vcvt.s32.f32 %v5591
        %v5720 = vcvt.s32.f32 %v5592
        %v5721 = vcvt.s32.f32 %v5593
        %v5722 = vcvt.s32.f32 %v5594
        %v5723 = vcvt.s32.f32 %v5595
        %v5724 = vcvt.s32.f32 %v5596
        %v5725 = vcvt.s32.f32 %v5597
        %v5726 = vcvt.s32.f32 %v5598
        %v5727 = vcvt.s32.f32 %v5599
        %v5728 = vcvt.s32.f32 %v5600
        %v5729 = vcvt.s32.f32 %v5601
        %v5730 = vcvt.s32.f32 %v5602
        %v5731 = vcvt.s32.f32 %v5603
        %v5732 = vcvt.s32.f32 %v5604
        %v5733 = vcvt.s32.f32 %v5605
        %v5734 = vcvt.s32.f32 %v5606
        %v5735 = vcvt.s32.f32 %v5607
        %v5736 = vcvt.s32.f32 %v5608
        %v5737 = vcvt.s32.f32 %v5609
        %v5738 = vcvt.s32.f32 %v5610
        %v5739 = vcvt.s32.f32 %v5611
        %v5740 = vcvt.s32.f32 %v5612
        %v5741 = vcvt.s32.f32 %v5613
        %v5742 = vcvt.s32.f32 %v5614
        %v5743 = vcvt.s32.f32 %v5615
        %v5744 = vcvt.s32.f32 %v5616
        %v5745 = vcvt.s32.f32 %v5617
        %v5746 = vcvt.s32.f32 %v5618
        %v5747 = vcvt.s32.f32 %v5619
        %v5748 = vcvt.s32.f32 %v5620
        %v5749 = vcvt.s32.f32 %v5621
        %v5750 = vcvt.s32.f32 %v5622
        %v5751 = vcvt.s32.f32 %v5623
        %v5752 = vcvt.s32.f32 %v5624
        %v5753 = vcvt.s32.f32 %v5625
        %v5754 = vcvt.s32.f32 %v5626
        %v5755 = vcvt.s32.f32 %v5627
        %v5756 = vcvt.s32.f32 %v5628
        %v5757 = vcvt.s32.f32 %v5629
        %v5758 = vcvt.s32.f32 %v5630
        %v5759 = vcvt.s32.f32 %v5631
        %v5760 = vcvt.s32.f32 %v5632
        %v5761 = vcvt.s32.f32 %v5633
        %v5762 = vcvt.s32.f32 %v5634
        %v5763 = vcvt.s32.f32 %v5635
        %v5764 = vcvt.s32.f32 %v5636
        %v5765 = vcvt.s32.f32 %v5637
        %v5766 = vcvt.s32.f32 %v5638
        %v5767 = vcvt.s32.f32 %v5639
        %v5768 = vcvt.s32.f32 %v5640
        %v5769 = vcvt.s32.f32 %v5641
        %v5770 = vcvt.s32.f32 %v5642
        %v5771 = vcvt.s32.f32 %v5643
        %v5772 = vcvt.s32.f32 %v5644
        %v5773 = vcvt.s32.f32 %v5645
        %v5774 = vcvt.s32.f32 %v5646
        %v5775 = vcvt.s32.f32 %v5647
        %v5776 = vcvt.s32.f32 %v5648
        %v5777 = vcvt.s32.f32 %v5649
        %v5778 = vcvt.s32.f32 %v5650
        %v5779 = vcvt.s32.f32 %v5651
        %v5780 = vcvt.s32.f32 %v5652
        %v5781 = vcvt.s32.f32 %v5653
        %v5782 = vcvt.s32.f32 %v5654
        %v5783 = vcvt.s32.f32 %v5655
        %v5784 = vcvt.s32.f32 %v5656
        %v5785 = vcvt.s32.f32 %v5657
        %v5786 = vcvt.s32.f32 %v5658
        %v5787 = vcvt.s32.f32 %v5659
        %v5788 = vcvt.s32.f32 %v5660
        %v5789 = vcvt.s32.f32 %v5661
        %v5790 = vcvt.s32.f32 %v5662
        %v5791 = vcvt.s32.f32 %v5663
        %v5792 = vcvt.s32.f32 %v5664
        %v5793 = vcvt.s32.f32 %v5665
        %v5794 = vcvt.s32.f32 %v5666
        %v5795 = vcvt.s32.f32 %v5667
        %v5796 = vcvt.s32.f32 %v5668
        %v5797 = vcvt.s32.f32 %v5669
        %v5798 = vcvt.s32.f32 %v5670
        %v5799 = vcvt.s32.f32 %v5671
        %v5800 = vcvt.s32.f32 %v5672
        %v5801 = vcvt.s32.f32 %v5673
        %v5802 = vcvt.s32.f32 %v5674
        %v5803 = vcvt.s32.f32 %v5675
        %v5804 = vcvt.s32.f32 %v5676
        %v5805 = vcvt.s32.f32 %v5677
        %v5806 = vcvt.s32.f32 %v5678
        %v5807 = vcvt.s32.f32 %v5679
        %v5808 = vcvt.s32.f32 %v5680
        %v5809 = vcvt.s32.f32 %v5681
        %v5810 = vcvt.s32.f32 %v5682
        %v5811 = vcvt.s32.f32 %v5683
        %v5812 = vcvt.s32.f32 %v5684
        %v5813 = vcvt.s32.f32 %v5685
        %v5814 = vcvt.s32.f32 %v5686
        %v5815 = vcvt.s32.f32 %v5687
        %v5816 = vcvt.s32.f32 %v5688
        %v5817 = vcvt.s32.f32 %v5689
        %v5818 = vcvt.s32.f32 %v5690
        %v5819 = vcvt.s32.f32 %v5691
        %v5820 = vcvt.s32.f32 %v5692
        %v5821 = vcvt.s32.f32 %v5693
        %v5822 = vcvt.s32.f32 %v5694
        %v5823 = vcvt.s32.f32 %v5695
        %v5824 = vcvt.s32.f32 %v5696
        %v5825 = vcvt.s32.f32 %v5697
        %v5826 = vcvt.s32.f32 %v5698
        %v5827 = vcvt.s32.f32 %v5699
        %v5828 = vcvt.s32.f32 %v5700
        %v5829 = vadd.f32 %v5253, %v5701
        %v5830 = vadd.f32 %v5254, %v5702
        %v5831 = vadd.f32 %v5255, %v5703
        %v5832 = vadd.f32 %v5256, %v5704
        %v5833 = vadd.f32 %v5257, %v5705
        %v5834 = vadd.f32 %v5258, %v5706
        %v5835 = vadd.f32 %v5259, %v5707
        %v5836 = vadd.f32 %v5260, %v5708
        %v5837 = vadd.f32 %v5261, %v5709
        %v5838 = vadd.f32 %v5262, %v5710
        %v5839 = vadd.f32 %v5263, %v5711
        %v5840 = vadd.f32 %v5264, %v5712
        %v5841 = vadd.f32 %v5265, %v5713
        %v5842 = vadd.f32 %v5266, %v5714
        %v5843 = vadd.f32 %v5267, %v5715
        %v5844 = vadd.f32 %v5268, %v5716
        %v5845 = vadd.f32 %v5269, %v5717
        %v5846 = vadd.f32 %v5270, %v5718
        %v5847 = vadd.f32 %v5271, %v5719
        %v5848 = vadd.f32 %v5272, %v5720
        %v5849 = vadd.f32 %v5273, %v5721
        %v5850 = vadd.f32 %v5274, %v5722
        %v5851 = vadd.f32 %v5275, %v5723
        %v5852 = vadd.f32 %v5276, %v5724
        %v5853 = vadd.f32 %v5277, %v5725
        %v5854 = vadd.f32 %v5278, %v5726
        %v5855 = vadd.f32 %v5279, %v5727
        %v5856 = vadd.f32 %v5280, %v5728
        %v5857 = vadd.f32 %v5281, %v5729
        %v5858 = vadd.f32 %v5282, %v5730
        %v5859 = vadd.f32 %v5283, %v5731
        %v5860 = vadd.f32 %v5284, %v5732
        %v5861 = vadd.f32 %v5285, %v5733
        %v5862 = vadd.f32 %v5286, %v5734
        %v5863 = vadd.f32 %v5287, %v5735
        %v5864 = vadd.f32 %v5288, %v5736
        %v5865 = vadd.f32 %v5289, %v5737
        %v5866 = vadd.f32 %v5290, %v5738
        %v5867 = vadd.f32 %v5291, %v5739
        %v5868 = vadd.f32 %v5292, %v5740
        %v5869 = vadd.f32 %v5293, %v5741
        %v5870 = vadd.f32 %v5294, %v5742
        %v5871 = vadd.f32 %v5295, %v5743
        %v5872 = vadd.f32 %v5296, %v5744
        %v5873 = vadd.f32 %v5297, %v5745
        %v5874 = vadd.f32 %v5298, %v5746
        %v5875 = vadd.f32 %v5299, %v5747
        %v5876 = vadd.f32 %v5300, %v5748
        %v5877 = vadd.f32 %v5301, %v5749
        %v5878 = vadd.f32 %v5302, %v5750
        %v5879 = vadd.f32 %v5303, %v5751
        %v5880 = vadd.f32 %v5304, %v5752
        %v5881 = vadd.f32 %v5305, %v5753
        %v5882 = vadd.f32 %v5306, %v5754
        %v5883 = vadd.f32 %v5307, %v5755
        %v5884 = vadd.f32 %v5308, %v5756
        %v5885 = vadd.f32 %v5309, %v5757
        %v5886 = vadd.f32 %v5310, %v5758
        %v5887 = vadd.f32 %v5311, %v5759
        %v5888 = vadd.f32 %v5312, %v5760
        %v5889 = vadd.f32 %v5313, %v5761
        %v5890 = vadd.f32 %v5314, %v5762
        %v5891 = vadd.f32 %v5315, %v5763
        %v5892 = vadd.f32 %v5316, %v5764
        %v5893 = vadd.f32 %v5317, %v5765
        %v5894 = vadd.f32 %v5318, %v5766
        %v5895 = vadd.f32 %v5319, %v5767
        %v5896 = vadd.f32 %v5320, %v5768
        %v5897 = vadd.f32 %v5321, %v5769
        %v5898 = vadd.f32 %v5322, %v5770
        %v5899 = vadd.f32 %v5323, %v5771
        %v5900 = vadd.f32 %v5324, %v5772
        %v5901 = vadd.f32 %v5325, %v5773
        %v5902 = vadd.f32 %v5326, %v5774
        %v5903 = vadd.f32 %v5327, %v5775
        %v5904 = vadd.f32 %v5328, %v5776
        %v5905 = vadd.f32 %v5329, %v5777
        %v5906 = vadd.f32 %v5330, %v5778
        %v5907 = vadd.f32 %v5331, %v5779
        %v5908 = vadd.f32 %v5332, %v5780
        %v5909 = vadd.f32 %v5333, %v5781
        %v5910 = vadd.f32 %v5334, %v5782
        %v5911 = vadd.f32 %v5335, %v5783
        %v5912 = vadd.f32 %v5336, %v5784
        %v5913 = vadd.f32 %v5337, %v5785
        %v5914 = vadd.f32 %v5338, %v5786
        %v5915 = vadd.f32 %v5339, %v5787
        %v5916 = vadd.f32 %v5340, %v5788
        %v5917 = vadd.f32 %v5341, %v5789
        %v5918 = vadd.f32 %v5342, %v5790
        %v5919 = vadd.f32 %v5343, %v5791
        %v5920 = vadd.f32 %v5344, %v5792
        %v5921 = vadd.f32 %v5345, %v5793
        %v5922 = vadd.f32 %v5346, %v5794
        %v5923 = vadd.f32 %v5347, %v5795
        %v5924 = vadd.f32 %v5348, %v5796
        %v5925 = vadd.f32 %v5349, %v5797
        %v5926 = vadd.f32 %v5350, %v5798
        %v5927 = vadd.f32 %v5351, %v5799
        %v5928 = vadd.f32 %v5352, %v5800
        %v5929 = vadd.f32 %v5353, %v5801
        %v5930 = vadd.f32 %v5354, %v5802
        %v5931 = vadd.f32 %v5355, %v5803
        %v5932 = vadd.f32 %v5356, %v5804
        %v5933 = vadd.f32 %v5357, %v5805
        %v5934 = vadd.f32 %v5358, %v5806
        %v5935 = vadd.f32 %v5359, %v5807
        %v5936 = vadd.f32 %v5360, %v5808
        %v5937 = vadd.f32 %v5361, %v5809
        %v5938 = vadd.f32 %v5362, %v5810
        %v5939 = vadd.f32 %v5363, %v5811
        %v5940 = vadd.f32 %v5364, %v5812
        %v5941 = vadd.f32 %v5365, %v5813
        %v5942 = vadd.f32 %v5366, %v5814
        %v5943 = vadd.f32 %v5367, %v5815
        %v5944 = vadd.f32 %v5368, %v5816
        %v5945 = vadd.f32 %v5369, %v5817
        %v5946 = vadd.f32 %v5370, %v5818
        %v5947 = vadd.f32 %v5371, %v5819
        %v5948 = vadd.f32 %v5372, %v5820
        %v5949 = vadd.f32 %v5373, %v5821
        %v5950 = vadd.f32 %v5374, %v5822
        %v5951 = vadd.f32 %v5375, %v5823
        %v5952 = vadd.f32 %v5376, %v5824
        %v5953 = vadd.f32 %v5377, %v5825
        %v5954 = vadd.f32 %v5378, %v5826
        %v5955 = vadd.f32 %v5379, %v5827
        %v5956 = vadd.f32 %v5380, %v5828
        %v5957 = vadd.s32 %v188, 640
        %v5958 = vadd.s32 %v189, 640
        %v5959 = vadd.s32 %v190, 640
        %v5960 = vadd.s32 %v191, 640
        %v5961 = vadd.s32 %v192, 640
        %v5962 = vadd.s32 %v193, 640
        %v5963 = vadd.s32 %v194, 640
        %v5964 = vadd.s32 %v195, 640
        %v5965 = vadd.s32 %v196, 640
        %v5966 = vadd.s32 %v197, 640
        %v5967 = vadd.s32 %v198, 640
        %v5968 = vadd.s32 %v199, 640
        %v5969 = vadd.s32 %v200, 640
        %v5970 = vadd.s32 %v201, 640
        %v5971 = vadd.s32 %v202, 640
        %v5972 = vadd.s32 %v203, 640
        %5973 = vset.pattern.permute.xlu0 10
        %5974 = vperm.xlu0 %5973, %v5957
        %v5975 = vpop.permute.xlu0 %5974
        %5976 = vset.pattern.permute.xlu0 10
        %5977 = vperm.xlu0 %5976, %v5958
        %v5978 = vpop.permute.xlu0 %5977
        %5979 = vset.pattern.permute.xlu0 10
        %5980 = vperm.xlu0 %5979, %v5959
        %v5981 = vpop.permute.xlu0 %5980
        %5982 = vset.pattern.permute.xlu0 10
        %5983 = vperm.xlu0 %5982, %v5960
        %v5984 = vpop.permute.xlu0 %5983
        %5985 = vset.pattern.permute.xlu0 10
        %5986 = vperm.xlu0 %5985, %v5961
        %v5987 = vpop.permute.xlu0 %5986
        %5988 = vset.pattern.permute.xlu0 10
        %5989 = vperm.xlu0 %5988, %v5962
        %v5990 = vpop.permute.xlu0 %5989
        %5991 = vset.pattern.permute.xlu0 10
        %5992 = vperm.xlu0 %5991, %v5963
        %v5993 = vpop.permute.xlu0 %5992
        %5994 = vset.pattern.permute.xlu0 10
        %5995 = vperm.xlu0 %5994, %v5964
        %v5996 = vpop.permute.xlu0 %5995
        %5997 = vset.pattern.permute.xlu0 10
        %5998 = vperm.xlu0 %5997, %v5965
        %v5999 = vpop.permute.xlu0 %5998
        %6000 = vset.pattern.permute.xlu0 10
        %6001 = vperm.xlu0 %6000, %v5966
        %v6002 = vpop.permute.xlu0 %6001
        %6003 = vset.pattern.permute.xlu0 10
        %6004 = vperm.xlu0 %6003, %v5967
        %v6005 = vpop.permute.xlu0 %6004
        %6006 = vset.pattern.permute.xlu0 10
        %6007 = vperm.xlu0 %6006, %v5968
        %v6008 = vpop.permute.xlu0 %6007
        %6009 = vset.pattern.permute.xlu0 10
        %6010 = vperm.xlu0 %6009, %v5969
        %v6011 = vpop.permute.xlu0 %6010
        %6012 = vset.pattern.permute.xlu0 10
        %6013 = vperm.xlu0 %6012, %v5970
        %v6014 = vpop.permute.xlu0 %6013
        %6015 = vset.pattern.permute.xlu0 10
        %6016 = vperm.xlu0 %6015, %v5971
        %v6017 = vpop.permute.xlu0 %6016
        %6018 = vset.pattern.permute.xlu0 10
        %6019 = vperm.xlu0 %6018, %v5972
        %v6020 = vpop.permute.xlu0 %6019
        %vm6021 = vcmp.eq.s32.totalorder %v205, %v5975
        %vm6022 = vcmp.eq.s32.totalorder %v206, %v5975
        %vm6023 = vcmp.eq.s32.totalorder %v207, %v5975
        %vm6024 = vcmp.eq.s32.totalorder %v208, %v5975
        %vm6025 = vcmp.eq.s32.totalorder %v209, %v5975
        %vm6026 = vcmp.eq.s32.totalorder %v210, %v5975
        %vm6027 = vcmp.eq.s32.totalorder %v211, %v5975
        %vm6028 = vcmp.eq.s32.totalorder %v212, %v5975
        %vm6029 = vcmp.eq.s32.totalorder %v205, %v5978
        %vm6030 = vcmp.eq.s32.totalorder %v206, %v5978
        %vm6031 = vcmp.eq.s32.totalorder %v207, %v5978
        %vm6032 = vcmp.eq.s32.totalorder %v208, %v5978
        %vm6033 = vcmp.eq.s32.totalorder %v209, %v5978
        %vm6034 = vcmp.eq.s32.totalorder %v210, %v5978
        %vm6035 = vcmp.eq.s32.totalorder %v211, %v5978
        %vm6036 = vcmp.eq.s32.totalorder %v212, %v5978
        %vm6037 = vcmp.eq.s32.totalorder %v205, %v5981
        %vm6038 = vcmp.eq.s32.totalorder %v206, %v5981
        %vm6039 = vcmp.eq.s32.totalorder %v207, %v5981
        %vm6040 = vcmp.eq.s32.totalorder %v208, %v5981
        %vm6041 = vcmp.eq.s32.totalorder %v209, %v5981
        %vm6042 = vcmp.eq.s32.totalorder %v210, %v5981
        %vm6043 = vcmp.eq.s32.totalorder %v211, %v5981
        %vm6044 = vcmp.eq.s32.totalorder %v212, %v5981
        %vm6045 = vcmp.eq.s32.totalorder %v205, %v5984
        %vm6046 = vcmp.eq.s32.totalorder %v206, %v5984
        %vm6047 = vcmp.eq.s32.totalorder %v207, %v5984
        %vm6048 = vcmp.eq.s32.totalorder %v208, %v5984
        %vm6049 = vcmp.eq.s32.totalorder %v209, %v5984
        %vm6050 = vcmp.eq.s32.totalorder %v210, %v5984
        %vm6051 = vcmp.eq.s32.totalorder %v211, %v5984
        %vm6052 = vcmp.eq.s32.totalorder %v212, %v5984
        %vm6053 = vcmp.eq.s32.totalorder %v205, %v5987
        %vm6054 = vcmp.eq.s32.totalorder %v206, %v5987
        %vm6055 = vcmp.eq.s32.totalorder %v207, %v5987
        %vm6056 = vcmp.eq.s32.totalorder %v208, %v5987
        %vm6057 = vcmp.eq.s32.totalorder %v209, %v5987
        %vm6058 = vcmp.eq.s32.totalorder %v210, %v5987
        %vm6059 = vcmp.eq.s32.totalorder %v211, %v5987
        %vm6060 = vcmp.eq.s32.totalorder %v212, %v5987
        %vm6061 = vcmp.eq.s32.totalorder %v205, %v5990
        %vm6062 = vcmp.eq.s32.totalorder %v206, %v5990
        %vm6063 = vcmp.eq.s32.totalorder %v207, %v5990
        %vm6064 = vcmp.eq.s32.totalorder %v208, %v5990
        %vm6065 = vcmp.eq.s32.totalorder %v209, %v5990
        %vm6066 = vcmp.eq.s32.totalorder %v210, %v5990
        %vm6067 = vcmp.eq.s32.totalorder %v211, %v5990
        %vm6068 = vcmp.eq.s32.totalorder %v212, %v5990
        %vm6069 = vcmp.eq.s32.totalorder %v205, %v5993
        %vm6070 = vcmp.eq.s32.totalorder %v206, %v5993
        %vm6071 = vcmp.eq.s32.totalorder %v207, %v5993
        %vm6072 = vcmp.eq.s32.totalorder %v208, %v5993
        %vm6073 = vcmp.eq.s32.totalorder %v209, %v5993
        %vm6074 = vcmp.eq.s32.totalorder %v210, %v5993
        %vm6075 = vcmp.eq.s32.totalorder %v211, %v5993
        %vm6076 = vcmp.eq.s32.totalorder %v212, %v5993
        %vm6077 = vcmp.eq.s32.totalorder %v205, %v5996
        %vm6078 = vcmp.eq.s32.totalorder %v206, %v5996
        %vm6079 = vcmp.eq.s32.totalorder %v207, %v5996
        %vm6080 = vcmp.eq.s32.totalorder %v208, %v5996
        %vm6081 = vcmp.eq.s32.totalorder %v209, %v5996
        %vm6082 = vcmp.eq.s32.totalorder %v210, %v5996
        %vm6083 = vcmp.eq.s32.totalorder %v211, %v5996
        %vm6084 = vcmp.eq.s32.totalorder %v212, %v5996
        %vm6085 = vcmp.eq.s32.totalorder %v205, %v5999
        %vm6086 = vcmp.eq.s32.totalorder %v206, %v5999
        %vm6087 = vcmp.eq.s32.totalorder %v207, %v5999
        %vm6088 = vcmp.eq.s32.totalorder %v208, %v5999
        %vm6089 = vcmp.eq.s32.totalorder %v209, %v5999
        %vm6090 = vcmp.eq.s32.totalorder %v210, %v5999
        %vm6091 = vcmp.eq.s32.totalorder %v211, %v5999
        %vm6092 = vcmp.eq.s32.totalorder %v212, %v5999
        %vm6093 = vcmp.eq.s32.totalorder %v205, %v6002
        %vm6094 = vcmp.eq.s32.totalorder %v206, %v6002
        %vm6095 = vcmp.eq.s32.totalorder %v207, %v6002
        %vm6096 = vcmp.eq.s32.totalorder %v208, %v6002
        %vm6097 = vcmp.eq.s32.totalorder %v209, %v6002
        %vm6098 = vcmp.eq.s32.totalorder %v210, %v6002
        %vm6099 = vcmp.eq.s32.totalorder %v211, %v6002
        %vm6100 = vcmp.eq.s32.totalorder %v212, %v6002
        %vm6101 = vcmp.eq.s32.totalorder %v205, %v6005
        %vm6102 = vcmp.eq.s32.totalorder %v206, %v6005
        %vm6103 = vcmp.eq.s32.totalorder %v207, %v6005
        %vm6104 = vcmp.eq.s32.totalorder %v208, %v6005
        %vm6105 = vcmp.eq.s32.totalorder %v209, %v6005
        %vm6106 = vcmp.eq.s32.totalorder %v210, %v6005
        %vm6107 = vcmp.eq.s32.totalorder %v211, %v6005
        %vm6108 = vcmp.eq.s32.totalorder %v212, %v6005
        %vm6109 = vcmp.eq.s32.totalorder %v205, %v6008
        %vm6110 = vcmp.eq.s32.totalorder %v206, %v6008
        %vm6111 = vcmp.eq.s32.totalorder %v207, %v6008
        %vm6112 = vcmp.eq.s32.totalorder %v208, %v6008
        %vm6113 = vcmp.eq.s32.totalorder %v209, %v6008
        %vm6114 = vcmp.eq.s32.totalorder %v210, %v6008
        %vm6115 = vcmp.eq.s32.totalorder %v211, %v6008
        %vm6116 = vcmp.eq.s32.totalorder %v212, %v6008
        %vm6117 = vcmp.eq.s32.totalorder %v205, %v6011
        %vm6118 = vcmp.eq.s32.totalorder %v206, %v6011
        %vm6119 = vcmp.eq.s32.totalorder %v207, %v6011
        %vm6120 = vcmp.eq.s32.totalorder %v208, %v6011
        %vm6121 = vcmp.eq.s32.totalorder %v209, %v6011
        %vm6122 = vcmp.eq.s32.totalorder %v210, %v6011
        %vm6123 = vcmp.eq.s32.totalorder %v211, %v6011
        %vm6124 = vcmp.eq.s32.totalorder %v212, %v6011
        %vm6125 = vcmp.eq.s32.totalorder %v205, %v6014
        %vm6126 = vcmp.eq.s32.totalorder %v206, %v6014
        %vm6127 = vcmp.eq.s32.totalorder %v207, %v6014
        %vm6128 = vcmp.eq.s32.totalorder %v208, %v6014
        %vm6129 = vcmp.eq.s32.totalorder %v209, %v6014
        %vm6130 = vcmp.eq.s32.totalorder %v210, %v6014
        %vm6131 = vcmp.eq.s32.totalorder %v211, %v6014
        %vm6132 = vcmp.eq.s32.totalorder %v212, %v6014
        %vm6133 = vcmp.eq.s32.totalorder %v205, %v6017
        %vm6134 = vcmp.eq.s32.totalorder %v206, %v6017
        %vm6135 = vcmp.eq.s32.totalorder %v207, %v6017
        %vm6136 = vcmp.eq.s32.totalorder %v208, %v6017
        %vm6137 = vcmp.eq.s32.totalorder %v209, %v6017
        %vm6138 = vcmp.eq.s32.totalorder %v210, %v6017
        %vm6139 = vcmp.eq.s32.totalorder %v211, %v6017
        %vm6140 = vcmp.eq.s32.totalorder %v212, %v6017
        %vm6141 = vcmp.eq.s32.totalorder %v205, %v6020
        %vm6142 = vcmp.eq.s32.totalorder %v206, %v6020
        %vm6143 = vcmp.eq.s32.totalorder %v207, %v6020
        %vm6144 = vcmp.eq.s32.totalorder %v208, %v6020
        %vm6145 = vcmp.eq.s32.totalorder %v209, %v6020
        %vm6146 = vcmp.eq.s32.totalorder %v210, %v6020
        %vm6147 = vcmp.eq.s32.totalorder %v211, %v6020
        %vm6148 = vcmp.eq.s32.totalorder %v212, %v6020
        %v6149 = vsel %vm6021, 1, 0
        %v6150 = vsel %vm6022, 1, 0
        %v6151 = vsel %vm6023, 1, 0
        %v6152 = vsel %vm6024, 1, 0
        %v6153 = vsel %vm6025, 1, 0
        %v6154 = vsel %vm6026, 1, 0
        %v6155 = vsel %vm6027, 1, 0
        %v6156 = vsel %vm6028, 1, 0
        %v6157 = vsel %vm6029, 1, 0
        %v6158 = vsel %vm6030, 1, 0
        %v6159 = vsel %vm6031, 1, 0
        %v6160 = vsel %vm6032, 1, 0
        %v6161 = vsel %vm6033, 1, 0
        %v6162 = vsel %vm6034, 1, 0
        %v6163 = vsel %vm6035, 1, 0
        %v6164 = vsel %vm6036, 1, 0
        %v6165 = vsel %vm6037, 1, 0
        %v6166 = vsel %vm6038, 1, 0
        %v6167 = vsel %vm6039, 1, 0
        %v6168 = vsel %vm6040, 1, 0
        %v6169 = vsel %vm6041, 1, 0
        %v6170 = vsel %vm6042, 1, 0
        %v6171 = vsel %vm6043, 1, 0
        %v6172 = vsel %vm6044, 1, 0
        %v6173 = vsel %vm6045, 1, 0
        %v6174 = vsel %vm6046, 1, 0
        %v6175 = vsel %vm6047, 1, 0
        %v6176 = vsel %vm6048, 1, 0
        %v6177 = vsel %vm6049, 1, 0
        %v6178 = vsel %vm6050, 1, 0
        %v6179 = vsel %vm6051, 1, 0
        %v6180 = vsel %vm6052, 1, 0
        %v6181 = vsel %vm6053, 1, 0
        %v6182 = vsel %vm6054, 1, 0
        %v6183 = vsel %vm6055, 1, 0
        %v6184 = vsel %vm6056, 1, 0
        %v6185 = vsel %vm6057, 1, 0
        %v6186 = vsel %vm6058, 1, 0
        %v6187 = vsel %vm6059, 1, 0
        %v6188 = vsel %vm6060, 1, 0
        %v6189 = vsel %vm6061, 1, 0
        %v6190 = vsel %vm6062, 1, 0
        %v6191 = vsel %vm6063, 1, 0
        %v6192 = vsel %vm6064, 1, 0
        %v6193 = vsel %vm6065, 1, 0
        %v6194 = vsel %vm6066, 1, 0
        %v6195 = vsel %vm6067, 1, 0
        %v6196 = vsel %vm6068, 1, 0
        %v6197 = vsel %vm6069, 1, 0
        %v6198 = vsel %vm6070, 1, 0
        %v6199 = vsel %vm6071, 1, 0
        %v6200 = vsel %vm6072, 1, 0
        %v6201 = vsel %vm6073, 1, 0
        %v6202 = vsel %vm6074, 1, 0
        %v6203 = vsel %vm6075, 1, 0
        %v6204 = vsel %vm6076, 1, 0
        %v6205 = vsel %vm6077, 1, 0
        %v6206 = vsel %vm6078, 1, 0
        %v6207 = vsel %vm6079, 1, 0
        %v6208 = vsel %vm6080, 1, 0
        %v6209 = vsel %vm6081, 1, 0
        %v6210 = vsel %vm6082, 1, 0
        %v6211 = vsel %vm6083, 1, 0
        %v6212 = vsel %vm6084, 1, 0
        %v6213 = vsel %vm6085, 1, 0
        %v6214 = vsel %vm6086, 1, 0
        %v6215 = vsel %vm6087, 1, 0
        %v6216 = vsel %vm6088, 1, 0
        %v6217 = vsel %vm6089, 1, 0
        %v6218 = vsel %vm6090, 1, 0
        %v6219 = vsel %vm6091, 1, 0
        %v6220 = vsel %vm6092, 1, 0
        %v6221 = vsel %vm6093, 1, 0
        %v6222 = vsel %vm6094, 1, 0
        %v6223 = vsel %vm6095, 1, 0
        %v6224 = vsel %vm6096, 1, 0
        %v6225 = vsel %vm6097, 1, 0
        %v6226 = vsel %vm6098, 1, 0
        %v6227 = vsel %vm6099, 1, 0
        %v6228 = vsel %vm6100, 1, 0
        %v6229 = vsel %vm6101, 1, 0
        %v6230 = vsel %vm6102, 1, 0
        %v6231 = vsel %vm6103, 1, 0
        %v6232 = vsel %vm6104, 1, 0
        %v6233 = vsel %vm6105, 1, 0
        %v6234 = vsel %vm6106, 1, 0
        %v6235 = vsel %vm6107, 1, 0
        %v6236 = vsel %vm6108, 1, 0
        %v6237 = vsel %vm6109, 1, 0
        %v6238 = vsel %vm6110, 1, 0
        %v6239 = vsel %vm6111, 1, 0
        %v6240 = vsel %vm6112, 1, 0
        %v6241 = vsel %vm6113, 1, 0
        %v6242 = vsel %vm6114, 1, 0
        %v6243 = vsel %vm6115, 1, 0
        %v6244 = vsel %vm6116, 1, 0
        %v6245 = vsel %vm6117, 1, 0
        %v6246 = vsel %vm6118, 1, 0
        %v6247 = vsel %vm6119, 1, 0
        %v6248 = vsel %vm6120, 1, 0
        %v6249 = vsel %vm6121, 1, 0
        %v6250 = vsel %vm6122, 1, 0
        %v6251 = vsel %vm6123, 1, 0
        %v6252 = vsel %vm6124, 1, 0
        %v6253 = vsel %vm6125, 1, 0
        %v6254 = vsel %vm6126, 1, 0
        %v6255 = vsel %vm6127, 1, 0
        %v6256 = vsel %vm6128, 1, 0
        %v6257 = vsel %vm6129, 1, 0
        %v6258 = vsel %vm6130, 1, 0
        %v6259 = vsel %vm6131, 1, 0
        %v6260 = vsel %vm6132, 1, 0
        %v6261 = vsel %vm6133, 1, 0
        %v6262 = vsel %vm6134, 1, 0
        %v6263 = vsel %vm6135, 1, 0
        %v6264 = vsel %vm6136, 1, 0
        %v6265 = vsel %vm6137, 1, 0
        %v6266 = vsel %vm6138, 1, 0
        %v6267 = vsel %vm6139, 1, 0
        %v6268 = vsel %vm6140, 1, 0
        %v6269 = vsel %vm6141, 1, 0
        %v6270 = vsel %vm6142, 1, 0
        %v6271 = vsel %vm6143, 1, 0
        %v6272 = vsel %vm6144, 1, 0
        %v6273 = vsel %vm6145, 1, 0
        %v6274 = vsel %vm6146, 1, 0
        %v6275 = vsel %vm6147, 1, 0
        %v6276 = vsel %vm6148, 1, 0
        %v6277 = vcvt.s32.f32 %v6149
        %v6278 = vcvt.s32.f32 %v6150
        %v6279 = vcvt.s32.f32 %v6151
        %v6280 = vcvt.s32.f32 %v6152
        %v6281 = vcvt.s32.f32 %v6153
        %v6282 = vcvt.s32.f32 %v6154
        %v6283 = vcvt.s32.f32 %v6155
        %v6284 = vcvt.s32.f32 %v6156
        %v6285 = vcvt.s32.f32 %v6157
        %v6286 = vcvt.s32.f32 %v6158
        %v6287 = vcvt.s32.f32 %v6159
        %v6288 = vcvt.s32.f32 %v6160
        %v6289 = vcvt.s32.f32 %v6161
        %v6290 = vcvt.s32.f32 %v6162
        %v6291 = vcvt.s32.f32 %v6163
        %v6292 = vcvt.s32.f32 %v6164
        %v6293 = vcvt.s32.f32 %v6165
        %v6294 = vcvt.s32.f32 %v6166
        %v6295 = vcvt.s32.f32 %v6167
        %v6296 = vcvt.s32.f32 %v6168
        %v6297 = vcvt.s32.f32 %v6169
        %v6298 = vcvt.s32.f32 %v6170
        %v6299 = vcvt.s32.f32 %v6171
        %v6300 = vcvt.s32.f32 %v6172
        %v6301 = vcvt.s32.f32 %v6173
        %v6302 = vcvt.s32.f32 %v6174
        %v6303 = vcvt.s32.f32 %v6175
        %v6304 = vcvt.s32.f32 %v6176
        %v6305 = vcvt.s32.f32 %v6177
        %v6306 = vcvt.s32.f32 %v6178
        %v6307 = vcvt.s32.f32 %v6179
        %v6308 = vcvt.s32.f32 %v6180
        %v6309 = vcvt.s32.f32 %v6181
        %v6310 = vcvt.s32.f32 %v6182
        %v6311 = vcvt.s32.f32 %v6183
        %v6312 = vcvt.s32.f32 %v6184
        %v6313 = vcvt.s32.f32 %v6185
        %v6314 = vcvt.s32.f32 %v6186
        %v6315 = vcvt.s32.f32 %v6187
        %v6316 = vcvt.s32.f32 %v6188
        %v6317 = vcvt.s32.f32 %v6189
        %v6318 = vcvt.s32.f32 %v6190
        %v6319 = vcvt.s32.f32 %v6191
        %v6320 = vcvt.s32.f32 %v6192
        %v6321 = vcvt.s32.f32 %v6193
        %v6322 = vcvt.s32.f32 %v6194
        %v6323 = vcvt.s32.f32 %v6195
        %v6324 = vcvt.s32.f32 %v6196
        %v6325 = vcvt.s32.f32 %v6197
        %v6326 = vcvt.s32.f32 %v6198
        %v6327 = vcvt.s32.f32 %v6199
        %v6328 = vcvt.s32.f32 %v6200
        %v6329 = vcvt.s32.f32 %v6201
        %v6330 = vcvt.s32.f32 %v6202
        %v6331 = vcvt.s32.f32 %v6203
        %v6332 = vcvt.s32.f32 %v6204
        %v6333 = vcvt.s32.f32 %v6205
        %v6334 = vcvt.s32.f32 %v6206
        %v6335 = vcvt.s32.f32 %v6207
        %v6336 = vcvt.s32.f32 %v6208
        %v6337 = vcvt.s32.f32 %v6209
        %v6338 = vcvt.s32.f32 %v6210
        %v6339 = vcvt.s32.f32 %v6211
        %v6340 = vcvt.s32.f32 %v6212
        %v6341 = vcvt.s32.f32 %v6213
        %v6342 = vcvt.s32.f32 %v6214
        %v6343 = vcvt.s32.f32 %v6215
        %v6344 = vcvt.s32.f32 %v6216
        %v6345 = vcvt.s32.f32 %v6217
        %v6346 = vcvt.s32.f32 %v6218
        %v6347 = vcvt.s32.f32 %v6219
        %v6348 = vcvt.s32.f32 %v6220
        %v6349 = vcvt.s32.f32 %v6221
        %v6350 = vcvt.s32.f32 %v6222
        %v6351 = vcvt.s32.f32 %v6223
        %v6352 = vcvt.s32.f32 %v6224
        %v6353 = vcvt.s32.f32 %v6225
        %v6354 = vcvt.s32.f32 %v6226
        %v6355 = vcvt.s32.f32 %v6227
        %v6356 = vcvt.s32.f32 %v6228
        %v6357 = vcvt.s32.f32 %v6229
        %v6358 = vcvt.s32.f32 %v6230
        %v6359 = vcvt.s32.f32 %v6231
        %v6360 = vcvt.s32.f32 %v6232
        %v6361 = vcvt.s32.f32 %v6233
        %v6362 = vcvt.s32.f32 %v6234
        %v6363 = vcvt.s32.f32 %v6235
        %v6364 = vcvt.s32.f32 %v6236
        %v6365 = vcvt.s32.f32 %v6237
        %v6366 = vcvt.s32.f32 %v6238
        %v6367 = vcvt.s32.f32 %v6239
        %v6368 = vcvt.s32.f32 %v6240
        %v6369 = vcvt.s32.f32 %v6241
        %v6370 = vcvt.s32.f32 %v6242
        %v6371 = vcvt.s32.f32 %v6243
        %v6372 = vcvt.s32.f32 %v6244
        %v6373 = vcvt.s32.f32 %v6245
        %v6374 = vcvt.s32.f32 %v6246
        %v6375 = vcvt.s32.f32 %v6247
        %v6376 = vcvt.s32.f32 %v6248
        %v6377 = vcvt.s32.f32 %v6249
        %v6378 = vcvt.s32.f32 %v6250
        %v6379 = vcvt.s32.f32 %v6251
        %v6380 = vcvt.s32.f32 %v6252
        %v6381 = vcvt.s32.f32 %v6253
        %v6382 = vcvt.s32.f32 %v6254
        %v6383 = vcvt.s32.f32 %v6255
        %v6384 = vcvt.s32.f32 %v6256
        %v6385 = vcvt.s32.f32 %v6257
        %v6386 = vcvt.s32.f32 %v6258
        %v6387 = vcvt.s32.f32 %v6259
        %v6388 = vcvt.s32.f32 %v6260
        %v6389 = vcvt.s32.f32 %v6261
        %v6390 = vcvt.s32.f32 %v6262
        %v6391 = vcvt.s32.f32 %v6263
        %v6392 = vcvt.s32.f32 %v6264
        %v6393 = vcvt.s32.f32 %v6265
        %v6394 = vcvt.s32.f32 %v6266
        %v6395 = vcvt.s32.f32 %v6267
        %v6396 = vcvt.s32.f32 %v6268
        %v6397 = vcvt.s32.f32 %v6269
        %v6398 = vcvt.s32.f32 %v6270
        %v6399 = vcvt.s32.f32 %v6271
        %v6400 = vcvt.s32.f32 %v6272
        %v6401 = vcvt.s32.f32 %v6273
        %v6402 = vcvt.s32.f32 %v6274
        %v6403 = vcvt.s32.f32 %v6275
        %v6404 = vcvt.s32.f32 %v6276
        %v6405 = vadd.f32 %v5829, %v6277
        %v6406 = vadd.f32 %v5830, %v6278
        %v6407 = vadd.f32 %v5831, %v6279
        %v6408 = vadd.f32 %v5832, %v6280
        %v6409 = vadd.f32 %v5833, %v6281
        %v6410 = vadd.f32 %v5834, %v6282
        %v6411 = vadd.f32 %v5835, %v6283
        %v6412 = vadd.f32 %v5836, %v6284
        %v6413 = vadd.f32 %v5837, %v6285
        %v6414 = vadd.f32 %v5838, %v6286
        %v6415 = vadd.f32 %v5839, %v6287
        %v6416 = vadd.f32 %v5840, %v6288
        %v6417 = vadd.f32 %v5841, %v6289
        %v6418 = vadd.f32 %v5842, %v6290
        %v6419 = vadd.f32 %v5843, %v6291
        %v6420 = vadd.f32 %v5844, %v6292
        %v6421 = vadd.f32 %v5845, %v6293
        %v6422 = vadd.f32 %v5846, %v6294
        %v6423 = vadd.f32 %v5847, %v6295
        %v6424 = vadd.f32 %v5848, %v6296
        %v6425 = vadd.f32 %v5849, %v6297
        %v6426 = vadd.f32 %v5850, %v6298
        %v6427 = vadd.f32 %v5851, %v6299
        %v6428 = vadd.f32 %v5852, %v6300
        %v6429 = vadd.f32 %v5853, %v6301
        %v6430 = vadd.f32 %v5854, %v6302
        %v6431 = vadd.f32 %v5855, %v6303
        %v6432 = vadd.f32 %v5856, %v6304
        %v6433 = vadd.f32 %v5857, %v6305
        %v6434 = vadd.f32 %v5858, %v6306
        %v6435 = vadd.f32 %v5859, %v6307
        %v6436 = vadd.f32 %v5860, %v6308
        %v6437 = vadd.f32 %v5861, %v6309
        %v6438 = vadd.f32 %v5862, %v6310
        %v6439 = vadd.f32 %v5863, %v6311
        %v6440 = vadd.f32 %v5864, %v6312
        %v6441 = vadd.f32 %v5865, %v6313
        %v6442 = vadd.f32 %v5866, %v6314
        %v6443 = vadd.f32 %v5867, %v6315
        %v6444 = vadd.f32 %v5868, %v6316
        %v6445 = vadd.f32 %v5869, %v6317
        %v6446 = vadd.f32 %v5870, %v6318
        %v6447 = vadd.f32 %v5871, %v6319
        %v6448 = vadd.f32 %v5872, %v6320
        %v6449 = vadd.f32 %v5873, %v6321
        %v6450 = vadd.f32 %v5874, %v6322
        %v6451 = vadd.f32 %v5875, %v6323
        %v6452 = vadd.f32 %v5876, %v6324
        %v6453 = vadd.f32 %v5877, %v6325
        %v6454 = vadd.f32 %v5878, %v6326
        %v6455 = vadd.f32 %v5879, %v6327
        %v6456 = vadd.f32 %v5880, %v6328
        %v6457 = vadd.f32 %v5881, %v6329
        %v6458 = vadd.f32 %v5882, %v6330
        %v6459 = vadd.f32 %v5883, %v6331
        %v6460 = vadd.f32 %v5884, %v6332
        %v6461 = vadd.f32 %v5885, %v6333
        %v6462 = vadd.f32 %v5886, %v6334
        %v6463 = vadd.f32 %v5887, %v6335
        %v6464 = vadd.f32 %v5888, %v6336
        %v6465 = vadd.f32 %v5889, %v6337
        %v6466 = vadd.f32 %v5890, %v6338
        %v6467 = vadd.f32 %v5891, %v6339
        %v6468 = vadd.f32 %v5892, %v6340
        %v6469 = vadd.f32 %v5893, %v6341
        %v6470 = vadd.f32 %v5894, %v6342
        %v6471 = vadd.f32 %v5895, %v6343
        %v6472 = vadd.f32 %v5896, %v6344
        %v6473 = vadd.f32 %v5897, %v6345
        %v6474 = vadd.f32 %v5898, %v6346
        %v6475 = vadd.f32 %v5899, %v6347
        %v6476 = vadd.f32 %v5900, %v6348
        %v6477 = vadd.f32 %v5901, %v6349
        %v6478 = vadd.f32 %v5902, %v6350
        %v6479 = vadd.f32 %v5903, %v6351
        %v6480 = vadd.f32 %v5904, %v6352
        %v6481 = vadd.f32 %v5905, %v6353
        %v6482 = vadd.f32 %v5906, %v6354
        %v6483 = vadd.f32 %v5907, %v6355
        %v6484 = vadd.f32 %v5908, %v6356
        %v6485 = vadd.f32 %v5909, %v6357
        %v6486 = vadd.f32 %v5910, %v6358
        %v6487 = vadd.f32 %v5911, %v6359
        %v6488 = vadd.f32 %v5912, %v6360
        %v6489 = vadd.f32 %v5913, %v6361
        %v6490 = vadd.f32 %v5914, %v6362
        %v6491 = vadd.f32 %v5915, %v6363
        %v6492 = vadd.f32 %v5916, %v6364
        %v6493 = vadd.f32 %v5917, %v6365
        %v6494 = vadd.f32 %v5918, %v6366
        %v6495 = vadd.f32 %v5919, %v6367
        %v6496 = vadd.f32 %v5920, %v6368
        %v6497 = vadd.f32 %v5921, %v6369
        %v6498 = vadd.f32 %v5922, %v6370
        %v6499 = vadd.f32 %v5923, %v6371
        %v6500 = vadd.f32 %v5924, %v6372
        %v6501 = vadd.f32 %v5925, %v6373
        %v6502 = vadd.f32 %v5926, %v6374
        %v6503 = vadd.f32 %v5927, %v6375
        %v6504 = vadd.f32 %v5928, %v6376
        %v6505 = vadd.f32 %v5929, %v6377
        %v6506 = vadd.f32 %v5930, %v6378
        %v6507 = vadd.f32 %v5931, %v6379
        %v6508 = vadd.f32 %v5932, %v6380
        %v6509 = vadd.f32 %v5933, %v6381
        %v6510 = vadd.f32 %v5934, %v6382
        %v6511 = vadd.f32 %v5935, %v6383
        %v6512 = vadd.f32 %v5936, %v6384
        %v6513 = vadd.f32 %v5937, %v6385
        %v6514 = vadd.f32 %v5938, %v6386
        %v6515 = vadd.f32 %v5939, %v6387
        %v6516 = vadd.f32 %v5940, %v6388
        %v6517 = vadd.f32 %v5941, %v6389
        %v6518 = vadd.f32 %v5942, %v6390
        %v6519 = vadd.f32 %v5943, %v6391
        %v6520 = vadd.f32 %v5944, %v6392
        %v6521 = vadd.f32 %v5945, %v6393
        %v6522 = vadd.f32 %v5946, %v6394
        %v6523 = vadd.f32 %v5947, %v6395
        %v6524 = vadd.f32 %v5948, %v6396
        %v6525 = vadd.f32 %v5949, %v6397
        %v6526 = vadd.f32 %v5950, %v6398
        %v6527 = vadd.f32 %v5951, %v6399
        %v6528 = vadd.f32 %v5952, %v6400
        %v6529 = vadd.f32 %v5953, %v6401
        %v6530 = vadd.f32 %v5954, %v6402
        %v6531 = vadd.f32 %v5955, %v6403
        %v6532 = vadd.f32 %v5956, %v6404
        %v6533 = vadd.s32 %v188, 704
        %v6534 = vadd.s32 %v189, 704
        %v6535 = vadd.s32 %v190, 704
        %v6536 = vadd.s32 %v191, 704
        %v6537 = vadd.s32 %v192, 704
        %v6538 = vadd.s32 %v193, 704
        %v6539 = vadd.s32 %v194, 704
        %v6540 = vadd.s32 %v195, 704
        %v6541 = vadd.s32 %v196, 704
        %v6542 = vadd.s32 %v197, 704
        %v6543 = vadd.s32 %v198, 704
        %v6544 = vadd.s32 %v199, 704
        %v6545 = vadd.s32 %v200, 704
        %v6546 = vadd.s32 %v201, 704
        %v6547 = vadd.s32 %v202, 704
        %v6548 = vadd.s32 %v203, 704
        %6549 = vset.pattern.permute.xlu0 11
        %6550 = vperm.xlu0 %6549, %v6533
        %v6551 = vpop.permute.xlu0 %6550
        %6552 = vset.pattern.permute.xlu0 11
        %6553 = vperm.xlu0 %6552, %v6534
        %v6554 = vpop.permute.xlu0 %6553
        %6555 = vset.pattern.permute.xlu0 11
        %6556 = vperm.xlu0 %6555, %v6535
        %v6557 = vpop.permute.xlu0 %6556
        %6558 = vset.pattern.permute.xlu0 11
        %6559 = vperm.xlu0 %6558, %v6536
        %v6560 = vpop.permute.xlu0 %6559
        %6561 = vset.pattern.permute.xlu0 11
        %6562 = vperm.xlu0 %6561, %v6537
        %v6563 = vpop.permute.xlu0 %6562
        %6564 = vset.pattern.permute.xlu0 11
        %6565 = vperm.xlu0 %6564, %v6538
        %v6566 = vpop.permute.xlu0 %6565
        %6567 = vset.pattern.permute.xlu0 11
        %6568 = vperm.xlu0 %6567, %v6539
        %v6569 = vpop.permute.xlu0 %6568
        %6570 = vset.pattern.permute.xlu0 11
        %6571 = vperm.xlu0 %6570, %v6540
        %v6572 = vpop.permute.xlu0 %6571
        %6573 = vset.pattern.permute.xlu0 11
        %6574 = vperm.xlu0 %6573, %v6541
        %v6575 = vpop.permute.xlu0 %6574
        %6576 = vset.pattern.permute.xlu0 11
        %6577 = vperm.xlu0 %6576, %v6542
        %v6578 = vpop.permute.xlu0 %6577
        %6579 = vset.pattern.permute.xlu0 11
        %6580 = vperm.xlu0 %6579, %v6543
        %v6581 = vpop.permute.xlu0 %6580
        %6582 = vset.pattern.permute.xlu0 11
        %6583 = vperm.xlu0 %6582, %v6544
        %v6584 = vpop.permute.xlu0 %6583
        %6585 = vset.pattern.permute.xlu0 11
        %6586 = vperm.xlu0 %6585, %v6545
        %v6587 = vpop.permute.xlu0 %6586
        %6588 = vset.pattern.permute.xlu0 11
        %6589 = vperm.xlu0 %6588, %v6546
        %v6590 = vpop.permute.xlu0 %6589
        %6591 = vset.pattern.permute.xlu0 11
        %6592 = vperm.xlu0 %6591, %v6547
        %v6593 = vpop.permute.xlu0 %6592
        %6594 = vset.pattern.permute.xlu0 11
        %6595 = vperm.xlu0 %6594, %v6548
        %v6596 = vpop.permute.xlu0 %6595
        %vm6597 = vcmp.eq.s32.totalorder %v205, %v6551
        %vm6598 = vcmp.eq.s32.totalorder %v206, %v6551
        %vm6599 = vcmp.eq.s32.totalorder %v207, %v6551
        %vm6600 = vcmp.eq.s32.totalorder %v208, %v6551
        %vm6601 = vcmp.eq.s32.totalorder %v209, %v6551
        %vm6602 = vcmp.eq.s32.totalorder %v210, %v6551
        %vm6603 = vcmp.eq.s32.totalorder %v211, %v6551
        %vm6604 = vcmp.eq.s32.totalorder %v212, %v6551
        %vm6605 = vcmp.eq.s32.totalorder %v205, %v6554
        %vm6606 = vcmp.eq.s32.totalorder %v206, %v6554
        %vm6607 = vcmp.eq.s32.totalorder %v207, %v6554
        %vm6608 = vcmp.eq.s32.totalorder %v208, %v6554
        %vm6609 = vcmp.eq.s32.totalorder %v209, %v6554
        %vm6610 = vcmp.eq.s32.totalorder %v210, %v6554
        %vm6611 = vcmp.eq.s32.totalorder %v211, %v6554
        %vm6612 = vcmp.eq.s32.totalorder %v212, %v6554
        %vm6613 = vcmp.eq.s32.totalorder %v205, %v6557
        %vm6614 = vcmp.eq.s32.totalorder %v206, %v6557
        %vm6615 = vcmp.eq.s32.totalorder %v207, %v6557
        %vm6616 = vcmp.eq.s32.totalorder %v208, %v6557
        %vm6617 = vcmp.eq.s32.totalorder %v209, %v6557
        %vm6618 = vcmp.eq.s32.totalorder %v210, %v6557
        %vm6619 = vcmp.eq.s32.totalorder %v211, %v6557
        %vm6620 = vcmp.eq.s32.totalorder %v212, %v6557
        %vm6621 = vcmp.eq.s32.totalorder %v205, %v6560
        %vm6622 = vcmp.eq.s32.totalorder %v206, %v6560
        %vm6623 = vcmp.eq.s32.totalorder %v207, %v6560
        %vm6624 = vcmp.eq.s32.totalorder %v208, %v6560
        %vm6625 = vcmp.eq.s32.totalorder %v209, %v6560
        %vm6626 = vcmp.eq.s32.totalorder %v210, %v6560
        %vm6627 = vcmp.eq.s32.totalorder %v211, %v6560
        %vm6628 = vcmp.eq.s32.totalorder %v212, %v6560
        %vm6629 = vcmp.eq.s32.totalorder %v205, %v6563
        %vm6630 = vcmp.eq.s32.totalorder %v206, %v6563
        %vm6631 = vcmp.eq.s32.totalorder %v207, %v6563
        %vm6632 = vcmp.eq.s32.totalorder %v208, %v6563
        %vm6633 = vcmp.eq.s32.totalorder %v209, %v6563
        %vm6634 = vcmp.eq.s32.totalorder %v210, %v6563
        %vm6635 = vcmp.eq.s32.totalorder %v211, %v6563
        %vm6636 = vcmp.eq.s32.totalorder %v212, %v6563
        %vm6637 = vcmp.eq.s32.totalorder %v205, %v6566
        %vm6638 = vcmp.eq.s32.totalorder %v206, %v6566
        %vm6639 = vcmp.eq.s32.totalorder %v207, %v6566
        %vm6640 = vcmp.eq.s32.totalorder %v208, %v6566
        %vm6641 = vcmp.eq.s32.totalorder %v209, %v6566
        %vm6642 = vcmp.eq.s32.totalorder %v210, %v6566
        %vm6643 = vcmp.eq.s32.totalorder %v211, %v6566
        %vm6644 = vcmp.eq.s32.totalorder %v212, %v6566
        %vm6645 = vcmp.eq.s32.totalorder %v205, %v6569
        %vm6646 = vcmp.eq.s32.totalorder %v206, %v6569
        %vm6647 = vcmp.eq.s32.totalorder %v207, %v6569
        %vm6648 = vcmp.eq.s32.totalorder %v208, %v6569
        %vm6649 = vcmp.eq.s32.totalorder %v209, %v6569
        %vm6650 = vcmp.eq.s32.totalorder %v210, %v6569
        %vm6651 = vcmp.eq.s32.totalorder %v211, %v6569
        %vm6652 = vcmp.eq.s32.totalorder %v212, %v6569
        %vm6653 = vcmp.eq.s32.totalorder %v205, %v6572
        %vm6654 = vcmp.eq.s32.totalorder %v206, %v6572
        %vm6655 = vcmp.eq.s32.totalorder %v207, %v6572
        %vm6656 = vcmp.eq.s32.totalorder %v208, %v6572
        %vm6657 = vcmp.eq.s32.totalorder %v209, %v6572
        %vm6658 = vcmp.eq.s32.totalorder %v210, %v6572
        %vm6659 = vcmp.eq.s32.totalorder %v211, %v6572
        %vm6660 = vcmp.eq.s32.totalorder %v212, %v6572
        %vm6661 = vcmp.eq.s32.totalorder %v205, %v6575
        %vm6662 = vcmp.eq.s32.totalorder %v206, %v6575
        %vm6663 = vcmp.eq.s32.totalorder %v207, %v6575
        %vm6664 = vcmp.eq.s32.totalorder %v208, %v6575
        %vm6665 = vcmp.eq.s32.totalorder %v209, %v6575
        %vm6666 = vcmp.eq.s32.totalorder %v210, %v6575
        %vm6667 = vcmp.eq.s32.totalorder %v211, %v6575
        %vm6668 = vcmp.eq.s32.totalorder %v212, %v6575
        %vm6669 = vcmp.eq.s32.totalorder %v205, %v6578
        %vm6670 = vcmp.eq.s32.totalorder %v206, %v6578
        %vm6671 = vcmp.eq.s32.totalorder %v207, %v6578
        %vm6672 = vcmp.eq.s32.totalorder %v208, %v6578
        %vm6673 = vcmp.eq.s32.totalorder %v209, %v6578
        %vm6674 = vcmp.eq.s32.totalorder %v210, %v6578
        %vm6675 = vcmp.eq.s32.totalorder %v211, %v6578
        %vm6676 = vcmp.eq.s32.totalorder %v212, %v6578
        %vm6677 = vcmp.eq.s32.totalorder %v205, %v6581
        %vm6678 = vcmp.eq.s32.totalorder %v206, %v6581
        %vm6679 = vcmp.eq.s32.totalorder %v207, %v6581
        %vm6680 = vcmp.eq.s32.totalorder %v208, %v6581
        %vm6681 = vcmp.eq.s32.totalorder %v209, %v6581
        %vm6682 = vcmp.eq.s32.totalorder %v210, %v6581
        %vm6683 = vcmp.eq.s32.totalorder %v211, %v6581
        %vm6684 = vcmp.eq.s32.totalorder %v212, %v6581
        %vm6685 = vcmp.eq.s32.totalorder %v205, %v6584
        %vm6686 = vcmp.eq.s32.totalorder %v206, %v6584
        %vm6687 = vcmp.eq.s32.totalorder %v207, %v6584
        %vm6688 = vcmp.eq.s32.totalorder %v208, %v6584
        %vm6689 = vcmp.eq.s32.totalorder %v209, %v6584
        %vm6690 = vcmp.eq.s32.totalorder %v210, %v6584
        %vm6691 = vcmp.eq.s32.totalorder %v211, %v6584
        %vm6692 = vcmp.eq.s32.totalorder %v212, %v6584
        %vm6693 = vcmp.eq.s32.totalorder %v205, %v6587
        %vm6694 = vcmp.eq.s32.totalorder %v206, %v6587
        %vm6695 = vcmp.eq.s32.totalorder %v207, %v6587
        %vm6696 = vcmp.eq.s32.totalorder %v208, %v6587
        %vm6697 = vcmp.eq.s32.totalorder %v209, %v6587
        %vm6698 = vcmp.eq.s32.totalorder %v210, %v6587
        %vm6699 = vcmp.eq.s32.totalorder %v211, %v6587
        %vm6700 = vcmp.eq.s32.totalorder %v212, %v6587
        %vm6701 = vcmp.eq.s32.totalorder %v205, %v6590
        %vm6702 = vcmp.eq.s32.totalorder %v206, %v6590
        %vm6703 = vcmp.eq.s32.totalorder %v207, %v6590
        %vm6704 = vcmp.eq.s32.totalorder %v208, %v6590
        %vm6705 = vcmp.eq.s32.totalorder %v209, %v6590
        %vm6706 = vcmp.eq.s32.totalorder %v210, %v6590
        %vm6707 = vcmp.eq.s32.totalorder %v211, %v6590
        %vm6708 = vcmp.eq.s32.totalorder %v212, %v6590
        %vm6709 = vcmp.eq.s32.totalorder %v205, %v6593
        %vm6710 = vcmp.eq.s32.totalorder %v206, %v6593
        %vm6711 = vcmp.eq.s32.totalorder %v207, %v6593
        %vm6712 = vcmp.eq.s32.totalorder %v208, %v6593
        %vm6713 = vcmp.eq.s32.totalorder %v209, %v6593
        %vm6714 = vcmp.eq.s32.totalorder %v210, %v6593
        %vm6715 = vcmp.eq.s32.totalorder %v211, %v6593
        %vm6716 = vcmp.eq.s32.totalorder %v212, %v6593
        %vm6717 = vcmp.eq.s32.totalorder %v205, %v6596
        %vm6718 = vcmp.eq.s32.totalorder %v206, %v6596
        %vm6719 = vcmp.eq.s32.totalorder %v207, %v6596
        %vm6720 = vcmp.eq.s32.totalorder %v208, %v6596
        %vm6721 = vcmp.eq.s32.totalorder %v209, %v6596
        %vm6722 = vcmp.eq.s32.totalorder %v210, %v6596
        %vm6723 = vcmp.eq.s32.totalorder %v211, %v6596
        %vm6724 = vcmp.eq.s32.totalorder %v212, %v6596
        %v6725 = vsel %vm6597, 1, 0
        %v6726 = vsel %vm6598, 1, 0
        %v6727 = vsel %vm6599, 1, 0
        %v6728 = vsel %vm6600, 1, 0
        %v6729 = vsel %vm6601, 1, 0
        %v6730 = vsel %vm6602, 1, 0
        %v6731 = vsel %vm6603, 1, 0
        %v6732 = vsel %vm6604, 1, 0
        %v6733 = vsel %vm6605, 1, 0
        %v6734 = vsel %vm6606, 1, 0
        %v6735 = vsel %vm6607, 1, 0
        %v6736 = vsel %vm6608, 1, 0
        %v6737 = vsel %vm6609, 1, 0
        %v6738 = vsel %vm6610, 1, 0
        %v6739 = vsel %vm6611, 1, 0
        %v6740 = vsel %vm6612, 1, 0
        %v6741 = vsel %vm6613, 1, 0
        %v6742 = vsel %vm6614, 1, 0
        %v6743 = vsel %vm6615, 1, 0
        %v6744 = vsel %vm6616, 1, 0
        %v6745 = vsel %vm6617, 1, 0
        %v6746 = vsel %vm6618, 1, 0
        %v6747 = vsel %vm6619, 1, 0
        %v6748 = vsel %vm6620, 1, 0
        %v6749 = vsel %vm6621, 1, 0
        %v6750 = vsel %vm6622, 1, 0
        %v6751 = vsel %vm6623, 1, 0
        %v6752 = vsel %vm6624, 1, 0
        %v6753 = vsel %vm6625, 1, 0
        %v6754 = vsel %vm6626, 1, 0
        %v6755 = vsel %vm6627, 1, 0
        %v6756 = vsel %vm6628, 1, 0
        %v6757 = vsel %vm6629, 1, 0
        %v6758 = vsel %vm6630, 1, 0
        %v6759 = vsel %vm6631, 1, 0
        %v6760 = vsel %vm6632, 1, 0
        %v6761 = vsel %vm6633, 1, 0
        %v6762 = vsel %vm6634, 1, 0
        %v6763 = vsel %vm6635, 1, 0
        %v6764 = vsel %vm6636, 1, 0
        %v6765 = vsel %vm6637, 1, 0
        %v6766 = vsel %vm6638, 1, 0
        %v6767 = vsel %vm6639, 1, 0
        %v6768 = vsel %vm6640, 1, 0
        %v6769 = vsel %vm6641, 1, 0
        %v6770 = vsel %vm6642, 1, 0
        %v6771 = vsel %vm6643, 1, 0
        %v6772 = vsel %vm6644, 1, 0
        %v6773 = vsel %vm6645, 1, 0
        %v6774 = vsel %vm6646, 1, 0
        %v6775 = vsel %vm6647, 1, 0
        %v6776 = vsel %vm6648, 1, 0
        %v6777 = vsel %vm6649, 1, 0
        %v6778 = vsel %vm6650, 1, 0
        %v6779 = vsel %vm6651, 1, 0
        %v6780 = vsel %vm6652, 1, 0
        %v6781 = vsel %vm6653, 1, 0
        %v6782 = vsel %vm6654, 1, 0
        %v6783 = vsel %vm6655, 1, 0
        %v6784 = vsel %vm6656, 1, 0
        %v6785 = vsel %vm6657, 1, 0
        %v6786 = vsel %vm6658, 1, 0
        %v6787 = vsel %vm6659, 1, 0
        %v6788 = vsel %vm6660, 1, 0
        %v6789 = vsel %vm6661, 1, 0
        %v6790 = vsel %vm6662, 1, 0
        %v6791 = vsel %vm6663, 1, 0
        %v6792 = vsel %vm6664, 1, 0
        %v6793 = vsel %vm6665, 1, 0
        %v6794 = vsel %vm6666, 1, 0
        %v6795 = vsel %vm6667, 1, 0
        %v6796 = vsel %vm6668, 1, 0
        %v6797 = vsel %vm6669, 1, 0
        %v6798 = vsel %vm6670, 1, 0
        %v6799 = vsel %vm6671, 1, 0
        %v6800 = vsel %vm6672, 1, 0
        %v6801 = vsel %vm6673, 1, 0
        %v6802 = vsel %vm6674, 1, 0
        %v6803 = vsel %vm6675, 1, 0
        %v6804 = vsel %vm6676, 1, 0
        %v6805 = vsel %vm6677, 1, 0
        %v6806 = vsel %vm6678, 1, 0
        %v6807 = vsel %vm6679, 1, 0
        %v6808 = vsel %vm6680, 1, 0
        %v6809 = vsel %vm6681, 1, 0
        %v6810 = vsel %vm6682, 1, 0
        %v6811 = vsel %vm6683, 1, 0
        %v6812 = vsel %vm6684, 1, 0
        %v6813 = vsel %vm6685, 1, 0
        %v6814 = vsel %vm6686, 1, 0
        %v6815 = vsel %vm6687, 1, 0
        %v6816 = vsel %vm6688, 1, 0
        %v6817 = vsel %vm6689, 1, 0
        %v6818 = vsel %vm6690, 1, 0
        %v6819 = vsel %vm6691, 1, 0
        %v6820 = vsel %vm6692, 1, 0
        %v6821 = vsel %vm6693, 1, 0
        %v6822 = vsel %vm6694, 1, 0
        %v6823 = vsel %vm6695, 1, 0
        %v6824 = vsel %vm6696, 1, 0
        %v6825 = vsel %vm6697, 1, 0
        %v6826 = vsel %vm6698, 1, 0
        %v6827 = vsel %vm6699, 1, 0
        %v6828 = vsel %vm6700, 1, 0
        %v6829 = vsel %vm6701, 1, 0
        %v6830 = vsel %vm6702, 1, 0
        %v6831 = vsel %vm6703, 1, 0
        %v6832 = vsel %vm6704, 1, 0
        %v6833 = vsel %vm6705, 1, 0
        %v6834 = vsel %vm6706, 1, 0
        %v6835 = vsel %vm6707, 1, 0
        %v6836 = vsel %vm6708, 1, 0
        %v6837 = vsel %vm6709, 1, 0
        %v6838 = vsel %vm6710, 1, 0
        %v6839 = vsel %vm6711, 1, 0
        %v6840 = vsel %vm6712, 1, 0
        %v6841 = vsel %vm6713, 1, 0
        %v6842 = vsel %vm6714, 1, 0
        %v6843 = vsel %vm6715, 1, 0
        %v6844 = vsel %vm6716, 1, 0
        %v6845 = vsel %vm6717, 1, 0
        %v6846 = vsel %vm6718, 1, 0
        %v6847 = vsel %vm6719, 1, 0
        %v6848 = vsel %vm6720, 1, 0
        %v6849 = vsel %vm6721, 1, 0
        %v6850 = vsel %vm6722, 1, 0
        %v6851 = vsel %vm6723, 1, 0
        %v6852 = vsel %vm6724, 1, 0
        %v6853 = vcvt.s32.f32 %v6725
        %v6854 = vcvt.s32.f32 %v6726
        %v6855 = vcvt.s32.f32 %v6727
        %v6856 = vcvt.s32.f32 %v6728
        %v6857 = vcvt.s32.f32 %v6729
        %v6858 = vcvt.s32.f32 %v6730
        %v6859 = vcvt.s32.f32 %v6731
        %v6860 = vcvt.s32.f32 %v6732
        %v6861 = vcvt.s32.f32 %v6733
        %v6862 = vcvt.s32.f32 %v6734
        %v6863 = vcvt.s32.f32 %v6735
        %v6864 = vcvt.s32.f32 %v6736
        %v6865 = vcvt.s32.f32 %v6737
        %v6866 = vcvt.s32.f32 %v6738
        %v6867 = vcvt.s32.f32 %v6739
        %v6868 = vcvt.s32.f32 %v6740
        %v6869 = vcvt.s32.f32 %v6741
        %v6870 = vcvt.s32.f32 %v6742
        %v6871 = vcvt.s32.f32 %v6743
        %v6872 = vcvt.s32.f32 %v6744
        %v6873 = vcvt.s32.f32 %v6745
        %v6874 = vcvt.s32.f32 %v6746
        %v6875 = vcvt.s32.f32 %v6747
        %v6876 = vcvt.s32.f32 %v6748
        %v6877 = vcvt.s32.f32 %v6749
        %v6878 = vcvt.s32.f32 %v6750
        %v6879 = vcvt.s32.f32 %v6751
        %v6880 = vcvt.s32.f32 %v6752
        %v6881 = vcvt.s32.f32 %v6753
        %v6882 = vcvt.s32.f32 %v6754
        %v6883 = vcvt.s32.f32 %v6755
        %v6884 = vcvt.s32.f32 %v6756
        %v6885 = vcvt.s32.f32 %v6757
        %v6886 = vcvt.s32.f32 %v6758
        %v6887 = vcvt.s32.f32 %v6759
        %v6888 = vcvt.s32.f32 %v6760
        %v6889 = vcvt.s32.f32 %v6761
        %v6890 = vcvt.s32.f32 %v6762
        %v6891 = vcvt.s32.f32 %v6763
        %v6892 = vcvt.s32.f32 %v6764
        %v6893 = vcvt.s32.f32 %v6765
        %v6894 = vcvt.s32.f32 %v6766
        %v6895 = vcvt.s32.f32 %v6767
        %v6896 = vcvt.s32.f32 %v6768
        %v6897 = vcvt.s32.f32 %v6769
        %v6898 = vcvt.s32.f32 %v6770
        %v6899 = vcvt.s32.f32 %v6771
        %v6900 = vcvt.s32.f32 %v6772
        %v6901 = vcvt.s32.f32 %v6773
        %v6902 = vcvt.s32.f32 %v6774
        %v6903 = vcvt.s32.f32 %v6775
        %v6904 = vcvt.s32.f32 %v6776
        %v6905 = vcvt.s32.f32 %v6777
        %v6906 = vcvt.s32.f32 %v6778
        %v6907 = vcvt.s32.f32 %v6779
        %v6908 = vcvt.s32.f32 %v6780
        %v6909 = vcvt.s32.f32 %v6781
        %v6910 = vcvt.s32.f32 %v6782
        %v6911 = vcvt.s32.f32 %v6783
        %v6912 = vcvt.s32.f32 %v6784
        %v6913 = vcvt.s32.f32 %v6785
        %v6914 = vcvt.s32.f32 %v6786
        %v6915 = vcvt.s32.f32 %v6787
        %v6916 = vcvt.s32.f32 %v6788
        %v6917 = vcvt.s32.f32 %v6789
        %v6918 = vcvt.s32.f32 %v6790
        %v6919 = vcvt.s32.f32 %v6791
        %v6920 = vcvt.s32.f32 %v6792
        %v6921 = vcvt.s32.f32 %v6793
        %v6922 = vcvt.s32.f32 %v6794
        %v6923 = vcvt.s32.f32 %v6795
        %v6924 = vcvt.s32.f32 %v6796
        %v6925 = vcvt.s32.f32 %v6797
        %v6926 = vcvt.s32.f32 %v6798
        %v6927 = vcvt.s32.f32 %v6799
        %v6928 = vcvt.s32.f32 %v6800
        %v6929 = vcvt.s32.f32 %v6801
        %v6930 = vcvt.s32.f32 %v6802
        %v6931 = vcvt.s32.f32 %v6803
        %v6932 = vcvt.s32.f32 %v6804
        %v6933 = vcvt.s32.f32 %v6805
        %v6934 = vcvt.s32.f32 %v6806
        %v6935 = vcvt.s32.f32 %v6807
        %v6936 = vcvt.s32.f32 %v6808
        %v6937 = vcvt.s32.f32 %v6809
        %v6938 = vcvt.s32.f32 %v6810
        %v6939 = vcvt.s32.f32 %v6811
        %v6940 = vcvt.s32.f32 %v6812
        %v6941 = vcvt.s32.f32 %v6813
        %v6942 = vcvt.s32.f32 %v6814
        %v6943 = vcvt.s32.f32 %v6815
        %v6944 = vcvt.s32.f32 %v6816
        %v6945 = vcvt.s32.f32 %v6817
        %v6946 = vcvt.s32.f32 %v6818
        %v6947 = vcvt.s32.f32 %v6819
        %v6948 = vcvt.s32.f32 %v6820
        %v6949 = vcvt.s32.f32 %v6821
        %v6950 = vcvt.s32.f32 %v6822
        %v6951 = vcvt.s32.f32 %v6823
        %v6952 = vcvt.s32.f32 %v6824
        %v6953 = vcvt.s32.f32 %v6825
        %v6954 = vcvt.s32.f32 %v6826
        %v6955 = vcvt.s32.f32 %v6827
        %v6956 = vcvt.s32.f32 %v6828
        %v6957 = vcvt.s32.f32 %v6829
        %v6958 = vcvt.s32.f32 %v6830
        %v6959 = vcvt.s32.f32 %v6831
        %v6960 = vcvt.s32.f32 %v6832
        %v6961 = vcvt.s32.f32 %v6833
        %v6962 = vcvt.s32.f32 %v6834
        %v6963 = vcvt.s32.f32 %v6835
        %v6964 = vcvt.s32.f32 %v6836
        %v6965 = vcvt.s32.f32 %v6837
        %v6966 = vcvt.s32.f32 %v6838
        %v6967 = vcvt.s32.f32 %v6839
        %v6968 = vcvt.s32.f32 %v6840
        %v6969 = vcvt.s32.f32 %v6841
        %v6970 = vcvt.s32.f32 %v6842
        %v6971 = vcvt.s32.f32 %v6843
        %v6972 = vcvt.s32.f32 %v6844
        %v6973 = vcvt.s32.f32 %v6845
        %v6974 = vcvt.s32.f32 %v6846
        %v6975 = vcvt.s32.f32 %v6847
        %v6976 = vcvt.s32.f32 %v6848
        %v6977 = vcvt.s32.f32 %v6849
        %v6978 = vcvt.s32.f32 %v6850
        %v6979 = vcvt.s32.f32 %v6851
        %v6980 = vcvt.s32.f32 %v6852
        %v6981 = vadd.f32 %v6405, %v6853
        %v6982 = vadd.f32 %v6406, %v6854
        %v6983 = vadd.f32 %v6407, %v6855
        %v6984 = vadd.f32 %v6408, %v6856
        %v6985 = vadd.f32 %v6409, %v6857
        %v6986 = vadd.f32 %v6410, %v6858
        %v6987 = vadd.f32 %v6411, %v6859
        %v6988 = vadd.f32 %v6412, %v6860
        %v6989 = vadd.f32 %v6413, %v6861
        %v6990 = vadd.f32 %v6414, %v6862
        %v6991 = vadd.f32 %v6415, %v6863
        %v6992 = vadd.f32 %v6416, %v6864
        %v6993 = vadd.f32 %v6417, %v6865
        %v6994 = vadd.f32 %v6418, %v6866
        %v6995 = vadd.f32 %v6419, %v6867
        %v6996 = vadd.f32 %v6420, %v6868
        %v6997 = vadd.f32 %v6421, %v6869
        %v6998 = vadd.f32 %v6422, %v6870
        %v6999 = vadd.f32 %v6423, %v6871
        %v7000 = vadd.f32 %v6424, %v6872
        %v7001 = vadd.f32 %v6425, %v6873
        %v7002 = vadd.f32 %v6426, %v6874
        %v7003 = vadd.f32 %v6427, %v6875
        %v7004 = vadd.f32 %v6428, %v6876
        %v7005 = vadd.f32 %v6429, %v6877
        %v7006 = vadd.f32 %v6430, %v6878
        %v7007 = vadd.f32 %v6431, %v6879
        %v7008 = vadd.f32 %v6432, %v6880
        %v7009 = vadd.f32 %v6433, %v6881
        %v7010 = vadd.f32 %v6434, %v6882
        %v7011 = vadd.f32 %v6435, %v6883
        %v7012 = vadd.f32 %v6436, %v6884
        %v7013 = vadd.f32 %v6437, %v6885
        %v7014 = vadd.f32 %v6438, %v6886
        %v7015 = vadd.f32 %v6439, %v6887
        %v7016 = vadd.f32 %v6440, %v6888
        %v7017 = vadd.f32 %v6441, %v6889
        %v7018 = vadd.f32 %v6442, %v6890
        %v7019 = vadd.f32 %v6443, %v6891
        %v7020 = vadd.f32 %v6444, %v6892
        %v7021 = vadd.f32 %v6445, %v6893
        %v7022 = vadd.f32 %v6446, %v6894
        %v7023 = vadd.f32 %v6447, %v6895
        %v7024 = vadd.f32 %v6448, %v6896
        %v7025 = vadd.f32 %v6449, %v6897
        %v7026 = vadd.f32 %v6450, %v6898
        %v7027 = vadd.f32 %v6451, %v6899
        %v7028 = vadd.f32 %v6452, %v6900
        %v7029 = vadd.f32 %v6453, %v6901
        %v7030 = vadd.f32 %v6454, %v6902
        %v7031 = vadd.f32 %v6455, %v6903
        %v7032 = vadd.f32 %v6456, %v6904
        %v7033 = vadd.f32 %v6457, %v6905
        %v7034 = vadd.f32 %v6458, %v6906
        %v7035 = vadd.f32 %v6459, %v6907
        %v7036 = vadd.f32 %v6460, %v6908
        %v7037 = vadd.f32 %v6461, %v6909
        %v7038 = vadd.f32 %v6462, %v6910
        %v7039 = vadd.f32 %v6463, %v6911
        %v7040 = vadd.f32 %v6464, %v6912
        %v7041 = vadd.f32 %v6465, %v6913
        %v7042 = vadd.f32 %v6466, %v6914
        %v7043 = vadd.f32 %v6467, %v6915
        %v7044 = vadd.f32 %v6468, %v6916
        %v7045 = vadd.f32 %v6469, %v6917
        %v7046 = vadd.f32 %v6470, %v6918
        %v7047 = vadd.f32 %v6471, %v6919
        %v7048 = vadd.f32 %v6472, %v6920
        %v7049 = vadd.f32 %v6473, %v6921
        %v7050 = vadd.f32 %v6474, %v6922
        %v7051 = vadd.f32 %v6475, %v6923
        %v7052 = vadd.f32 %v6476, %v6924
        %v7053 = vadd.f32 %v6477, %v6925
        %v7054 = vadd.f32 %v6478, %v6926
        %v7055 = vadd.f32 %v6479, %v6927
        %v7056 = vadd.f32 %v6480, %v6928
        %v7057 = vadd.f32 %v6481, %v6929
        %v7058 = vadd.f32 %v6482, %v6930
        %v7059 = vadd.f32 %v6483, %v6931
        %v7060 = vadd.f32 %v6484, %v6932
        %v7061 = vadd.f32 %v6485, %v6933
        %v7062 = vadd.f32 %v6486, %v6934
        %v7063 = vadd.f32 %v6487, %v6935
        %v7064 = vadd.f32 %v6488, %v6936
        %v7065 = vadd.f32 %v6489, %v6937
        %v7066 = vadd.f32 %v6490, %v6938
        %v7067 = vadd.f32 %v6491, %v6939
        %v7068 = vadd.f32 %v6492, %v6940
        %v7069 = vadd.f32 %v6493, %v6941
        %v7070 = vadd.f32 %v6494, %v6942
        %v7071 = vadd.f32 %v6495, %v6943
        %v7072 = vadd.f32 %v6496, %v6944
        %v7073 = vadd.f32 %v6497, %v6945
        %v7074 = vadd.f32 %v6498, %v6946
        %v7075 = vadd.f32 %v6499, %v6947
        %v7076 = vadd.f32 %v6500, %v6948
        %v7077 = vadd.f32 %v6501, %v6949
        %v7078 = vadd.f32 %v6502, %v6950
        %v7079 = vadd.f32 %v6503, %v6951
        %v7080 = vadd.f32 %v6504, %v6952
        %v7081 = vadd.f32 %v6505, %v6953
        %v7082 = vadd.f32 %v6506, %v6954
        %v7083 = vadd.f32 %v6507, %v6955
        %v7084 = vadd.f32 %v6508, %v6956
        %v7085 = vadd.f32 %v6509, %v6957
        %v7086 = vadd.f32 %v6510, %v6958
        %v7087 = vadd.f32 %v6511, %v6959
        %v7088 = vadd.f32 %v6512, %v6960
        %v7089 = vadd.f32 %v6513, %v6961
        %v7090 = vadd.f32 %v6514, %v6962
        %v7091 = vadd.f32 %v6515, %v6963
        %v7092 = vadd.f32 %v6516, %v6964
        %v7093 = vadd.f32 %v6517, %v6965
        %v7094 = vadd.f32 %v6518, %v6966
        %v7095 = vadd.f32 %v6519, %v6967
        %v7096 = vadd.f32 %v6520, %v6968
        %v7097 = vadd.f32 %v6521, %v6969
        %v7098 = vadd.f32 %v6522, %v6970
        %v7099 = vadd.f32 %v6523, %v6971
        %v7100 = vadd.f32 %v6524, %v6972
        %v7101 = vadd.f32 %v6525, %v6973
        %v7102 = vadd.f32 %v6526, %v6974
        %v7103 = vadd.f32 %v6527, %v6975
        %v7104 = vadd.f32 %v6528, %v6976
        %v7105 = vadd.f32 %v6529, %v6977
        %v7106 = vadd.f32 %v6530, %v6978
        %v7107 = vadd.f32 %v6531, %v6979
        %v7108 = vadd.f32 %v6532, %v6980
        %v7109 = vadd.s32 %v188, 768
        %v7110 = vadd.s32 %v189, 768
        %v7111 = vadd.s32 %v190, 768
        %v7112 = vadd.s32 %v191, 768
        %v7113 = vadd.s32 %v192, 768
        %v7114 = vadd.s32 %v193, 768
        %v7115 = vadd.s32 %v194, 768
        %v7116 = vadd.s32 %v195, 768
        %v7117 = vadd.s32 %v196, 768
        %v7118 = vadd.s32 %v197, 768
        %v7119 = vadd.s32 %v198, 768
        %v7120 = vadd.s32 %v199, 768
        %v7121 = vadd.s32 %v200, 768
        %v7122 = vadd.s32 %v201, 768
        %v7123 = vadd.s32 %v202, 768
        %v7124 = vadd.s32 %v203, 768
        %7125 = vset.pattern.permute.xlu0 12
        %7126 = vperm.xlu0 %7125, %v7109
        %v7127 = vpop.permute.xlu0 %7126
        %7128 = vset.pattern.permute.xlu0 12
        %7129 = vperm.xlu0 %7128, %v7110
        %v7130 = vpop.permute.xlu0 %7129
        %7131 = vset.pattern.permute.xlu0 12
        %7132 = vperm.xlu0 %7131, %v7111
        %v7133 = vpop.permute.xlu0 %7132
        %7134 = vset.pattern.permute.xlu0 12
        %7135 = vperm.xlu0 %7134, %v7112
        %v7136 = vpop.permute.xlu0 %7135
        %7137 = vset.pattern.permute.xlu0 12
        %7138 = vperm.xlu0 %7137, %v7113
        %v7139 = vpop.permute.xlu0 %7138
        %7140 = vset.pattern.permute.xlu0 12
        %7141 = vperm.xlu0 %7140, %v7114
        %v7142 = vpop.permute.xlu0 %7141
        %7143 = vset.pattern.permute.xlu0 12
        %7144 = vperm.xlu0 %7143, %v7115
        %v7145 = vpop.permute.xlu0 %7144
        %7146 = vset.pattern.permute.xlu0 12
        %7147 = vperm.xlu0 %7146, %v7116
        %v7148 = vpop.permute.xlu0 %7147
        %7149 = vset.pattern.permute.xlu0 12
        %7150 = vperm.xlu0 %7149, %v7117
        %v7151 = vpop.permute.xlu0 %7150
        %7152 = vset.pattern.permute.xlu0 12
        %7153 = vperm.xlu0 %7152, %v7118
        %v7154 = vpop.permute.xlu0 %7153
        %7155 = vset.pattern.permute.xlu0 12
        %7156 = vperm.xlu0 %7155, %v7119
        %v7157 = vpop.permute.xlu0 %7156
        %7158 = vset.pattern.permute.xlu0 12
        %7159 = vperm.xlu0 %7158, %v7120
        %v7160 = vpop.permute.xlu0 %7159
        %7161 = vset.pattern.permute.xlu0 12
        %7162 = vperm.xlu0 %7161, %v7121
        %v7163 = vpop.permute.xlu0 %7162
        %7164 = vset.pattern.permute.xlu0 12
        %7165 = vperm.xlu0 %7164, %v7122
        %v7166 = vpop.permute.xlu0 %7165
        %7167 = vset.pattern.permute.xlu0 12
        %7168 = vperm.xlu0 %7167, %v7123
        %v7169 = vpop.permute.xlu0 %7168
        %7170 = vset.pattern.permute.xlu0 12
        %7171 = vperm.xlu0 %7170, %v7124
        %v7172 = vpop.permute.xlu0 %7171
        %vm7173 = vcmp.eq.s32.totalorder %v205, %v7127
        %vm7174 = vcmp.eq.s32.totalorder %v206, %v7127
        %vm7175 = vcmp.eq.s32.totalorder %v207, %v7127
        %vm7176 = vcmp.eq.s32.totalorder %v208, %v7127
        %vm7177 = vcmp.eq.s32.totalorder %v209, %v7127
        %vm7178 = vcmp.eq.s32.totalorder %v210, %v7127
        %vm7179 = vcmp.eq.s32.totalorder %v211, %v7127
        %vm7180 = vcmp.eq.s32.totalorder %v212, %v7127
        %vm7181 = vcmp.eq.s32.totalorder %v205, %v7130
        %vm7182 = vcmp.eq.s32.totalorder %v206, %v7130
        %vm7183 = vcmp.eq.s32.totalorder %v207, %v7130
        %vm7184 = vcmp.eq.s32.totalorder %v208, %v7130
        %vm7185 = vcmp.eq.s32.totalorder %v209, %v7130
        %vm7186 = vcmp.eq.s32.totalorder %v210, %v7130
        %vm7187 = vcmp.eq.s32.totalorder %v211, %v7130
        %vm7188 = vcmp.eq.s32.totalorder %v212, %v7130
        %vm7189 = vcmp.eq.s32.totalorder %v205, %v7133
        %vm7190 = vcmp.eq.s32.totalorder %v206, %v7133
        %vm7191 = vcmp.eq.s32.totalorder %v207, %v7133
        %vm7192 = vcmp.eq.s32.totalorder %v208, %v7133
        %vm7193 = vcmp.eq.s32.totalorder %v209, %v7133
        %vm7194 = vcmp.eq.s32.totalorder %v210, %v7133
        %vm7195 = vcmp.eq.s32.totalorder %v211, %v7133
        %vm7196 = vcmp.eq.s32.totalorder %v212, %v7133
        %vm7197 = vcmp.eq.s32.totalorder %v205, %v7136
        %vm7198 = vcmp.eq.s32.totalorder %v206, %v7136
        %vm7199 = vcmp.eq.s32.totalorder %v207, %v7136
        %vm7200 = vcmp.eq.s32.totalorder %v208, %v7136
        %vm7201 = vcmp.eq.s32.totalorder %v209, %v7136
        %vm7202 = vcmp.eq.s32.totalorder %v210, %v7136
        %vm7203 = vcmp.eq.s32.totalorder %v211, %v7136
        %vm7204 = vcmp.eq.s32.totalorder %v212, %v7136
        %vm7205 = vcmp.eq.s32.totalorder %v205, %v7139
        %vm7206 = vcmp.eq.s32.totalorder %v206, %v7139
        %vm7207 = vcmp.eq.s32.totalorder %v207, %v7139
        %vm7208 = vcmp.eq.s32.totalorder %v208, %v7139
        %vm7209 = vcmp.eq.s32.totalorder %v209, %v7139
        %vm7210 = vcmp.eq.s32.totalorder %v210, %v7139
        %vm7211 = vcmp.eq.s32.totalorder %v211, %v7139
        %vm7212 = vcmp.eq.s32.totalorder %v212, %v7139
        %vm7213 = vcmp.eq.s32.totalorder %v205, %v7142
        %vm7214 = vcmp.eq.s32.totalorder %v206, %v7142
        %vm7215 = vcmp.eq.s32.totalorder %v207, %v7142
        %vm7216 = vcmp.eq.s32.totalorder %v208, %v7142
        %vm7217 = vcmp.eq.s32.totalorder %v209, %v7142
        %vm7218 = vcmp.eq.s32.totalorder %v210, %v7142
        %vm7219 = vcmp.eq.s32.totalorder %v211, %v7142
        %vm7220 = vcmp.eq.s32.totalorder %v212, %v7142
        %vm7221 = vcmp.eq.s32.totalorder %v205, %v7145
        %vm7222 = vcmp.eq.s32.totalorder %v206, %v7145
        %vm7223 = vcmp.eq.s32.totalorder %v207, %v7145
        %vm7224 = vcmp.eq.s32.totalorder %v208, %v7145
        %vm7225 = vcmp.eq.s32.totalorder %v209, %v7145
        %vm7226 = vcmp.eq.s32.totalorder %v210, %v7145
        %vm7227 = vcmp.eq.s32.totalorder %v211, %v7145
        %vm7228 = vcmp.eq.s32.totalorder %v212, %v7145
        %vm7229 = vcmp.eq.s32.totalorder %v205, %v7148
        %vm7230 = vcmp.eq.s32.totalorder %v206, %v7148
        %vm7231 = vcmp.eq.s32.totalorder %v207, %v7148
        %vm7232 = vcmp.eq.s32.totalorder %v208, %v7148
        %vm7233 = vcmp.eq.s32.totalorder %v209, %v7148
        %vm7234 = vcmp.eq.s32.totalorder %v210, %v7148
        %vm7235 = vcmp.eq.s32.totalorder %v211, %v7148
        %vm7236 = vcmp.eq.s32.totalorder %v212, %v7148
        %vm7237 = vcmp.eq.s32.totalorder %v205, %v7151
        %vm7238 = vcmp.eq.s32.totalorder %v206, %v7151
        %vm7239 = vcmp.eq.s32.totalorder %v207, %v7151
        %vm7240 = vcmp.eq.s32.totalorder %v208, %v7151
        %vm7241 = vcmp.eq.s32.totalorder %v209, %v7151
        %vm7242 = vcmp.eq.s32.totalorder %v210, %v7151
        %vm7243 = vcmp.eq.s32.totalorder %v211, %v7151
        %vm7244 = vcmp.eq.s32.totalorder %v212, %v7151
        %vm7245 = vcmp.eq.s32.totalorder %v205, %v7154
        %vm7246 = vcmp.eq.s32.totalorder %v206, %v7154
        %vm7247 = vcmp.eq.s32.totalorder %v207, %v7154
        %vm7248 = vcmp.eq.s32.totalorder %v208, %v7154
        %vm7249 = vcmp.eq.s32.totalorder %v209, %v7154
        %vm7250 = vcmp.eq.s32.totalorder %v210, %v7154
        %vm7251 = vcmp.eq.s32.totalorder %v211, %v7154
        %vm7252 = vcmp.eq.s32.totalorder %v212, %v7154
        %vm7253 = vcmp.eq.s32.totalorder %v205, %v7157
        %vm7254 = vcmp.eq.s32.totalorder %v206, %v7157
        %vm7255 = vcmp.eq.s32.totalorder %v207, %v7157
        %vm7256 = vcmp.eq.s32.totalorder %v208, %v7157
        %vm7257 = vcmp.eq.s32.totalorder %v209, %v7157
        %vm7258 = vcmp.eq.s32.totalorder %v210, %v7157
        %vm7259 = vcmp.eq.s32.totalorder %v211, %v7157
        %vm7260 = vcmp.eq.s32.totalorder %v212, %v7157
        %vm7261 = vcmp.eq.s32.totalorder %v205, %v7160
        %vm7262 = vcmp.eq.s32.totalorder %v206, %v7160
        %vm7263 = vcmp.eq.s32.totalorder %v207, %v7160
        %vm7264 = vcmp.eq.s32.totalorder %v208, %v7160
        %vm7265 = vcmp.eq.s32.totalorder %v209, %v7160
        %vm7266 = vcmp.eq.s32.totalorder %v210, %v7160
        %vm7267 = vcmp.eq.s32.totalorder %v211, %v7160
        %vm7268 = vcmp.eq.s32.totalorder %v212, %v7160
        %vm7269 = vcmp.eq.s32.totalorder %v205, %v7163
        %vm7270 = vcmp.eq.s32.totalorder %v206, %v7163
        %vm7271 = vcmp.eq.s32.totalorder %v207, %v7163
        %vm7272 = vcmp.eq.s32.totalorder %v208, %v7163
        %vm7273 = vcmp.eq.s32.totalorder %v209, %v7163
        %vm7274 = vcmp.eq.s32.totalorder %v210, %v7163
        %vm7275 = vcmp.eq.s32.totalorder %v211, %v7163
        %vm7276 = vcmp.eq.s32.totalorder %v212, %v7163
        %vm7277 = vcmp.eq.s32.totalorder %v205, %v7166
        %vm7278 = vcmp.eq.s32.totalorder %v206, %v7166
        %vm7279 = vcmp.eq.s32.totalorder %v207, %v7166
        %vm7280 = vcmp.eq.s32.totalorder %v208, %v7166
        %vm7281 = vcmp.eq.s32.totalorder %v209, %v7166
        %vm7282 = vcmp.eq.s32.totalorder %v210, %v7166
        %vm7283 = vcmp.eq.s32.totalorder %v211, %v7166
        %vm7284 = vcmp.eq.s32.totalorder %v212, %v7166
        %vm7285 = vcmp.eq.s32.totalorder %v205, %v7169
        %vm7286 = vcmp.eq.s32.totalorder %v206, %v7169
        %vm7287 = vcmp.eq.s32.totalorder %v207, %v7169
        %vm7288 = vcmp.eq.s32.totalorder %v208, %v7169
        %vm7289 = vcmp.eq.s32.totalorder %v209, %v7169
        %vm7290 = vcmp.eq.s32.totalorder %v210, %v7169
        %vm7291 = vcmp.eq.s32.totalorder %v211, %v7169
        %vm7292 = vcmp.eq.s32.totalorder %v212, %v7169
        %vm7293 = vcmp.eq.s32.totalorder %v205, %v7172
        %vm7294 = vcmp.eq.s32.totalorder %v206, %v7172
        %vm7295 = vcmp.eq.s32.totalorder %v207, %v7172
        %vm7296 = vcmp.eq.s32.totalorder %v208, %v7172
        %vm7297 = vcmp.eq.s32.totalorder %v209, %v7172
        %vm7298 = vcmp.eq.s32.totalorder %v210, %v7172
        %vm7299 = vcmp.eq.s32.totalorder %v211, %v7172
        %vm7300 = vcmp.eq.s32.totalorder %v212, %v7172
        %v7301 = vsel %vm7173, 1, 0
        %v7302 = vsel %vm7174, 1, 0
        %v7303 = vsel %vm7175, 1, 0
        %v7304 = vsel %vm7176, 1, 0
        %v7305 = vsel %vm7177, 1, 0
        %v7306 = vsel %vm7178, 1, 0
        %v7307 = vsel %vm7179, 1, 0
        %v7308 = vsel %vm7180, 1, 0
        %v7309 = vsel %vm7181, 1, 0
        %v7310 = vsel %vm7182, 1, 0
        %v7311 = vsel %vm7183, 1, 0
        %v7312 = vsel %vm7184, 1, 0
        %v7313 = vsel %vm7185, 1, 0
        %v7314 = vsel %vm7186, 1, 0
        %v7315 = vsel %vm7187, 1, 0
        %v7316 = vsel %vm7188, 1, 0
        %v7317 = vsel %vm7189, 1, 0
        %v7318 = vsel %vm7190, 1, 0
        %v7319 = vsel %vm7191, 1, 0
        %v7320 = vsel %vm7192, 1, 0
        %v7321 = vsel %vm7193, 1, 0
        %v7322 = vsel %vm7194, 1, 0
        %v7323 = vsel %vm7195, 1, 0
        %v7324 = vsel %vm7196, 1, 0
        %v7325 = vsel %vm7197, 1, 0
        %v7326 = vsel %vm7198, 1, 0
        %v7327 = vsel %vm7199, 1, 0
        %v7328 = vsel %vm7200, 1, 0
        %v7329 = vsel %vm7201, 1, 0
        %v7330 = vsel %vm7202, 1, 0
        %v7331 = vsel %vm7203, 1, 0
        %v7332 = vsel %vm7204, 1, 0
        %v7333 = vsel %vm7205, 1, 0
        %v7334 = vsel %vm7206, 1, 0
        %v7335 = vsel %vm7207, 1, 0
        %v7336 = vsel %vm7208, 1, 0
        %v7337 = vsel %vm7209, 1, 0
        %v7338 = vsel %vm7210, 1, 0
        %v7339 = vsel %vm7211, 1, 0
        %v7340 = vsel %vm7212, 1, 0
        %v7341 = vsel %vm7213, 1, 0
        %v7342 = vsel %vm7214, 1, 0
        %v7343 = vsel %vm7215, 1, 0
        %v7344 = vsel %vm7216, 1, 0
        %v7345 = vsel %vm7217, 1, 0
        %v7346 = vsel %vm7218, 1, 0
        %v7347 = vsel %vm7219, 1, 0
        %v7348 = vsel %vm7220, 1, 0
        %v7349 = vsel %vm7221, 1, 0
        %v7350 = vsel %vm7222, 1, 0
        %v7351 = vsel %vm7223, 1, 0
        %v7352 = vsel %vm7224, 1, 0
        %v7353 = vsel %vm7225, 1, 0
        %v7354 = vsel %vm7226, 1, 0
        %v7355 = vsel %vm7227, 1, 0
        %v7356 = vsel %vm7228, 1, 0
        %v7357 = vsel %vm7229, 1, 0
        %v7358 = vsel %vm7230, 1, 0
        %v7359 = vsel %vm7231, 1, 0
        %v7360 = vsel %vm7232, 1, 0
        %v7361 = vsel %vm7233, 1, 0
        %v7362 = vsel %vm7234, 1, 0
        %v7363 = vsel %vm7235, 1, 0
        %v7364 = vsel %vm7236, 1, 0
        %v7365 = vsel %vm7237, 1, 0
        %v7366 = vsel %vm7238, 1, 0
        %v7367 = vsel %vm7239, 1, 0
        %v7368 = vsel %vm7240, 1, 0
        %v7369 = vsel %vm7241, 1, 0
        %v7370 = vsel %vm7242, 1, 0
        %v7371 = vsel %vm7243, 1, 0
        %v7372 = vsel %vm7244, 1, 0
        %v7373 = vsel %vm7245, 1, 0
        %v7374 = vsel %vm7246, 1, 0
        %v7375 = vsel %vm7247, 1, 0
        %v7376 = vsel %vm7248, 1, 0
        %v7377 = vsel %vm7249, 1, 0
        %v7378 = vsel %vm7250, 1, 0
        %v7379 = vsel %vm7251, 1, 0
        %v7380 = vsel %vm7252, 1, 0
        %v7381 = vsel %vm7253, 1, 0
        %v7382 = vsel %vm7254, 1, 0
        %v7383 = vsel %vm7255, 1, 0
        %v7384 = vsel %vm7256, 1, 0
        %v7385 = vsel %vm7257, 1, 0
        %v7386 = vsel %vm7258, 1, 0
        %v7387 = vsel %vm7259, 1, 0
        %v7388 = vsel %vm7260, 1, 0
        %v7389 = vsel %vm7261, 1, 0
        %v7390 = vsel %vm7262, 1, 0
        %v7391 = vsel %vm7263, 1, 0
        %v7392 = vsel %vm7264, 1, 0
        %v7393 = vsel %vm7265, 1, 0
        %v7394 = vsel %vm7266, 1, 0
        %v7395 = vsel %vm7267, 1, 0
        %v7396 = vsel %vm7268, 1, 0
        %v7397 = vsel %vm7269, 1, 0
        %v7398 = vsel %vm7270, 1, 0
        %v7399 = vsel %vm7271, 1, 0
        %v7400 = vsel %vm7272, 1, 0
        %v7401 = vsel %vm7273, 1, 0
        %v7402 = vsel %vm7274, 1, 0
        %v7403 = vsel %vm7275, 1, 0
        %v7404 = vsel %vm7276, 1, 0
        %v7405 = vsel %vm7277, 1, 0
        %v7406 = vsel %vm7278, 1, 0
        %v7407 = vsel %vm7279, 1, 0
        %v7408 = vsel %vm7280, 1, 0
        %v7409 = vsel %vm7281, 1, 0
        %v7410 = vsel %vm7282, 1, 0
        %v7411 = vsel %vm7283, 1, 0
        %v7412 = vsel %vm7284, 1, 0
        %v7413 = vsel %vm7285, 1, 0
        %v7414 = vsel %vm7286, 1, 0
        %v7415 = vsel %vm7287, 1, 0
        %v7416 = vsel %vm7288, 1, 0
        %v7417 = vsel %vm7289, 1, 0
        %v7418 = vsel %vm7290, 1, 0
        %v7419 = vsel %vm7291, 1, 0
        %v7420 = vsel %vm7292, 1, 0
        %v7421 = vsel %vm7293, 1, 0
        %v7422 = vsel %vm7294, 1, 0
        %v7423 = vsel %vm7295, 1, 0
        %v7424 = vsel %vm7296, 1, 0
        %v7425 = vsel %vm7297, 1, 0
        %v7426 = vsel %vm7298, 1, 0
        %v7427 = vsel %vm7299, 1, 0
        %v7428 = vsel %vm7300, 1, 0
        %v7429 = vcvt.s32.f32 %v7301
        %v7430 = vcvt.s32.f32 %v7302
        %v7431 = vcvt.s32.f32 %v7303
        %v7432 = vcvt.s32.f32 %v7304
        %v7433 = vcvt.s32.f32 %v7305
        %v7434 = vcvt.s32.f32 %v7306
        %v7435 = vcvt.s32.f32 %v7307
        %v7436 = vcvt.s32.f32 %v7308
        %v7437 = vcvt.s32.f32 %v7309
        %v7438 = vcvt.s32.f32 %v7310
        %v7439 = vcvt.s32.f32 %v7311
        %v7440 = vcvt.s32.f32 %v7312
        %v7441 = vcvt.s32.f32 %v7313
        %v7442 = vcvt.s32.f32 %v7314
        %v7443 = vcvt.s32.f32 %v7315
        %v7444 = vcvt.s32.f32 %v7316
        %v7445 = vcvt.s32.f32 %v7317
        %v7446 = vcvt.s32.f32 %v7318
        %v7447 = vcvt.s32.f32 %v7319
        %v7448 = vcvt.s32.f32 %v7320
        %v7449 = vcvt.s32.f32 %v7321
        %v7450 = vcvt.s32.f32 %v7322
        %v7451 = vcvt.s32.f32 %v7323
        %v7452 = vcvt.s32.f32 %v7324
        %v7453 = vcvt.s32.f32 %v7325
        %v7454 = vcvt.s32.f32 %v7326
        %v7455 = vcvt.s32.f32 %v7327
        %v7456 = vcvt.s32.f32 %v7328
        %v7457 = vcvt.s32.f32 %v7329
        %v7458 = vcvt.s32.f32 %v7330
        %v7459 = vcvt.s32.f32 %v7331
        %v7460 = vcvt.s32.f32 %v7332
        %v7461 = vcvt.s32.f32 %v7333
        %v7462 = vcvt.s32.f32 %v7334
        %v7463 = vcvt.s32.f32 %v7335
        %v7464 = vcvt.s32.f32 %v7336
        %v7465 = vcvt.s32.f32 %v7337
        %v7466 = vcvt.s32.f32 %v7338
        %v7467 = vcvt.s32.f32 %v7339
        %v7468 = vcvt.s32.f32 %v7340
        %v7469 = vcvt.s32.f32 %v7341
        %v7470 = vcvt.s32.f32 %v7342
        %v7471 = vcvt.s32.f32 %v7343
        %v7472 = vcvt.s32.f32 %v7344
        %v7473 = vcvt.s32.f32 %v7345
        %v7474 = vcvt.s32.f32 %v7346
        %v7475 = vcvt.s32.f32 %v7347
        %v7476 = vcvt.s32.f32 %v7348
        %v7477 = vcvt.s32.f32 %v7349
        %v7478 = vcvt.s32.f32 %v7350
        %v7479 = vcvt.s32.f32 %v7351
        %v7480 = vcvt.s32.f32 %v7352
        %v7481 = vcvt.s32.f32 %v7353
        %v7482 = vcvt.s32.f32 %v7354
        %v7483 = vcvt.s32.f32 %v7355
        %v7484 = vcvt.s32.f32 %v7356
        %v7485 = vcvt.s32.f32 %v7357
        %v7486 = vcvt.s32.f32 %v7358
        %v7487 = vcvt.s32.f32 %v7359
        %v7488 = vcvt.s32.f32 %v7360
        %v7489 = vcvt.s32.f32 %v7361
        %v7490 = vcvt.s32.f32 %v7362
        %v7491 = vcvt.s32.f32 %v7363
        %v7492 = vcvt.s32.f32 %v7364
        %v7493 = vcvt.s32.f32 %v7365
        %v7494 = vcvt.s32.f32 %v7366
        %v7495 = vcvt.s32.f32 %v7367
        %v7496 = vcvt.s32.f32 %v7368
        %v7497 = vcvt.s32.f32 %v7369
        %v7498 = vcvt.s32.f32 %v7370
        %v7499 = vcvt.s32.f32 %v7371
        %v7500 = vcvt.s32.f32 %v7372
        %v7501 = vcvt.s32.f32 %v7373
        %v7502 = vcvt.s32.f32 %v7374
        %v7503 = vcvt.s32.f32 %v7375
        %v7504 = vcvt.s32.f32 %v7376
        %v7505 = vcvt.s32.f32 %v7377
        %v7506 = vcvt.s32.f32 %v7378
        %v7507 = vcvt.s32.f32 %v7379
        %v7508 = vcvt.s32.f32 %v7380
        %v7509 = vcvt.s32.f32 %v7381
        %v7510 = vcvt.s32.f32 %v7382
        %v7511 = vcvt.s32.f32 %v7383
        %v7512 = vcvt.s32.f32 %v7384
        %v7513 = vcvt.s32.f32 %v7385
        %v7514 = vcvt.s32.f32 %v7386
        %v7515 = vcvt.s32.f32 %v7387
        %v7516 = vcvt.s32.f32 %v7388
        %v7517 = vcvt.s32.f32 %v7389
        %v7518 = vcvt.s32.f32 %v7390
        %v7519 = vcvt.s32.f32 %v7391
        %v7520 = vcvt.s32.f32 %v7392
        %v7521 = vcvt.s32.f32 %v7393
        %v7522 = vcvt.s32.f32 %v7394
        %v7523 = vcvt.s32.f32 %v7395
        %v7524 = vcvt.s32.f32 %v7396
        %v7525 = vcvt.s32.f32 %v7397
        %v7526 = vcvt.s32.f32 %v7398
        %v7527 = vcvt.s32.f32 %v7399
        %v7528 = vcvt.s32.f32 %v7400
        %v7529 = vcvt.s32.f32 %v7401
        %v7530 = vcvt.s32.f32 %v7402
        %v7531 = vcvt.s32.f32 %v7403
        %v7532 = vcvt.s32.f32 %v7404
        %v7533 = vcvt.s32.f32 %v7405
        %v7534 = vcvt.s32.f32 %v7406
        %v7535 = vcvt.s32.f32 %v7407
        %v7536 = vcvt.s32.f32 %v7408
        %v7537 = vcvt.s32.f32 %v7409
        %v7538 = vcvt.s32.f32 %v7410
        %v7539 = vcvt.s32.f32 %v7411
        %v7540 = vcvt.s32.f32 %v7412
        %v7541 = vcvt.s32.f32 %v7413
        %v7542 = vcvt.s32.f32 %v7414
        %v7543 = vcvt.s32.f32 %v7415
        %v7544 = vcvt.s32.f32 %v7416
        %v7545 = vcvt.s32.f32 %v7417
        %v7546 = vcvt.s32.f32 %v7418
        %v7547 = vcvt.s32.f32 %v7419
        %v7548 = vcvt.s32.f32 %v7420
        %v7549 = vcvt.s32.f32 %v7421
        %v7550 = vcvt.s32.f32 %v7422
        %v7551 = vcvt.s32.f32 %v7423
        %v7552 = vcvt.s32.f32 %v7424
        %v7553 = vcvt.s32.f32 %v7425
        %v7554 = vcvt.s32.f32 %v7426
        %v7555 = vcvt.s32.f32 %v7427
        %v7556 = vcvt.s32.f32 %v7428
        %v7557 = vadd.f32 %v6981, %v7429
        %v7558 = vadd.f32 %v6982, %v7430
        %v7559 = vadd.f32 %v6983, %v7431
        %v7560 = vadd.f32 %v6984, %v7432
        %v7561 = vadd.f32 %v6985, %v7433
        %v7562 = vadd.f32 %v6986, %v7434
        %v7563 = vadd.f32 %v6987, %v7435
        %v7564 = vadd.f32 %v6988, %v7436
        %v7565 = vadd.f32 %v6989, %v7437
        %v7566 = vadd.f32 %v6990, %v7438
        %v7567 = vadd.f32 %v6991, %v7439
        %v7568 = vadd.f32 %v6992, %v7440
        %v7569 = vadd.f32 %v6993, %v7441
        %v7570 = vadd.f32 %v6994, %v7442
        %v7571 = vadd.f32 %v6995, %v7443
        %v7572 = vadd.f32 %v6996, %v7444
        %v7573 = vadd.f32 %v6997, %v7445
        %v7574 = vadd.f32 %v6998, %v7446
        %v7575 = vadd.f32 %v6999, %v7447
        %v7576 = vadd.f32 %v7000, %v7448
        %v7577 = vadd.f32 %v7001, %v7449
        %v7578 = vadd.f32 %v7002, %v7450
        %v7579 = vadd.f32 %v7003, %v7451
        %v7580 = vadd.f32 %v7004, %v7452
        %v7581 = vadd.f32 %v7005, %v7453
        %v7582 = vadd.f32 %v7006, %v7454
        %v7583 = vadd.f32 %v7007, %v7455
        %v7584 = vadd.f32 %v7008, %v7456
        %v7585 = vadd.f32 %v7009, %v7457
        %v7586 = vadd.f32 %v7010, %v7458
        %v7587 = vadd.f32 %v7011, %v7459
        %v7588 = vadd.f32 %v7012, %v7460
        %v7589 = vadd.f32 %v7013, %v7461
        %v7590 = vadd.f32 %v7014, %v7462
        %v7591 = vadd.f32 %v7015, %v7463
        %v7592 = vadd.f32 %v7016, %v7464
        %v7593 = vadd.f32 %v7017, %v7465
        %v7594 = vadd.f32 %v7018, %v7466
        %v7595 = vadd.f32 %v7019, %v7467
        %v7596 = vadd.f32 %v7020, %v7468
        %v7597 = vadd.f32 %v7021, %v7469
        %v7598 = vadd.f32 %v7022, %v7470
        %v7599 = vadd.f32 %v7023, %v7471
        %v7600 = vadd.f32 %v7024, %v7472
        %v7601 = vadd.f32 %v7025, %v7473
        %v7602 = vadd.f32 %v7026, %v7474
        %v7603 = vadd.f32 %v7027, %v7475
        %v7604 = vadd.f32 %v7028, %v7476
        %v7605 = vadd.f32 %v7029, %v7477
        %v7606 = vadd.f32 %v7030, %v7478
        %v7607 = vadd.f32 %v7031, %v7479
        %v7608 = vadd.f32 %v7032, %v7480
        %v7609 = vadd.f32 %v7033, %v7481
        %v7610 = vadd.f32 %v7034, %v7482
        %v7611 = vadd.f32 %v7035, %v7483
        %v7612 = vadd.f32 %v7036, %v7484
        %v7613 = vadd.f32 %v7037, %v7485
        %v7614 = vadd.f32 %v7038, %v7486
        %v7615 = vadd.f32 %v7039, %v7487
        %v7616 = vadd.f32 %v7040, %v7488
        %v7617 = vadd.f32 %v7041, %v7489
        %v7618 = vadd.f32 %v7042, %v7490
        %v7619 = vadd.f32 %v7043, %v7491
        %v7620 = vadd.f32 %v7044, %v7492
        %v7621 = vadd.f32 %v7045, %v7493
        %v7622 = vadd.f32 %v7046, %v7494
        %v7623 = vadd.f32 %v7047, %v7495
        %v7624 = vadd.f32 %v7048, %v7496
        %v7625 = vadd.f32 %v7049, %v7497
        %v7626 = vadd.f32 %v7050, %v7498
        %v7627 = vadd.f32 %v7051, %v7499
        %v7628 = vadd.f32 %v7052, %v7500
        %v7629 = vadd.f32 %v7053, %v7501
        %v7630 = vadd.f32 %v7054, %v7502
        %v7631 = vadd.f32 %v7055, %v7503
        %v7632 = vadd.f32 %v7056, %v7504
        %v7633 = vadd.f32 %v7057, %v7505
        %v7634 = vadd.f32 %v7058, %v7506
        %v7635 = vadd.f32 %v7059, %v7507
        %v7636 = vadd.f32 %v7060, %v7508
        %v7637 = vadd.f32 %v7061, %v7509
        %v7638 = vadd.f32 %v7062, %v7510
        %v7639 = vadd.f32 %v7063, %v7511
        %v7640 = vadd.f32 %v7064, %v7512
        %v7641 = vadd.f32 %v7065, %v7513
        %v7642 = vadd.f32 %v7066, %v7514
        %v7643 = vadd.f32 %v7067, %v7515
        %v7644 = vadd.f32 %v7068, %v7516
        %v7645 = vadd.f32 %v7069, %v7517
        %v7646 = vadd.f32 %v7070, %v7518
        %v7647 = vadd.f32 %v7071, %v7519
        %v7648 = vadd.f32 %v7072, %v7520
        %v7649 = vadd.f32 %v7073, %v7521
        %v7650 = vadd.f32 %v7074, %v7522
        %v7651 = vadd.f32 %v7075, %v7523
        %v7652 = vadd.f32 %v7076, %v7524
        %v7653 = vadd.f32 %v7077, %v7525
        %v7654 = vadd.f32 %v7078, %v7526
        %v7655 = vadd.f32 %v7079, %v7527
        %v7656 = vadd.f32 %v7080, %v7528
        %v7657 = vadd.f32 %v7081, %v7529
        %v7658 = vadd.f32 %v7082, %v7530
        %v7659 = vadd.f32 %v7083, %v7531
        %v7660 = vadd.f32 %v7084, %v7532
        %v7661 = vadd.f32 %v7085, %v7533
        %v7662 = vadd.f32 %v7086, %v7534
        %v7663 = vadd.f32 %v7087, %v7535
        %v7664 = vadd.f32 %v7088, %v7536
        %v7665 = vadd.f32 %v7089, %v7537
        %v7666 = vadd.f32 %v7090, %v7538
        %v7667 = vadd.f32 %v7091, %v7539
        %v7668 = vadd.f32 %v7092, %v7540
        %v7669 = vadd.f32 %v7093, %v7541
        %v7670 = vadd.f32 %v7094, %v7542
        %v7671 = vadd.f32 %v7095, %v7543
        %v7672 = vadd.f32 %v7096, %v7544
        %v7673 = vadd.f32 %v7097, %v7545
        %v7674 = vadd.f32 %v7098, %v7546
        %v7675 = vadd.f32 %v7099, %v7547
        %v7676 = vadd.f32 %v7100, %v7548
        %v7677 = vadd.f32 %v7101, %v7549
        %v7678 = vadd.f32 %v7102, %v7550
        %v7679 = vadd.f32 %v7103, %v7551
        %v7680 = vadd.f32 %v7104, %v7552
        %v7681 = vadd.f32 %v7105, %v7553
        %v7682 = vadd.f32 %v7106, %v7554
        %v7683 = vadd.f32 %v7107, %v7555
        %v7684 = vadd.f32 %v7108, %v7556
        %v7685 = vadd.s32 %v188, 832
        %v7686 = vadd.s32 %v189, 832
        %v7687 = vadd.s32 %v190, 832
        %v7688 = vadd.s32 %v191, 832
        %v7689 = vadd.s32 %v192, 832
        %v7690 = vadd.s32 %v193, 832
        %v7691 = vadd.s32 %v194, 832
        %v7692 = vadd.s32 %v195, 832
        %v7693 = vadd.s32 %v196, 832
        %v7694 = vadd.s32 %v197, 832
        %v7695 = vadd.s32 %v198, 832
        %v7696 = vadd.s32 %v199, 832
        %v7697 = vadd.s32 %v200, 832
        %v7698 = vadd.s32 %v201, 832
        %v7699 = vadd.s32 %v202, 832
        %v7700 = vadd.s32 %v203, 832
        %7701 = vset.pattern.permute.xlu0 13
        %7702 = vperm.xlu0 %7701, %v7685
        %v7703 = vpop.permute.xlu0 %7702
        %7704 = vset.pattern.permute.xlu0 13
        %7705 = vperm.xlu0 %7704, %v7686
        %v7706 = vpop.permute.xlu0 %7705
        %7707 = vset.pattern.permute.xlu0 13
        %7708 = vperm.xlu0 %7707, %v7687
        %v7709 = vpop.permute.xlu0 %7708
        %7710 = vset.pattern.permute.xlu0 13
        %7711 = vperm.xlu0 %7710, %v7688
        %v7712 = vpop.permute.xlu0 %7711
        %7713 = vset.pattern.permute.xlu0 13
        %7714 = vperm.xlu0 %7713, %v7689
        %v7715 = vpop.permute.xlu0 %7714
        %7716 = vset.pattern.permute.xlu0 13
        %7717 = vperm.xlu0 %7716, %v7690
        %v7718 = vpop.permute.xlu0 %7717
        %7719 = vset.pattern.permute.xlu0 13
        %7720 = vperm.xlu0 %7719, %v7691
        %v7721 = vpop.permute.xlu0 %7720
        %7722 = vset.pattern.permute.xlu0 13
        %7723 = vperm.xlu0 %7722, %v7692
        %v7724 = vpop.permute.xlu0 %7723
        %7725 = vset.pattern.permute.xlu0 13
        %7726 = vperm.xlu0 %7725, %v7693
        %v7727 = vpop.permute.xlu0 %7726
        %7728 = vset.pattern.permute.xlu0 13
        %7729 = vperm.xlu0 %7728, %v7694
        %v7730 = vpop.permute.xlu0 %7729
        %7731 = vset.pattern.permute.xlu0 13
        %7732 = vperm.xlu0 %7731, %v7695
        %v7733 = vpop.permute.xlu0 %7732
        %7734 = vset.pattern.permute.xlu0 13
        %7735 = vperm.xlu0 %7734, %v7696
        %v7736 = vpop.permute.xlu0 %7735
        %7737 = vset.pattern.permute.xlu0 13
        %7738 = vperm.xlu0 %7737, %v7697
        %v7739 = vpop.permute.xlu0 %7738
        %7740 = vset.pattern.permute.xlu0 13
        %7741 = vperm.xlu0 %7740, %v7698
        %v7742 = vpop.permute.xlu0 %7741
        %7743 = vset.pattern.permute.xlu0 13
        %7744 = vperm.xlu0 %7743, %v7699
        %v7745 = vpop.permute.xlu0 %7744
        %7746 = vset.pattern.permute.xlu0 13
        %7747 = vperm.xlu0 %7746, %v7700
        %v7748 = vpop.permute.xlu0 %7747
        %vm7749 = vcmp.eq.s32.totalorder %v205, %v7703
        %vm7750 = vcmp.eq.s32.totalorder %v206, %v7703
        %vm7751 = vcmp.eq.s32.totalorder %v207, %v7703
        %vm7752 = vcmp.eq.s32.totalorder %v208, %v7703
        %vm7753 = vcmp.eq.s32.totalorder %v209, %v7703
        %vm7754 = vcmp.eq.s32.totalorder %v210, %v7703
        %vm7755 = vcmp.eq.s32.totalorder %v211, %v7703
        %vm7756 = vcmp.eq.s32.totalorder %v212, %v7703
        %vm7757 = vcmp.eq.s32.totalorder %v205, %v7706
        %vm7758 = vcmp.eq.s32.totalorder %v206, %v7706
        %vm7759 = vcmp.eq.s32.totalorder %v207, %v7706
        %vm7760 = vcmp.eq.s32.totalorder %v208, %v7706
        %vm7761 = vcmp.eq.s32.totalorder %v209, %v7706
        %vm7762 = vcmp.eq.s32.totalorder %v210, %v7706
        %vm7763 = vcmp.eq.s32.totalorder %v211, %v7706
        %vm7764 = vcmp.eq.s32.totalorder %v212, %v7706
        %vm7765 = vcmp.eq.s32.totalorder %v205, %v7709
        %vm7766 = vcmp.eq.s32.totalorder %v206, %v7709
        %vm7767 = vcmp.eq.s32.totalorder %v207, %v7709
        %vm7768 = vcmp.eq.s32.totalorder %v208, %v7709
        %vm7769 = vcmp.eq.s32.totalorder %v209, %v7709
        %vm7770 = vcmp.eq.s32.totalorder %v210, %v7709
        %vm7771 = vcmp.eq.s32.totalorder %v211, %v7709
        %vm7772 = vcmp.eq.s32.totalorder %v212, %v7709
        %vm7773 = vcmp.eq.s32.totalorder %v205, %v7712
        %vm7774 = vcmp.eq.s32.totalorder %v206, %v7712
        %vm7775 = vcmp.eq.s32.totalorder %v207, %v7712
        %vm7776 = vcmp.eq.s32.totalorder %v208, %v7712
        %vm7777 = vcmp.eq.s32.totalorder %v209, %v7712
        %vm7778 = vcmp.eq.s32.totalorder %v210, %v7712
        %vm7779 = vcmp.eq.s32.totalorder %v211, %v7712
        %vm7780 = vcmp.eq.s32.totalorder %v212, %v7712
        %vm7781 = vcmp.eq.s32.totalorder %v205, %v7715
        %vm7782 = vcmp.eq.s32.totalorder %v206, %v7715
        %vm7783 = vcmp.eq.s32.totalorder %v207, %v7715
        %vm7784 = vcmp.eq.s32.totalorder %v208, %v7715
        %vm7785 = vcmp.eq.s32.totalorder %v209, %v7715
        %vm7786 = vcmp.eq.s32.totalorder %v210, %v7715
        %vm7787 = vcmp.eq.s32.totalorder %v211, %v7715
        %vm7788 = vcmp.eq.s32.totalorder %v212, %v7715
        %vm7789 = vcmp.eq.s32.totalorder %v205, %v7718
        %vm7790 = vcmp.eq.s32.totalorder %v206, %v7718
        %vm7791 = vcmp.eq.s32.totalorder %v207, %v7718
        %vm7792 = vcmp.eq.s32.totalorder %v208, %v7718
        %vm7793 = vcmp.eq.s32.totalorder %v209, %v7718
        %vm7794 = vcmp.eq.s32.totalorder %v210, %v7718
        %vm7795 = vcmp.eq.s32.totalorder %v211, %v7718
        %vm7796 = vcmp.eq.s32.totalorder %v212, %v7718
        %vm7797 = vcmp.eq.s32.totalorder %v205, %v7721
        %vm7798 = vcmp.eq.s32.totalorder %v206, %v7721
        %vm7799 = vcmp.eq.s32.totalorder %v207, %v7721
        %vm7800 = vcmp.eq.s32.totalorder %v208, %v7721
        %vm7801 = vcmp.eq.s32.totalorder %v209, %v7721
        %vm7802 = vcmp.eq.s32.totalorder %v210, %v7721
        %vm7803 = vcmp.eq.s32.totalorder %v211, %v7721
        %vm7804 = vcmp.eq.s32.totalorder %v212, %v7721
        %vm7805 = vcmp.eq.s32.totalorder %v205, %v7724
        %vm7806 = vcmp.eq.s32.totalorder %v206, %v7724
        %vm7807 = vcmp.eq.s32.totalorder %v207, %v7724
        %vm7808 = vcmp.eq.s32.totalorder %v208, %v7724
        %vm7809 = vcmp.eq.s32.totalorder %v209, %v7724
        %vm7810 = vcmp.eq.s32.totalorder %v210, %v7724
        %vm7811 = vcmp.eq.s32.totalorder %v211, %v7724
        %vm7812 = vcmp.eq.s32.totalorder %v212, %v7724
        %vm7813 = vcmp.eq.s32.totalorder %v205, %v7727
        %vm7814 = vcmp.eq.s32.totalorder %v206, %v7727
        %vm7815 = vcmp.eq.s32.totalorder %v207, %v7727
        %vm7816 = vcmp.eq.s32.totalorder %v208, %v7727
        %vm7817 = vcmp.eq.s32.totalorder %v209, %v7727
        %vm7818 = vcmp.eq.s32.totalorder %v210, %v7727
        %vm7819 = vcmp.eq.s32.totalorder %v211, %v7727
        %vm7820 = vcmp.eq.s32.totalorder %v212, %v7727
        %vm7821 = vcmp.eq.s32.totalorder %v205, %v7730
        %vm7822 = vcmp.eq.s32.totalorder %v206, %v7730
        %vm7823 = vcmp.eq.s32.totalorder %v207, %v7730
        %vm7824 = vcmp.eq.s32.totalorder %v208, %v7730
        %vm7825 = vcmp.eq.s32.totalorder %v209, %v7730
        %vm7826 = vcmp.eq.s32.totalorder %v210, %v7730
        %vm7827 = vcmp.eq.s32.totalorder %v211, %v7730
        %vm7828 = vcmp.eq.s32.totalorder %v212, %v7730
        %vm7829 = vcmp.eq.s32.totalorder %v205, %v7733
        %vm7830 = vcmp.eq.s32.totalorder %v206, %v7733
        %vm7831 = vcmp.eq.s32.totalorder %v207, %v7733
        %vm7832 = vcmp.eq.s32.totalorder %v208, %v7733
        %vm7833 = vcmp.eq.s32.totalorder %v209, %v7733
        %vm7834 = vcmp.eq.s32.totalorder %v210, %v7733
        %vm7835 = vcmp.eq.s32.totalorder %v211, %v7733
        %vm7836 = vcmp.eq.s32.totalorder %v212, %v7733
        %vm7837 = vcmp.eq.s32.totalorder %v205, %v7736
        %vm7838 = vcmp.eq.s32.totalorder %v206, %v7736
        %vm7839 = vcmp.eq.s32.totalorder %v207, %v7736
        %vm7840 = vcmp.eq.s32.totalorder %v208, %v7736
        %vm7841 = vcmp.eq.s32.totalorder %v209, %v7736
        %vm7842 = vcmp.eq.s32.totalorder %v210, %v7736
        %vm7843 = vcmp.eq.s32.totalorder %v211, %v7736
        %vm7844 = vcmp.eq.s32.totalorder %v212, %v7736
        %vm7845 = vcmp.eq.s32.totalorder %v205, %v7739
        %vm7846 = vcmp.eq.s32.totalorder %v206, %v7739
        %vm7847 = vcmp.eq.s32.totalorder %v207, %v7739
        %vm7848 = vcmp.eq.s32.totalorder %v208, %v7739
        %vm7849 = vcmp.eq.s32.totalorder %v209, %v7739
        %vm7850 = vcmp.eq.s32.totalorder %v210, %v7739
        %vm7851 = vcmp.eq.s32.totalorder %v211, %v7739
        %vm7852 = vcmp.eq.s32.totalorder %v212, %v7739
        %vm7853 = vcmp.eq.s32.totalorder %v205, %v7742
        %vm7854 = vcmp.eq.s32.totalorder %v206, %v7742
        %vm7855 = vcmp.eq.s32.totalorder %v207, %v7742
        %vm7856 = vcmp.eq.s32.totalorder %v208, %v7742
        %vm7857 = vcmp.eq.s32.totalorder %v209, %v7742
        %vm7858 = vcmp.eq.s32.totalorder %v210, %v7742
        %vm7859 = vcmp.eq.s32.totalorder %v211, %v7742
        %vm7860 = vcmp.eq.s32.totalorder %v212, %v7742
        %vm7861 = vcmp.eq.s32.totalorder %v205, %v7745
        %vm7862 = vcmp.eq.s32.totalorder %v206, %v7745
        %vm7863 = vcmp.eq.s32.totalorder %v207, %v7745
        %vm7864 = vcmp.eq.s32.totalorder %v208, %v7745
        %vm7865 = vcmp.eq.s32.totalorder %v209, %v7745
        %vm7866 = vcmp.eq.s32.totalorder %v210, %v7745
        %vm7867 = vcmp.eq.s32.totalorder %v211, %v7745
        %vm7868 = vcmp.eq.s32.totalorder %v212, %v7745
        %vm7869 = vcmp.eq.s32.totalorder %v205, %v7748
        %vm7870 = vcmp.eq.s32.totalorder %v206, %v7748
        %vm7871 = vcmp.eq.s32.totalorder %v207, %v7748
        %vm7872 = vcmp.eq.s32.totalorder %v208, %v7748
        %vm7873 = vcmp.eq.s32.totalorder %v209, %v7748
        %vm7874 = vcmp.eq.s32.totalorder %v210, %v7748
        %vm7875 = vcmp.eq.s32.totalorder %v211, %v7748
        %vm7876 = vcmp.eq.s32.totalorder %v212, %v7748
        %v7877 = vsel %vm7749, 1, 0
        %v7878 = vsel %vm7750, 1, 0
        %v7879 = vsel %vm7751, 1, 0
        %v7880 = vsel %vm7752, 1, 0
        %v7881 = vsel %vm7753, 1, 0
        %v7882 = vsel %vm7754, 1, 0
        %v7883 = vsel %vm7755, 1, 0
        %v7884 = vsel %vm7756, 1, 0
        %v7885 = vsel %vm7757, 1, 0
        %v7886 = vsel %vm7758, 1, 0
        %v7887 = vsel %vm7759, 1, 0
        %v7888 = vsel %vm7760, 1, 0
        %v7889 = vsel %vm7761, 1, 0
        %v7890 = vsel %vm7762, 1, 0
        %v7891 = vsel %vm7763, 1, 0
        %v7892 = vsel %vm7764, 1, 0
        %v7893 = vsel %vm7765, 1, 0
        %v7894 = vsel %vm7766, 1, 0
        %v7895 = vsel %vm7767, 1, 0
        %v7896 = vsel %vm7768, 1, 0
        %v7897 = vsel %vm7769, 1, 0
        %v7898 = vsel %vm7770, 1, 0
        %v7899 = vsel %vm7771, 1, 0
        %v7900 = vsel %vm7772, 1, 0
        %v7901 = vsel %vm7773, 1, 0
        %v7902 = vsel %vm7774, 1, 0
        %v7903 = vsel %vm7775, 1, 0
        %v7904 = vsel %vm7776, 1, 0
        %v7905 = vsel %vm7777, 1, 0
        %v7906 = vsel %vm7778, 1, 0
        %v7907 = vsel %vm7779, 1, 0
        %v7908 = vsel %vm7780, 1, 0
        %v7909 = vsel %vm7781, 1, 0
        %v7910 = vsel %vm7782, 1, 0
        %v7911 = vsel %vm7783, 1, 0
        %v7912 = vsel %vm7784, 1, 0
        %v7913 = vsel %vm7785, 1, 0
        %v7914 = vsel %vm7786, 1, 0
        %v7915 = vsel %vm7787, 1, 0
        %v7916 = vsel %vm7788, 1, 0
        %v7917 = vsel %vm7789, 1, 0
        %v7918 = vsel %vm7790, 1, 0
        %v7919 = vsel %vm7791, 1, 0
        %v7920 = vsel %vm7792, 1, 0
        %v7921 = vsel %vm7793, 1, 0
        %v7922 = vsel %vm7794, 1, 0
        %v7923 = vsel %vm7795, 1, 0
        %v7924 = vsel %vm7796, 1, 0
        %v7925 = vsel %vm7797, 1, 0
        %v7926 = vsel %vm7798, 1, 0
        %v7927 = vsel %vm7799, 1, 0
        %v7928 = vsel %vm7800, 1, 0
        %v7929 = vsel %vm7801, 1, 0
        %v7930 = vsel %vm7802, 1, 0
        %v7931 = vsel %vm7803, 1, 0
        %v7932 = vsel %vm7804, 1, 0
        %v7933 = vsel %vm7805, 1, 0
        %v7934 = vsel %vm7806, 1, 0
        %v7935 = vsel %vm7807, 1, 0
        %v7936 = vsel %vm7808, 1, 0
        %v7937 = vsel %vm7809, 1, 0
        %v7938 = vsel %vm7810, 1, 0
        %v7939 = vsel %vm7811, 1, 0
        %v7940 = vsel %vm7812, 1, 0
        %v7941 = vsel %vm7813, 1, 0
        %v7942 = vsel %vm7814, 1, 0
        %v7943 = vsel %vm7815, 1, 0
        %v7944 = vsel %vm7816, 1, 0
        %v7945 = vsel %vm7817, 1, 0
        %v7946 = vsel %vm7818, 1, 0
        %v7947 = vsel %vm7819, 1, 0
        %v7948 = vsel %vm7820, 1, 0
        %v7949 = vsel %vm7821, 1, 0
        %v7950 = vsel %vm7822, 1, 0
        %v7951 = vsel %vm7823, 1, 0
        %v7952 = vsel %vm7824, 1, 0
        %v7953 = vsel %vm7825, 1, 0
        %v7954 = vsel %vm7826, 1, 0
        %v7955 = vsel %vm7827, 1, 0
        %v7956 = vsel %vm7828, 1, 0
        %v7957 = vsel %vm7829, 1, 0
        %v7958 = vsel %vm7830, 1, 0
        %v7959 = vsel %vm7831, 1, 0
        %v7960 = vsel %vm7832, 1, 0
        %v7961 = vsel %vm7833, 1, 0
        %v7962 = vsel %vm7834, 1, 0
        %v7963 = vsel %vm7835, 1, 0
        %v7964 = vsel %vm7836, 1, 0
        %v7965 = vsel %vm7837, 1, 0
        %v7966 = vsel %vm7838, 1, 0
        %v7967 = vsel %vm7839, 1, 0
        %v7968 = vsel %vm7840, 1, 0
        %v7969 = vsel %vm7841, 1, 0
        %v7970 = vsel %vm7842, 1, 0
        %v7971 = vsel %vm7843, 1, 0
        %v7972 = vsel %vm7844, 1, 0
        %v7973 = vsel %vm7845, 1, 0
        %v7974 = vsel %vm7846, 1, 0
        %v7975 = vsel %vm7847, 1, 0
        %v7976 = vsel %vm7848, 1, 0
        %v7977 = vsel %vm7849, 1, 0
        %v7978 = vsel %vm7850, 1, 0
        %v7979 = vsel %vm7851, 1, 0
        %v7980 = vsel %vm7852, 1, 0
        %v7981 = vsel %vm7853, 1, 0
        %v7982 = vsel %vm7854, 1, 0
        %v7983 = vsel %vm7855, 1, 0
        %v7984 = vsel %vm7856, 1, 0
        %v7985 = vsel %vm7857, 1, 0
        %v7986 = vsel %vm7858, 1, 0
        %v7987 = vsel %vm7859, 1, 0
        %v7988 = vsel %vm7860, 1, 0
        %v7989 = vsel %vm7861, 1, 0
        %v7990 = vsel %vm7862, 1, 0
        %v7991 = vsel %vm7863, 1, 0
        %v7992 = vsel %vm7864, 1, 0
        %v7993 = vsel %vm7865, 1, 0
        %v7994 = vsel %vm7866, 1, 0
        %v7995 = vsel %vm7867, 1, 0
        %v7996 = vsel %vm7868, 1, 0
        %v7997 = vsel %vm7869, 1, 0
        %v7998 = vsel %vm7870, 1, 0
        %v7999 = vsel %vm7871, 1, 0
        %v8000 = vsel %vm7872, 1, 0
        %v8001 = vsel %vm7873, 1, 0
        %v8002 = vsel %vm7874, 1, 0
        %v8003 = vsel %vm7875, 1, 0
        %v8004 = vsel %vm7876, 1, 0
        %v8005 = vcvt.s32.f32 %v7877
        %v8006 = vcvt.s32.f32 %v7878
        %v8007 = vcvt.s32.f32 %v7879
        %v8008 = vcvt.s32.f32 %v7880
        %v8009 = vcvt.s32.f32 %v7881
        %v8010 = vcvt.s32.f32 %v7882
        %v8011 = vcvt.s32.f32 %v7883
        %v8012 = vcvt.s32.f32 %v7884
        %v8013 = vcvt.s32.f32 %v7885
        %v8014 = vcvt.s32.f32 %v7886
        %v8015 = vcvt.s32.f32 %v7887
        %v8016 = vcvt.s32.f32 %v7888
        %v8017 = vcvt.s32.f32 %v7889
        %v8018 = vcvt.s32.f32 %v7890
        %v8019 = vcvt.s32.f32 %v7891
        %v8020 = vcvt.s32.f32 %v7892
        %v8021 = vcvt.s32.f32 %v7893
        %v8022 = vcvt.s32.f32 %v7894
        %v8023 = vcvt.s32.f32 %v7895
        %v8024 = vcvt.s32.f32 %v7896
        %v8025 = vcvt.s32.f32 %v7897
        %v8026 = vcvt.s32.f32 %v7898
        %v8027 = vcvt.s32.f32 %v7899
        %v8028 = vcvt.s32.f32 %v7900
        %v8029 = vcvt.s32.f32 %v7901
        %v8030 = vcvt.s32.f32 %v7902
        %v8031 = vcvt.s32.f32 %v7903
        %v8032 = vcvt.s32.f32 %v7904
        %v8033 = vcvt.s32.f32 %v7905
        %v8034 = vcvt.s32.f32 %v7906
        %v8035 = vcvt.s32.f32 %v7907
        %v8036 = vcvt.s32.f32 %v7908
        %v8037 = vcvt.s32.f32 %v7909
        %v8038 = vcvt.s32.f32 %v7910
        %v8039 = vcvt.s32.f32 %v7911
        %v8040 = vcvt.s32.f32 %v7912
        %v8041 = vcvt.s32.f32 %v7913
        %v8042 = vcvt.s32.f32 %v7914
        %v8043 = vcvt.s32.f32 %v7915
        %v8044 = vcvt.s32.f32 %v7916
        %v8045 = vcvt.s32.f32 %v7917
        %v8046 = vcvt.s32.f32 %v7918
        %v8047 = vcvt.s32.f32 %v7919
        %v8048 = vcvt.s32.f32 %v7920
        %v8049 = vcvt.s32.f32 %v7921
        %v8050 = vcvt.s32.f32 %v7922
        %v8051 = vcvt.s32.f32 %v7923
        %v8052 = vcvt.s32.f32 %v7924
        %v8053 = vcvt.s32.f32 %v7925
        %v8054 = vcvt.s32.f32 %v7926
        %v8055 = vcvt.s32.f32 %v7927
        %v8056 = vcvt.s32.f32 %v7928
        %v8057 = vcvt.s32.f32 %v7929
        %v8058 = vcvt.s32.f32 %v7930
        %v8059 = vcvt.s32.f32 %v7931
        %v8060 = vcvt.s32.f32 %v7932
        %v8061 = vcvt.s32.f32 %v7933
        %v8062 = vcvt.s32.f32 %v7934
        %v8063 = vcvt.s32.f32 %v7935
        %v8064 = vcvt.s32.f32 %v7936
        %v8065 = vcvt.s32.f32 %v7937
        %v8066 = vcvt.s32.f32 %v7938
        %v8067 = vcvt.s32.f32 %v7939
        %v8068 = vcvt.s32.f32 %v7940
        %v8069 = vcvt.s32.f32 %v7941
        %v8070 = vcvt.s32.f32 %v7942
        %v8071 = vcvt.s32.f32 %v7943
        %v8072 = vcvt.s32.f32 %v7944
        %v8073 = vcvt.s32.f32 %v7945
        %v8074 = vcvt.s32.f32 %v7946
        %v8075 = vcvt.s32.f32 %v7947
        %v8076 = vcvt.s32.f32 %v7948
        %v8077 = vcvt.s32.f32 %v7949
        %v8078 = vcvt.s32.f32 %v7950
        %v8079 = vcvt.s32.f32 %v7951
        %v8080 = vcvt.s32.f32 %v7952
        %v8081 = vcvt.s32.f32 %v7953
        %v8082 = vcvt.s32.f32 %v7954
        %v8083 = vcvt.s32.f32 %v7955
        %v8084 = vcvt.s32.f32 %v7956
        %v8085 = vcvt.s32.f32 %v7957
        %v8086 = vcvt.s32.f32 %v7958
        %v8087 = vcvt.s32.f32 %v7959
        %v8088 = vcvt.s32.f32 %v7960
        %v8089 = vcvt.s32.f32 %v7961
        %v8090 = vcvt.s32.f32 %v7962
        %v8091 = vcvt.s32.f32 %v7963
        %v8092 = vcvt.s32.f32 %v7964
        %v8093 = vcvt.s32.f32 %v7965
        %v8094 = vcvt.s32.f32 %v7966
        %v8095 = vcvt.s32.f32 %v7967
        %v8096 = vcvt.s32.f32 %v7968
        %v8097 = vcvt.s32.f32 %v7969
        %v8098 = vcvt.s32.f32 %v7970
        %v8099 = vcvt.s32.f32 %v7971
        %v8100 = vcvt.s32.f32 %v7972
        %v8101 = vcvt.s32.f32 %v7973
        %v8102 = vcvt.s32.f32 %v7974
        %v8103 = vcvt.s32.f32 %v7975
        %v8104 = vcvt.s32.f32 %v7976
        %v8105 = vcvt.s32.f32 %v7977
        %v8106 = vcvt.s32.f32 %v7978
        %v8107 = vcvt.s32.f32 %v7979
        %v8108 = vcvt.s32.f32 %v7980
        %v8109 = vcvt.s32.f32 %v7981
        %v8110 = vcvt.s32.f32 %v7982
        %v8111 = vcvt.s32.f32 %v7983
        %v8112 = vcvt.s32.f32 %v7984
        %v8113 = vcvt.s32.f32 %v7985
        %v8114 = vcvt.s32.f32 %v7986
        %v8115 = vcvt.s32.f32 %v7987
        %v8116 = vcvt.s32.f32 %v7988
        %v8117 = vcvt.s32.f32 %v7989
        %v8118 = vcvt.s32.f32 %v7990
        %v8119 = vcvt.s32.f32 %v7991
        %v8120 = vcvt.s32.f32 %v7992
        %v8121 = vcvt.s32.f32 %v7993
        %v8122 = vcvt.s32.f32 %v7994
        %v8123 = vcvt.s32.f32 %v7995
        %v8124 = vcvt.s32.f32 %v7996
        %v8125 = vcvt.s32.f32 %v7997
        %v8126 = vcvt.s32.f32 %v7998
        %v8127 = vcvt.s32.f32 %v7999
        %v8128 = vcvt.s32.f32 %v8000
        %v8129 = vcvt.s32.f32 %v8001
        %v8130 = vcvt.s32.f32 %v8002
        %v8131 = vcvt.s32.f32 %v8003
        %v8132 = vcvt.s32.f32 %v8004
        %v8133 = vadd.f32 %v7557, %v8005
        %v8134 = vadd.f32 %v7558, %v8006
        %v8135 = vadd.f32 %v7559, %v8007
        %v8136 = vadd.f32 %v7560, %v8008
        %v8137 = vadd.f32 %v7561, %v8009
        %v8138 = vadd.f32 %v7562, %v8010
        %v8139 = vadd.f32 %v7563, %v8011
        %v8140 = vadd.f32 %v7564, %v8012
        %v8141 = vadd.f32 %v7565, %v8013
        %v8142 = vadd.f32 %v7566, %v8014
        %v8143 = vadd.f32 %v7567, %v8015
        %v8144 = vadd.f32 %v7568, %v8016
        %v8145 = vadd.f32 %v7569, %v8017
        %v8146 = vadd.f32 %v7570, %v8018
        %v8147 = vadd.f32 %v7571, %v8019
        %v8148 = vadd.f32 %v7572, %v8020
        %v8149 = vadd.f32 %v7573, %v8021
        %v8150 = vadd.f32 %v7574, %v8022
        %v8151 = vadd.f32 %v7575, %v8023
        %v8152 = vadd.f32 %v7576, %v8024
        %v8153 = vadd.f32 %v7577, %v8025
        %v8154 = vadd.f32 %v7578, %v8026
        %v8155 = vadd.f32 %v7579, %v8027
        %v8156 = vadd.f32 %v7580, %v8028
        %v8157 = vadd.f32 %v7581, %v8029
        %v8158 = vadd.f32 %v7582, %v8030
        %v8159 = vadd.f32 %v7583, %v8031
        %v8160 = vadd.f32 %v7584, %v8032
        %v8161 = vadd.f32 %v7585, %v8033
        %v8162 = vadd.f32 %v7586, %v8034
        %v8163 = vadd.f32 %v7587, %v8035
        %v8164 = vadd.f32 %v7588, %v8036
        %v8165 = vadd.f32 %v7589, %v8037
        %v8166 = vadd.f32 %v7590, %v8038
        %v8167 = vadd.f32 %v7591, %v8039
        %v8168 = vadd.f32 %v7592, %v8040
        %v8169 = vadd.f32 %v7593, %v8041
        %v8170 = vadd.f32 %v7594, %v8042
        %v8171 = vadd.f32 %v7595, %v8043
        %v8172 = vadd.f32 %v7596, %v8044
        %v8173 = vadd.f32 %v7597, %v8045
        %v8174 = vadd.f32 %v7598, %v8046
        %v8175 = vadd.f32 %v7599, %v8047
        %v8176 = vadd.f32 %v7600, %v8048
        %v8177 = vadd.f32 %v7601, %v8049
        %v8178 = vadd.f32 %v7602, %v8050
        %v8179 = vadd.f32 %v7603, %v8051
        %v8180 = vadd.f32 %v7604, %v8052
        %v8181 = vadd.f32 %v7605, %v8053
        %v8182 = vadd.f32 %v7606, %v8054
        %v8183 = vadd.f32 %v7607, %v8055
        %v8184 = vadd.f32 %v7608, %v8056
        %v8185 = vadd.f32 %v7609, %v8057
        %v8186 = vadd.f32 %v7610, %v8058
        %v8187 = vadd.f32 %v7611, %v8059
        %v8188 = vadd.f32 %v7612, %v8060
        %v8189 = vadd.f32 %v7613, %v8061
        %v8190 = vadd.f32 %v7614, %v8062
        %v8191 = vadd.f32 %v7615, %v8063
        %v8192 = vadd.f32 %v7616, %v8064
        %v8193 = vadd.f32 %v7617, %v8065
        %v8194 = vadd.f32 %v7618, %v8066
        %v8195 = vadd.f32 %v7619, %v8067
        %v8196 = vadd.f32 %v7620, %v8068
        %v8197 = vadd.f32 %v7621, %v8069
        %v8198 = vadd.f32 %v7622, %v8070
        %v8199 = vadd.f32 %v7623, %v8071
        %v8200 = vadd.f32 %v7624, %v8072
        %v8201 = vadd.f32 %v7625, %v8073
        %v8202 = vadd.f32 %v7626, %v8074
        %v8203 = vadd.f32 %v7627, %v8075
        %v8204 = vadd.f32 %v7628, %v8076
        %v8205 = vadd.f32 %v7629, %v8077
        %v8206 = vadd.f32 %v7630, %v8078
        %v8207 = vadd.f32 %v7631, %v8079
        %v8208 = vadd.f32 %v7632, %v8080
        %v8209 = vadd.f32 %v7633, %v8081
        %v8210 = vadd.f32 %v7634, %v8082
        %v8211 = vadd.f32 %v7635, %v8083
        %v8212 = vadd.f32 %v7636, %v8084
        %v8213 = vadd.f32 %v7637, %v8085
        %v8214 = vadd.f32 %v7638, %v8086
        %v8215 = vadd.f32 %v7639, %v8087
        %v8216 = vadd.f32 %v7640, %v8088
        %v8217 = vadd.f32 %v7641, %v8089
        %v8218 = vadd.f32 %v7642, %v8090
        %v8219 = vadd.f32 %v7643, %v8091
        %v8220 = vadd.f32 %v7644, %v8092
        %v8221 = vadd.f32 %v7645, %v8093
        %v8222 = vadd.f32 %v7646, %v8094
        %v8223 = vadd.f32 %v7647, %v8095
        %v8224 = vadd.f32 %v7648, %v8096
        %v8225 = vadd.f32 %v7649, %v8097
        %v8226 = vadd.f32 %v7650, %v8098
        %v8227 = vadd.f32 %v7651, %v8099
        %v8228 = vadd.f32 %v7652, %v8100
        %v8229 = vadd.f32 %v7653, %v8101
        %v8230 = vadd.f32 %v7654, %v8102
        %v8231 = vadd.f32 %v7655, %v8103
        %v8232 = vadd.f32 %v7656, %v8104
        %v8233 = vadd.f32 %v7657, %v8105
        %v8234 = vadd.f32 %v7658, %v8106
        %v8235 = vadd.f32 %v7659, %v8107
        %v8236 = vadd.f32 %v7660, %v8108
        %v8237 = vadd.f32 %v7661, %v8109
        %v8238 = vadd.f32 %v7662, %v8110
        %v8239 = vadd.f32 %v7663, %v8111
        %v8240 = vadd.f32 %v7664, %v8112
        %v8241 = vadd.f32 %v7665, %v8113
        %v8242 = vadd.f32 %v7666, %v8114
        %v8243 = vadd.f32 %v7667, %v8115
        %v8244 = vadd.f32 %v7668, %v8116
        %v8245 = vadd.f32 %v7669, %v8117
        %v8246 = vadd.f32 %v7670, %v8118
        %v8247 = vadd.f32 %v7671, %v8119
        %v8248 = vadd.f32 %v7672, %v8120
        %v8249 = vadd.f32 %v7673, %v8121
        %v8250 = vadd.f32 %v7674, %v8122
        %v8251 = vadd.f32 %v7675, %v8123
        %v8252 = vadd.f32 %v7676, %v8124
        %v8253 = vadd.f32 %v7677, %v8125
        %v8254 = vadd.f32 %v7678, %v8126
        %v8255 = vadd.f32 %v7679, %v8127
        %v8256 = vadd.f32 %v7680, %v8128
        %v8257 = vadd.f32 %v7681, %v8129
        %v8258 = vadd.f32 %v7682, %v8130
        %v8259 = vadd.f32 %v7683, %v8131
        %v8260 = vadd.f32 %v7684, %v8132
        %v8261 = vadd.s32 %v188, 896
        %v8262 = vadd.s32 %v189, 896
        %v8263 = vadd.s32 %v190, 896
        %v8264 = vadd.s32 %v191, 896
        %v8265 = vadd.s32 %v192, 896
        %v8266 = vadd.s32 %v193, 896
        %v8267 = vadd.s32 %v194, 896
        %v8268 = vadd.s32 %v195, 896
        %v8269 = vadd.s32 %v196, 896
        %v8270 = vadd.s32 %v197, 896
        %v8271 = vadd.s32 %v198, 896
        %v8272 = vadd.s32 %v199, 896
        %v8273 = vadd.s32 %v200, 896
        %v8274 = vadd.s32 %v201, 896
        %v8275 = vadd.s32 %v202, 896
        %v8276 = vadd.s32 %v203, 896
        %8277 = vset.pattern.permute.xlu0 14
        %8278 = vperm.xlu0 %8277, %v8261
        %v8279 = vpop.permute.xlu0 %8278
        %8280 = vset.pattern.permute.xlu0 14
        %8281 = vperm.xlu0 %8280, %v8262
        %v8282 = vpop.permute.xlu0 %8281
        %8283 = vset.pattern.permute.xlu0 14
        %8284 = vperm.xlu0 %8283, %v8263
        %v8285 = vpop.permute.xlu0 %8284
        %8286 = vset.pattern.permute.xlu0 14
        %8287 = vperm.xlu0 %8286, %v8264
        %v8288 = vpop.permute.xlu0 %8287
        %8289 = vset.pattern.permute.xlu0 14
        %8290 = vperm.xlu0 %8289, %v8265
        %v8291 = vpop.permute.xlu0 %8290
        %8292 = vset.pattern.permute.xlu0 14
        %8293 = vperm.xlu0 %8292, %v8266
        %v8294 = vpop.permute.xlu0 %8293
        %8295 = vset.pattern.permute.xlu0 14
        %8296 = vperm.xlu0 %8295, %v8267
        %v8297 = vpop.permute.xlu0 %8296
        %8298 = vset.pattern.permute.xlu0 14
        %8299 = vperm.xlu0 %8298, %v8268
        %v8300 = vpop.permute.xlu0 %8299
        %8301 = vset.pattern.permute.xlu0 14
        %8302 = vperm.xlu0 %8301, %v8269
        %v8303 = vpop.permute.xlu0 %8302
        %8304 = vset.pattern.permute.xlu0 14
        %8305 = vperm.xlu0 %8304, %v8270
        %v8306 = vpop.permute.xlu0 %8305
        %8307 = vset.pattern.permute.xlu0 14
        %8308 = vperm.xlu0 %8307, %v8271
        %v8309 = vpop.permute.xlu0 %8308
        %8310 = vset.pattern.permute.xlu0 14
        %8311 = vperm.xlu0 %8310, %v8272
        %v8312 = vpop.permute.xlu0 %8311
        %8313 = vset.pattern.permute.xlu0 14
        %8314 = vperm.xlu0 %8313, %v8273
        %v8315 = vpop.permute.xlu0 %8314
        %8316 = vset.pattern.permute.xlu0 14
        %8317 = vperm.xlu0 %8316, %v8274
        %v8318 = vpop.permute.xlu0 %8317
        %8319 = vset.pattern.permute.xlu0 14
        %8320 = vperm.xlu0 %8319, %v8275
        %v8321 = vpop.permute.xlu0 %8320
        %8322 = vset.pattern.permute.xlu0 14
        %8323 = vperm.xlu0 %8322, %v8276
        %v8324 = vpop.permute.xlu0 %8323
        %vm8325 = vcmp.eq.s32.totalorder %v205, %v8279
        %vm8326 = vcmp.eq.s32.totalorder %v206, %v8279
        %vm8327 = vcmp.eq.s32.totalorder %v207, %v8279
        %vm8328 = vcmp.eq.s32.totalorder %v208, %v8279
        %vm8329 = vcmp.eq.s32.totalorder %v209, %v8279
        %vm8330 = vcmp.eq.s32.totalorder %v210, %v8279
        %vm8331 = vcmp.eq.s32.totalorder %v211, %v8279
        %vm8332 = vcmp.eq.s32.totalorder %v212, %v8279
        %vm8333 = vcmp.eq.s32.totalorder %v205, %v8282
        %vm8334 = vcmp.eq.s32.totalorder %v206, %v8282
        %vm8335 = vcmp.eq.s32.totalorder %v207, %v8282
        %vm8336 = vcmp.eq.s32.totalorder %v208, %v8282
        %vm8337 = vcmp.eq.s32.totalorder %v209, %v8282
        %vm8338 = vcmp.eq.s32.totalorder %v210, %v8282
        %vm8339 = vcmp.eq.s32.totalorder %v211, %v8282
        %vm8340 = vcmp.eq.s32.totalorder %v212, %v8282
        %vm8341 = vcmp.eq.s32.totalorder %v205, %v8285
        %vm8342 = vcmp.eq.s32.totalorder %v206, %v8285
        %vm8343 = vcmp.eq.s32.totalorder %v207, %v8285
        %vm8344 = vcmp.eq.s32.totalorder %v208, %v8285
        %vm8345 = vcmp.eq.s32.totalorder %v209, %v8285
        %vm8346 = vcmp.eq.s32.totalorder %v210, %v8285
        %vm8347 = vcmp.eq.s32.totalorder %v211, %v8285
        %vm8348 = vcmp.eq.s32.totalorder %v212, %v8285
        %vm8349 = vcmp.eq.s32.totalorder %v205, %v8288
        %vm8350 = vcmp.eq.s32.totalorder %v206, %v8288
        %vm8351 = vcmp.eq.s32.totalorder %v207, %v8288
        %vm8352 = vcmp.eq.s32.totalorder %v208, %v8288
        %vm8353 = vcmp.eq.s32.totalorder %v209, %v8288
        %vm8354 = vcmp.eq.s32.totalorder %v210, %v8288
        %vm8355 = vcmp.eq.s32.totalorder %v211, %v8288
        %vm8356 = vcmp.eq.s32.totalorder %v212, %v8288
        %vm8357 = vcmp.eq.s32.totalorder %v205, %v8291
        %vm8358 = vcmp.eq.s32.totalorder %v206, %v8291
        %vm8359 = vcmp.eq.s32.totalorder %v207, %v8291
        %vm8360 = vcmp.eq.s32.totalorder %v208, %v8291
        %vm8361 = vcmp.eq.s32.totalorder %v209, %v8291
        %vm8362 = vcmp.eq.s32.totalorder %v210, %v8291
        %vm8363 = vcmp.eq.s32.totalorder %v211, %v8291
        %vm8364 = vcmp.eq.s32.totalorder %v212, %v8291
        %vm8365 = vcmp.eq.s32.totalorder %v205, %v8294
        %vm8366 = vcmp.eq.s32.totalorder %v206, %v8294
        %vm8367 = vcmp.eq.s32.totalorder %v207, %v8294
        %vm8368 = vcmp.eq.s32.totalorder %v208, %v8294
        %vm8369 = vcmp.eq.s32.totalorder %v209, %v8294
        %vm8370 = vcmp.eq.s32.totalorder %v210, %v8294
        %vm8371 = vcmp.eq.s32.totalorder %v211, %v8294
        %vm8372 = vcmp.eq.s32.totalorder %v212, %v8294
        %vm8373 = vcmp.eq.s32.totalorder %v205, %v8297
        %vm8374 = vcmp.eq.s32.totalorder %v206, %v8297
        %vm8375 = vcmp.eq.s32.totalorder %v207, %v8297
        %vm8376 = vcmp.eq.s32.totalorder %v208, %v8297
        %vm8377 = vcmp.eq.s32.totalorder %v209, %v8297
        %vm8378 = vcmp.eq.s32.totalorder %v210, %v8297
        %vm8379 = vcmp.eq.s32.totalorder %v211, %v8297
        %vm8380 = vcmp.eq.s32.totalorder %v212, %v8297
        %vm8381 = vcmp.eq.s32.totalorder %v205, %v8300
        %vm8382 = vcmp.eq.s32.totalorder %v206, %v8300
        %vm8383 = vcmp.eq.s32.totalorder %v207, %v8300
        %vm8384 = vcmp.eq.s32.totalorder %v208, %v8300
        %vm8385 = vcmp.eq.s32.totalorder %v209, %v8300
        %vm8386 = vcmp.eq.s32.totalorder %v210, %v8300
        %vm8387 = vcmp.eq.s32.totalorder %v211, %v8300
        %vm8388 = vcmp.eq.s32.totalorder %v212, %v8300
        %vm8389 = vcmp.eq.s32.totalorder %v205, %v8303
        %vm8390 = vcmp.eq.s32.totalorder %v206, %v8303
        %vm8391 = vcmp.eq.s32.totalorder %v207, %v8303
        %vm8392 = vcmp.eq.s32.totalorder %v208, %v8303
        %vm8393 = vcmp.eq.s32.totalorder %v209, %v8303
        %vm8394 = vcmp.eq.s32.totalorder %v210, %v8303
        %vm8395 = vcmp.eq.s32.totalorder %v211, %v8303
        %vm8396 = vcmp.eq.s32.totalorder %v212, %v8303
        %vm8397 = vcmp.eq.s32.totalorder %v205, %v8306
        %vm8398 = vcmp.eq.s32.totalorder %v206, %v8306
        %vm8399 = vcmp.eq.s32.totalorder %v207, %v8306
        %vm8400 = vcmp.eq.s32.totalorder %v208, %v8306
        %vm8401 = vcmp.eq.s32.totalorder %v209, %v8306
        %vm8402 = vcmp.eq.s32.totalorder %v210, %v8306
        %vm8403 = vcmp.eq.s32.totalorder %v211, %v8306
        %vm8404 = vcmp.eq.s32.totalorder %v212, %v8306
        %vm8405 = vcmp.eq.s32.totalorder %v205, %v8309
        %vm8406 = vcmp.eq.s32.totalorder %v206, %v8309
        %vm8407 = vcmp.eq.s32.totalorder %v207, %v8309
        %vm8408 = vcmp.eq.s32.totalorder %v208, %v8309
        %vm8409 = vcmp.eq.s32.totalorder %v209, %v8309
        %vm8410 = vcmp.eq.s32.totalorder %v210, %v8309
        %vm8411 = vcmp.eq.s32.totalorder %v211, %v8309
        %vm8412 = vcmp.eq.s32.totalorder %v212, %v8309
        %vm8413 = vcmp.eq.s32.totalorder %v205, %v8312
        %vm8414 = vcmp.eq.s32.totalorder %v206, %v8312
        %vm8415 = vcmp.eq.s32.totalorder %v207, %v8312
        %vm8416 = vcmp.eq.s32.totalorder %v208, %v8312
        %vm8417 = vcmp.eq.s32.totalorder %v209, %v8312
        %vm8418 = vcmp.eq.s32.totalorder %v210, %v8312
        %vm8419 = vcmp.eq.s32.totalorder %v211, %v8312
        %vm8420 = vcmp.eq.s32.totalorder %v212, %v8312
        %vm8421 = vcmp.eq.s32.totalorder %v205, %v8315
        %vm8422 = vcmp.eq.s32.totalorder %v206, %v8315
        %vm8423 = vcmp.eq.s32.totalorder %v207, %v8315
        %vm8424 = vcmp.eq.s32.totalorder %v208, %v8315
        %vm8425 = vcmp.eq.s32.totalorder %v209, %v8315
        %vm8426 = vcmp.eq.s32.totalorder %v210, %v8315
        %vm8427 = vcmp.eq.s32.totalorder %v211, %v8315
        %vm8428 = vcmp.eq.s32.totalorder %v212, %v8315
        %vm8429 = vcmp.eq.s32.totalorder %v205, %v8318
        %vm8430 = vcmp.eq.s32.totalorder %v206, %v8318
        %vm8431 = vcmp.eq.s32.totalorder %v207, %v8318
        %vm8432 = vcmp.eq.s32.totalorder %v208, %v8318
        %vm8433 = vcmp.eq.s32.totalorder %v209, %v8318
        %vm8434 = vcmp.eq.s32.totalorder %v210, %v8318
        %vm8435 = vcmp.eq.s32.totalorder %v211, %v8318
        %vm8436 = vcmp.eq.s32.totalorder %v212, %v8318
        %vm8437 = vcmp.eq.s32.totalorder %v205, %v8321
        %vm8438 = vcmp.eq.s32.totalorder %v206, %v8321
        %vm8439 = vcmp.eq.s32.totalorder %v207, %v8321
        %vm8440 = vcmp.eq.s32.totalorder %v208, %v8321
        %vm8441 = vcmp.eq.s32.totalorder %v209, %v8321
        %vm8442 = vcmp.eq.s32.totalorder %v210, %v8321
        %vm8443 = vcmp.eq.s32.totalorder %v211, %v8321
        %vm8444 = vcmp.eq.s32.totalorder %v212, %v8321
        %vm8445 = vcmp.eq.s32.totalorder %v205, %v8324
        %vm8446 = vcmp.eq.s32.totalorder %v206, %v8324
        %vm8447 = vcmp.eq.s32.totalorder %v207, %v8324
        %vm8448 = vcmp.eq.s32.totalorder %v208, %v8324
        %vm8449 = vcmp.eq.s32.totalorder %v209, %v8324
        %vm8450 = vcmp.eq.s32.totalorder %v210, %v8324
        %vm8451 = vcmp.eq.s32.totalorder %v211, %v8324
        %vm8452 = vcmp.eq.s32.totalorder %v212, %v8324
        %v8453 = vsel %vm8325, 1, 0
        %v8454 = vsel %vm8326, 1, 0
        %v8455 = vsel %vm8327, 1, 0
        %v8456 = vsel %vm8328, 1, 0
        %v8457 = vsel %vm8329, 1, 0
        %v8458 = vsel %vm8330, 1, 0
        %v8459 = vsel %vm8331, 1, 0
        %v8460 = vsel %vm8332, 1, 0
        %v8461 = vsel %vm8333, 1, 0
        %v8462 = vsel %vm8334, 1, 0
        %v8463 = vsel %vm8335, 1, 0
        %v8464 = vsel %vm8336, 1, 0
        %v8465 = vsel %vm8337, 1, 0
        %v8466 = vsel %vm8338, 1, 0
        %v8467 = vsel %vm8339, 1, 0
        %v8468 = vsel %vm8340, 1, 0
        %v8469 = vsel %vm8341, 1, 0
        %v8470 = vsel %vm8342, 1, 0
        %v8471 = vsel %vm8343, 1, 0
        %v8472 = vsel %vm8344, 1, 0
        %v8473 = vsel %vm8345, 1, 0
        %v8474 = vsel %vm8346, 1, 0
        %v8475 = vsel %vm8347, 1, 0
        %v8476 = vsel %vm8348, 1, 0
        %v8477 = vsel %vm8349, 1, 0
        %v8478 = vsel %vm8350, 1, 0
        %v8479 = vsel %vm8351, 1, 0
        %v8480 = vsel %vm8352, 1, 0
        %v8481 = vsel %vm8353, 1, 0
        %v8482 = vsel %vm8354, 1, 0
        %v8483 = vsel %vm8355, 1, 0
        %v8484 = vsel %vm8356, 1, 0
        %v8485 = vsel %vm8357, 1, 0
        %v8486 = vsel %vm8358, 1, 0
        %v8487 = vsel %vm8359, 1, 0
        %v8488 = vsel %vm8360, 1, 0
        %v8489 = vsel %vm8361, 1, 0
        %v8490 = vsel %vm8362, 1, 0
        %v8491 = vsel %vm8363, 1, 0
        %v8492 = vsel %vm8364, 1, 0
        %v8493 = vsel %vm8365, 1, 0
        %v8494 = vsel %vm8366, 1, 0
        %v8495 = vsel %vm8367, 1, 0
        %v8496 = vsel %vm8368, 1, 0
        %v8497 = vsel %vm8369, 1, 0
        %v8498 = vsel %vm8370, 1, 0
        %v8499 = vsel %vm8371, 1, 0
        %v8500 = vsel %vm8372, 1, 0
        %v8501 = vsel %vm8373, 1, 0
        %v8502 = vsel %vm8374, 1, 0
        %v8503 = vsel %vm8375, 1, 0
        %v8504 = vsel %vm8376, 1, 0
        %v8505 = vsel %vm8377, 1, 0
        %v8506 = vsel %vm8378, 1, 0
        %v8507 = vsel %vm8379, 1, 0
        %v8508 = vsel %vm8380, 1, 0
        %v8509 = vsel %vm8381, 1, 0
        %v8510 = vsel %vm8382, 1, 0
        %v8511 = vsel %vm8383, 1, 0
        %v8512 = vsel %vm8384, 1, 0
        %v8513 = vsel %vm8385, 1, 0
        %v8514 = vsel %vm8386, 1, 0
        %v8515 = vsel %vm8387, 1, 0
        %v8516 = vsel %vm8388, 1, 0
        %v8517 = vsel %vm8389, 1, 0
        %v8518 = vsel %vm8390, 1, 0
        %v8519 = vsel %vm8391, 1, 0
        %v8520 = vsel %vm8392, 1, 0
        %v8521 = vsel %vm8393, 1, 0
        %v8522 = vsel %vm8394, 1, 0
        %v8523 = vsel %vm8395, 1, 0
        %v8524 = vsel %vm8396, 1, 0
        %v8525 = vsel %vm8397, 1, 0
        %v8526 = vsel %vm8398, 1, 0
        %v8527 = vsel %vm8399, 1, 0
        %v8528 = vsel %vm8400, 1, 0
        %v8529 = vsel %vm8401, 1, 0
        %v8530 = vsel %vm8402, 1, 0
        %v8531 = vsel %vm8403, 1, 0
        %v8532 = vsel %vm8404, 1, 0
        %v8533 = vsel %vm8405, 1, 0
        %v8534 = vsel %vm8406, 1, 0
        %v8535 = vsel %vm8407, 1, 0
        %v8536 = vsel %vm8408, 1, 0
        %v8537 = vsel %vm8409, 1, 0
        %v8538 = vsel %vm8410, 1, 0
        %v8539 = vsel %vm8411, 1, 0
        %v8540 = vsel %vm8412, 1, 0
        %v8541 = vsel %vm8413, 1, 0
        %v8542 = vsel %vm8414, 1, 0
        %v8543 = vsel %vm8415, 1, 0
        %v8544 = vsel %vm8416, 1, 0
        %v8545 = vsel %vm8417, 1, 0
        %v8546 = vsel %vm8418, 1, 0
        %v8547 = vsel %vm8419, 1, 0
        %v8548 = vsel %vm8420, 1, 0
        %v8549 = vsel %vm8421, 1, 0
        %v8550 = vsel %vm8422, 1, 0
        %v8551 = vsel %vm8423, 1, 0
        %v8552 = vsel %vm8424, 1, 0
        %v8553 = vsel %vm8425, 1, 0
        %v8554 = vsel %vm8426, 1, 0
        %v8555 = vsel %vm8427, 1, 0
        %v8556 = vsel %vm8428, 1, 0
        %v8557 = vsel %vm8429, 1, 0
        %v8558 = vsel %vm8430, 1, 0
        %v8559 = vsel %vm8431, 1, 0
        %v8560 = vsel %vm8432, 1, 0
        %v8561 = vsel %vm8433, 1, 0
        %v8562 = vsel %vm8434, 1, 0
        %v8563 = vsel %vm8435, 1, 0
        %v8564 = vsel %vm8436, 1, 0
        %v8565 = vsel %vm8437, 1, 0
        %v8566 = vsel %vm8438, 1, 0
        %v8567 = vsel %vm8439, 1, 0
        %v8568 = vsel %vm8440, 1, 0
        %v8569 = vsel %vm8441, 1, 0
        %v8570 = vsel %vm8442, 1, 0
        %v8571 = vsel %vm8443, 1, 0
        %v8572 = vsel %vm8444, 1, 0
        %v8573 = vsel %vm8445, 1, 0
        %v8574 = vsel %vm8446, 1, 0
        %v8575 = vsel %vm8447, 1, 0
        %v8576 = vsel %vm8448, 1, 0
        %v8577 = vsel %vm8449, 1, 0
        %v8578 = vsel %vm8450, 1, 0
        %v8579 = vsel %vm8451, 1, 0
        %v8580 = vsel %vm8452, 1, 0
        %v8581 = vcvt.s32.f32 %v8453
        %v8582 = vcvt.s32.f32 %v8454
        %v8583 = vcvt.s32.f32 %v8455
        %v8584 = vcvt.s32.f32 %v8456
        %v8585 = vcvt.s32.f32 %v8457
        %v8586 = vcvt.s32.f32 %v8458
        %v8587 = vcvt.s32.f32 %v8459
        %v8588 = vcvt.s32.f32 %v8460
        %v8589 = vcvt.s32.f32 %v8461
        %v8590 = vcvt.s32.f32 %v8462
        %v8591 = vcvt.s32.f32 %v8463
        %v8592 = vcvt.s32.f32 %v8464
        %v8593 = vcvt.s32.f32 %v8465
        %v8594 = vcvt.s32.f32 %v8466
        %v8595 = vcvt.s32.f32 %v8467
        %v8596 = vcvt.s32.f32 %v8468
        %v8597 = vcvt.s32.f32 %v8469
        %v8598 = vcvt.s32.f32 %v8470
        %v8599 = vcvt.s32.f32 %v8471
        %v8600 = vcvt.s32.f32 %v8472
        %v8601 = vcvt.s32.f32 %v8473
        %v8602 = vcvt.s32.f32 %v8474
        %v8603 = vcvt.s32.f32 %v8475
        %v8604 = vcvt.s32.f32 %v8476
        %v8605 = vcvt.s32.f32 %v8477
        %v8606 = vcvt.s32.f32 %v8478
        %v8607 = vcvt.s32.f32 %v8479
        %v8608 = vcvt.s32.f32 %v8480
        %v8609 = vcvt.s32.f32 %v8481
        %v8610 = vcvt.s32.f32 %v8482
        %v8611 = vcvt.s32.f32 %v8483
        %v8612 = vcvt.s32.f32 %v8484
        %v8613 = vcvt.s32.f32 %v8485
        %v8614 = vcvt.s32.f32 %v8486
        %v8615 = vcvt.s32.f32 %v8487
        %v8616 = vcvt.s32.f32 %v8488
        %v8617 = vcvt.s32.f32 %v8489
        %v8618 = vcvt.s32.f32 %v8490
        %v8619 = vcvt.s32.f32 %v8491
        %v8620 = vcvt.s32.f32 %v8492
        %v8621 = vcvt.s32.f32 %v8493
        %v8622 = vcvt.s32.f32 %v8494
        %v8623 = vcvt.s32.f32 %v8495
        %v8624 = vcvt.s32.f32 %v8496
        %v8625 = vcvt.s32.f32 %v8497
        %v8626 = vcvt.s32.f32 %v8498
        %v8627 = vcvt.s32.f32 %v8499
        %v8628 = vcvt.s32.f32 %v8500
        %v8629 = vcvt.s32.f32 %v8501
        %v8630 = vcvt.s32.f32 %v8502
        %v8631 = vcvt.s32.f32 %v8503
        %v8632 = vcvt.s32.f32 %v8504
        %v8633 = vcvt.s32.f32 %v8505
        %v8634 = vcvt.s32.f32 %v8506
        %v8635 = vcvt.s32.f32 %v8507
        %v8636 = vcvt.s32.f32 %v8508
        %v8637 = vcvt.s32.f32 %v8509
        %v8638 = vcvt.s32.f32 %v8510
        %v8639 = vcvt.s32.f32 %v8511
        %v8640 = vcvt.s32.f32 %v8512
        %v8641 = vcvt.s32.f32 %v8513
        %v8642 = vcvt.s32.f32 %v8514
        %v8643 = vcvt.s32.f32 %v8515
        %v8644 = vcvt.s32.f32 %v8516
        %v8645 = vcvt.s32.f32 %v8517
        %v8646 = vcvt.s32.f32 %v8518
        %v8647 = vcvt.s32.f32 %v8519
        %v8648 = vcvt.s32.f32 %v8520
        %v8649 = vcvt.s32.f32 %v8521
        %v8650 = vcvt.s32.f32 %v8522
        %v8651 = vcvt.s32.f32 %v8523
        %v8652 = vcvt.s32.f32 %v8524
        %v8653 = vcvt.s32.f32 %v8525
        %v8654 = vcvt.s32.f32 %v8526
        %v8655 = vcvt.s32.f32 %v8527
        %v8656 = vcvt.s32.f32 %v8528
        %v8657 = vcvt.s32.f32 %v8529
        %v8658 = vcvt.s32.f32 %v8530
        %v8659 = vcvt.s32.f32 %v8531
        %v8660 = vcvt.s32.f32 %v8532
        %v8661 = vcvt.s32.f32 %v8533
        %v8662 = vcvt.s32.f32 %v8534
        %v8663 = vcvt.s32.f32 %v8535
        %v8664 = vcvt.s32.f32 %v8536
        %v8665 = vcvt.s32.f32 %v8537
        %v8666 = vcvt.s32.f32 %v8538
        %v8667 = vcvt.s32.f32 %v8539
        %v8668 = vcvt.s32.f32 %v8540
        %v8669 = vcvt.s32.f32 %v8541
        %v8670 = vcvt.s32.f32 %v8542
        %v8671 = vcvt.s32.f32 %v8543
        %v8672 = vcvt.s32.f32 %v8544
        %v8673 = vcvt.s32.f32 %v8545
        %v8674 = vcvt.s32.f32 %v8546
        %v8675 = vcvt.s32.f32 %v8547
        %v8676 = vcvt.s32.f32 %v8548
        %v8677 = vcvt.s32.f32 %v8549
        %v8678 = vcvt.s32.f32 %v8550
        %v8679 = vcvt.s32.f32 %v8551
        %v8680 = vcvt.s32.f32 %v8552
        %v8681 = vcvt.s32.f32 %v8553
        %v8682 = vcvt.s32.f32 %v8554
        %v8683 = vcvt.s32.f32 %v8555
        %v8684 = vcvt.s32.f32 %v8556
        %v8685 = vcvt.s32.f32 %v8557
        %v8686 = vcvt.s32.f32 %v8558
        %v8687 = vcvt.s32.f32 %v8559
        %v8688 = vcvt.s32.f32 %v8560
        %v8689 = vcvt.s32.f32 %v8561
        %v8690 = vcvt.s32.f32 %v8562
        %v8691 = vcvt.s32.f32 %v8563
        %v8692 = vcvt.s32.f32 %v8564
        %v8693 = vcvt.s32.f32 %v8565
        %v8694 = vcvt.s32.f32 %v8566
        %v8695 = vcvt.s32.f32 %v8567
        %v8696 = vcvt.s32.f32 %v8568
        %v8697 = vcvt.s32.f32 %v8569
        %v8698 = vcvt.s32.f32 %v8570
        %v8699 = vcvt.s32.f32 %v8571
        %v8700 = vcvt.s32.f32 %v8572
        %v8701 = vcvt.s32.f32 %v8573
        %v8702 = vcvt.s32.f32 %v8574
        %v8703 = vcvt.s32.f32 %v8575
        %v8704 = vcvt.s32.f32 %v8576
        %v8705 = vcvt.s32.f32 %v8577
        %v8706 = vcvt.s32.f32 %v8578
        %v8707 = vcvt.s32.f32 %v8579
        %v8708 = vcvt.s32.f32 %v8580
        %v8709 = vadd.f32 %v8133, %v8581
        %v8710 = vadd.f32 %v8134, %v8582
        %v8711 = vadd.f32 %v8135, %v8583
        %v8712 = vadd.f32 %v8136, %v8584
        %v8713 = vadd.f32 %v8137, %v8585
        %v8714 = vadd.f32 %v8138, %v8586
        %v8715 = vadd.f32 %v8139, %v8587
        %v8716 = vadd.f32 %v8140, %v8588
        %v8717 = vadd.f32 %v8141, %v8589
        %v8718 = vadd.f32 %v8142, %v8590
        %v8719 = vadd.f32 %v8143, %v8591
        %v8720 = vadd.f32 %v8144, %v8592
        %v8721 = vadd.f32 %v8145, %v8593
        %v8722 = vadd.f32 %v8146, %v8594
        %v8723 = vadd.f32 %v8147, %v8595
        %v8724 = vadd.f32 %v8148, %v8596
        %v8725 = vadd.f32 %v8149, %v8597
        %v8726 = vadd.f32 %v8150, %v8598
        %v8727 = vadd.f32 %v8151, %v8599
        %v8728 = vadd.f32 %v8152, %v8600
        %v8729 = vadd.f32 %v8153, %v8601
        %v8730 = vadd.f32 %v8154, %v8602
        %v8731 = vadd.f32 %v8155, %v8603
        %v8732 = vadd.f32 %v8156, %v8604
        %v8733 = vadd.f32 %v8157, %v8605
        %v8734 = vadd.f32 %v8158, %v8606
        %v8735 = vadd.f32 %v8159, %v8607
        %v8736 = vadd.f32 %v8160, %v8608
        %v8737 = vadd.f32 %v8161, %v8609
        %v8738 = vadd.f32 %v8162, %v8610
        %v8739 = vadd.f32 %v8163, %v8611
        %v8740 = vadd.f32 %v8164, %v8612
        %v8741 = vadd.f32 %v8165, %v8613
        %v8742 = vadd.f32 %v8166, %v8614
        %v8743 = vadd.f32 %v8167, %v8615
        %v8744 = vadd.f32 %v8168, %v8616
        %v8745 = vadd.f32 %v8169, %v8617
        %v8746 = vadd.f32 %v8170, %v8618
        %v8747 = vadd.f32 %v8171, %v8619
        %v8748 = vadd.f32 %v8172, %v8620
        %v8749 = vadd.f32 %v8173, %v8621
        %v8750 = vadd.f32 %v8174, %v8622
        %v8751 = vadd.f32 %v8175, %v8623
        %v8752 = vadd.f32 %v8176, %v8624
        %v8753 = vadd.f32 %v8177, %v8625
        %v8754 = vadd.f32 %v8178, %v8626
        %v8755 = vadd.f32 %v8179, %v8627
        %v8756 = vadd.f32 %v8180, %v8628
        %v8757 = vadd.f32 %v8181, %v8629
        %v8758 = vadd.f32 %v8182, %v8630
        %v8759 = vadd.f32 %v8183, %v8631
        %v8760 = vadd.f32 %v8184, %v8632
        %v8761 = vadd.f32 %v8185, %v8633
        %v8762 = vadd.f32 %v8186, %v8634
        %v8763 = vadd.f32 %v8187, %v8635
        %v8764 = vadd.f32 %v8188, %v8636
        %v8765 = vadd.f32 %v8189, %v8637
        %v8766 = vadd.f32 %v8190, %v8638
        %v8767 = vadd.f32 %v8191, %v8639
        %v8768 = vadd.f32 %v8192, %v8640
        %v8769 = vadd.f32 %v8193, %v8641
        %v8770 = vadd.f32 %v8194, %v8642
        %v8771 = vadd.f32 %v8195, %v8643
        %v8772 = vadd.f32 %v8196, %v8644
        %v8773 = vadd.f32 %v8197, %v8645
        %v8774 = vadd.f32 %v8198, %v8646
        %v8775 = vadd.f32 %v8199, %v8647
        %v8776 = vadd.f32 %v8200, %v8648
        %v8777 = vadd.f32 %v8201, %v8649
        %v8778 = vadd.f32 %v8202, %v8650
        %v8779 = vadd.f32 %v8203, %v8651
        %v8780 = vadd.f32 %v8204, %v8652
        %v8781 = vadd.f32 %v8205, %v8653
        %v8782 = vadd.f32 %v8206, %v8654
        %v8783 = vadd.f32 %v8207, %v8655
        %v8784 = vadd.f32 %v8208, %v8656
        %v8785 = vadd.f32 %v8209, %v8657
        %v8786 = vadd.f32 %v8210, %v8658
        %v8787 = vadd.f32 %v8211, %v8659
        %v8788 = vadd.f32 %v8212, %v8660
        %v8789 = vadd.f32 %v8213, %v8661
        %v8790 = vadd.f32 %v8214, %v8662
        %v8791 = vadd.f32 %v8215, %v8663
        %v8792 = vadd.f32 %v8216, %v8664
        %v8793 = vadd.f32 %v8217, %v8665
        %v8794 = vadd.f32 %v8218, %v8666
        %v8795 = vadd.f32 %v8219, %v8667
        %v8796 = vadd.f32 %v8220, %v8668
        %v8797 = vadd.f32 %v8221, %v8669
        %v8798 = vadd.f32 %v8222, %v8670
        %v8799 = vadd.f32 %v8223, %v8671
        %v8800 = vadd.f32 %v8224, %v8672
        %v8801 = vadd.f32 %v8225, %v8673
        %v8802 = vadd.f32 %v8226, %v8674
        %v8803 = vadd.f32 %v8227, %v8675
        %v8804 = vadd.f32 %v8228, %v8676
        %v8805 = vadd.f32 %v8229, %v8677
        %v8806 = vadd.f32 %v8230, %v8678
        %v8807 = vadd.f32 %v8231, %v8679
        %v8808 = vadd.f32 %v8232, %v8680
        %v8809 = vadd.f32 %v8233, %v8681
        %v8810 = vadd.f32 %v8234, %v8682
        %v8811 = vadd.f32 %v8235, %v8683
        %v8812 = vadd.f32 %v8236, %v8684
        %v8813 = vadd.f32 %v8237, %v8685
        %v8814 = vadd.f32 %v8238, %v8686
        %v8815 = vadd.f32 %v8239, %v8687
        %v8816 = vadd.f32 %v8240, %v8688
        %v8817 = vadd.f32 %v8241, %v8689
        %v8818 = vadd.f32 %v8242, %v8690
        %v8819 = vadd.f32 %v8243, %v8691
        %v8820 = vadd.f32 %v8244, %v8692
        %v8821 = vadd.f32 %v8245, %v8693
        %v8822 = vadd.f32 %v8246, %v8694
        %v8823 = vadd.f32 %v8247, %v8695
        %v8824 = vadd.f32 %v8248, %v8696
        %v8825 = vadd.f32 %v8249, %v8697
        %v8826 = vadd.f32 %v8250, %v8698
        %v8827 = vadd.f32 %v8251, %v8699
        %v8828 = vadd.f32 %v8252, %v8700
        %v8829 = vadd.f32 %v8253, %v8701
        %v8830 = vadd.f32 %v8254, %v8702
        %v8831 = vadd.f32 %v8255, %v8703
        %v8832 = vadd.f32 %v8256, %v8704
        %v8833 = vadd.f32 %v8257, %v8705
        %v8834 = vadd.f32 %v8258, %v8706
        %v8835 = vadd.f32 %v8259, %v8707
        %v8836 = vadd.f32 %v8260, %v8708
        %v8837 = vadd.s32 %v188, 960
        %v8838 = vadd.s32 %v189, 960
        %v8839 = vadd.s32 %v190, 960
        %v8840 = vadd.s32 %v191, 960
        %v8841 = vadd.s32 %v192, 960
        %v8842 = vadd.s32 %v193, 960
        %v8843 = vadd.s32 %v194, 960
        %v8844 = vadd.s32 %v195, 960
        %v8845 = vadd.s32 %v196, 960
        %v8846 = vadd.s32 %v197, 960
        %v8847 = vadd.s32 %v198, 960
        %v8848 = vadd.s32 %v199, 960
        %v8849 = vadd.s32 %v200, 960
        %v8850 = vadd.s32 %v201, 960
        %v8851 = vadd.s32 %v202, 960
        %v8852 = vadd.s32 %v203, 960
        %8853 = vset.pattern.permute.xlu0 15
        %8854 = vperm.xlu0 %8853, %v8837
        %v8855 = vpop.permute.xlu0 %8854
        %8856 = vset.pattern.permute.xlu0 15
        %8857 = vperm.xlu0 %8856, %v8838
        %v8858 = vpop.permute.xlu0 %8857
        %8859 = vset.pattern.permute.xlu0 15
        %8860 = vperm.xlu0 %8859, %v8839
        %v8861 = vpop.permute.xlu0 %8860
        %8862 = vset.pattern.permute.xlu0 15
        %8863 = vperm.xlu0 %8862, %v8840
        %v8864 = vpop.permute.xlu0 %8863
        %8865 = vset.pattern.permute.xlu0 15
        %8866 = vperm.xlu0 %8865, %v8841
        %v8867 = vpop.permute.xlu0 %8866
        %8868 = vset.pattern.permute.xlu0 15
        %8869 = vperm.xlu0 %8868, %v8842
        %v8870 = vpop.permute.xlu0 %8869
        %8871 = vset.pattern.permute.xlu0 15
        %8872 = vperm.xlu0 %8871, %v8843
        %v8873 = vpop.permute.xlu0 %8872
        %8874 = vset.pattern.permute.xlu0 15
        %8875 = vperm.xlu0 %8874, %v8844
        %v8876 = vpop.permute.xlu0 %8875
        %8877 = vset.pattern.permute.xlu0 15
        %8878 = vperm.xlu0 %8877, %v8845
        %v8879 = vpop.permute.xlu0 %8878
        %8880 = vset.pattern.permute.xlu0 15
        %8881 = vperm.xlu0 %8880, %v8846
        %v8882 = vpop.permute.xlu0 %8881
        %8883 = vset.pattern.permute.xlu0 15
        %8884 = vperm.xlu0 %8883, %v8847
        %v8885 = vpop.permute.xlu0 %8884
        %8886 = vset.pattern.permute.xlu0 15
        %8887 = vperm.xlu0 %8886, %v8848
        %v8888 = vpop.permute.xlu0 %8887
        %8889 = vset.pattern.permute.xlu0 15
        %8890 = vperm.xlu0 %8889, %v8849
        %v8891 = vpop.permute.xlu0 %8890
        %8892 = vset.pattern.permute.xlu0 15
        %8893 = vperm.xlu0 %8892, %v8850
        %v8894 = vpop.permute.xlu0 %8893
        %8895 = vset.pattern.permute.xlu0 15
        %8896 = vperm.xlu0 %8895, %v8851
        %v8897 = vpop.permute.xlu0 %8896
        %8898 = vset.pattern.permute.xlu0 15
        %8899 = vperm.xlu0 %8898, %v8852
        %v8900 = vpop.permute.xlu0 %8899
        %vm8901 = vcmp.eq.s32.totalorder %v205, %v8855
        %vm8902 = vcmp.eq.s32.totalorder %v206, %v8855
        %vm8903 = vcmp.eq.s32.totalorder %v207, %v8855
        %vm8904 = vcmp.eq.s32.totalorder %v208, %v8855
        %vm8905 = vcmp.eq.s32.totalorder %v209, %v8855
        %vm8906 = vcmp.eq.s32.totalorder %v210, %v8855
        %vm8907 = vcmp.eq.s32.totalorder %v211, %v8855
        %vm8908 = vcmp.eq.s32.totalorder %v212, %v8855
        %vm8909 = vcmp.eq.s32.totalorder %v205, %v8858
        %vm8910 = vcmp.eq.s32.totalorder %v206, %v8858
        %vm8911 = vcmp.eq.s32.totalorder %v207, %v8858
        %vm8912 = vcmp.eq.s32.totalorder %v208, %v8858
        %vm8913 = vcmp.eq.s32.totalorder %v209, %v8858
        %vm8914 = vcmp.eq.s32.totalorder %v210, %v8858
        %vm8915 = vcmp.eq.s32.totalorder %v211, %v8858
        %vm8916 = vcmp.eq.s32.totalorder %v212, %v8858
        %vm8917 = vcmp.eq.s32.totalorder %v205, %v8861
        %vm8918 = vcmp.eq.s32.totalorder %v206, %v8861
        %vm8919 = vcmp.eq.s32.totalorder %v207, %v8861
        %vm8920 = vcmp.eq.s32.totalorder %v208, %v8861
        %vm8921 = vcmp.eq.s32.totalorder %v209, %v8861
        %vm8922 = vcmp.eq.s32.totalorder %v210, %v8861
        %vm8923 = vcmp.eq.s32.totalorder %v211, %v8861
        %vm8924 = vcmp.eq.s32.totalorder %v212, %v8861
        %vm8925 = vcmp.eq.s32.totalorder %v205, %v8864
        %vm8926 = vcmp.eq.s32.totalorder %v206, %v8864
        %vm8927 = vcmp.eq.s32.totalorder %v207, %v8864
        %vm8928 = vcmp.eq.s32.totalorder %v208, %v8864
        %vm8929 = vcmp.eq.s32.totalorder %v209, %v8864
        %vm8930 = vcmp.eq.s32.totalorder %v210, %v8864
        %vm8931 = vcmp.eq.s32.totalorder %v211, %v8864
        %vm8932 = vcmp.eq.s32.totalorder %v212, %v8864
        %vm8933 = vcmp.eq.s32.totalorder %v205, %v8867
        %vm8934 = vcmp.eq.s32.totalorder %v206, %v8867
        %vm8935 = vcmp.eq.s32.totalorder %v207, %v8867
        %vm8936 = vcmp.eq.s32.totalorder %v208, %v8867
        %vm8937 = vcmp.eq.s32.totalorder %v209, %v8867
        %vm8938 = vcmp.eq.s32.totalorder %v210, %v8867
        %vm8939 = vcmp.eq.s32.totalorder %v211, %v8867
        %vm8940 = vcmp.eq.s32.totalorder %v212, %v8867
        %vm8941 = vcmp.eq.s32.totalorder %v205, %v8870
        %vm8942 = vcmp.eq.s32.totalorder %v206, %v8870
        %vm8943 = vcmp.eq.s32.totalorder %v207, %v8870
        %vm8944 = vcmp.eq.s32.totalorder %v208, %v8870
        %vm8945 = vcmp.eq.s32.totalorder %v209, %v8870
        %vm8946 = vcmp.eq.s32.totalorder %v210, %v8870
        %vm8947 = vcmp.eq.s32.totalorder %v211, %v8870
        %vm8948 = vcmp.eq.s32.totalorder %v212, %v8870
        %vm8949 = vcmp.eq.s32.totalorder %v205, %v8873
        %vm8950 = vcmp.eq.s32.totalorder %v206, %v8873
        %vm8951 = vcmp.eq.s32.totalorder %v207, %v8873
        %vm8952 = vcmp.eq.s32.totalorder %v208, %v8873
        %vm8953 = vcmp.eq.s32.totalorder %v209, %v8873
        %vm8954 = vcmp.eq.s32.totalorder %v210, %v8873
        %vm8955 = vcmp.eq.s32.totalorder %v211, %v8873
        %vm8956 = vcmp.eq.s32.totalorder %v212, %v8873
        %vm8957 = vcmp.eq.s32.totalorder %v205, %v8876
        %vm8958 = vcmp.eq.s32.totalorder %v206, %v8876
        %vm8959 = vcmp.eq.s32.totalorder %v207, %v8876
        %vm8960 = vcmp.eq.s32.totalorder %v208, %v8876
        %vm8961 = vcmp.eq.s32.totalorder %v209, %v8876
        %vm8962 = vcmp.eq.s32.totalorder %v210, %v8876
        %vm8963 = vcmp.eq.s32.totalorder %v211, %v8876
        %vm8964 = vcmp.eq.s32.totalorder %v212, %v8876
        %vm8965 = vcmp.eq.s32.totalorder %v205, %v8879
        %vm8966 = vcmp.eq.s32.totalorder %v206, %v8879
        %vm8967 = vcmp.eq.s32.totalorder %v207, %v8879
        %vm8968 = vcmp.eq.s32.totalorder %v208, %v8879
        %vm8969 = vcmp.eq.s32.totalorder %v209, %v8879
        %vm8970 = vcmp.eq.s32.totalorder %v210, %v8879
        %vm8971 = vcmp.eq.s32.totalorder %v211, %v8879
        %vm8972 = vcmp.eq.s32.totalorder %v212, %v8879
        %vm8973 = vcmp.eq.s32.totalorder %v205, %v8882
        %vm8974 = vcmp.eq.s32.totalorder %v206, %v8882
        %vm8975 = vcmp.eq.s32.totalorder %v207, %v8882
        %vm8976 = vcmp.eq.s32.totalorder %v208, %v8882
        %vm8977 = vcmp.eq.s32.totalorder %v209, %v8882
        %vm8978 = vcmp.eq.s32.totalorder %v210, %v8882
        %vm8979 = vcmp.eq.s32.totalorder %v211, %v8882
        %vm8980 = vcmp.eq.s32.totalorder %v212, %v8882
        %vm8981 = vcmp.eq.s32.totalorder %v205, %v8885
        %vm8982 = vcmp.eq.s32.totalorder %v206, %v8885
        %vm8983 = vcmp.eq.s32.totalorder %v207, %v8885
        %vm8984 = vcmp.eq.s32.totalorder %v208, %v8885
        %vm8985 = vcmp.eq.s32.totalorder %v209, %v8885
        %vm8986 = vcmp.eq.s32.totalorder %v210, %v8885
        %vm8987 = vcmp.eq.s32.totalorder %v211, %v8885
        %vm8988 = vcmp.eq.s32.totalorder %v212, %v8885
        %vm8989 = vcmp.eq.s32.totalorder %v205, %v8888
        %vm8990 = vcmp.eq.s32.totalorder %v206, %v8888
        %vm8991 = vcmp.eq.s32.totalorder %v207, %v8888
        %vm8992 = vcmp.eq.s32.totalorder %v208, %v8888
        %vm8993 = vcmp.eq.s32.totalorder %v209, %v8888
        %vm8994 = vcmp.eq.s32.totalorder %v210, %v8888
        %vm8995 = vcmp.eq.s32.totalorder %v211, %v8888
        %vm8996 = vcmp.eq.s32.totalorder %v212, %v8888
        %vm8997 = vcmp.eq.s32.totalorder %v205, %v8891
        %vm8998 = vcmp.eq.s32.totalorder %v206, %v8891
        %vm8999 = vcmp.eq.s32.totalorder %v207, %v8891
        %vm9000 = vcmp.eq.s32.totalorder %v208, %v8891
        %vm9001 = vcmp.eq.s32.totalorder %v209, %v8891
        %vm9002 = vcmp.eq.s32.totalorder %v210, %v8891
        %vm9003 = vcmp.eq.s32.totalorder %v211, %v8891
        %vm9004 = vcmp.eq.s32.totalorder %v212, %v8891
        %vm9005 = vcmp.eq.s32.totalorder %v205, %v8894
        %vm9006 = vcmp.eq.s32.totalorder %v206, %v8894
        %vm9007 = vcmp.eq.s32.totalorder %v207, %v8894
        %vm9008 = vcmp.eq.s32.totalorder %v208, %v8894
        %vm9009 = vcmp.eq.s32.totalorder %v209, %v8894
        %vm9010 = vcmp.eq.s32.totalorder %v210, %v8894
        %vm9011 = vcmp.eq.s32.totalorder %v211, %v8894
        %vm9012 = vcmp.eq.s32.totalorder %v212, %v8894
        %vm9013 = vcmp.eq.s32.totalorder %v205, %v8897
        %vm9014 = vcmp.eq.s32.totalorder %v206, %v8897
        %vm9015 = vcmp.eq.s32.totalorder %v207, %v8897
        %vm9016 = vcmp.eq.s32.totalorder %v208, %v8897
        %vm9017 = vcmp.eq.s32.totalorder %v209, %v8897
        %vm9018 = vcmp.eq.s32.totalorder %v210, %v8897
        %vm9019 = vcmp.eq.s32.totalorder %v211, %v8897
        %vm9020 = vcmp.eq.s32.totalorder %v212, %v8897
        %vm9021 = vcmp.eq.s32.totalorder %v205, %v8900
        %vm9022 = vcmp.eq.s32.totalorder %v206, %v8900
        %vm9023 = vcmp.eq.s32.totalorder %v207, %v8900
        %vm9024 = vcmp.eq.s32.totalorder %v208, %v8900
        %vm9025 = vcmp.eq.s32.totalorder %v209, %v8900
        %vm9026 = vcmp.eq.s32.totalorder %v210, %v8900
        %vm9027 = vcmp.eq.s32.totalorder %v211, %v8900
        %vm9028 = vcmp.eq.s32.totalorder %v212, %v8900
        %v9029 = vsel %vm8901, 1, 0
        %v9030 = vsel %vm8902, 1, 0
        %v9031 = vsel %vm8903, 1, 0
        %v9032 = vsel %vm8904, 1, 0
        %v9033 = vsel %vm8905, 1, 0
        %v9034 = vsel %vm8906, 1, 0
        %v9035 = vsel %vm8907, 1, 0
        %v9036 = vsel %vm8908, 1, 0
        %v9037 = vsel %vm8909, 1, 0
        %v9038 = vsel %vm8910, 1, 0
        %v9039 = vsel %vm8911, 1, 0
        %v9040 = vsel %vm8912, 1, 0
        %v9041 = vsel %vm8913, 1, 0
        %v9042 = vsel %vm8914, 1, 0
        %v9043 = vsel %vm8915, 1, 0
        %v9044 = vsel %vm8916, 1, 0
        %v9045 = vsel %vm8917, 1, 0
        %v9046 = vsel %vm8918, 1, 0
        %v9047 = vsel %vm8919, 1, 0
        %v9048 = vsel %vm8920, 1, 0
        %v9049 = vsel %vm8921, 1, 0
        %v9050 = vsel %vm8922, 1, 0
        %v9051 = vsel %vm8923, 1, 0
        %v9052 = vsel %vm8924, 1, 0
        %v9053 = vsel %vm8925, 1, 0
        %v9054 = vsel %vm8926, 1, 0
        %v9055 = vsel %vm8927, 1, 0
        %v9056 = vsel %vm8928, 1, 0
        %v9057 = vsel %vm8929, 1, 0
        %v9058 = vsel %vm8930, 1, 0
        %v9059 = vsel %vm8931, 1, 0
        %v9060 = vsel %vm8932, 1, 0
        %v9061 = vsel %vm8933, 1, 0
        %v9062 = vsel %vm8934, 1, 0
        %v9063 = vsel %vm8935, 1, 0
        %v9064 = vsel %vm8936, 1, 0
        %v9065 = vsel %vm8937, 1, 0
        %v9066 = vsel %vm8938, 1, 0
        %v9067 = vsel %vm8939, 1, 0
        %v9068 = vsel %vm8940, 1, 0
        %v9069 = vsel %vm8941, 1, 0
        %v9070 = vsel %vm8942, 1, 0
        %v9071 = vsel %vm8943, 1, 0
        %v9072 = vsel %vm8944, 1, 0
        %v9073 = vsel %vm8945, 1, 0
        %v9074 = vsel %vm8946, 1, 0
        %v9075 = vsel %vm8947, 1, 0
        %v9076 = vsel %vm8948, 1, 0
        %v9077 = vsel %vm8949, 1, 0
        %v9078 = vsel %vm8950, 1, 0
        %v9079 = vsel %vm8951, 1, 0
        %v9080 = vsel %vm8952, 1, 0
        %v9081 = vsel %vm8953, 1, 0
        %v9082 = vsel %vm8954, 1, 0
        %v9083 = vsel %vm8955, 1, 0
        %v9084 = vsel %vm8956, 1, 0
        %v9085 = vsel %vm8957, 1, 0
        %v9086 = vsel %vm8958, 1, 0
        %v9087 = vsel %vm8959, 1, 0
        %v9088 = vsel %vm8960, 1, 0
        %v9089 = vsel %vm8961, 1, 0
        %v9090 = vsel %vm8962, 1, 0
        %v9091 = vsel %vm8963, 1, 0
        %v9092 = vsel %vm8964, 1, 0
        %v9093 = vsel %vm8965, 1, 0
        %v9094 = vsel %vm8966, 1, 0
        %v9095 = vsel %vm8967, 1, 0
        %v9096 = vsel %vm8968, 1, 0
        %v9097 = vsel %vm8969, 1, 0
        %v9098 = vsel %vm8970, 1, 0
        %v9099 = vsel %vm8971, 1, 0
        %v9100 = vsel %vm8972, 1, 0
        %v9101 = vsel %vm8973, 1, 0
        %v9102 = vsel %vm8974, 1, 0
        %v9103 = vsel %vm8975, 1, 0
        %v9104 = vsel %vm8976, 1, 0
        %v9105 = vsel %vm8977, 1, 0
        %v9106 = vsel %vm8978, 1, 0
        %v9107 = vsel %vm8979, 1, 0
        %v9108 = vsel %vm8980, 1, 0
        %v9109 = vsel %vm8981, 1, 0
        %v9110 = vsel %vm8982, 1, 0
        %v9111 = vsel %vm8983, 1, 0
        %v9112 = vsel %vm8984, 1, 0
        %v9113 = vsel %vm8985, 1, 0
        %v9114 = vsel %vm8986, 1, 0
        %v9115 = vsel %vm8987, 1, 0
        %v9116 = vsel %vm8988, 1, 0
        %v9117 = vsel %vm8989, 1, 0
        %v9118 = vsel %vm8990, 1, 0
        %v9119 = vsel %vm8991, 1, 0
        %v9120 = vsel %vm8992, 1, 0
        %v9121 = vsel %vm8993, 1, 0
        %v9122 = vsel %vm8994, 1, 0
        %v9123 = vsel %vm8995, 1, 0
        %v9124 = vsel %vm8996, 1, 0
        %v9125 = vsel %vm8997, 1, 0
        %v9126 = vsel %vm8998, 1, 0
        %v9127 = vsel %vm8999, 1, 0
        %v9128 = vsel %vm9000, 1, 0
        %v9129 = vsel %vm9001, 1, 0
        %v9130 = vsel %vm9002, 1, 0
        %v9131 = vsel %vm9003, 1, 0
        %v9132 = vsel %vm9004, 1, 0
        %v9133 = vsel %vm9005, 1, 0
        %v9134 = vsel %vm9006, 1, 0
        %v9135 = vsel %vm9007, 1, 0
        %v9136 = vsel %vm9008, 1, 0
        %v9137 = vsel %vm9009, 1, 0
        %v9138 = vsel %vm9010, 1, 0
        %v9139 = vsel %vm9011, 1, 0
        %v9140 = vsel %vm9012, 1, 0
        %v9141 = vsel %vm9013, 1, 0
        %v9142 = vsel %vm9014, 1, 0
        %v9143 = vsel %vm9015, 1, 0
        %v9144 = vsel %vm9016, 1, 0
        %v9145 = vsel %vm9017, 1, 0
        %v9146 = vsel %vm9018, 1, 0
        %v9147 = vsel %vm9019, 1, 0
        %v9148 = vsel %vm9020, 1, 0
        %v9149 = vsel %vm9021, 1, 0
        %v9150 = vsel %vm9022, 1, 0
        %v9151 = vsel %vm9023, 1, 0
        %v9152 = vsel %vm9024, 1, 0
        %v9153 = vsel %vm9025, 1, 0
        %v9154 = vsel %vm9026, 1, 0
        %v9155 = vsel %vm9027, 1, 0
        %v9156 = vsel %vm9028, 1, 0
        %v9157 = vcvt.s32.f32 %v9029
        %v9158 = vcvt.s32.f32 %v9030
        %v9159 = vcvt.s32.f32 %v9031
        %v9160 = vcvt.s32.f32 %v9032
        %v9161 = vcvt.s32.f32 %v9033
        %v9162 = vcvt.s32.f32 %v9034
        %v9163 = vcvt.s32.f32 %v9035
        %v9164 = vcvt.s32.f32 %v9036
        %v9165 = vcvt.s32.f32 %v9037
        %v9166 = vcvt.s32.f32 %v9038
        %v9167 = vcvt.s32.f32 %v9039
        %v9168 = vcvt.s32.f32 %v9040
        %v9169 = vcvt.s32.f32 %v9041
        %v9170 = vcvt.s32.f32 %v9042
        %v9171 = vcvt.s32.f32 %v9043
        %v9172 = vcvt.s32.f32 %v9044
        %v9173 = vcvt.s32.f32 %v9045
        %v9174 = vcvt.s32.f32 %v9046
        %v9175 = vcvt.s32.f32 %v9047
        %v9176 = vcvt.s32.f32 %v9048
        %v9177 = vcvt.s32.f32 %v9049
        %v9178 = vcvt.s32.f32 %v9050
        %v9179 = vcvt.s32.f32 %v9051
        %v9180 = vcvt.s32.f32 %v9052
        %v9181 = vcvt.s32.f32 %v9053
        %v9182 = vcvt.s32.f32 %v9054
        %v9183 = vcvt.s32.f32 %v9055
        %v9184 = vcvt.s32.f32 %v9056
        %v9185 = vcvt.s32.f32 %v9057
        %v9186 = vcvt.s32.f32 %v9058
        %v9187 = vcvt.s32.f32 %v9059
        %v9188 = vcvt.s32.f32 %v9060
        %v9189 = vcvt.s32.f32 %v9061
        %v9190 = vcvt.s32.f32 %v9062
        %v9191 = vcvt.s32.f32 %v9063
        %v9192 = vcvt.s32.f32 %v9064
        %v9193 = vcvt.s32.f32 %v9065
        %v9194 = vcvt.s32.f32 %v9066
        %v9195 = vcvt.s32.f32 %v9067
        %v9196 = vcvt.s32.f32 %v9068
        %v9197 = vcvt.s32.f32 %v9069
        %v9198 = vcvt.s32.f32 %v9070
        %v9199 = vcvt.s32.f32 %v9071
        %v9200 = vcvt.s32.f32 %v9072
        %v9201 = vcvt.s32.f32 %v9073
        %v9202 = vcvt.s32.f32 %v9074
        %v9203 = vcvt.s32.f32 %v9075
        %v9204 = vcvt.s32.f32 %v9076
        %v9205 = vcvt.s32.f32 %v9077
        %v9206 = vcvt.s32.f32 %v9078
        %v9207 = vcvt.s32.f32 %v9079
        %v9208 = vcvt.s32.f32 %v9080
        %v9209 = vcvt.s32.f32 %v9081
        %v9210 = vcvt.s32.f32 %v9082
        %v9211 = vcvt.s32.f32 %v9083
        %v9212 = vcvt.s32.f32 %v9084
        %v9213 = vcvt.s32.f32 %v9085
        %v9214 = vcvt.s32.f32 %v9086
        %v9215 = vcvt.s32.f32 %v9087
        %v9216 = vcvt.s32.f32 %v9088
        %v9217 = vcvt.s32.f32 %v9089
        %v9218 = vcvt.s32.f32 %v9090
        %v9219 = vcvt.s32.f32 %v9091
        %v9220 = vcvt.s32.f32 %v9092
        %v9221 = vcvt.s32.f32 %v9093
        %v9222 = vcvt.s32.f32 %v9094
        %v9223 = vcvt.s32.f32 %v9095
        %v9224 = vcvt.s32.f32 %v9096
        %v9225 = vcvt.s32.f32 %v9097
        %v9226 = vcvt.s32.f32 %v9098
        %v9227 = vcvt.s32.f32 %v9099
        %v9228 = vcvt.s32.f32 %v9100
        %v9229 = vcvt.s32.f32 %v9101
        %v9230 = vcvt.s32.f32 %v9102
        %v9231 = vcvt.s32.f32 %v9103
        %v9232 = vcvt.s32.f32 %v9104
        %v9233 = vcvt.s32.f32 %v9105
        %v9234 = vcvt.s32.f32 %v9106
        %v9235 = vcvt.s32.f32 %v9107
        %v9236 = vcvt.s32.f32 %v9108
        %v9237 = vcvt.s32.f32 %v9109
        %v9238 = vcvt.s32.f32 %v9110
        %v9239 = vcvt.s32.f32 %v9111
        %v9240 = vcvt.s32.f32 %v9112
        %v9241 = vcvt.s32.f32 %v9113
        %v9242 = vcvt.s32.f32 %v9114
        %v9243 = vcvt.s32.f32 %v9115
        %v9244 = vcvt.s32.f32 %v9116
        %v9245 = vcvt.s32.f32 %v9117
        %v9246 = vcvt.s32.f32 %v9118
        %v9247 = vcvt.s32.f32 %v9119
        %v9248 = vcvt.s32.f32 %v9120
        %v9249 = vcvt.s32.f32 %v9121
        %v9250 = vcvt.s32.f32 %v9122
        %v9251 = vcvt.s32.f32 %v9123
        %v9252 = vcvt.s32.f32 %v9124
        %v9253 = vcvt.s32.f32 %v9125
        %v9254 = vcvt.s32.f32 %v9126
        %v9255 = vcvt.s32.f32 %v9127
        %v9256 = vcvt.s32.f32 %v9128
        %v9257 = vcvt.s32.f32 %v9129
        %v9258 = vcvt.s32.f32 %v9130
        %v9259 = vcvt.s32.f32 %v9131
        %v9260 = vcvt.s32.f32 %v9132
        %v9261 = vcvt.s32.f32 %v9133
        %v9262 = vcvt.s32.f32 %v9134
        %v9263 = vcvt.s32.f32 %v9135
        %v9264 = vcvt.s32.f32 %v9136
        %v9265 = vcvt.s32.f32 %v9137
        %v9266 = vcvt.s32.f32 %v9138
        %v9267 = vcvt.s32.f32 %v9139
        %v9268 = vcvt.s32.f32 %v9140
        %v9269 = vcvt.s32.f32 %v9141
        %v9270 = vcvt.s32.f32 %v9142
        %v9271 = vcvt.s32.f32 %v9143
        %v9272 = vcvt.s32.f32 %v9144
        %v9273 = vcvt.s32.f32 %v9145
        %v9274 = vcvt.s32.f32 %v9146
        %v9275 = vcvt.s32.f32 %v9147
        %v9276 = vcvt.s32.f32 %v9148
        %v9277 = vcvt.s32.f32 %v9149
        %v9278 = vcvt.s32.f32 %v9150
        %v9279 = vcvt.s32.f32 %v9151
        %v9280 = vcvt.s32.f32 %v9152
        %v9281 = vcvt.s32.f32 %v9153
        %v9282 = vcvt.s32.f32 %v9154
        %v9283 = vcvt.s32.f32 %v9155
        %v9284 = vcvt.s32.f32 %v9156
        %v9285 = vadd.f32 %v8709, %v9157
        %v9286 = vadd.f32 %v8710, %v9158
        %v9287 = vadd.f32 %v8711, %v9159
        %v9288 = vadd.f32 %v8712, %v9160
        %v9289 = vadd.f32 %v8713, %v9161
        %v9290 = vadd.f32 %v8714, %v9162
        %v9291 = vadd.f32 %v8715, %v9163
        %v9292 = vadd.f32 %v8716, %v9164
        %v9293 = vadd.f32 %v8717, %v9165
        %v9294 = vadd.f32 %v8718, %v9166
        %v9295 = vadd.f32 %v8719, %v9167
        %v9296 = vadd.f32 %v8720, %v9168
        %v9297 = vadd.f32 %v8721, %v9169
        %v9298 = vadd.f32 %v8722, %v9170
        %v9299 = vadd.f32 %v8723, %v9171
        %v9300 = vadd.f32 %v8724, %v9172
        %v9301 = vadd.f32 %v8725, %v9173
        %v9302 = vadd.f32 %v8726, %v9174
        %v9303 = vadd.f32 %v8727, %v9175
        %v9304 = vadd.f32 %v8728, %v9176
        %v9305 = vadd.f32 %v8729, %v9177
        %v9306 = vadd.f32 %v8730, %v9178
        %v9307 = vadd.f32 %v8731, %v9179
        %v9308 = vadd.f32 %v8732, %v9180
        %v9309 = vadd.f32 %v8733, %v9181
        %v9310 = vadd.f32 %v8734, %v9182
        %v9311 = vadd.f32 %v8735, %v9183
        %v9312 = vadd.f32 %v8736, %v9184
        %v9313 = vadd.f32 %v8737, %v9185
        %v9314 = vadd.f32 %v8738, %v9186
        %v9315 = vadd.f32 %v8739, %v9187
        %v9316 = vadd.f32 %v8740, %v9188
        %v9317 = vadd.f32 %v8741, %v9189
        %v9318 = vadd.f32 %v8742, %v9190
        %v9319 = vadd.f32 %v8743, %v9191
        %v9320 = vadd.f32 %v8744, %v9192
        %v9321 = vadd.f32 %v8745, %v9193
        %v9322 = vadd.f32 %v8746, %v9194
        %v9323 = vadd.f32 %v8747, %v9195
        %v9324 = vadd.f32 %v8748, %v9196
        %v9325 = vadd.f32 %v8749, %v9197
        %v9326 = vadd.f32 %v8750, %v9198
        %v9327 = vadd.f32 %v8751, %v9199
        %v9328 = vadd.f32 %v8752, %v9200
        %v9329 = vadd.f32 %v8753, %v9201
        %v9330 = vadd.f32 %v8754, %v9202
        %v9331 = vadd.f32 %v8755, %v9203
        %v9332 = vadd.f32 %v8756, %v9204
        %v9333 = vadd.f32 %v8757, %v9205
        %v9334 = vadd.f32 %v8758, %v9206
        %v9335 = vadd.f32 %v8759, %v9207
        %v9336 = vadd.f32 %v8760, %v9208
        %v9337 = vadd.f32 %v8761, %v9209
        %v9338 = vadd.f32 %v8762, %v9210
        %v9339 = vadd.f32 %v8763, %v9211
        %v9340 = vadd.f32 %v8764, %v9212
        %v9341 = vadd.f32 %v8765, %v9213
        %v9342 = vadd.f32 %v8766, %v9214
        %v9343 = vadd.f32 %v8767, %v9215
        %v9344 = vadd.f32 %v8768, %v9216
        %v9345 = vadd.f32 %v8769, %v9217
        %v9346 = vadd.f32 %v8770, %v9218
        %v9347 = vadd.f32 %v8771, %v9219
        %v9348 = vadd.f32 %v8772, %v9220
        %v9349 = vadd.f32 %v8773, %v9221
        %v9350 = vadd.f32 %v8774, %v9222
        %v9351 = vadd.f32 %v8775, %v9223
        %v9352 = vadd.f32 %v8776, %v9224
        %v9353 = vadd.f32 %v8777, %v9225
        %v9354 = vadd.f32 %v8778, %v9226
        %v9355 = vadd.f32 %v8779, %v9227
        %v9356 = vadd.f32 %v8780, %v9228
        %v9357 = vadd.f32 %v8781, %v9229
        %v9358 = vadd.f32 %v8782, %v9230
        %v9359 = vadd.f32 %v8783, %v9231
        %v9360 = vadd.f32 %v8784, %v9232
        %v9361 = vadd.f32 %v8785, %v9233
        %v9362 = vadd.f32 %v8786, %v9234
        %v9363 = vadd.f32 %v8787, %v9235
        %v9364 = vadd.f32 %v8788, %v9236
        %v9365 = vadd.f32 %v8789, %v9237
        %v9366 = vadd.f32 %v8790, %v9238
        %v9367 = vadd.f32 %v8791, %v9239
        %v9368 = vadd.f32 %v8792, %v9240
        %v9369 = vadd.f32 %v8793, %v9241
        %v9370 = vadd.f32 %v8794, %v9242
        %v9371 = vadd.f32 %v8795, %v9243
        %v9372 = vadd.f32 %v8796, %v9244
        %v9373 = vadd.f32 %v8797, %v9245
        %v9374 = vadd.f32 %v8798, %v9246
        %v9375 = vadd.f32 %v8799, %v9247
        %v9376 = vadd.f32 %v8800, %v9248
        %v9377 = vadd.f32 %v8801, %v9249
        %v9378 = vadd.f32 %v8802, %v9250
        %v9379 = vadd.f32 %v8803, %v9251
        %v9380 = vadd.f32 %v8804, %v9252
        %v9381 = vadd.f32 %v8805, %v9253
        %v9382 = vadd.f32 %v8806, %v9254
        %v9383 = vadd.f32 %v8807, %v9255
        %v9384 = vadd.f32 %v8808, %v9256
        %v9385 = vadd.f32 %v8809, %v9257
        %v9386 = vadd.f32 %v8810, %v9258
        %v9387 = vadd.f32 %v8811, %v9259
        %v9388 = vadd.f32 %v8812, %v9260
        %v9389 = vadd.f32 %v8813, %v9261
        %v9390 = vadd.f32 %v8814, %v9262
        %v9391 = vadd.f32 %v8815, %v9263
        %v9392 = vadd.f32 %v8816, %v9264
        %v9393 = vadd.f32 %v8817, %v9265
        %v9394 = vadd.f32 %v8818, %v9266
        %v9395 = vadd.f32 %v8819, %v9267
        %v9396 = vadd.f32 %v8820, %v9268
        %v9397 = vadd.f32 %v8821, %v9269
        %v9398 = vadd.f32 %v8822, %v9270
        %v9399 = vadd.f32 %v8823, %v9271
        %v9400 = vadd.f32 %v8824, %v9272
        %v9401 = vadd.f32 %v8825, %v9273
        %v9402 = vadd.f32 %v8826, %v9274
        %v9403 = vadd.f32 %v8827, %v9275
        %v9404 = vadd.f32 %v8828, %v9276
        %v9405 = vadd.f32 %v8829, %v9277
        %v9406 = vadd.f32 %v8830, %v9278
        %v9407 = vadd.f32 %v8831, %v9279
        %v9408 = vadd.f32 %v8832, %v9280
        %v9409 = vadd.f32 %v8833, %v9281
        %v9410 = vadd.f32 %v8834, %v9282
        %v9411 = vadd.f32 %v8835, %v9283
        %v9412 = vadd.f32 %v8836, %v9284
        %v9413 = vpack.c.bf16 %v9293, %v9285
        %v9414 = vpack.c.bf16 %v9294, %v9286
        %v9415 = vpack.c.bf16 %v9295, %v9287
        %v9416 = vpack.c.bf16 %v9296, %v9288
        %v9417 = vpack.c.bf16 %v9297, %v9289
        %v9418 = vpack.c.bf16 %v9298, %v9290
        %v9419 = vpack.c.bf16 %v9299, %v9291
        %v9420 = vpack.c.bf16 %v9300, %v9292
        %v9421 = vpack.c.bf16 %v9309, %v9301
        %v9422 = vpack.c.bf16 %v9310, %v9302
        %v9423 = vpack.c.bf16 %v9311, %v9303
        %v9424 = vpack.c.bf16 %v9312, %v9304
        %v9425 = vpack.c.bf16 %v9313, %v9305
        %v9426 = vpack.c.bf16 %v9314, %v9306
        %v9427 = vpack.c.bf16 %v9315, %v9307
        %v9428 = vpack.c.bf16 %v9316, %v9308
        %v9429 = vpack.c.bf16 %v9325, %v9317
        %v9430 = vpack.c.bf16 %v9326, %v9318
        %v9431 = vpack.c.bf16 %v9327, %v9319
        %v9432 = vpack.c.bf16 %v9328, %v9320
        %v9433 = vpack.c.bf16 %v9329, %v9321
        %v9434 = vpack.c.bf16 %v9330, %v9322
        %v9435 = vpack.c.bf16 %v9331, %v9323
        %v9436 = vpack.c.bf16 %v9332, %v9324
        %v9437 = vpack.c.bf16 %v9341, %v9333
        %v9438 = vpack.c.bf16 %v9342, %v9334
        %v9439 = vpack.c.bf16 %v9343, %v9335
        %v9440 = vpack.c.bf16 %v9344, %v9336
        %v9441 = vpack.c.bf16 %v9345, %v9337
        %v9442 = vpack.c.bf16 %v9346, %v9338
        %v9443 = vpack.c.bf16 %v9347, %v9339
        %v9444 = vpack.c.bf16 %v9348, %v9340
        %v9445 = vpack.c.bf16 %v9357, %v9349
        %v9446 = vpack.c.bf16 %v9358, %v9350
        %v9447 = vpack.c.bf16 %v9359, %v9351
        %v9448 = vpack.c.bf16 %v9360, %v9352
        %v9449 = vpack.c.bf16 %v9361, %v9353
        %v9450 = vpack.c.bf16 %v9362, %v9354
        %v9451 = vpack.c.bf16 %v9363, %v9355
        %v9452 = vpack.c.bf16 %v9364, %v9356
        %v9453 = vpack.c.bf16 %v9373, %v9365
        %v9454 = vpack.c.bf16 %v9374, %v9366
        %v9455 = vpack.c.bf16 %v9375, %v9367
        %v9456 = vpack.c.bf16 %v9376, %v9368
        %v9457 = vpack.c.bf16 %v9377, %v9369
        %v9458 = vpack.c.bf16 %v9378, %v9370
        %v9459 = vpack.c.bf16 %v9379, %v9371
        %v9460 = vpack.c.bf16 %v9380, %v9372
        %v9461 = vpack.c.bf16 %v9389, %v9381
        %v9462 = vpack.c.bf16 %v9390, %v9382
        %v9463 = vpack.c.bf16 %v9391, %v9383
        %v9464 = vpack.c.bf16 %v9392, %v9384
        %v9465 = vpack.c.bf16 %v9393, %v9385
        %v9466 = vpack.c.bf16 %v9394, %v9386
        %v9467 = vpack.c.bf16 %v9395, %v9387
        %v9468 = vpack.c.bf16 %v9396, %v9388
        %v9469 = vpack.c.bf16 %v9405, %v9397
        %v9470 = vpack.c.bf16 %v9406, %v9398
        %v9471 = vpack.c.bf16 %v9407, %v9399
        %v9472 = vpack.c.bf16 %v9408, %v9400
        %v9473 = vpack.c.bf16 %v9409, %v9401
        %v9474 = vpack.c.bf16 %v9410, %v9402
        %v9475 = vpack.c.bf16 %v9411, %v9403
        %v9476 = vpack.c.bf16 %v9412, %v9404
        %v9477 = vld [vmem:[#allocation2] sm:$0xf]
        %v9478 = vld [vmem:[#allocation2 + $0x4] sm:$0xf]
        %v9479 = vld [vmem:[#allocation2 + $0x8] sm:$0xf]
        %v9480 = vld [vmem:[#allocation2 + $0xc] sm:$0xf]
        %v9481 = vld [vmem:[#allocation2 + $0x10] sm:$0xf]
        %v9482 = vld [vmem:[#allocation2 + $0x14] sm:$0xf]
        %v9483 = vld [vmem:[#allocation2 + $0x18] sm:$0xf]
        %v9484 = vld [vmem:[#allocation2 + $0x1c] sm:$0xf]
        %v9485 = vld [vmem:[#allocation2 + $0x20] sm:$0xf]
        %v9486 = vld [vmem:[#allocation2 + $0x24] sm:$0xf]
        %v9487 = vld [vmem:[#allocation2 + $0x28] sm:$0xf]
        %v9488 = vld [vmem:[#allocation2 + $0x2c] sm:$0xf]
        %v9489 = vld [vmem:[#allocation2 + $0x30] sm:$0xf]
        %v9490 = vld [vmem:[#allocation2 + $0x34] sm:$0xf]
        %v9491 = vld [vmem:[#allocation2 + $0x38] sm:$0xf]
        %v9492 = vld [vmem:[#allocation2 + $0x3c] sm:$0xf]
        %v9493 = vld [vmem:[#allocation2 + $0x40] sm:$0xf]
        %v9494 = vld [vmem:[#allocation2 + $0x44] sm:$0xf]
        %v9495 = vld [vmem:[#allocation2 + $0x48] sm:$0xf]
        %v9496 = vld [vmem:[#allocation2 + $0x4c] sm:$0xf]
        %v9497 = vld [vmem:[#allocation2 + $0x50] sm:$0xf]
        %v9498 = vld [vmem:[#allocation2 + $0x54] sm:$0xf]
        %v9499 = vld [vmem:[#allocation2 + $0x58] sm:$0xf]
        %v9500 = vld [vmem:[#allocation2 + $0x5c] sm:$0xf]
        %v9501 = vld [vmem:[#allocation2 + $0x60] sm:$0xf]
        %v9502 = vld [vmem:[#allocation2 + $0x64] sm:$0xf]
        %v9503 = vld [vmem:[#allocation2 + $0x68] sm:$0xf]
        %v9504 = vld [vmem:[#allocation2 + $0x6c] sm:$0xf]
        %v9505 = vld [vmem:[#allocation2 + $0x70] sm:$0xf]
        %v9506 = vld [vmem:[#allocation2 + $0x74] sm:$0xf]
        %v9507 = vld [vmem:[#allocation2 + $0x78] sm:$0xf]
        %v9508 = vld [vmem:[#allocation2 + $0x7c] sm:$0xf]
        %v9509 = vld [vmem:[#allocation2 + $0x80] sm:$0xf]
        %v9510 = vld [vmem:[#allocation2 + $0x84] sm:$0xf]
        %v9511 = vld [vmem:[#allocation2 + $0x88] sm:$0xf]
        %v9512 = vld [vmem:[#allocation2 + $0x8c] sm:$0xf]
        %v9513 = vld [vmem:[#allocation2 + $0x90] sm:$0xf]
        %v9514 = vld [vmem:[#allocation2 + $0x94] sm:$0xf]
        %v9515 = vld [vmem:[#allocation2 + $0x98] sm:$0xf]
        %v9516 = vld [vmem:[#allocation2 + $0x9c] sm:$0xf]
        %v9517 = vld [vmem:[#allocation2 + $0xa0] sm:$0xf]
        %v9518 = vld [vmem:[#allocation2 + $0xa4] sm:$0xf]
        %v9519 = vld [vmem:[#allocation2 + $0xa8] sm:$0xf]
        %v9520 = vld [vmem:[#allocation2 + $0xac] sm:$0xf]
        %v9521 = vld [vmem:[#allocation2 + $0xb0] sm:$0xf]
        %v9522 = vld [vmem:[#allocation2 + $0xb4] sm:$0xf]
        %v9523 = vld [vmem:[#allocation2 + $0xb8] sm:$0xf]
        %v9524 = vld [vmem:[#allocation2 + $0xbc] sm:$0xf]
        %v9525 = vld [vmem:[#allocation2 + $0xc0] sm:$0xf]
        %v9526 = vld [vmem:[#allocation2 + $0xc4] sm:$0xf]
        %v9527 = vld [vmem:[#allocation2 + $0xc8] sm:$0xf]
        %v9528 = vld [vmem:[#allocation2 + $0xcc] sm:$0xf]
        %v9529 = vld [vmem:[#allocation2 + $0xd0] sm:$0xf]
        %v9530 = vld [vmem:[#allocation2 + $0xd4] sm:$0xf]
        %v9531 = vld [vmem:[#allocation2 + $0xd8] sm:$0xf]
        %v9532 = vld [vmem:[#allocation2 + $0xdc] sm:$0xf]
        %v9533 = vld [vmem:[#allocation2 + $0xe0] sm:$0xf]
        %v9534 = vld [vmem:[#allocation2 + $0xe4] sm:$0xf]
        %v9535 = vld [vmem:[#allocation2 + $0xe8] sm:$0xf]
        %v9536 = vld [vmem:[#allocation2 + $0xec] sm:$0xf]
        %v9537 = vld [vmem:[#allocation2 + $0xf0] sm:$0xf]
        %v9538 = vld [vmem:[#allocation2 + $0xf4] sm:$0xf]
        %v9539 = vld [vmem:[#allocation2 + $0xf8] sm:$0xf]
        %v9540 = vld [vmem:[#allocation2 + $0xfc] sm:$0xf]
        %v9541 = vld [vmem:[#allocation2 + $0x100] sm:$0xf]
        %v9542 = vld [vmem:[#allocation2 + $0x104] sm:$0xf]
        %v9543 = vld [vmem:[#allocation2 + $0x108] sm:$0xf]
        %v9544 = vld [vmem:[#allocation2 + $0x10c] sm:$0xf]
        %v9545 = vld [vmem:[#allocation2 + $0x110] sm:$0xf]
        %v9546 = vld [vmem:[#allocation2 + $0x114] sm:$0xf]
        %v9547 = vld [vmem:[#allocation2 + $0x118] sm:$0xf]
        %v9548 = vld [vmem:[#allocation2 + $0x11c] sm:$0xf]
        %v9549 = vld [vmem:[#allocation2 + $0x120] sm:$0xf]
        %v9550 = vld [vmem:[#allocation2 + $0x124] sm:$0xf]
        %v9551 = vld [vmem:[#allocation2 + $0x128] sm:$0xf]
        %v9552 = vld [vmem:[#allocation2 + $0x12c] sm:$0xf]
        %v9553 = vld [vmem:[#allocation2 + $0x130] sm:$0xf]
        %v9554 = vld [vmem:[#allocation2 + $0x134] sm:$0xf]
        %v9555 = vld [vmem:[#allocation2 + $0x138] sm:$0xf]
        %v9556 = vld [vmem:[#allocation2 + $0x13c] sm:$0xf]
        %v9557 = vld [vmem:[#allocation2 + $0x140] sm:$0xf]
        %v9558 = vld [vmem:[#allocation2 + $0x144] sm:$0xf]
        %v9559 = vld [vmem:[#allocation2 + $0x148] sm:$0xf]
        %v9560 = vld [vmem:[#allocation2 + $0x14c] sm:$0xf]
        %v9561 = vld [vmem:[#allocation2 + $0x150] sm:$0xf]
        %v9562 = vld [vmem:[#allocation2 + $0x154] sm:$0xf]
        %v9563 = vld [vmem:[#allocation2 + $0x158] sm:$0xf]
        %v9564 = vld [vmem:[#allocation2 + $0x15c] sm:$0xf]
        %v9565 = vld [vmem:[#allocation2 + $0x160] sm:$0xf]
        %v9566 = vld [vmem:[#allocation2 + $0x164] sm:$0xf]
        %v9567 = vld [vmem:[#allocation2 + $0x168] sm:$0xf]
        %v9568 = vld [vmem:[#allocation2 + $0x16c] sm:$0xf]
        %v9569 = vld [vmem:[#allocation2 + $0x170] sm:$0xf]
        %v9570 = vld [vmem:[#allocation2 + $0x174] sm:$0xf]
        %v9571 = vld [vmem:[#allocation2 + $0x178] sm:$0xf]
        %v9572 = vld [vmem:[#allocation2 + $0x17c] sm:$0xf]
        %v9573 = vld [vmem:[#allocation2 + $0x180] sm:$0xf]
        %v9574 = vld [vmem:[#allocation2 + $0x184] sm:$0xf]
        %v9575 = vld [vmem:[#allocation2 + $0x188] sm:$0xf]
        %v9576 = vld [vmem:[#allocation2 + $0x18c] sm:$0xf]
        %v9577 = vld [vmem:[#allocation2 + $0x190] sm:$0xf]
        %v9578 = vld [vmem:[#allocation2 + $0x194] sm:$0xf]
        %v9579 = vld [vmem:[#allocation2 + $0x198] sm:$0xf]
        %v9580 = vld [vmem:[#allocation2 + $0x19c] sm:$0xf]
        %v9581 = vld [vmem:[#allocation2 + $0x1a0] sm:$0xf]
        %v9582 = vld [vmem:[#allocation2 + $0x1a4] sm:$0xf]
        %v9583 = vld [vmem:[#allocation2 + $0x1a8] sm:$0xf]
        %v9584 = vld [vmem:[#allocation2 + $0x1ac] sm:$0xf]
        %v9585 = vld [vmem:[#allocation2 + $0x1b0] sm:$0xf]
        %v9586 = vld [vmem:[#allocation2 + $0x1b4] sm:$0xf]
        %v9587 = vld [vmem:[#allocation2 + $0x1b8] sm:$0xf]
        %v9588 = vld [vmem:[#allocation2 + $0x1bc] sm:$0xf]
        %v9589 = vld [vmem:[#allocation2 + $0x1c0] sm:$0xf]
        %v9590 = vld [vmem:[#allocation2 + $0x1c4] sm:$0xf]
        %v9591 = vld [vmem:[#allocation2 + $0x1c8] sm:$0xf]
        %v9592 = vld [vmem:[#allocation2 + $0x1cc] sm:$0xf]
        %v9593 = vld [vmem:[#allocation2 + $0x1d0] sm:$0xf]
        %v9594 = vld [vmem:[#allocation2 + $0x1d4] sm:$0xf]
        %v9595 = vld [vmem:[#allocation2 + $0x1d8] sm:$0xf]
        %v9596 = vld [vmem:[#allocation2 + $0x1dc] sm:$0xf]
        %v9597 = vld [vmem:[#allocation2 + $0x1e0] sm:$0xf]
        %v9598 = vld [vmem:[#allocation2 + $0x1e4] sm:$0xf]
        %v9599 = vld [vmem:[#allocation2 + $0x1e8] sm:$0xf]
        %v9600 = vld [vmem:[#allocation2 + $0x1ec] sm:$0xf]
        %v9601 = vld [vmem:[#allocation2 + $0x1f0] sm:$0xf]
        %v9602 = vld [vmem:[#allocation2 + $0x1f4] sm:$0xf]
        %v9603 = vld [vmem:[#allocation2 + $0x1f8] sm:$0xf]
        %v9604 = vld [vmem:[#allocation2 + $0x1fc] sm:$0xf]
        %v9605 = vld [vmem:[%s2] sm:$0x1]
        %v9607 = vlaneseq
        %v9608 = vshrl.u32 %v9607, 7
        %v9609 = vsub.s32 0, %v9608
        %v9610 = vrot.slane %v9605, %v9609
        %v9740 = vunpack.c.l.b16 %v9477
        %v9741 = vunpack.c.l.b16 %v9478
        %v9742 = vunpack.c.l.b16 %v9479
        %v9743 = vunpack.c.l.b16 %v9480
        %v9744 = vunpack.c.l.b16 %v9481
        %v9745 = vunpack.c.l.b16 %v9482
        %v9746 = vunpack.c.l.b16 %v9483
        %v9747 = vunpack.c.l.b16 %v9484
        %v9748 = vunpack.c.l.b16 %v9485
        %v9749 = vunpack.c.l.b16 %v9486
        %v9750 = vunpack.c.l.b16 %v9487
        %v9751 = vunpack.c.l.b16 %v9488
        %v9752 = vunpack.c.l.b16 %v9489
        %v9753 = vunpack.c.l.b16 %v9490
        %v9754 = vunpack.c.l.b16 %v9491
        %v9755 = vunpack.c.l.b16 %v9492
        %v9756 = vunpack.c.l.b16 %v9493
        %v9757 = vunpack.c.l.b16 %v9494
        %v9758 = vunpack.c.l.b16 %v9495
        %v9759 = vunpack.c.l.b16 %v9496
        %v9760 = vunpack.c.l.b16 %v9497
        %v9761 = vunpack.c.l.b16 %v9498
        %v9762 = vunpack.c.l.b16 %v9499
        %v9763 = vunpack.c.l.b16 %v9500
        %v9764 = vunpack.c.l.b16 %v9501
        %v9765 = vunpack.c.l.b16 %v9502
        %v9766 = vunpack.c.l.b16 %v9503
        %v9767 = vunpack.c.l.b16 %v9504
        %v9768 = vunpack.c.l.b16 %v9505
        %v9769 = vunpack.c.l.b16 %v9506
        %v9770 = vunpack.c.l.b16 %v9507
        %v9771 = vunpack.c.l.b16 %v9508
        %v9772 = vunpack.c.l.b16 %v9509
        %v9773 = vunpack.c.l.b16 %v9510
        %v9774 = vunpack.c.l.b16 %v9511
        %v9775 = vunpack.c.l.b16 %v9512
        %v9776 = vunpack.c.l.b16 %v9513
        %v9777 = vunpack.c.l.b16 %v9514
        %v9778 = vunpack.c.l.b16 %v9515
        %v9779 = vunpack.c.l.b16 %v9516
        %v9780 = vunpack.c.l.b16 %v9517
        %v9781 = vunpack.c.l.b16 %v9518
        %v9782 = vunpack.c.l.b16 %v9519
        %v9783 = vunpack.c.l.b16 %v9520
        %v9784 = vunpack.c.l.b16 %v9521
        %v9785 = vunpack.c.l.b16 %v9522
        %v9786 = vunpack.c.l.b16 %v9523
        %v9787 = vunpack.c.l.b16 %v9524
        %v9788 = vunpack.c.l.b16 %v9525
        %v9789 = vunpack.c.l.b16 %v9526
        %v9790 = vunpack.c.l.b16 %v9527
        %v9791 = vunpack.c.l.b16 %v9528
        %v9792 = vunpack.c.l.b16 %v9529
        %v9793 = vunpack.c.l.b16 %v9530
        %v9794 = vunpack.c.l.b16 %v9531
        %v9795 = vunpack.c.l.b16 %v9532
        %v9796 = vunpack.c.l.b16 %v9533
        %v9797 = vunpack.c.l.b16 %v9534
        %v9798 = vunpack.c.l.b16 %v9535
        %v9799 = vunpack.c.l.b16 %v9536
        %v9800 = vunpack.c.l.b16 %v9537
        %v9801 = vunpack.c.l.b16 %v9538
        %v9802 = vunpack.c.l.b16 %v9539
        %v9803 = vunpack.c.l.b16 %v9540
        %v9804 = vunpack.c.l.b16 %v9541
        %v9805 = vunpack.c.l.b16 %v9542
        %v9806 = vunpack.c.l.b16 %v9543
        %v9807 = vunpack.c.l.b16 %v9544
        %v9808 = vunpack.c.l.b16 %v9545
        %v9809 = vunpack.c.l.b16 %v9546
        %v9810 = vunpack.c.l.b16 %v9547
        %v9811 = vunpack.c.l.b16 %v9548
        %v9812 = vunpack.c.l.b16 %v9549
        %v9813 = vunpack.c.l.b16 %v9550
        %v9814 = vunpack.c.l.b16 %v9551
        %v9815 = vunpack.c.l.b16 %v9552
        %v9816 = vunpack.c.l.b16 %v9553
        %v9817 = vunpack.c.l.b16 %v9554
        %v9818 = vunpack.c.l.b16 %v9555
        %v9819 = vunpack.c.l.b16 %v9556
        %v9820 = vunpack.c.l.b16 %v9557
        %v9821 = vunpack.c.l.b16 %v9558
        %v9822 = vunpack.c.l.b16 %v9559
        %v9823 = vunpack.c.l.b16 %v9560
        %v9824 = vunpack.c.l.b16 %v9561
        %v9825 = vunpack.c.l.b16 %v9562
        %v9826 = vunpack.c.l.b16 %v9563
        %v9827 = vunpack.c.l.b16 %v9564
        %v9828 = vunpack.c.l.b16 %v9565
        %v9829 = vunpack.c.l.b16 %v9566
        %v9830 = vunpack.c.l.b16 %v9567
        %v9831 = vunpack.c.l.b16 %v9568
        %v9832 = vunpack.c.l.b16 %v9569
        %v9833 = vunpack.c.l.b16 %v9570
        %v9834 = vunpack.c.l.b16 %v9571
        %v9835 = vunpack.c.l.b16 %v9572
        %v9836 = vunpack.c.l.b16 %v9573
        %v9837 = vunpack.c.l.b16 %v9574
        %v9838 = vunpack.c.l.b16 %v9575
        %v9839 = vunpack.c.l.b16 %v9576
        %v9840 = vunpack.c.l.b16 %v9577
        %v9841 = vunpack.c.l.b16 %v9578
        %v9842 = vunpack.c.l.b16 %v9579
        %v9843 = vunpack.c.l.b16 %v9580
        %v9844 = vunpack.c.l.b16 %v9581
        %v9845 = vunpack.c.l.b16 %v9582
        %v9846 = vunpack.c.l.b16 %v9583
        %v9847 = vunpack.c.l.b16 %v9584
        %v9848 = vunpack.c.l.b16 %v9585
        %v9849 = vunpack.c.l.b16 %v9586
        %v9850 = vunpack.c.l.b16 %v9587
        %v9851 = vunpack.c.l.b16 %v9588
        %v9852 = vunpack.c.l.b16 %v9589
        %v9853 = vunpack.c.l.b16 %v9590
        %v9854 = vunpack.c.l.b16 %v9591
        %v9855 = vunpack.c.l.b16 %v9592
        %v9856 = vunpack.c.l.b16 %v9593
        %v9857 = vunpack.c.l.b16 %v9594
        %v9858 = vunpack.c.l.b16 %v9595
        %v9859 = vunpack.c.l.b16 %v9596
        %v9860 = vunpack.c.l.b16 %v9597
        %v9861 = vunpack.c.l.b16 %v9598
        %v9862 = vunpack.c.l.b16 %v9599
        %v9863 = vunpack.c.l.b16 %v9600
        %v9864 = vunpack.c.l.b16 %v9601
        %v9865 = vunpack.c.l.b16 %v9602
        %v9866 = vunpack.c.l.b16 %v9603
        %v9867 = vunpack.c.l.b16 %v9604
        %v9868 = vpack.c.b16 %v9741, %v9740
        %v9869 = vpack.c.b16 %v9743, %v9742
        %v9870 = vpack.c.b16 %v9745, %v9744
        %v9871 = vpack.c.b16 %v9747, %v9746
        %v9872 = vpack.c.b16 %v9749, %v9748
        %v9873 = vpack.c.b16 %v9751, %v9750
        %v9874 = vpack.c.b16 %v9753, %v9752
        %v9875 = vpack.c.b16 %v9755, %v9754
        %v9876 = vpack.c.b16 %v9757, %v9756
        %v9877 = vpack.c.b16 %v9759, %v9758
        %v9878 = vpack.c.b16 %v9761, %v9760
        %v9879 = vpack.c.b16 %v9763, %v9762
        %v9880 = vpack.c.b16 %v9765, %v9764
        %v9881 = vpack.c.b16 %v9767, %v9766
        %v9882 = vpack.c.b16 %v9769, %v9768
        %v9883 = vpack.c.b16 %v9771, %v9770
        %v9884 = vpack.c.b16 %v9773, %v9772
        %v9885 = vpack.c.b16 %v9775, %v9774
        %v9886 = vpack.c.b16 %v9777, %v9776
        %v9887 = vpack.c.b16 %v9779, %v9778
        %v9888 = vpack.c.b16 %v9781, %v9780
        %v9889 = vpack.c.b16 %v9783, %v9782
        %v9890 = vpack.c.b16 %v9785, %v9784
        %v9891 = vpack.c.b16 %v9787, %v9786
        %v9892 = vpack.c.b16 %v9789, %v9788
        %v9893 = vpack.c.b16 %v9791, %v9790
        %v9894 = vpack.c.b16 %v9793, %v9792
        %v9895 = vpack.c.b16 %v9795, %v9794
        %v9896 = vpack.c.b16 %v9797, %v9796
        %v9897 = vpack.c.b16 %v9799, %v9798
        %v9898 = vpack.c.b16 %v9801, %v9800
        %v9899 = vpack.c.b16 %v9803, %v9802
        %v9900 = vpack.c.b16 %v9805, %v9804
        %v9901 = vpack.c.b16 %v9807, %v9806
        %v9902 = vpack.c.b16 %v9809, %v9808
        %v9903 = vpack.c.b16 %v9811, %v9810
        %v9904 = vpack.c.b16 %v9813, %v9812
        %v9905 = vpack.c.b16 %v9815, %v9814
        %v9906 = vpack.c.b16 %v9817, %v9816
        %v9907 = vpack.c.b16 %v9819, %v9818
        %v9908 = vpack.c.b16 %v9821, %v9820
        %v9909 = vpack.c.b16 %v9823, %v9822
        %v9910 = vpack.c.b16 %v9825, %v9824
        %v9911 = vpack.c.b16 %v9827, %v9826
        %v9912 = vpack.c.b16 %v9829, %v9828
        %v9913 = vpack.c.b16 %v9831, %v9830
        %v9914 = vpack.c.b16 %v9833, %v9832
        %v9915 = vpack.c.b16 %v9835, %v9834
        %v9916 = vpack.c.b16 %v9837, %v9836
        %v9917 = vpack.c.b16 %v9839, %v9838
        %v9918 = vpack.c.b16 %v9841, %v9840
        %v9919 = vpack.c.b16 %v9843, %v9842
        %v9920 = vpack.c.b16 %v9845, %v9844
        %v9921 = vpack.c.b16 %v9847, %v9846
        %v9922 = vpack.c.b16 %v9849, %v9848
        %v9923 = vpack.c.b16 %v9851, %v9850
        %v9924 = vpack.c.b16 %v9853, %v9852
        %v9925 = vpack.c.b16 %v9855, %v9854
        %v9926 = vpack.c.b16 %v9857, %v9856
        %v9927 = vpack.c.b16 %v9859, %v9858
        %v9928 = vpack.c.b16 %v9861, %v9860
        %v9929 = vpack.c.b16 %v9863, %v9862
        %v9930 = vpack.c.b16 %v9865, %v9864
        %v9931 = vpack.c.b16 %v9867, %v9866
        %9996 = vmatprep.subr.bf16.mxu0 0
        %9997 = vmatpush1.bf16.msra.mxu0 %v9868
        %9998 = vmatprep.subr.bf16.mxu0 0
        %9999 = vmatpush1.bf16.msra.mxu0 %v9869
        %10000 = vmatprep.subr.bf16.mxu0 0
        %10001 = vmatpush1.bf16.msra.mxu0 %v9870
        %10002 = vmatprep.subr.bf16.mxu0 0
        %10003 = vmatpush1.bf16.msra.mxu0 %v9871
        %10004 = vmatprep.subr.bf16.mxu0 0
        %10005 = vmatpush1.bf16.msra.mxu0 %v9872
        %10006 = vmatprep.subr.bf16.mxu0 0
        %10007 = vmatpush1.bf16.msra.mxu0 %v9873
        %10008 = vmatprep.subr.bf16.mxu0 0
        %10009 = vmatpush1.bf16.msra.mxu0 %v9874
        %10010 = vmatprep.subr.bf16.mxu0 0
        %10011 = vmatpush1.bf16.msra.mxu0 %v9875
        %10012 = vmatprep.subr.bf16.mxu0 0
        %10013 = vmatpush1.bf16.msra.mxu0 %v9876
        %10014 = vmatprep.subr.bf16.mxu0 0
        %10015 = vmatpush1.bf16.msra.mxu0 %v9877
        %10016 = vmatprep.subr.bf16.mxu0 0
        %10017 = vmatpush1.bf16.msra.mxu0 %v9878
        %10018 = vmatprep.subr.bf16.mxu0 0
        %10019 = vmatpush1.bf16.msra.mxu0 %v9879
        %10020 = vmatprep.subr.bf16.mxu0 0
        %10021 = vmatpush1.bf16.msra.mxu0 %v9880
        %10022 = vmatprep.subr.bf16.mxu0 0
        %10023 = vmatpush1.bf16.msra.mxu0 %v9881
        %10024 = vmatprep.subr.bf16.mxu0 0
        %10025 = vmatpush1.bf16.msra.mxu0 %v9882
        %10026 = vmatprep.subr.bf16.mxu0 0
        %10027 = vmatpush1.bf16.msra.mxu0 %v9883
        %10028 = vmatprep.mubr.bf16.mxu0 %v9414
        %10029 = vmatmul.mubr.bf16.gmra.mrb[0].mxu0 %v9413
        %v10030 = vpop.f32.mrb[0].mxu0
        %v10031 = vadd.f32 %v9610, %v10030
        %v10032 = vpop.f32.mrb[0].mxu0
        %v10033 = vpop.f32.mrb[0].mxu0
        %v10034 = vadd.f32 %v9610, %v10033
        %v10035 = vpop.f32.mrb[0].mxu0
        %10036 = vmatprep.mubr.bf16.mxu0 %v9422
        %10037 = vmatmul.mubr.bf16.gmra.mrb[0].mxu0 %v9421
        %v10038 = vpop.f32.mrb[0].mxu0
        %v10039 = vadd.f32 %v9610, %v10038
        %v10040 = vpop.f32.mrb[0].mxu0
        %v10041 = vpop.f32.mrb[0].mxu0
        %v10042 = vadd.f32 %v9610, %v10041
        %v10043 = vpop.f32.mrb[0].mxu0
        %10044 = vmatprep.mubr.bf16.mxu0 %v9430
        %10045 = vmatmul.mubr.bf16.gmra.mrb[0].mxu0 %v9429
        %v10046 = vpop.f32.mrb[0].mxu0
        %v10047 = vadd.f32 %v9610, %v10046
        %v10048 = vpop.f32.mrb[0].mxu0
        %v10049 = vpop.f32.mrb[0].mxu0
        %v10050 = vadd.f32 %v9610, %v10049
        %v10051 = vpop.f32.mrb[0].mxu0
        %10052 = vmatprep.mubr.bf16.mxu0 %v9438
        %10053 = vmatmul.mubr.bf16.gmra.mrb[0].mxu0 %v9437
        %v10054 = vpop.f32.mrb[0].mxu0
        %v10055 = vadd.f32 %v9610, %v10054
        %v10056 = vpop.f32.mrb[0].mxu0
        %v10057 = vpop.f32.mrb[0].mxu0
        %v10058 = vadd.f32 %v9610, %v10057
        %v10059 = vpop.f32.mrb[0].mxu0
        %10060 = vmatprep.mubr.bf16.mxu0 %v9446
        %10061 = vmatmul.mubr.bf16.gmra.mrb[0].mxu0 %v9445
        %v10062 = vpop.f32.mrb[0].mxu0
        %v10063 = vadd.f32 %v9610, %v10062
        %v10064 = vpop.f32.mrb[0].mxu0
        %v10065 = vpop.f32.mrb[0].mxu0
        %v10066 = vadd.f32 %v9610, %v10065
        %v10067 = vpop.f32.mrb[0].mxu0
        %10068 = vmatprep.mubr.bf16.mxu0 %v9454
        %10069 = vmatmul.mubr.bf16.gmra.mrb[0].mxu0 %v9453
        %v10070 = vpop.f32.mrb[0].mxu0
        %v10071 = vadd.f32 %v9610, %v10070
        %v10072 = vpop.f32.mrb[0].mxu0
        %v10073 = vpop.f32.mrb[0].mxu0
        %v10074 = vadd.f32 %v9610, %v10073
        %v10075 = vpop.f32.mrb[0].mxu0
        %10076 = vmatprep.mubr.bf16.mxu0 %v9462
        %10077 = vmatmul.mubr.bf16.gmra.mrb[0].mxu0 %v9461
        %v10078 = vpop.f32.mrb[0].mxu0
        %v10079 = vadd.f32 %v9610, %v10078
        %v10080 = vpop.f32.mrb[0].mxu0
        %v10081 = vpop.f32.mrb[0].mxu0
        %v10082 = vadd.f32 %v9610, %v10081
        %v10083 = vpop.f32.mrb[0].mxu0
        %10084 = vmatprep.mubr.bf16.mxu0 %v9470
        %10085 = vmatmul.mubr.bf16.gmra.mrb[0].mxu0 %v9469
        %v10086 = vpop.f32.mrb[0].mxu0
        %v10087 = vadd.f32 %v9610, %v10086
        %v10088 = vpop.f32.mrb[0].mxu0
        %v10089 = vpop.f32.mrb[0].mxu0
        %v10090 = vadd.f32 %v9610, %v10089
        %v10091 = vpop.f32.mrb[0].mxu0
        %10092 = vdwg.mxu0
        %10093 = vmatprep.subr.bf16.mxu0 0
        %10094 = vmatpush1.bf16.msra.mxu0 %v9884
        %10095 = vmatprep.subr.bf16.mxu0 0
        %10096 = vmatpush1.bf16.msra.mxu0 %v9885
        %10097 = vmatprep.subr.bf16.mxu0 0
        %10098 = vmatpush1.bf16.msra.mxu0 %v9886
        %10099 = vmatprep.subr.bf16.mxu0 0
        %10100 = vmatpush1.bf16.msra.mxu0 %v9887
        %10101 = vmatprep.subr.bf16.mxu0 0
        %10102 = vmatpush1.bf16.msra.mxu0 %v9888
        %10103 = vmatprep.subr.bf16.mxu0 0
        %10104 = vmatpush1.bf16.msra.mxu0 %v9889
        %10105 = vmatprep.subr.bf16.mxu0 0
        %10106 = vmatpush1.bf16.msra.mxu0 %v9890
        %10107 = vmatprep.subr.bf16.mxu0 0
        %10108 = vmatpush1.bf16.msra.mxu0 %v9891
        %10109 = vmatprep.subr.bf16.mxu0 0
        %10110 = vmatpush1.bf16.msra.mxu0 %v9892
        %10111 = vmatprep.subr.bf16.mxu0 0
        %10112 = vmatpush1.bf16.msra.mxu0 %v9893
        %10113 = vmatprep.subr.bf16.mxu0 0
        %10114 = vmatpush1.bf16.msra.mxu0 %v9894
        %10115 = vmatprep.subr.bf16.mxu0 0
        %10116 = vmatpush1.bf16.msra.mxu0 %v9895
        %10117 = vmatprep.subr.bf16.mxu0 0
        %10118 = vmatpush1.bf16.msra.mxu0 %v9896
        %10119 = vmatprep.subr.bf16.mxu0 0
        %10120 = vmatpush1.bf16.msra.mxu0 %v9897
        %10121 = vmatprep.subr.bf16.mxu0 0
        %10122 = vmatpush1.bf16.msra.mxu0 %v9898
        %10123 = vmatprep.subr.bf16.mxu0 0
        %10124 = vmatpush1.bf16.msra.mxu0 %v9899
        %10125 = vmatprep.mubr.bf16.mxu0 %v9416
        %10126 = vmatmul.mubr.bf16.gmra.mrb[0].mxu0 %v9415
        %v10127 = vpop.f32.mrb[0].mxu0
        %v10128 = vadd.f32 %v10031, %v10127
        %v10129 = vpop.f32.mrb[0].mxu0
        %v10130 = vpop.f32.mrb[0].mxu0
        %v10131 = vadd.f32 %v10034, %v10130
        %v10132 = vpop.f32.mrb[0].mxu0
        %10133 = vmatprep.mubr.bf16.mxu0 %v9424
        %10134 = vmatmul.mubr.bf16.gmra.mrb[0].mxu0 %v9423
        %v10135 = vpop.f32.mrb[0].mxu0
        %v10136 = vadd.f32 %v10039, %v10135
        %v10137 = vpop.f32.mrb[0].mxu0
        %v10138 = vpop.f32.mrb[0].mxu0
        %v10139 = vadd.f32 %v10042, %v10138
        %v10140 = vpop.f32.mrb[0].mxu0
        %10141 = vmatprep.mubr.bf16.mxu0 %v9432
        %10142 = vmatmul.mubr.bf16.gmra.mrb[0].mxu0 %v9431
        %v10143 = vpop.f32.mrb[0].mxu0
        %v10144 = vadd.f32 %v10047, %v10143
        %v10145 = vpop.f32.mrb[0].mxu0
        %v10146 = vpop.f32.mrb[0].mxu0
        %v10147 = vadd.f32 %v10050, %v10146
        %v10148 = vpop.f32.mrb[0].mxu0
        %10149 = vmatprep.mubr.bf16.mxu0 %v9440
        %10150 = vmatmul.mubr.bf16.gmra.mrb[0].mxu0 %v9439
        %v10151 = vpop.f32.mrb[0].mxu0
        %v10152 = vadd.f32 %v10055, %v10151
        %v10153 = vpop.f32.mrb[0].mxu0
        %v10154 = vpop.f32.mrb[0].mxu0
        %v10155 = vadd.f32 %v10058, %v10154
        %v10156 = vpop.f32.mrb[0].mxu0
        %10157 = vmatprep.mubr.bf16.mxu0 %v9448
        %10158 = vmatmul.mubr.bf16.gmra.mrb[0].mxu0 %v9447
        %v10159 = vpop.f32.mrb[0].mxu0
        %v10160 = vadd.f32 %v10063, %v10159
        %v10161 = vpop.f32.mrb[0].mxu0
        %v10162 = vpop.f32.mrb[0].mxu0
        %v10163 = vadd.f32 %v10066, %v10162
        %v10164 = vpop.f32.mrb[0].mxu0
        %10165 = vmatprep.mubr.bf16.mxu0 %v9456
        %10166 = vmatmul.mubr.bf16.gmra.mrb[0].mxu0 %v9455
        %v10167 = vpop.f32.mrb[0].mxu0
        %v10168 = vadd.f32 %v10071, %v10167
        %v10169 = vpop.f32.mrb[0].mxu0
        %v10170 = vpop.f32.mrb[0].mxu0
        %v10171 = vadd.f32 %v10074, %v10170
        %v10172 = vpop.f32.mrb[0].mxu0
        %10173 = vmatprep.mubr.bf16.mxu0 %v9464
        %10174 = vmatmul.mubr.bf16.gmra.mrb[0].mxu0 %v9463
        %v10175 = vpop.f32.mrb[0].mxu0
        %v10176 = vadd.f32 %v10079, %v10175
        %v10177 = vpop.f32.mrb[0].mxu0
        %v10178 = vpop.f32.mrb[0].mxu0
        %v10179 = vadd.f32 %v10082, %v10178
        %v10180 = vpop.f32.mrb[0].mxu0
        %10181 = vmatprep.mubr.bf16.mxu0 %v9472
        %10182 = vmatmul.mubr.bf16.gmra.mrb[0].mxu0 %v9471
        %v10183 = vpop.f32.mrb[0].mxu0
        %v10184 = vadd.f32 %v10087, %v10183
        %v10185 = vpop.f32.mrb[0].mxu0
        %v10186 = vpop.f32.mrb[0].mxu0
        %v10187 = vadd.f32 %v10090, %v10186
        %v10188 = vpop.f32.mrb[0].mxu0
        %10189 = vdwg.mxu0
        %10190 = vmatprep.subr.bf16.mxu0 0
        %10191 = vmatpush1.bf16.msra.mxu0 %v9900
        %10192 = vmatprep.subr.bf16.mxu0 0
        %10193 = vmatpush1.bf16.msra.mxu0 %v9901
        %10194 = vmatprep.subr.bf16.mxu0 0
        %10195 = vmatpush1.bf16.msra.mxu0 %v9902
        %10196 = vmatprep.subr.bf16.mxu0 0
        %10197 = vmatpush1.bf16.msra.mxu0 %v9903
        %10198 = vmatprep.subr.bf16.mxu0 0
        %10199 = vmatpush1.bf16.msra.mxu0 %v9904
        %10200 = vmatprep.subr.bf16.mxu0 0
        %10201 = vmatpush1.bf16.msra.mxu0 %v9905
        %10202 = vmatprep.subr.bf16.mxu0 0
        %10203 = vmatpush1.bf16.msra.mxu0 %v9906
        %10204 = vmatprep.subr.bf16.mxu0 0
        %10205 = vmatpush1.bf16.msra.mxu0 %v9907
        %10206 = vmatprep.subr.bf16.mxu0 0
        %10207 = vmatpush1.bf16.msra.mxu0 %v9908
        %10208 = vmatprep.subr.bf16.mxu0 0
        %10209 = vmatpush1.bf16.msra.mxu0 %v9909
        %10210 = vmatprep.subr.bf16.mxu0 0
        %10211 = vmatpush1.bf16.msra.mxu0 %v9910
        %10212 = vmatprep.subr.bf16.mxu0 0
        %10213 = vmatpush1.bf16.msra.mxu0 %v9911
        %10214 = vmatprep.subr.bf16.mxu0 0
        %10215 = vmatpush1.bf16.msra.mxu0 %v9912
        %10216 = vmatprep.subr.bf16.mxu0 0
        %10217 = vmatpush1.bf16.msra.mxu0 %v9913
        %10218 = vmatprep.subr.bf16.mxu0 0
        %10219 = vmatpush1.bf16.msra.mxu0 %v9914
        %10220 = vmatprep.subr.bf16.mxu0 0
        %10221 = vmatpush1.bf16.msra.mxu0 %v9915
        %10222 = vmatprep.mubr.bf16.mxu0 %v9418
        %10223 = vmatmul.mubr.bf16.gmra.mrb[0].mxu0 %v9417
        %v10224 = vpop.f32.mrb[0].mxu0
        %v10225 = vadd.f32 %v10128, %v10224
        %v10226 = vpop.f32.mrb[0].mxu0
        %v10227 = vpop.f32.mrb[0].mxu0
        %v10228 = vadd.f32 %v10131, %v10227
        %v10229 = vpop.f32.mrb[0].mxu0
        %10230 = vmatprep.mubr.bf16.mxu0 %v9426
        %10231 = vmatmul.mubr.bf16.gmra.mrb[0].mxu0 %v9425
        %v10232 = vpop.f32.mrb[0].mxu0
        %v10233 = vadd.f32 %v10136, %v10232
        %v10234 = vpop.f32.mrb[0].mxu0
        %v10235 = vpop.f32.mrb[0].mxu0
        %v10236 = vadd.f32 %v10139, %v10235
        %v10237 = vpop.f32.mrb[0].mxu0
        %10238 = vmatprep.mubr.bf16.mxu0 %v9434
        %10239 = vmatmul.mubr.bf16.gmra.mrb[0].mxu0 %v9433
        %v10240 = vpop.f32.mrb[0].mxu0
        %v10241 = vadd.f32 %v10144, %v10240
        %v10242 = vpop.f32.mrb[0].mxu0
        %v10243 = vpop.f32.mrb[0].mxu0
        %v10244 = vadd.f32 %v10147, %v10243
        %v10245 = vpop.f32.mrb[0].mxu0
        %10246 = vmatprep.mubr.bf16.mxu0 %v9442
        %10247 = vmatmul.mubr.bf16.gmra.mrb[0].mxu0 %v9441
        %v10248 = vpop.f32.mrb[0].mxu0
        %v10249 = vadd.f32 %v10152, %v10248
        %v10250 = vpop.f32.mrb[0].mxu0
        %v10251 = vpop.f32.mrb[0].mxu0
        %v10252 = vadd.f32 %v10155, %v10251
        %v10253 = vpop.f32.mrb[0].mxu0
        %10254 = vmatprep.mubr.bf16.mxu0 %v9450
        %10255 = vmatmul.mubr.bf16.gmra.mrb[0].mxu0 %v9449
        %v10256 = vpop.f32.mrb[0].mxu0
        %v10257 = vadd.f32 %v10160, %v10256
        %v10258 = vpop.f32.mrb[0].mxu0
        %v10259 = vpop.f32.mrb[0].mxu0
        %v10260 = vadd.f32 %v10163, %v10259
        %v10261 = vpop.f32.mrb[0].mxu0
        %10262 = vmatprep.mubr.bf16.mxu0 %v9458
        %10263 = vmatmul.mubr.bf16.gmra.mrb[0].mxu0 %v9457
        %v10264 = vpop.f32.mrb[0].mxu0
        %v10265 = vadd.f32 %v10168, %v10264
        %v10266 = vpop.f32.mrb[0].mxu0
        %v10267 = vpop.f32.mrb[0].mxu0
        %v10268 = vadd.f32 %v10171, %v10267
        %v10269 = vpop.f32.mrb[0].mxu0
        %10270 = vmatprep.mubr.bf16.mxu0 %v9466
        %10271 = vmatmul.mubr.bf16.gmra.mrb[0].mxu0 %v9465
        %v10272 = vpop.f32.mrb[0].mxu0
        %v10273 = vadd.f32 %v10176, %v10272
        %v10274 = vpop.f32.mrb[0].mxu0
        %v10275 = vpop.f32.mrb[0].mxu0
        %v10276 = vadd.f32 %v10179, %v10275
        %v10277 = vpop.f32.mrb[0].mxu0
        %10278 = vmatprep.mubr.bf16.mxu0 %v9474
        %10279 = vmatmul.mubr.bf16.gmra.mrb[0].mxu0 %v9473
        %v10280 = vpop.f32.mrb[0].mxu0
        %v10281 = vadd.f32 %v10184, %v10280
        %v10282 = vpop.f32.mrb[0].mxu0
        %v10283 = vpop.f32.mrb[0].mxu0
        %v10284 = vadd.f32 %v10187, %v10283
        %v10285 = vpop.f32.mrb[0].mxu0
        %10286 = vdwg.mxu0
        %10287 = vmatprep.subr.bf16.mxu0 0
        %10288 = vmatpush1.bf16.msra.mxu0 %v9916
        %10289 = vmatprep.subr.bf16.mxu0 0
        %10290 = vmatpush1.bf16.msra.mxu0 %v9917
        %10291 = vmatprep.subr.bf16.mxu0 0
        %10292 = vmatpush1.bf16.msra.mxu0 %v9918
        %10293 = vmatprep.subr.bf16.mxu0 0
        %10294 = vmatpush1.bf16.msra.mxu0 %v9919
        %10295 = vmatprep.subr.bf16.mxu0 0
        %10296 = vmatpush1.bf16.msra.mxu0 %v9920
        %10297 = vmatprep.subr.bf16.mxu0 0
        %10298 = vmatpush1.bf16.msra.mxu0 %v9921
        %10299 = vmatprep.subr.bf16.mxu0 0
        %10300 = vmatpush1.bf16.msra.mxu0 %v9922
        %10301 = vmatprep.subr.bf16.mxu0 0
        %10302 = vmatpush1.bf16.msra.mxu0 %v9923
        %10303 = vmatprep.subr.bf16.mxu0 0
        %10304 = vmatpush1.bf16.msra.mxu0 %v9924
        %10305 = vmatprep.subr.bf16.mxu0 0
        %10306 = vmatpush1.bf16.msra.mxu0 %v9925
        %10307 = vmatprep.subr.bf16.mxu0 0
        %10308 = vmatpush1.bf16.msra.mxu0 %v9926
        %10309 = vmatprep.subr.bf16.mxu0 0
        %10310 = vmatpush1.bf16.msra.mxu0 %v9927
        %10311 = vmatprep.subr.bf16.mxu0 0
        %10312 = vmatpush1.bf16.msra.mxu0 %v9928
        %10313 = vmatprep.subr.bf16.mxu0 0
        %10314 = vmatpush1.bf16.msra.mxu0 %v9929
        %10315 = vmatprep.subr.bf16.mxu0 0
        %10316 = vmatpush1.bf16.msra.mxu0 %v9930
        %10317 = vmatprep.subr.bf16.mxu0 0
        %10318 = vmatpush1.bf16.msra.mxu0 %v9931
        %10319 = vmatprep.mubr.bf16.mxu0 %v9420
        %10320 = vmatmul.mubr.bf16.gmra.mrb[0].mxu0 %v9419
        %v10321 = vpop.f32.mrb[0].mxu0
        %v10322 = vadd.f32 %v10225, %v10321
        %v10323 = vpop.f32.mrb[0].mxu0
        %v10324 = vpop.f32.mrb[0].mxu0
        %v10325 = vadd.f32 %v10228, %v10324
        %v10326 = vpop.f32.mrb[0].mxu0
        %10327 = vmatprep.mubr.bf16.mxu0 %v9428
        %10328 = vmatmul.mubr.bf16.gmra.mrb[0].mxu0 %v9427
        %v10329 = vpop.f32.mrb[0].mxu0
        %v10330 = vadd.f32 %v10233, %v10329
        %v10331 = vpop.f32.mrb[0].mxu0
        %v10332 = vpop.f32.mrb[0].mxu0
        %v10333 = vadd.f32 %v10236, %v10332
        %v10334 = vpop.f32.mrb[0].mxu0
        %10335 = vmatprep.mubr.bf16.mxu0 %v9436
        %10336 = vmatmul.mubr.bf16.gmra.mrb[0].mxu0 %v9435
        %v10337 = vpop.f32.mrb[0].mxu0
        %v10338 = vadd.f32 %v10241, %v10337
        %v10339 = vpop.f32.mrb[0].mxu0
        %v10340 = vpop.f32.mrb[0].mxu0
        %v10341 = vadd.f32 %v10244, %v10340
        %v10342 = vpop.f32.mrb[0].mxu0
        %10343 = vmatprep.mubr.bf16.mxu0 %v9444
        %10344 = vmatmul.mubr.bf16.gmra.mrb[0].mxu0 %v9443
        %v10345 = vpop.f32.mrb[0].mxu0
        %v10346 = vadd.f32 %v10249, %v10345
        %v10347 = vpop.f32.mrb[0].mxu0
        %v10348 = vpop.f32.mrb[0].mxu0
        %v10349 = vadd.f32 %v10252, %v10348
        %v10350 = vpop.f32.mrb[0].mxu0
        %10351 = vmatprep.mubr.bf16.mxu0 %v9452
        %10352 = vmatmul.mubr.bf16.gmra.mrb[0].mxu0 %v9451
        %v10353 = vpop.f32.mrb[0].mxu0
        %v10354 = vadd.f32 %v10257, %v10353
        %v10355 = vpop.f32.mrb[0].mxu0
        %v10356 = vpop.f32.mrb[0].mxu0
        %v10357 = vadd.f32 %v10260, %v10356
        %v10358 = vpop.f32.mrb[0].mxu0
        %10359 = vmatprep.mubr.bf16.mxu0 %v9460
        %10360 = vmatmul.mubr.bf16.gmra.mrb[0].mxu0 %v9459
        %v10361 = vpop.f32.mrb[0].mxu0
        %v10362 = vadd.f32 %v10265, %v10361
        %v10363 = vpop.f32.mrb[0].mxu0
        %v10364 = vpop.f32.mrb[0].mxu0
        %v10365 = vadd.f32 %v10268, %v10364
        %v10366 = vpop.f32.mrb[0].mxu0
        %10367 = vmatprep.mubr.bf16.mxu0 %v9468
        %10368 = vmatmul.mubr.bf16.gmra.mrb[0].mxu0 %v9467
        %v10369 = vpop.f32.mrb[0].mxu0
        %v10370 = vadd.f32 %v10273, %v10369
        %v10371 = vpop.f32.mrb[0].mxu0
        %v10372 = vpop.f32.mrb[0].mxu0
        %v10373 = vadd.f32 %v10276, %v10372
        %v10374 = vpop.f32.mrb[0].mxu0
        %10375 = vmatprep.mubr.bf16.mxu0 %v9476
        %10376 = vmatmul.mubr.bf16.gmra.mrb[0].mxu0 %v9475
        %v10377 = vpop.f32.mrb[0].mxu0
        %v10378 = vadd.f32 %v10281, %v10377
        %v10379 = vpop.f32.mrb[0].mxu0
        %v10380 = vpop.f32.mrb[0].mxu0
        %v10381 = vadd.f32 %v10284, %v10380
        %v10382 = vpop.f32.mrb[0].mxu0
        %10383 = vdwg.mxu0
        %10384 = vmax.xlane.f32.xlu0 %v10322
        %v10385 = vpop.xlane.xlu0 %10384
        %10386 = vmax.xlane.f32.xlu0 %v10325
        %v10387 = vpop.xlane.xlu0 %10386
        %10388 = vmax.xlane.f32.xlu0 %v10330
        %v10389 = vpop.xlane.xlu0 %10388
        %10390 = vmax.xlane.f32.xlu0 %v10333
        %v10391 = vpop.xlane.xlu0 %10390
        %10392 = vmax.xlane.f32.xlu0 %v10338
        %v10393 = vpop.xlane.xlu0 %10392
        %10394 = vmax.xlane.f32.xlu0 %v10341
        %v10395 = vpop.xlane.xlu0 %10394
        %10396 = vmax.xlane.f32.xlu0 %v10346
        %v10397 = vpop.xlane.xlu0 %10396
        %10398 = vmax.xlane.f32.xlu0 %v10349
        %v10399 = vpop.xlane.xlu0 %10398
        %10400 = vmax.xlane.f32.xlu0 %v10354
        %v10401 = vpop.xlane.xlu0 %10400
        %10402 = vmax.xlane.f32.xlu0 %v10357
        %v10403 = vpop.xlane.xlu0 %10402
        %10404 = vmax.xlane.f32.xlu0 %v10362
        %v10405 = vpop.xlane.xlu0 %10404
        %10406 = vmax.xlane.f32.xlu0 %v10365
        %v10407 = vpop.xlane.xlu0 %10406
        %10408 = vmax.xlane.f32.xlu0 %v10370
        %v10409 = vpop.xlane.xlu0 %10408
        %10410 = vmax.xlane.f32.xlu0 %v10373
        %v10411 = vpop.xlane.xlu0 %10410
        %10412 = vmax.xlane.f32.xlu0 %v10378
        %v10413 = vpop.xlane.xlu0 %10412
        %10414 = vmax.xlane.f32.xlu0 %v10381
        %v10415 = vpop.xlane.xlu0 %10414
        %v10416 = vsub.f32 %v10322, %v10385
        %v10417 = vsub.f32 %v10325, %v10387
        %v10418 = vsub.f32 %v10330, %v10389
        %v10419 = vsub.f32 %v10333, %v10391
        %v10420 = vsub.f32 %v10338, %v10393
        %v10421 = vsub.f32 %v10341, %v10395
        %v10422 = vsub.f32 %v10346, %v10397
        %v10423 = vsub.f32 %v10349, %v10399
        %v10424 = vsub.f32 %v10354, %v10401
        %v10425 = vsub.f32 %v10357, %v10403
        %v10426 = vsub.f32 %v10362, %v10405
        %v10427 = vsub.f32 %v10365, %v10407
        %v10428 = vsub.f32 %v10370, %v10409
        %v10429 = vsub.f32 %v10373, %v10411
        %v10430 = vsub.f32 %v10378, %v10413
        %v10431 = vsub.f32 %v10381, %v10415
        %v10432 = vmul.f32 %v10416, 1.442695
        %v10433 = vpow.pop %v10432
        %v10434 = vmul.f32 %v10417, 1.442695
        %v10435 = vpow.pop %v10434
        %v10436 = vmul.f32 %v10418, 1.442695
        %v10437 = vpow.pop %v10436
        %v10438 = vmul.f32 %v10419, 1.442695
        %v10439 = vpow.pop %v10438
        %v10440 = vmul.f32 %v10420, 1.442695
        %v10441 = vpow.pop %v10440
        %v10442 = vmul.f32 %v10421, 1.442695
        %v10443 = vpow.pop %v10442
        %v10444 = vmul.f32 %v10422, 1.442695
        %v10445 = vpow.pop %v10444
        %v10446 = vmul.f32 %v10423, 1.442695
        %v10447 = vpow.pop %v10446
        %v10448 = vmul.f32 %v10424, 1.442695
        %v10449 = vpow.pop %v10448
        %v10450 = vmul.f32 %v10425, 1.442695
        %v10451 = vpow.pop %v10450
        %v10452 = vmul.f32 %v10426, 1.442695
        %v10453 = vpow.pop %v10452
        %v10454 = vmul.f32 %v10427, 1.442695
        %v10455 = vpow.pop %v10454
        %v10456 = vmul.f32 %v10428, 1.442695
        %v10457 = vpow.pop %v10456
        %v10458 = vmul.f32 %v10429, 1.442695
        %v10459 = vpow.pop %v10458
        %v10460 = vmul.f32 %v10430, 1.442695
        %v10461 = vpow.pop %v10460
        %v10462 = vmul.f32 %v10431, 1.442695
        %v10463 = vpow.pop %v10462
        %10464 = vadd.xlane.f32.xlu0 %v10433
        %v10465 = vpop.xlane.xlu0 %10464
        %10466 = vadd.xlane.f32.xlu0 %v10435
        %v10467 = vpop.xlane.xlu0 %10466
        %10468 = vadd.xlane.f32.xlu0 %v10437
        %v10469 = vpop.xlane.xlu0 %10468
        %10470 = vadd.xlane.f32.xlu0 %v10439
        %v10471 = vpop.xlane.xlu0 %10470
        %10472 = vadd.xlane.f32.xlu0 %v10441
        %v10473 = vpop.xlane.xlu0 %10472
        %10474 = vadd.xlane.f32.xlu0 %v10443
        %v10475 = vpop.xlane.xlu0 %10474
        %10476 = vadd.xlane.f32.xlu0 %v10445
        %v10477 = vpop.xlane.xlu0 %10476
        %10478 = vadd.xlane.f32.xlu0 %v10447
        %v10479 = vpop.xlane.xlu0 %10478
        %10480 = vadd.xlane.f32.xlu0 %v10449
        %v10481 = vpop.xlane.xlu0 %10480
        %10482 = vadd.xlane.f32.xlu0 %v10451
        %v10483 = vpop.xlane.xlu0 %10482
        %10484 = vadd.xlane.f32.xlu0 %v10453
        %v10485 = vpop.xlane.xlu0 %10484
        %10486 = vadd.xlane.f32.xlu0 %v10455
        %v10487 = vpop.xlane.xlu0 %10486
        %10488 = vadd.xlane.f32.xlu0 %v10457
        %v10489 = vpop.xlane.xlu0 %10488
        %10490 = vadd.xlane.f32.xlu0 %v10459
        %v10491 = vpop.xlane.xlu0 %10490
        %10492 = vadd.xlane.f32.xlu0 %v10461
        %v10493 = vpop.xlane.xlu0 %10492
        %10494 = vadd.xlane.f32.xlu0 %v10463
        %v10495 = vpop.xlane.xlu0 %10494
        %v10496 = vlog2.pop %v10465
        %v10497 = vmul.f32 %v10496, 0.6931472
        %v10498 = vlog2.pop %v10467
        %v10499 = vmul.f32 %v10498, 0.6931472
        %v10500 = vlog2.pop %v10469
        %v10501 = vmul.f32 %v10500, 0.6931472
        %v10502 = vlog2.pop %v10471
        %v10503 = vmul.f32 %v10502, 0.6931472
        %v10504 = vlog2.pop %v10473
        %v10505 = vmul.f32 %v10504, 0.6931472
        %v10506 = vlog2.pop %v10475
        %v10507 = vmul.f32 %v10506, 0.6931472
        %v10508 = vlog2.pop %v10477
        %v10509 = vmul.f32 %v10508, 0.6931472
        %v10510 = vlog2.pop %v10479
        %v10511 = vmul.f32 %v10510, 0.6931472
        %v10512 = vlog2.pop %v10481
        %v10513 = vmul.f32 %v10512, 0.6931472
        %v10514 = vlog2.pop %v10483
        %v10515 = vmul.f32 %v10514, 0.6931472
        %v10516 = vlog2.pop %v10485
        %v10517 = vmul.f32 %v10516, 0.6931472
        %v10518 = vlog2.pop %v10487
        %v10519 = vmul.f32 %v10518, 0.6931472
        %v10520 = vlog2.pop %v10489
        %v10521 = vmul.f32 %v10520, 0.6931472
        %v10522 = vlog2.pop %v10491
        %v10523 = vmul.f32 %v10522, 0.6931472
        %v10524 = vlog2.pop %v10493
        %v10525 = vmul.f32 %v10524, 0.6931472
        %v10526 = vlog2.pop %v10495
        %v10527 = vmul.f32 %v10526, 0.6931472
        %v10528 = vsub.f32 %v10416, %v10497
        %v10529 = vsub.f32 %v10417, %v10499
        %v10530 = vsub.f32 %v10418, %v10501
        %v10531 = vsub.f32 %v10419, %v10503
        %v10532 = vsub.f32 %v10420, %v10505
        %v10533 = vsub.f32 %v10421, %v10507
        %v10534 = vsub.f32 %v10422, %v10509
        %v10535 = vsub.f32 %v10423, %v10511
        %v10536 = vsub.f32 %v10424, %v10513
        %v10537 = vsub.f32 %v10425, %v10515
        %v10538 = vsub.f32 %v10426, %v10517
        %v10539 = vsub.f32 %v10427, %v10519
        %v10540 = vsub.f32 %v10428, %v10521
        %v10541 = vsub.f32 %v10429, %v10523
        %v10542 = vsub.f32 %v10430, %v10525
        %v10543 = vsub.f32 %v10431, %v10527
        %10544 = vst [vmem:[%s179] sm:$0xff] %v10528
        %10545 = vst [vmem:[%s179 + $0x8] sm:$0xff] %v10529
        %10546 = vst [vmem:[%s179 + $0x10] sm:$0xff] %v10530
        %10547 = vst [vmem:[%s179 + $0x18] sm:$0xff] %v10531
        %10548 = vst [vmem:[%s179 + $0x20] sm:$0xff] %v10532
        %10549 = vst [vmem:[%s179 + $0x28] sm:$0xff] %v10533
        %10550 = vst [vmem:[%s179 + $0x30] sm:$0xff] %v10534
        %10551 = vst [vmem:[%s179 + $0x38] sm:$0xff] %v10535
        %10552 = vst [vmem:[%s179 + $0x40] sm:$0xff] %v10536
        %10553 = vst [vmem:[%s179 + $0x48] sm:$0xff] %v10537
        %10554 = vst [vmem:[%s179 + $0x50] sm:$0xff] %v10538
        %10555 = vst [vmem:[%s179 + $0x58] sm:$0xff] %v10539
        %10556 = vst [vmem:[%s179 + $0x60] sm:$0xff] %v10540
        %10557 = vst [vmem:[%s179 + $0x68] sm:$0xff] %v10541
        %10558 = vst [vmem:[%s179 + $0x70] sm:$0xff] %v10542
        %10559 = vst [vmem:[%s179 + $0x78] sm:$0xff] %v10543
        %s10560 = sand.u32 %s94, 1
        %s10561 = scalar_lea.sflag [#allocation4], %s10560
        %s10562 = sand.u32 %s94, 1
        %s10563 = smul.addr %s10562, 128
        %s10564 = scalar_lea.vmem [#allocation5], %s10563
        // Predicated region
        $region37: #{tpu_custom_call.1} parent=31 // pred_check
          %p10565 = pneg %p104
        $region38: #{tpu_custom_call.1} parent=31 // pred_check_branch
          %10567 = sbr.rel (%p10565) target = $region40
        $region39: #{tpu_custom_call.1} parent=31 // pred_region
          %s10568 = smul.u32 16, %s18
          %s10570 = ssub.s32 2048, 2048
          %10571 = vsyncadd %s10561, %s10570
          %s10572 = smul.addr %s10568, 128
          %s10573 = scalar_lea.hbm %s3, %s10572
          %s10574 = sshll.u32 %s10564, 4
          %s10575 = int_to_ptr.vmem [resolvable:$true] %s10574
          %10580 = dma.vmem_to_hbm [thread:$0]  %s10575, 2048, %s10573, %s10561, 128, 128, 8
        $region40: #{tpu_custom_call.1} parent=31 // pred_fallthru
          _
      $region32: #{tpu_custom_call.1} parent=5 // pred_fallthru
        _
      %p10581 = scmp.le.s32.totalorder 2, %s13
      // Predicated region
      $region41: #{tpu_custom_call.1} parent=5 // pred_check
        %p10582 = pneg %p10581
      $region42: #{tpu_custom_call.1} parent=5 // pred_check_branch
        %10584 = sbr.rel (%p10582) target = $region44
      $region43: #{tpu_custom_call.1} parent=5 // pred_region
        %s10585 = ssub.s32 %s13, 2
        // Predicated region
        $region45: #{tpu_custom_call.1} parent=43 // pred_check
          %p10586 = pneg %p110
        $region46: #{tpu_custom_call.1} parent=43 // pred_check_branch
          %10588 = sbr.rel (%p10586) target = $region48
        $region47: #{tpu_custom_call.1} parent=43 // pred_region
          %s10589 = sand.u32 %s95, 1
          %s10590 = scalar_lea.sflag [#allocation4], %s10589
          %s10591 = sand.u32 %s95, 1
          %s10592 = smul.addr %s10591, 128
          %s10593 = scalar_lea.vmem [#allocation5], %s10592
          %10594 = dma.done %s10590, 2048
        $region48: #{tpu_custom_call.1} parent=43 // pred_fallthru
          _
      $region44: #{tpu_custom_call.1} parent=5 // pred_fallthru
        _
    $region6: #{tpu_custom_call.1} parent=1 // loop_footer
      %s17 = sadd.s32 1, %s13
    $region7: #{tpu_custom_call.1} parent=1 // loop_footer_branch
      %12 = sbr.rel target = $region3
    $region8: #{tpu_custom_call.1} parent=1 // loop_exit
      _
    %10595 = vsyncpa [#allocation3], 1
    %s10596 = scalar_lea.sflag [#allocation3], 1
    %10597 = vsyncpa %s10596, 1
    %10598 = vsyncpa [#allocation4], 1
    %s10599 = scalar_lea.sflag [#allocation4], 1
    %10600 = vsyncpa %s10599, 1

</llo_original>
